<compile_context>
chip_gen: v6e
topology: v6e:2x2x1
jax: 0.10.0
libtpu: 0.0.40
codegen_flags: <defaults>
</compile_context>

<pallas_src>
import jax
import jax.numpy as jnp
from jax.experimental import pallas as pl
from jax.experimental.pallas import tpu as pltpu


TN = 1024  # output-feature tile of the 2048-wide branch linears (grid = 2048//TN)


# --------------------------------------------------------------------------
# Fused kernel: both branches + concat head, gridded over branch-feature blocks
# --------------------------------------------------------------------------
def _fused_kernel(xt_ref, xr_ref, mt_ref, pbt_ref, mr_ref, pbr_ref,
                  lwt_ref, lbt_ref, lwr_ref, lbr_ref,
                  w1_ref, b1_ref, w2_ref, b2_ref, w3t_ref, b3_ref,
                  out_ref,
                  featt_sc, featr_sc, acc_sc):
    j = pl.program_id(0)

    @pl.when(j == 0)
    def _init():
        # Conv1d + AvgPool1d + Flatten folded into one bf16 matmul; then the
        # ReLU that precedes the 2048-wide Linear (Sequential(ReLU, Linear, ReLU)).
        ft = jnp.dot(xt_ref[...], mt_ref[...],
                     preferred_element_type=jnp.float32) + pbt_ref[...]
        fr = jnp.dot(xr_ref[...], mr_ref[...],
                     preferred_element_type=jnp.float32) + pbr_ref[...]
        featt_sc[...] = jnp.maximum(ft, 0.0).astype(featt_sc.dtype)
        featr_sc[...] = jnp.maximum(fr, 0.0).astype(featr_sc.dtype)
        acc_sc[...] = jnp.zeros_like(acc_sc)

    # Branch Linear(conv_len, 2048) on a TN-wide block of output features + ReLU.
    t_blk = jnp.dot(featt_sc[...], lwt_ref[...],
                    preferred_element_type=jnp.float32) + lbt_ref[...]
    t_blk = jnp.maximum(t_blk, 0.0)
    r_blk = jnp.dot(featr_sc[...], lwr_ref[...],
                    preferred_element_type=jnp.float32) + lbr_ref[...]
    r_blk = jnp.maximum(r_blk, 0.0)

    # Head Linear(4096,512): concat(t, r) @ W1 == t @ W1[:2048] + r @ W1[2048:].
    # W1 is host-restacked so block j's target rows and rna rows are contiguous:
    # one deep-K MXU pass + one accumulator RMW per grid step.
    tr_blk = jnp.concatenate([t_blk, r_blk], axis=1).astype(w1_ref.dtype)
    acc_sc[...] += jnp.dot(tr_blk, w1_ref[...],
                           preferred_element_type=jnp.float32)

    @pl.when(j == pl.num_programs(0) - 1)
    def _finalize():
        h1 = jnp.maximum(acc_sc[...] + b1_ref[...], 0.0)
        h2 = jnp.dot(h1.astype(w2_ref.dtype), w2_ref[...],
                     preferred_element_type=jnp.float32) + b2_ref[...]
        h2 = jnp.maximum(h2, 0.0)
        # Linear(512, 1) as VPU multiply + lane reduction (skip an N=1 MXU pass).
        z = jnp.sum(h2 * w3t_ref[...], axis=-1, keepdims=True) + b3_ref[...]
        out_ref[...] = 1.0 / (1.0 + jnp.exp(-z))


# --------------------------------------------------------------------------
# Host-side fold of Conv1d(1->8,k=3) + AvgPool1d(2,2) + channel-major Flatten
# into a single (L, Fpad) bf16 matrix plus a (1, Fpad) f32 bias row, zero-padded
# along the feature axis to a lane-aligned width Fpad (multiple of 128).
# --------------------------------------------------------------------------
def _conv_pool_matrix(conv_w, conv_b, L, f_pad):
    cw = conv_w.reshape(8, 3).astype(jnp.float32)
    Lc = L - 2                 # conv output length
    P = Lc // 2                # pooled length (trailing odd conv column dropped)
    F = 8 * P
    i = jnp.arange(L)[:, None, None]
    p = jnp.arange(P)[None, :, None]
    k = jnp.arange(3)[None, None, :]
    # input position i contributes cw[c,k] to pooled (c,p) iff i==2p+k or i==2p+1+k
    hit = ((i == 2 * p + k) | (i == 2 * p + 1 + k)).astype(jnp.float32)  # (L, P, 3)
    M = 0.5 * jnp.einsum('lpk,ck->lcp', hit, cw)                          # (L, 8, P)
    M = M.reshape(L, F)                               # feature index = c*P + p
    pooled_bias = jnp.repeat(conv_b.astype(jnp.float32), P).reshape(1, F)
    # Zero-pad feature axis: padded features come out as relu(0)=0 and the
    # corresponding (also zero-padded) branch-linear rows contribute nothing.
    M = jnp.pad(M, ((0, 0), (0, f_pad - F)))
    pooled_bias = jnp.pad(pooled_bias, ((0, 0), (0, f_pad - F)))
    return M.astype(jnp.bfloat16), pooled_bias


def _round_up(x, m):
    return ((x + m - 1) // m) * m


def vecnn_forward(target_input, rnas_input, params):
    B, L_t = target_input.shape
    _, L_r = rnas_input.shape
    Ft = 8 * ((L_t - 2) // 2)            # target conv_len (584 here)
    Fr = 8 * ((L_r - 2) // 2)            # rna conv_len    (648 here)
    Ftp = _round_up(Ft, 128)             # 640
    Frp = _round_up(Fr, 128)             # 768
    H = params["lw_t"].shape[1]          # 2048
    Hh = params["w2"].shape[0]           # 512
    assert H % TN == 0
    n_blocks = H // TN

    M_t, pb_t = _conv_pool_matrix(params["cw_t"], params["cb_t"], L_t, Ftp)
    M_r, pb_r = _conv_pool_matrix(params["cw_r"], params["cb_r"], L_r, Frp)

    # Large weights streamed in bf16; f32 accumulation happens in-kernel.
    # Branch linear weights: pad the K (conv-feature) axis with zero rows.
    lw_t = jnp.pad(params["lw_t"], ((0, Ftp - Ft), (0, 0))).astype(jnp.bfloat16)
    lw_r = jnp.pad(params["lw_r"], ((0, Frp - Fr), (0, 0))).astype(jnp.bfloat16)
    # Head weight W1 (4096, 512): restack so rows for feature-block j are
    # [ W1[j*TN:(j+1)*TN] ; W1[2048 + j*TN : 2048 + (j+1)*TN] ], contiguous.
    w1 = params["w1"]
    w1_stacked = jnp.concatenate(
        [jnp.concatenate([w1[j * TN:(j + 1) * TN],
                          w1[H + j * TN:H + (j + 1) * TN]], axis=0)
         for j in range(n_blocks)], axis=0).astype(jnp.bfloat16)   # (2H, Hh)
    w2 = params["w2"].astype(jnp.bfloat16)

    lb_t = params["lb_t"].reshape(1, H).astype(jnp.float32)
    lb_r = params["lb_r"].reshape(1, H).astype(jnp.float32)
    b1 = params["b1"].reshape(1, Hh).astype(jnp.float32)
    b2 = params["b2"].reshape(1, Hh).astype(jnp.float32)
    w3t = params["w3"].reshape(1, Hh).astype(jnp.float32)
    b3 = params["b3"].reshape(1, 1).astype(jnp.float32)

    def const2d(shape):
        return pl.BlockSpec(shape, lambda j: (0, 0))

    in_specs = [
        const2d((B, L_t)),                            # x_t (resident)
        const2d((B, L_r)),                            # x_r
        const2d((L_t, Ftp)),                          # folded conv+pool matrix (target)
        const2d((1, Ftp)),                            # pooled conv bias (target)
        const2d((L_r, Frp)),                          # folded conv+pool matrix (rna)
        const2d((1, Frp)),                            # pooled conv bias (rna)
        pl.BlockSpec((Ftp, TN), lambda j: (0, j)),    # branch linear weight block (target)
        pl.BlockSpec((1, TN), lambda j: (0, j)),      # branch linear bias block (target)
        pl.BlockSpec((Frp, TN), lambda j: (0, j)),    # branch linear weight block (rna)
        pl.BlockSpec((1, TN), lambda j: (0, j)),      # branch linear bias block (rna)
        pl.BlockSpec((2 * TN, Hh), lambda j: (j, 0)), # restacked W1 rows for block j
        const2d((1, Hh)),                             # b1
        const2d((Hh, Hh)),                            # w2
        const2d((1, Hh)),                             # b2
        const2d((1, Hh)),                             # w3 (transposed row)
        const2d((1, 1)),                              # b3
    ]

    return pl.pallas_call(
        _fused_kernel,
        out_shape=jax.ShapeDtypeStruct((B, 1), jnp.float32),
        grid_spec=pltpu.PrefetchScalarGridSpec(
            num_scalar_prefetch=0,
            grid=(n_blocks,),
            in_specs=in_specs,
            out_specs=pl.BlockSpec((B, 1), lambda j: (0, 0)),
            scratch_shapes=[
                pltpu.VMEM((B, Ftp), jnp.bfloat16),   # target branch features
                pltpu.VMEM((B, Frp), jnp.bfloat16),   # rna branch features
                pltpu.VMEM((B, Hh), jnp.float32),     # head Linear(4096,512) accumulator
            ],
        ),
        compiler_params=pltpu.CompilerParams(
            # The single grid axis is a reduction (head accumulator is resident
            # across it), so it must be "arbitrary".
            dimension_semantics=("arbitrary",),
            vmem_limit_bytes=32 * 1024 * 1024,
        ),
    )(target_input.astype(jnp.bfloat16), rnas_input.astype(jnp.bfloat16),
      M_t, pb_t, M_r, pb_r,
      lw_t, lb_t, lw_r, lb_r,
      w1_stacked, b1, w2, b2, w3t, b3)


# --------------------------------------------------------------------------
# Pure-JAX f32 reference (mirrors the PyTorch forward) for a tolerance check.
# --------------------------------------------------------------------------
def vecnn_reference(xt, xr, params):
    def branch(x, cw, cb, lw, lb):
        B, L = x.shape
        cw = cw.reshape(8, 3)
        taps = jnp.stack([x[:, k:L - 2 + k] for k in range(3)], axis=-1)    # (B, L-2, 3)
        conv = jnp.einsum('blk,ck->bcl', taps, cw) + cb[None, :, None]      # (B, 8, L-2)
        P = (L - 2) // 2
        pooled = 0.5 * (conv[:, :, 0:2 * P:2] + conv[:, :, 1:2 * P:2])      # (B, 8, P)
        feat = jax.nn.relu(pooled.reshape(B, 8 * P))
        return jax.nn.relu(feat @ lw + lb)

    t = branch(xt, params["cw_t"], params["cb_t"], params["lw_t"], params["lb_t"])
    r = branch(xr, params["cw_r"], params["cb_r"], params["lw_r"], params["lb_r"])
    comb = jnp.concatenate([t, r], axis=1)
    h1 = jax.nn.relu(comb @ params["w1"] + params["b1"])
    h2 = jax.nn.relu(h1 @ params["w2"] + params["b2"])
    z = h2 @ params["w3"] + params["b3"]
    return jax.nn.sigmoid(z)


if __name__ == "__main__":
    B = 2
    target_embed_len, rna_embed_len, graphsage = 49, 64, 1
    L_t = target_embed_len + 100 * graphsage          # 149
    L_r = rna_embed_len + 100 * graphsage             # 164
    target_conv_len = 8 * ((L_t - 2) // 2)            # 584 (module table: gs=1, 49)
    rna_conv_len = 8 * ((L_r - 2) // 2)               # 648 (module table: gs=1, 64)

    key = jax.random.PRNGKey(0)
    keys = jax.random.split(key, 16)

    def init(k, shape, scale=0.05):
        return (scale * jax.random.normal(k, shape)).astype(jnp.float32)

    params = dict(
        cw_t=init(keys[0], (8, 3)),  cb_t=init(keys[1], (8,)),
        cw_r=init(keys[2], (8, 3)),  cb_r=init(keys[3], (8,)),
        lw_t=init(keys[4], (target_conv_len, 2048)), lb_t=init(keys[5], (2048,)),
        lw_r=init(keys[6], (rna_conv_len, 2048)),    lb_r=init(keys[7], (2048,)),
        w1=init(keys[8], (4096, 512)),  b1=init(keys[9], (512,)),
        w2=init(keys[10], (512, 512)),  b2=init(keys[11], (512,)),
        w3=init(keys[12], (512, 1)),    b3=init(keys[13], (1,)),
    )

    target_input = jax.random.normal(keys[14], (B, L_t), jnp.float32)
    rnas_input = jax.random.normal(keys[15], (B, L_r), jnp.float32)

    out = vecnn_forward(target_input, rnas_input, params)
    out = jax.block_until_ready(out)

    assert out.shape == (B, 1), out.shape
    assert bool(jnp.all(jnp.isfinite(out)))
    assert bool(jnp.all((out >= 0.0) & (out <= 1.0)))   # sigmoid range

    ref = vecnn_reference(target_input, rnas_input, params)
    assert bool(jnp.allclose(out, ref, atol=5e-2)), (out, ref)  # bf16-stream tolerance

    print("KERNEL_OK")
</pallas_src>

<mosaic_0001>
module attributes {stable_mosaic.version = 11 : i64} {
  func.func @_fused_kernel(%arg0: i32, %arg1: memref<2x149xbf16, #tpu.memory_space<vmem>>, %arg2: memref<2x164xbf16, #tpu.memory_space<vmem>>, %arg3: memref<149x640xbf16, #tpu.memory_space<vmem>>, %arg4: memref<1x640xf32, #tpu.memory_space<vmem>>, %arg5: memref<164x768xbf16, #tpu.memory_space<vmem>>, %arg6: memref<1x768xf32, #tpu.memory_space<vmem>>, %arg7: memref<640x1024xbf16, #tpu.memory_space<vmem>>, %arg8: memref<1x1024xf32, #tpu.memory_space<vmem>>, %arg9: memref<768x1024xbf16, #tpu.memory_space<vmem>>, %arg10: memref<1x1024xf32, #tpu.memory_space<vmem>>, %arg11: memref<2048x512xbf16, #tpu.memory_space<vmem>>, %arg12: memref<1x512xf32, #tpu.memory_space<vmem>>, %arg13: memref<512x512xbf16, #tpu.memory_space<vmem>>, %arg14: memref<1x512xf32, #tpu.memory_space<vmem>>, %arg15: memref<1x512xf32, #tpu.memory_space<vmem>>, %arg16: memref<1x1xf32, #tpu.memory_space<vmem>>, %arg17: memref<2x1xf32, #tpu.memory_space<vmem>>, %arg18: memref<2x640xbf16, #tpu.memory_space<vmem>>, %arg19: memref<2x768xbf16, #tpu.memory_space<vmem>>, %arg20: memref<2x512xf32, #tpu.memory_space<vmem>>) attributes {dimension_semantics = [#tpu.dimension_semantics<arbitrary>], iteration_bounds = array<i64: 2>, scalar_prefetch = 0 : i64, scratch_operands = 3 : i64, tpu.core_type = #tpu.core_type<tc>, window_params = [{pipeline_mode = #tpu.pipeline_mode<synchronous>, transform_indices = @transform_0, window_bounds = array<i64: 2, 149>}, {pipeline_mode = #tpu.pipeline_mode<synchronous>, transform_indices = @transform_1, window_bounds = array<i64: 2, 164>}, {pipeline_mode = #tpu.pipeline_mode<synchronous>, transform_indices = @transform_2, window_bounds = array<i64: 149, 640>}, {pipeline_mode = #tpu.pipeline_mode<synchronous>, transform_indices = @transform_3, window_bounds = array<i64: 1, 640>}, {pipeline_mode = #tpu.pipeline_mode<synchronous>, transform_indices = @transform_4, window_bounds = array<i64: 164, 768>}, {pipeline_mode = #tpu.pipeline_mode<synchronous>, transform_indices = @transform_5, window_bounds = array<i64: 1, 768>}, {transform_indices = @transform_6, window_bounds = array<i64: 640, 1024>}, {transform_indices = @transform_7, window_bounds = array<i64: 1, 1024>}, {transform_indices = @transform_8, window_bounds = array<i64: 768, 1024>}, {transform_indices = @transform_9, window_bounds = array<i64: 1, 1024>}, {transform_indices = @transform_10, window_bounds = array<i64: 2048, 512>}, {pipeline_mode = #tpu.pipeline_mode<synchronous>, transform_indices = @transform_11, window_bounds = array<i64: 1, 512>}, {pipeline_mode = #tpu.pipeline_mode<synchronous>, transform_indices = @transform_12, window_bounds = array<i64: 512, 512>}, {pipeline_mode = #tpu.pipeline_mode<synchronous>, transform_indices = @transform_13, window_bounds = array<i64: 1, 512>}, {pipeline_mode = #tpu.pipeline_mode<synchronous>, transform_indices = @transform_14, window_bounds = array<i64: 1, 512>}, {pipeline_mode = #tpu.pipeline_mode<synchronous>, transform_indices = @transform_15, window_bounds = array<i64: 1, 1>}, {pipeline_mode = #tpu.pipeline_mode<synchronous>, transform_indices = @transform_16, window_bounds = array<i64: 2, 1>}]} {
    %c0_i32 = arith.constant 0 : i32
    %0 = arith.cmpi eq, %arg0, %c0_i32 : i32
    %1 = arith.extui %0 : i1 to i32
    %c0_i32_0 = arith.constant 0 : i32
    %2 = arith.cmpi ne, %1, %c0_i32_0 : i32
    scf.if %2 {
      %c0_23 = arith.constant 0 : index
      %c0_24 = arith.constant 0 : index
      %29 = vector.load %arg1[%c0_23, %c0_24] : memref<2x149xbf16, #tpu.memory_space<vmem>>, vector<2x149xbf16>
      %c0_25 = arith.constant 0 : index
      %c0_26 = arith.constant 0 : index
      %30 = vector.load %arg3[%c0_25, %c0_26] : memref<149x640xbf16, #tpu.memory_space<vmem>>, vector<149x640xbf16>
      %cst_27 = arith.constant dense<0.000000e+00> : vector<2x640xf32>
      %31 = tpu.matmul %29, %30, %cst_27 {dimension_numbers = #tpu.dot_dimension_numbers<[1], [0], [0], [1], [0, 0, 1, 1], [], []>} : vector<2x149xbf16>, vector<149x640xbf16>, vector<2x640xf32> -> vector<2x640xf32>
      %c0_28 = arith.constant 0 : index
      %c0_29 = arith.constant 0 : index
      %32 = vector.load %arg4[%c0_28, %c0_29] : memref<1x640xf32, #tpu.memory_space<vmem>>, vector<1x640xf32>
      %33 = vector.broadcast %32 : vector<1x640xf32> to vector<2x640xf32>
      %34 = arith.addf %31, %33 : vector<2x640xf32>
      %c0_30 = arith.constant 0 : index
      %c0_31 = arith.constant 0 : index
      %35 = vector.load %arg2[%c0_30, %c0_31] : memref<2x164xbf16, #tpu.memory_space<vmem>>, vector<2x164xbf16>
      %c0_32 = arith.constant 0 : index
      %c0_33 = arith.constant 0 : index
      %36 = vector.load %arg5[%c0_32, %c0_33] : memref<164x768xbf16, #tpu.memory_space<vmem>>, vector<164x768xbf16>
      %cst_34 = arith.constant dense<0.000000e+00> : vector<2x768xf32>
      %37 = tpu.matmul %35, %36, %cst_34 {dimension_numbers = #tpu.dot_dimension_numbers<[1], [0], [0], [1], [0, 0, 1, 1], [], []>} : vector<2x164xbf16>, vector<164x768xbf16>, vector<2x768xf32> -> vector<2x768xf32>
      %c0_35 = arith.constant 0 : index
      %c0_36 = arith.constant 0 : index
      %38 = vector.load %arg6[%c0_35, %c0_36] : memref<1x768xf32, #tpu.memory_space<vmem>>, vector<1x768xf32>
      %39 = vector.broadcast %38 : vector<1x768xf32> to vector<2x768xf32>
      %40 = arith.addf %37, %39 : vector<2x768xf32>
      %cst_37 = arith.constant 0.000000e+00 : f32
      %41 = vector.broadcast %cst_37 : f32 to vector<2x640xf32>
      %42 = arith.maximumf %34, %41 : vector<2x640xf32>
      %43 = arith.truncf %42 : vector<2x640xf32> to vector<2x640xbf16>
      %c0_38 = arith.constant 0 : index
      %c0_39 = arith.constant 0 : index
      %44 = vector.load %arg18[%c0_38, %c0_39] : memref<2x640xbf16, #tpu.memory_space<vmem>>, vector<2x640xbf16>
      tpu.vector_store %arg18[%c0_38, %c0_39], %43 {strides = array<i32>} : memref<2x640xbf16, #tpu.memory_space<vmem>>, vector<2x640xbf16>,
      %cst_40 = arith.constant 0.000000e+00 : f32
      %45 = vector.broadcast %cst_40 : f32 to vector<2x768xf32>
      %46 = arith.maximumf %40, %45 : vector<2x768xf32>
      %47 = arith.truncf %46 : vector<2x768xf32> to vector<2x768xbf16>
      %c0_41 = arith.constant 0 : index
      %c0_42 = arith.constant 0 : index
      %48 = vector.load %arg19[%c0_41, %c0_42] : memref<2x768xbf16, #tpu.memory_space<vmem>>, vector<2x768xbf16>
      tpu.vector_store %arg19[%c0_41, %c0_42], %47 {strides = array<i32>} : memref<2x768xbf16, #tpu.memory_space<vmem>>, vector<2x768xbf16>,
      %cst_43 = arith.constant 0.000000e+00 : f32
      %49 = vector.broadcast %cst_43 : f32 to vector<2x512xf32>
      %c0_44 = arith.constant 0 : index
      %c0_45 = arith.constant 0 : index
      %50 = vector.load %arg20[%c0_44, %c0_45] : memref<2x512xf32, #tpu.memory_space<vmem>>, vector<2x512xf32>
      tpu.vector_store %arg20[%c0_44, %c0_45], %49 {strides = array<i32>} : memref<2x512xf32, #tpu.memory_space<vmem>>, vector<2x512xf32>,
    } else {
    }
    %c0 = arith.constant 0 : index
    %c0_1 = arith.constant 0 : index
    %3 = vector.load %arg18[%c0, %c0_1] : memref<2x640xbf16, #tpu.memory_space<vmem>>, vector<2x640xbf16>
    %c0_2 = arith.constant 0 : index
    %c0_3 = arith.constant 0 : index
    %4 = vector.load %arg7[%c0_2, %c0_3] : memref<640x1024xbf16, #tpu.memory_space<vmem>>, vector<640x1024xbf16>
    %cst = arith.constant dense<0.000000e+00> : vector<2x1024xf32>
    %5 = tpu.matmul %3, %4, %cst {dimension_numbers = #tpu.dot_dimension_numbers<[1], [0], [0], [1], [0, 0, 1, 1], [], []>} : vector<2x640xbf16>, vector<640x1024xbf16>, vector<2x1024xf32> -> vector<2x1024xf32>
    %c0_4 = arith.constant 0 : index
    %c0_5 = arith.constant 0 : index
    %6 = vector.load %arg8[%c0_4, %c0_5] : memref<1x1024xf32, #tpu.memory_space<vmem>>, vector<1x1024xf32>
    %7 = vector.broadcast %6 : vector<1x1024xf32> to vector<2x1024xf32>
    %8 = arith.addf %5, %7 : vector<2x1024xf32>
    %cst_6 = arith.constant 0.000000e+00 : f32
    %9 = vector.broadcast %cst_6 : f32 to vector<2x1024xf32>
    %10 = arith.maximumf %8, %9 : vector<2x1024xf32>
    %c0_7 = arith.constant 0 : index
    %c0_8 = arith.constant 0 : index
    %11 = vector.load %arg19[%c0_7, %c0_8] : memref<2x768xbf16, #tpu.memory_space<vmem>>, vector<2x768xbf16>
    %c0_9 = arith.constant 0 : index
    %c0_10 = arith.constant 0 : index
    %12 = vector.load %arg9[%c0_9, %c0_10] : memref<768x1024xbf16, #tpu.memory_space<vmem>>, vector<768x1024xbf16>
    %cst_11 = arith.constant dense<0.000000e+00> : vector<2x1024xf32>
    %13 = tpu.matmul %11, %12, %cst_11 {dimension_numbers = #tpu.dot_dimension_numbers<[1], [0], [0], [1], [0, 0, 1, 1], [], []>} : vector<2x768xbf16>, vector<768x1024xbf16>, vector<2x1024xf32> -> vector<2x1024xf32>
    %c0_12 = arith.constant 0 : index
    %c0_13 = arith.constant 0 : index
    %14 = vector.load %arg10[%c0_12, %c0_13] : memref<1x1024xf32, #tpu.memory_space<vmem>>, vector<1x1024xf32>
    %15 = vector.broadcast %14 : vector<1x1024xf32> to vector<2x1024xf32>
    %16 = arith.addf %13, %15 : vector<2x1024xf32>
    %cst_14 = arith.constant 0.000000e+00 : f32
    %17 = vector.broadcast %cst_14 : f32 to vector<2x1024xf32>
    %18 = arith.maximumf %16, %17 : vector<2x1024xf32>
    %19 = tpu.concatenate %10, %18 in 1 : vector<2x1024xf32>, vector<2x1024xf32> -> vector<2x2048xf32>
    %20 = arith.truncf %19 : vector<2x2048xf32> to vector<2x2048xbf16>
    %c0_15 = arith.constant 0 : index
    %c0_16 = arith.constant 0 : index
    %21 = vector.load %arg20[%c0_15, %c0_16] : memref<2x512xf32, #tpu.memory_space<vmem>>, vector<2x512xf32>
    %c0_17 = arith.constant 0 : index
    %c0_18 = arith.constant 0 : index
    %22 = vector.load %arg11[%c0_17, %c0_18] : memref<2048x512xbf16, #tpu.memory_space<vmem>>, vector<2048x512xbf16>
    %cst_19 = arith.constant dense<0.000000e+00> : vector<2x512xf32>
    %23 = tpu.matmul %20, %22, %cst_19 {dimension_numbers = #tpu.dot_dimension_numbers<[1], [0], [0], [1], [0, 0, 1, 1], [], []>} : vector<2x2048xbf16>, vector<2048x512xbf16>, vector<2x512xf32> -> vector<2x512xf32>
    %24 = arith.addf %21, %23 : vector<2x512xf32>
    %c0_20 = arith.constant 0 : index
    %c0_21 = arith.constant 0 : index
    %25 = vector.load %arg20[%c0_20, %c0_21] : memref<2x512xf32, #tpu.memory_space<vmem>>, vector<2x512xf32>
    tpu.vector_store %arg20[%c0_20, %c0_21], %24 {strides = array<i32>} : memref<2x512xf32, #tpu.memory_space<vmem>>, vector<2x512xf32>,
    %c1_i32 = arith.constant 1 : i32
    %26 = arith.cmpi eq, %arg0, %c1_i32 : i32
    %27 = arith.extui %26 : i1 to i32
    %c0_i32_22 = arith.constant 0 : i32
    %28 = arith.cmpi ne, %27, %c0_i32_22 : i32
    scf.if %28 {
      %c0_23 = arith.constant 0 : index
      %c0_24 = arith.constant 0 : index
      %29 = vector.load %arg20[%c0_23, %c0_24] : memref<2x512xf32, #tpu.memory_space<vmem>>, vector<2x512xf32>
      %c0_25 = arith.constant 0 : index
      %c0_26 = arith.constant 0 : index
      %30 = vector.load %arg12[%c0_25, %c0_26] : memref<1x512xf32, #tpu.memory_space<vmem>>, vector<1x512xf32>
      %31 = vector.broadcast %30 : vector<1x512xf32> to vector<2x512xf32>
      %32 = arith.addf %29, %31 : vector<2x512xf32>
      %cst_27 = arith.constant 0.000000e+00 : f32
      %33 = vector.broadcast %cst_27 : f32 to vector<2x512xf32>
      %34 = arith.maximumf %32, %33 : vector<2x512xf32>
      %35 = arith.truncf %34 : vector<2x512xf32> to vector<2x512xbf16>
      %c0_28 = arith.constant 0 : index
      %c0_29 = arith.constant 0 : index
      %36 = vector.load %arg13[%c0_28, %c0_29] : memref<512x512xbf16, #tpu.memory_space<vmem>>, vector<512x512xbf16>
      %cst_30 = arith.constant dense<0.000000e+00> : vector<2x512xf32>
      %37 = tpu.matmul %35, %36, %cst_30 {dimension_numbers = #tpu.dot_dimension_numbers<[1], [0], [0], [1], [0, 0, 1, 1], [], []>} : vector<2x512xbf16>, vector<512x512xbf16>, vector<2x512xf32> -> vector<2x512xf32>
      %c0_31 = arith.constant 0 : index
      %c0_32 = arith.constant 0 : index
      %38 = vector.load %arg14[%c0_31, %c0_32] : memref<1x512xf32, #tpu.memory_space<vmem>>, vector<1x512xf32>
      %39 = vector.broadcast %38 : vector<1x512xf32> to vector<2x512xf32>
      %40 = arith.addf %37, %39 : vector<2x512xf32>
      %cst_33 = arith.constant 0.000000e+00 : f32
      %41 = vector.broadcast %cst_33 : f32 to vector<2x512xf32>
      %42 = arith.maximumf %40, %41 : vector<2x512xf32>
      %c0_34 = arith.constant 0 : index
      %c0_35 = arith.constant 0 : index
      %43 = vector.load %arg15[%c0_34, %c0_35] : memref<1x512xf32, #tpu.memory_space<vmem>>, vector<1x512xf32>
      %44 = vector.broadcast %43 : vector<1x512xf32> to vector<2x512xf32>
      %45 = arith.mulf %42, %44 : vector<2x512xf32>
      %cst_36 = arith.constant dense<0.000000e+00> : vector<2xf32>
      %46 = vector.multi_reduction <add>, %45, %cst_36 [1] : vector<2x512xf32> to vector<2xf32>
      %47 = vector.shape_cast %46 : vector<2xf32> to vector<2x1xf32>
      %c0_37 = arith.constant 0 : index
      %c0_38 = arith.constant 0 : index
      %48 = vector.load %arg16[%c0_37, %c0_38] : memref<1x1xf32, #tpu.memory_space<vmem>>, vector<1x1xf32>
      %49 = vector.broadcast %48 : vector<1x1xf32> to vector<2x1xf32>
      %50 = arith.addf %47, %49 : vector<2x1xf32>
      %cst_39 = arith.constant 0.000000e+00 : f32
      %51 = vector.broadcast %cst_39 : f32 to vector<2x1xf32>
      %52 = arith.subf %51, %50 : vector<2x1xf32>
      %53 = math.exp %52 : vector<2x1xf32>
      %cst_40 = arith.constant 1.000000e+00 : f32
      %54 = vector.broadcast %cst_40 : f32 to vector<2x1xf32>
      %55 = arith.addf %54, %53 : vector<2x1xf32>
      %cst_41 = arith.constant 1.000000e+00 : f32
      %56 = vector.broadcast %cst_41 : f32 to vector<2x1xf32>
      %57 = arith.divf %56, %55 : vector<2x1xf32>
      %c0_42 = arith.constant 0 : index
      %c0_43 = arith.constant 0 : index
      %58 = vector.load %arg17[%c0_42, %c0_43] : memref<2x1xf32, #tpu.memory_space<vmem>>, vector<2x1xf32>
      tpu.vector_store %arg17[%c0_42, %c0_43], %57 {strides = array<i32>} : memref<2x1xf32, #tpu.memory_space<vmem>>, vector<2x1xf32>,
    } else {
    }
    return
  }
  func.func @transform_0(%arg0: i32) -> (i32, i32) {
    %c0_i32 = arith.constant 0 : i32
    %c0_i32_0 = arith.constant 0 : i32
    %c0_i32_1 = arith.constant 0 : i32
    return %c0_i32, %c0_i32_0 : i32, i32
  }
  func.func @transform_1(%arg0: i32) -> (i32, i32) {
    %c0_i32 = arith.constant 0 : i32
    %c0_i32_0 = arith.constant 0 : i32
    %c0_i32_1 = arith.constant 0 : i32
    return %c0_i32, %c0_i32_0 : i32, i32
  }
  func.func @transform_2(%arg0: i32) -> (i32, i32) {
    %c0_i32 = arith.constant 0 : i32
    %c0_i32_0 = arith.constant 0 : i32
    %c0_i32_1 = arith.constant 0 : i32
    return %c0_i32, %c0_i32_0 : i32, i32
  }
  func.func @transform_3(%arg0: i32) -> (i32, i32) {
    %c0_i32 = arith.constant 0 : i32
    %c0_i32_0 = arith.constant 0 : i32
    %c0_i32_1 = arith.constant 0 : i32
    return %c0_i32, %c0_i32_0 : i32, i32
  }
  func.func @transform_4(%arg0: i32) -> (i32, i32) {
    %c0_i32 = arith.constant 0 : i32
    %c0_i32_0 = arith.constant 0 : i32
    %c0_i32_1 = arith.constant 0 : i32
    return %c0_i32, %c0_i32_0 : i32, i32
  }
  func.func @transform_5(%arg0: i32) -> (i32, i32) {
    %c0_i32 = arith.constant 0 : i32
    %c0_i32_0 = arith.constant 0 : i32
    %c0_i32_1 = arith.constant 0 : i32
    return %c0_i32, %c0_i32_0 : i32, i32
  }
  func.func @transform_6(%arg0: i32) -> (i32, i32) {
    %c0_i32 = arith.constant 0 : i32
    %c0_i32_0 = arith.constant 0 : i32
    return %c0_i32, %arg0 : i32, i32
  }
  func.func @transform_7(%arg0: i32) -> (i32, i32) {
    %c0_i32 = arith.constant 0 : i32
    %c0_i32_0 = arith.constant 0 : i32
    return %c0_i32, %arg0 : i32, i32
  }
  func.func @transform_8(%arg0: i32) -> (i32, i32) {
    %c0_i32 = arith.constant 0 : i32
    %c0_i32_0 = arith.constant 0 : i32
    return %c0_i32, %arg0 : i32, i32
  }
  func.func @transform_9(%arg0: i32) -> (i32, i32) {
    %c0_i32 = arith.constant 0 : i32
    %c0_i32_0 = arith.constant 0 : i32
    return %c0_i32, %arg0 : i32, i32
  }
  func.func @transform_10(%arg0: i32) -> (i32, i32) {
    %c0_i32 = arith.constant 0 : i32
    %c0_i32_0 = arith.constant 0 : i32
    return %arg0, %c0_i32 : i32, i32
  }
  func.func @transform_11(%arg0: i32) -> (i32, i32) {
    %c0_i32 = arith.constant 0 : i32
    %c0_i32_0 = arith.constant 0 : i32
    %c0_i32_1 = arith.constant 0 : i32
    return %c0_i32, %c0_i32_0 : i32, i32
  }
  func.func @transform_12(%arg0: i32) -> (i32, i32) {
    %c0_i32 = arith.constant 0 : i32
    %c0_i32_0 = arith.constant 0 : i32
    %c0_i32_1 = arith.constant 0 : i32
    return %c0_i32, %c0_i32_0 : i32, i32
  }
  func.func @transform_13(%arg0: i32) -> (i32, i32) {
    %c0_i32 = arith.constant 0 : i32
    %c0_i32_0 = arith.constant 0 : i32
    %c0_i32_1 = arith.constant 0 : i32
    return %c0_i32, %c0_i32_0 : i32, i32
  }
  func.func @transform_14(%arg0: i32) -> (i32, i32) {
    %c0_i32 = arith.constant 0 : i32
    %c0_i32_0 = arith.constant 0 : i32
    %c0_i32_1 = arith.constant 0 : i32
    return %c0_i32, %c0_i32_0 : i32, i32
  }
  func.func @transform_15(%arg0: i32) -> (i32, i32) {
    %c0_i32 = arith.constant 0 : i32
    %c0_i32_0 = arith.constant 0 : i32
    %c0_i32_1 = arith.constant 0 : i32
    return %c0_i32, %c0_i32_0 : i32, i32
  }
  func.func @transform_16(%arg0: i32) -> (i32, i32) {
    %c0_i32 = arith.constant 0 : i32
    %c0_i32_0 = arith.constant 0 : i32
    %c0_i32_1 = arith.constant 0 : i32
    return %c0_i32, %c0_i32_0 : i32, i32
  }
}

</mosaic_0001>

<llo_original>
// kernel: tpu_custom_call.1
$region0: #{tpu_custom_call.1}
  #allocation0 [shape = 'u32[]', space=smem, size = 0x4, offset = 0x4, fixed_abs, tag = 'smem constant byte address 0x4 - core index']
  #allocation1 [shape = 'u32[144,128]{1,0:T(1,128)}', space=vmem, size = 0x12000, scoped, tag = 'internal scratch']
  #allocation2 [shape = 'bf16[2,640]{1,0:T(2,128)(2,1)}', space=vmem, size = 0xa00, scoped, tag = 'scratch operand']
  #allocation3 [shape = 'bf16[2,768]{1,0:T(2,128)(2,1)}', space=vmem, size = 0xc00, scoped, tag = 'scratch operand']
  #allocation4 [shape = 'f32[2,512]{1,0:T(2,128)}', space=vmem, size = 0x1000, scoped, tag = 'scratch operand']
  #allocation5 [shape = 'f32[1,1]{1,0:T(1,128)S(1)}', space=vmem, size = 0x200, scoped, tag = 'scoped memory for tpu_custom_call.1']
  %s0 = inlined_call_operand.hbm [shape: bf16[2,149], index: 0, kind: input, shape index: {}]
  %s1 = inlined_call_operand.hbm [shape: bf16[2,164], index: 1, kind: input, shape index: {}]
  %s2 = inlined_call_operand.hbm [shape: bf16[149,640], index: 2, kind: input, shape index: {}]
  %s3 = inlined_call_operand.hbm [shape: f32[1,640], index: 3, kind: input, shape index: {}]
  %s4 = inlined_call_operand.hbm [shape: bf16[164,768], index: 4, kind: input, shape index: {}]
  %s5 = inlined_call_operand.hbm [shape: f32[1,768], index: 5, kind: input, shape index: {}]
  %s6 = inlined_call_operand.hbm [shape: bf16[640,2048], index: 6, kind: input, shape index: {}]
  %s7 = inlined_call_operand.hbm [shape: f32[1,2048], index: 7, kind: input, shape index: {}]
  %s8 = inlined_call_operand.hbm [shape: bf16[768,2048], index: 8, kind: input, shape index: {}]
  %s9 = inlined_call_operand.hbm [shape: f32[1,2048], index: 9, kind: input, shape index: {}]
  %s10 = inlined_call_operand.hbm [shape: bf16[4096,512], index: 10, kind: input, shape index: {}]
  %s11 = inlined_call_operand.hbm [shape: f32[1,512], index: 11, kind: input, shape index: {}]
  %s12 = inlined_call_operand.hbm [shape: bf16[512,512], index: 12, kind: input, shape index: {}]
  %s13 = inlined_call_operand.hbm [shape: f32[1,512], index: 13, kind: input, shape index: {}]
  %s14 = inlined_call_operand.hbm [shape: f32[1,512], index: 14, kind: input, shape index: {}]
  %s15 = inlined_call_operand.<no memory space> [shape: f32[1,1], index: 15, kind: input, shape index: {}]
  %s16 = inlined_call_operand.vmem [shape: f32[2,1], index: 16, kind: output, shape index: {}]
  %s17 = sld [smem:[#allocation0]]
  $region165: #{tpu_custom_call.1} parent=0
    _
  %s19 = ssub.s32 1, %s17
  %s20 = scalar_select 0, %s19, %s17
  %v21 = vstv %s15
  %22 = vst [vmem:[#allocation5] sm:$0x1] %v21
  $region1: #{tpu_custom_call.1} parent=0
    #allocation6 [shape = 'u8[1024]{0}', space=vmem, size = 0x400, scoped, tag = 'input window, operand 0, single buffered']
    #allocation7 [shape = 's32[2]{0}', space=sflag, size = 0x8, scoped, tag = 'scoped memory for tpu_custom_call.1']
    #allocation8 [shape = 'u8[1024]{0}', space=vmem, size = 0x400, scoped, tag = 'input window, operand 1, single buffered']
    #allocation9 [shape = 's32[1]{0}', space=sflag, size = 0x4, scoped, tag = 'scoped memory for tpu_custom_call.1']
    #allocation10 [shape = 'u8[194560]{0}', space=vmem, size = 0x2f800, scoped, tag = 'input window, operand 2, single buffered']
    #allocation11 [shape = 'u8[2560]{0}', space=vmem, size = 0xc00, scoped, tag = 'input window, operand 3, single buffered']
    #allocation12 [shape = 's32[1]{0}', space=sflag, size = 0x4, scoped, tag = 'scoped memory for tpu_custom_call.1']
    #allocation13 [shape = 'u8[258048]{0}', space=vmem, size = 0x3f000, scoped, tag = 'input window, operand 4, single buffered']
    #allocation14 [shape = 'u8[3072]{0}', space=vmem, size = 0xc00, scoped, tag = 'input window, operand 5, single buffered']
    #allocation15 [shape = 's32[1]{0}', space=sflag, size = 0x4, scoped, tag = 'scoped memory for tpu_custom_call.1']
    #allocation16 [shape = 'u8[2621440]{0}', space=vmem, size = 0x280000, scoped, tag = 'input window, operand 6']
    #allocation17 [shape = 'u8[8192]{0}', space=vmem, size = 0x2000, scoped, tag = 'input window, operand 7']
    #allocation18 [shape = 'u8[3145728]{0}', space=vmem, size = 0x300000, scoped, tag = 'input window, operand 8']
    #allocation19 [shape = 'u8[8192]{0}', space=vmem, size = 0x2000, scoped, tag = 'input window, operand 9']
    #allocation20 [shape = 'u8[4194304]{0}', space=vmem, size = 0x400000, scoped, tag = 'input window, operand 10']
    #allocation21 [shape = 'u8[2048]{0}', space=vmem, size = 0x800, scoped, tag = 'input window, operand 11, single buffered']
    #allocation22 [shape = 'u8[524288]{0}', space=vmem, size = 0x80000, scoped, tag = 'input window, operand 12, single buffered']
    #allocation23 [shape = 'u8[2048]{0}', space=vmem, size = 0x800, scoped, tag = 'input window, operand 13, single buffered']
    #allocation24 [shape = 'u8[2048]{0}', space=vmem, size = 0x800, scoped, tag = 'input window, operand 14, single buffered']
    #allocation25 [shape = 's32[1]{0}', space=sflag, size = 0x4, scoped, tag = 'scoped memory for tpu_custom_call.1']
    %23 = vsyncpa [#allocation7], 0
    %24 = vsyncpa [#allocation9], 0
    %25 = vsyncpa [#allocation12], 0
    %26 = vsyncpa [#allocation15], 0
    %27 = vsyncpa [#allocation25], 0
    loop: start=0, step=1, limit=4
    $region2: #{tpu_custom_call.1} parent=1 // loop_pre_header
      _
    $region3: #{tpu_custom_call.1} parent=1 // loop_header
      %s29 = sphi 0, %s33
      %p30 = scmp.ge.s32.totalorder %s29, 4
      %s37 = sphi 0, %s37
      %s39 = sphi 0, %s37
      %s40 = sphi 0, %s39
      %s54 = sphi 0, %s40
      %s58 = sphi 0, %s58
      %s60 = sphi 0, %s58
      %s61 = sphi 0, %s60
      %s75 = sphi 0, %s61
      %s79 = sphi 0, %s79
      %s81 = sphi 0, %s79
      %s82 = sphi 0, %s81
      %s96 = sphi 0, %s82
      %s100 = sphi 0, %s100
      %s102 = sphi 0, %s100
      %s103 = sphi 0, %s102
      %s117 = sphi 0, %s103
      %s121 = sphi 0, %s121
      %s123 = sphi 0, %s121
      %s124 = sphi 0, %s123
      %s138 = sphi 0, %s124
      %s142 = sphi 0, %s142
      %s144 = sphi 0, %s142
      %s145 = sphi 0, %s144
      %s159 = sphi 0, %s145
      %s165 = sphi 0, %s167
      %s168 = sphi 0, %s165
      %s169 = sphi 0, %s168
      %s185 = sphi 0, %s169
      %s191 = sphi 0, %s193
      %s194 = sphi 0, %s191
      %s195 = sphi 0, %s194
      %s211 = sphi 0, %s195
      %s217 = sphi 0, %s219
      %s220 = sphi 0, %s217
      %s221 = sphi 0, %s220
      %s237 = sphi 0, %s221
      %s243 = sphi 0, %s245
      %s246 = sphi 0, %s243
      %s247 = sphi 0, %s246
      %s263 = sphi 0, %s247
      %s269 = sphi 0, %s271
      %s272 = sphi 0, %s269
      %s273 = sphi 0, %s272
      %s289 = sphi 0, %s273
      %s293 = sphi 0, %s293
      %s295 = sphi 0, %s293
      %s296 = sphi 0, %s295
      %s310 = sphi 0, %s296
      %s314 = sphi 0, %s314
      %s316 = sphi 0, %s314
      %s317 = sphi 0, %s316
      %s331 = sphi 0, %s317
      %s335 = sphi 0, %s335
      %s337 = sphi 0, %s335
      %s338 = sphi 0, %s337
      %s352 = sphi 0, %s338
      %s356 = sphi 0, %s356
      %s358 = sphi 0, %s356
      %s359 = sphi 0, %s358
      %s373 = sphi 0, %s359
      %s377 = sphi 0, %s377
      %s379 = sphi 0, %s377
      %s380 = sphi 0, %s379
      %s394 = sphi 0, %s380
      %s398 = sphi 0, %s398
      %s400 = sphi 0, %s398
      %s401 = sphi 0, %s400
      %s415 = sphi 0, %s401
    $region4: #{tpu_custom_call.1} parent=1 // loop_header_branch
      %32 = sbr.rel (%p30) target = $region8
    $region5: #{tpu_custom_call.1} parent=1 // loop_body
      %s34 = ssub.s32 %s29, 1
      %s35 = ssub.s32 %s29, 2
      %s36 = sadd.s32 %s29, 1
      %s38 = sadd.s32 %s37, 1
      %p41 = scmp.eq.s32.totalorder %s29, 1
      %p42 = scmp.ne.s32.totalorder %s37, %s39
      %p43 = scmp.eq.s32.totalorder %s29, 0
      %p44 = por %p42, %p43
      %p45 = scmp.ne.s32.totalorder %s37, %s39
      %p46 = scmp.eq.s32.totalorder %s34, 1
      %p47 = por %p45, %p46
      %p48 = scmp.ne.s32.totalorder %s39, %s40
      %p49 = scmp.eq.s32.totalorder %s34, 0
      %p50 = por %p48, %p49
      %p51 = scmp.ne.s32.totalorder %s39, %s40
      %p52 = scmp.eq.s32.totalorder %s35, 1
      %p53 = por %p51, %p52
      %p55 = scmp.ne.s32.totalorder %s40, %s54
      %p56 = scmp.eq.s32.totalorder %s35, 0
      %p57 = por %p55, %p56
      %s59 = sadd.s32 %s58, 1
      %p62 = scmp.eq.s32.totalorder %s29, 1
      %p63 = scmp.ne.s32.totalorder %s58, %s60
      %p64 = scmp.eq.s32.totalorder %s29, 0
      %p65 = por %p63, %p64
      %p66 = scmp.ne.s32.totalorder %s58, %s60
      %p67 = scmp.eq.s32.totalorder %s34, 1
      %p68 = por %p66, %p67
      %p69 = scmp.ne.s32.totalorder %s60, %s61
      %p70 = scmp.eq.s32.totalorder %s34, 0
      %p71 = por %p69, %p70
      %p72 = scmp.ne.s32.totalorder %s60, %s61
      %p73 = scmp.eq.s32.totalorder %s35, 1
      %p74 = por %p72, %p73
      %p76 = scmp.ne.s32.totalorder %s61, %s75
      %p77 = scmp.eq.s32.totalorder %s35, 0
      %p78 = por %p76, %p77
      %s80 = sadd.s32 %s79, 1
      %p83 = scmp.eq.s32.totalorder %s29, 1
      %p84 = scmp.ne.s32.totalorder %s79, %s81
      %p85 = scmp.eq.s32.totalorder %s29, 0
      %p86 = por %p84, %p85
      %p87 = scmp.ne.s32.totalorder %s79, %s81
      %p88 = scmp.eq.s32.totalorder %s34, 1
      %p89 = por %p87, %p88
      %p90 = scmp.ne.s32.totalorder %s81, %s82
      %p91 = scmp.eq.s32.totalorder %s34, 0
      %p92 = por %p90, %p91
      %p93 = scmp.ne.s32.totalorder %s81, %s82
      %p94 = scmp.eq.s32.totalorder %s35, 1
      %p95 = por %p93, %p94
      %p97 = scmp.ne.s32.totalorder %s82, %s96
      %p98 = scmp.eq.s32.totalorder %s35, 0
      %p99 = por %p97, %p98
      %s101 = sadd.s32 %s100, 1
      %p104 = scmp.eq.s32.totalorder %s29, 1
      %p105 = scmp.ne.s32.totalorder %s100, %s102
      %p106 = scmp.eq.s32.totalorder %s29, 0
      %p107 = por %p105, %p106
      %p108 = scmp.ne.s32.totalorder %s100, %s102
      %p109 = scmp.eq.s32.totalorder %s34, 1
      %p110 = por %p108, %p109
      %p111 = scmp.ne.s32.totalorder %s102, %s103
      %p112 = scmp.eq.s32.totalorder %s34, 0
      %p113 = por %p111, %p112
      %p114 = scmp.ne.s32.totalorder %s102, %s103
      %p115 = scmp.eq.s32.totalorder %s35, 1
      %p116 = por %p114, %p115
      %p118 = scmp.ne.s32.totalorder %s103, %s117
      %p119 = scmp.eq.s32.totalorder %s35, 0
      %p120 = por %p118, %p119
      %s122 = sadd.s32 %s121, 1
      %p125 = scmp.eq.s32.totalorder %s29, 1
      %p126 = scmp.ne.s32.totalorder %s121, %s123
      %p127 = scmp.eq.s32.totalorder %s29, 0
      %p128 = por %p126, %p127
      %p129 = scmp.ne.s32.totalorder %s121, %s123
      %p130 = scmp.eq.s32.totalorder %s34, 1
      %p131 = por %p129, %p130
      %p132 = scmp.ne.s32.totalorder %s123, %s124
      %p133 = scmp.eq.s32.totalorder %s34, 0
      %p134 = por %p132, %p133
      %p135 = scmp.ne.s32.totalorder %s123, %s124
      %p136 = scmp.eq.s32.totalorder %s35, 1
      %p137 = por %p135, %p136
      %p139 = scmp.ne.s32.totalorder %s124, %s138
      %p140 = scmp.eq.s32.totalorder %s35, 0
      %p141 = por %p139, %p140
      %s143 = sadd.s32 %s142, 1
      %p146 = scmp.eq.s32.totalorder %s29, 1
      %p147 = scmp.ne.s32.totalorder %s142, %s144
      %p148 = scmp.eq.s32.totalorder %s29, 0
      %p149 = por %p147, %p148
      %p150 = scmp.ne.s32.totalorder %s142, %s144
      %p151 = scmp.eq.s32.totalorder %s34, 1
      %p152 = por %p150, %p151
      %p153 = scmp.ne.s32.totalorder %s144, %s145
      %p154 = scmp.eq.s32.totalorder %s34, 0
      %p155 = por %p153, %p154
      %p156 = scmp.ne.s32.totalorder %s144, %s145
      %p157 = scmp.eq.s32.totalorder %s35, 1
      %p158 = por %p156, %p157
      %p160 = scmp.ne.s32.totalorder %s145, %s159
      %p161 = scmp.eq.s32.totalorder %s35, 0
      %p162 = por %p160, %p161
      %s163 = ssub.s32 %s29, %s36
      %p164 = scmp.eq.s32.totalorder %s163, 0
      %s166 = sadd.s32 %s165, 1
      %s167 = scalar_select %p164, %s165, %s166
      %p170 = pneg %p164
      %p171 = scmp.eq.s32.totalorder %s29, 1
      %p172 = por %p170, %p171
      %p173 = scmp.ne.s32.totalorder %s165, %s168
      %p174 = scmp.eq.s32.totalorder %s29, 0
      %p175 = por %p173, %p174
      %p176 = scmp.ne.s32.totalorder %s165, %s168
      %p177 = scmp.eq.s32.totalorder %s34, 1
      %p178 = por %p176, %p177
      %p179 = scmp.ne.s32.totalorder %s168, %s169
      %p180 = scmp.eq.s32.totalorder %s34, 0
      %p181 = por %p179, %p180
      %p182 = scmp.ne.s32.totalorder %s168, %s169
      %p183 = scmp.eq.s32.totalorder %s35, 1
      %p184 = por %p182, %p183
      %p186 = scmp.ne.s32.totalorder %s169, %s185
      %p187 = scmp.eq.s32.totalorder %s35, 0
      %p188 = por %p186, %p187
      %s189 = ssub.s32 %s29, %s36
      %p190 = scmp.eq.s32.totalorder %s189, 0
      %s192 = sadd.s32 %s191, 1
      %s193 = scalar_select %p190, %s191, %s192
      %p196 = pneg %p190
      %p197 = scmp.eq.s32.totalorder %s29, 1
      %p198 = por %p196, %p197
      %p199 = scmp.ne.s32.totalorder %s191, %s194
      %p200 = scmp.eq.s32.totalorder %s29, 0
      %p201 = por %p199, %p200
      %p202 = scmp.ne.s32.totalorder %s191, %s194
      %p203 = scmp.eq.s32.totalorder %s34, 1
      %p204 = por %p202, %p203
      %p205 = scmp.ne.s32.totalorder %s194, %s195
      %p206 = scmp.eq.s32.totalorder %s34, 0
      %p207 = por %p205, %p206
      %p208 = scmp.ne.s32.totalorder %s194, %s195
      %p209 = scmp.eq.s32.totalorder %s35, 1
      %p210 = por %p208, %p209
      %p212 = scmp.ne.s32.totalorder %s195, %s211
      %p213 = scmp.eq.s32.totalorder %s35, 0
      %p214 = por %p212, %p213
      %s215 = ssub.s32 %s29, %s36
      %p216 = scmp.eq.s32.totalorder %s215, 0
      %s218 = sadd.s32 %s217, 1
      %s219 = scalar_select %p216, %s217, %s218
      %p222 = pneg %p216
      %p223 = scmp.eq.s32.totalorder %s29, 1
      %p224 = por %p222, %p223
      %p225 = scmp.ne.s32.totalorder %s217, %s220
      %p226 = scmp.eq.s32.totalorder %s29, 0
      %p227 = por %p225, %p226
      %p228 = scmp.ne.s32.totalorder %s217, %s220
      %p229 = scmp.eq.s32.totalorder %s34, 1
      %p230 = por %p228, %p229
      %p231 = scmp.ne.s32.totalorder %s220, %s221
      %p232 = scmp.eq.s32.totalorder %s34, 0
      %p233 = por %p231, %p232
      %p234 = scmp.ne.s32.totalorder %s220, %s221
      %p235 = scmp.eq.s32.totalorder %s35, 1
      %p236 = por %p234, %p235
      %p238 = scmp.ne.s32.totalorder %s221, %s237
      %p239 = scmp.eq.s32.totalorder %s35, 0
      %p240 = por %p238, %p239
      %s241 = ssub.s32 %s29, %s36
      %p242 = scmp.eq.s32.totalorder %s241, 0
      %s244 = sadd.s32 %s243, 1
      %s245 = scalar_select %p242, %s243, %s244
      %p248 = pneg %p242
      %p249 = scmp.eq.s32.totalorder %s29, 1
      %p250 = por %p248, %p249
      %p251 = scmp.ne.s32.totalorder %s243, %s246
      %p252 = scmp.eq.s32.totalorder %s29, 0
      %p253 = por %p251, %p252
      %p254 = scmp.ne.s32.totalorder %s243, %s246
      %p255 = scmp.eq.s32.totalorder %s34, 1
      %p256 = por %p254, %p255
      %p257 = scmp.ne.s32.totalorder %s246, %s247
      %p258 = scmp.eq.s32.totalorder %s34, 0
      %p259 = por %p257, %p258
      %p260 = scmp.ne.s32.totalorder %s246, %s247
      %p261 = scmp.eq.s32.totalorder %s35, 1
      %p262 = por %p260, %p261
      %p264 = scmp.ne.s32.totalorder %s247, %s263
      %p265 = scmp.eq.s32.totalorder %s35, 0
      %p266 = por %p264, %p265
      %s267 = ssub.s32 %s29, %s36
      %p268 = scmp.eq.s32.totalorder %s267, 0
      %s270 = sadd.s32 %s269, 1
      %s271 = scalar_select %p268, %s269, %s270
      %p274 = pneg %p268
      %p275 = scmp.eq.s32.totalorder %s29, 1
      %p276 = por %p274, %p275
      %p277 = scmp.ne.s32.totalorder %s269, %s272
      %p278 = scmp.eq.s32.totalorder %s29, 0
      %p279 = por %p277, %p278
      %p280 = scmp.ne.s32.totalorder %s269, %s272
      %p281 = scmp.eq.s32.totalorder %s34, 1
      %p282 = por %p280, %p281
      %p283 = scmp.ne.s32.totalorder %s272, %s273
      %p284 = scmp.eq.s32.totalorder %s34, 0
      %p285 = por %p283, %p284
      %p286 = scmp.ne.s32.totalorder %s272, %s273
      %p287 = scmp.eq.s32.totalorder %s35, 1
      %p288 = por %p286, %p287
      %p290 = scmp.ne.s32.totalorder %s273, %s289
      %p291 = scmp.eq.s32.totalorder %s35, 0
      %p292 = por %p290, %p291
      %s294 = sadd.s32 %s293, 1
      %p297 = scmp.eq.s32.totalorder %s29, 1
      %p298 = scmp.ne.s32.totalorder %s293, %s295
      %p299 = scmp.eq.s32.totalorder %s29, 0
      %p300 = por %p298, %p299
      %p301 = scmp.ne.s32.totalorder %s293, %s295
      %p302 = scmp.eq.s32.totalorder %s34, 1
      %p303 = por %p301, %p302
      %p304 = scmp.ne.s32.totalorder %s295, %s296
      %p305 = scmp.eq.s32.totalorder %s34, 0
      %p306 = por %p304, %p305
      %p307 = scmp.ne.s32.totalorder %s295, %s296
      %p308 = scmp.eq.s32.totalorder %s35, 1
      %p309 = por %p307, %p308
      %p311 = scmp.ne.s32.totalorder %s296, %s310
      %p312 = scmp.eq.s32.totalorder %s35, 0
      %p313 = por %p311, %p312
      %s315 = sadd.s32 %s314, 1
      %p318 = scmp.eq.s32.totalorder %s29, 1
      %p319 = scmp.ne.s32.totalorder %s314, %s316
      %p320 = scmp.eq.s32.totalorder %s29, 0
      %p321 = por %p319, %p320
      %p322 = scmp.ne.s32.totalorder %s314, %s316
      %p323 = scmp.eq.s32.totalorder %s34, 1
      %p324 = por %p322, %p323
      %p325 = scmp.ne.s32.totalorder %s316, %s317
      %p326 = scmp.eq.s32.totalorder %s34, 0
      %p327 = por %p325, %p326
      %p328 = scmp.ne.s32.totalorder %s316, %s317
      %p329 = scmp.eq.s32.totalorder %s35, 1
      %p330 = por %p328, %p329
      %p332 = scmp.ne.s32.totalorder %s317, %s331
      %p333 = scmp.eq.s32.totalorder %s35, 0
      %p334 = por %p332, %p333
      %s336 = sadd.s32 %s335, 1
      %p339 = scmp.eq.s32.totalorder %s29, 1
      %p340 = scmp.ne.s32.totalorder %s335, %s337
      %p341 = scmp.eq.s32.totalorder %s29, 0
      %p342 = por %p340, %p341
      %p343 = scmp.ne.s32.totalorder %s335, %s337
      %p344 = scmp.eq.s32.totalorder %s34, 1
      %p345 = por %p343, %p344
      %p346 = scmp.ne.s32.totalorder %s337, %s338
      %p347 = scmp.eq.s32.totalorder %s34, 0
      %p348 = por %p346, %p347
      %p349 = scmp.ne.s32.totalorder %s337, %s338
      %p350 = scmp.eq.s32.totalorder %s35, 1
      %p351 = por %p349, %p350
      %p353 = scmp.ne.s32.totalorder %s338, %s352
      %p354 = scmp.eq.s32.totalorder %s35, 0
      %p355 = por %p353, %p354
      %s357 = sadd.s32 %s356, 1
      %p360 = scmp.eq.s32.totalorder %s29, 1
      %p361 = scmp.ne.s32.totalorder %s356, %s358
      %p362 = scmp.eq.s32.totalorder %s29, 0
      %p363 = por %p361, %p362
      %p364 = scmp.ne.s32.totalorder %s356, %s358
      %p365 = scmp.eq.s32.totalorder %s34, 1
      %p366 = por %p364, %p365
      %p367 = scmp.ne.s32.totalorder %s358, %s359
      %p368 = scmp.eq.s32.totalorder %s34, 0
      %p369 = por %p367, %p368
      %p370 = scmp.ne.s32.totalorder %s358, %s359
      %p371 = scmp.eq.s32.totalorder %s35, 1
      %p372 = por %p370, %p371
      %p374 = scmp.ne.s32.totalorder %s359, %s373
      %p375 = scmp.eq.s32.totalorder %s35, 0
      %p376 = por %p374, %p375
      %s378 = sadd.s32 %s377, 1
      %p381 = scmp.eq.s32.totalorder %s29, 1
      %p382 = scmp.ne.s32.totalorder %s377, %s379
      %p383 = scmp.eq.s32.totalorder %s29, 0
      %p384 = por %p382, %p383
      %p385 = scmp.ne.s32.totalorder %s377, %s379
      %p386 = scmp.eq.s32.totalorder %s34, 1
      %p387 = por %p385, %p386
      %p388 = scmp.ne.s32.totalorder %s379, %s380
      %p389 = scmp.eq.s32.totalorder %s34, 0
      %p390 = por %p388, %p389
      %p391 = scmp.ne.s32.totalorder %s379, %s380
      %p392 = scmp.eq.s32.totalorder %s35, 1
      %p393 = por %p391, %p392
      %p395 = scmp.ne.s32.totalorder %s380, %s394
      %p396 = scmp.eq.s32.totalorder %s35, 0
      %p397 = por %p395, %p396
      %s399 = sadd.s32 %s398, 1
      %p402 = scmp.eq.s32.totalorder %s29, 1
      %p403 = scmp.ne.s32.totalorder %s398, %s400
      %p404 = scmp.eq.s32.totalorder %s29, 0
      %p405 = por %p403, %p404
      %p406 = scmp.ne.s32.totalorder %s398, %s400
      %p407 = scmp.eq.s32.totalorder %s34, 1
      %p408 = por %p406, %p407
      %p409 = scmp.ne.s32.totalorder %s400, %s401
      %p410 = scmp.eq.s32.totalorder %s34, 0
      %p411 = por %p409, %p410
      %p412 = scmp.ne.s32.totalorder %s400, %s401
      %p413 = scmp.eq.s32.totalorder %s35, 1
      %p414 = por %p412, %p413
      %p416 = scmp.ne.s32.totalorder %s401, %s415
      %p417 = scmp.eq.s32.totalorder %s35, 0
      %p418 = por %p416, %p417
      %p419 = scmp.le.s32.totalorder 1, %s29
      %p420 = scmp.lt.s32.totalorder %s29, 3
      %p421 = pnand %p419, %p420
      %p422 = pneg %p421
      // Predicated region
      $region9: #{tpu_custom_call.1} parent=5 // pred_check
        _
      $region10: #{tpu_custom_call.1} parent=5 // pred_check_branch
        %424 = sbr.rel (%p421) target = $region12
      $region11: #{tpu_custom_call.1} parent=5 // pred_region
        %s425 = ssub.s32 %s29, 1
        // Predicated region
        $region13: #{tpu_custom_call.1} parent=11 // pred_check
          %p426 = pneg %p50
        $region14: #{tpu_custom_call.1} parent=11 // pred_check_branch
          %428 = sbr.rel (%p426) target = $region16
        $region15: #{tpu_custom_call.1} parent=11 // pred_region
          %s430 = ssub.s32 32, 32
          %431 = vsyncadd [#allocation7], %s430
          %s433 = sshll.u32 [#allocation6], 4
          %s434 = int_to_ptr.vmem [resolvable:$true] %s433
          %436 = dma.hbm_to_vmem [thread:$0]  %s0, 32, %s434, [#allocation7]
        $region16: #{tpu_custom_call.1} parent=11 // pred_fallthru
          _
        // Predicated region
        $region17: #{tpu_custom_call.1} parent=11 // pred_check
          %p437 = pneg %p71
        $region18: #{tpu_custom_call.1} parent=11 // pred_check_branch
          %439 = sbr.rel (%p437) target = $region20
        $region19: #{tpu_custom_call.1} parent=11 // pred_region
          %s441 = ssub.s32 32, 32
          %442 = vsyncadd [#allocation9], %s441
          %s444 = sshll.u32 [#allocation8], 4
          %s445 = int_to_ptr.vmem [resolvable:$true] %s444
          %447 = dma.hbm_to_vmem [thread:$0]  %s1, 32, %s445, [#allocation9]
        $region20: #{tpu_custom_call.1} parent=11 // pred_fallthru
          _
        // Predicated region
        $region21: #{tpu_custom_call.1} parent=11 // pred_check
          %p448 = pneg %p92
        $region22: #{tpu_custom_call.1} parent=11 // pred_check_branch
          %450 = sbr.rel (%p448) target = $region24
        $region23: #{tpu_custom_call.1} parent=11 // pred_region
          %s452 = ssub.s32 6080, 6080
          %453 = vsyncadd [#allocation9], %s452
          %s454 = sshll.u32 [#allocation10], 4
          %s455 = int_to_ptr.vmem [resolvable:$true] %s454
          %460 = dma.hbm_to_vmem [thread:$0]  %s2, 6080, %s455, [#allocation9], 320, 320, 20
        $region24: #{tpu_custom_call.1} parent=11 // pred_fallthru
          _
        // Predicated region
        $region25: #{tpu_custom_call.1} parent=11 // pred_check
          %p461 = pneg %p113
        $region26: #{tpu_custom_call.1} parent=11 // pred_check_branch
          %463 = sbr.rel (%p461) target = $region28
        $region27: #{tpu_custom_call.1} parent=11 // pred_region
          %s465 = ssub.s32 80, 80
          %466 = vsyncadd [#allocation12], %s465
          %s468 = sshll.u32 [#allocation11], 4
          %s469 = int_to_ptr.vmem [resolvable:$true] %s468
          %471 = dma.hbm_to_vmem [thread:$0]  %s3, 80, %s469, [#allocation12]
        $region28: #{tpu_custom_call.1} parent=11 // pred_fallthru
          _
        // Predicated region
        $region29: #{tpu_custom_call.1} parent=11 // pred_check
          %p472 = pneg %p134
        $region30: #{tpu_custom_call.1} parent=11 // pred_check_branch
          %474 = sbr.rel (%p472) target = $region32
        $region31: #{tpu_custom_call.1} parent=11 // pred_region
          %s476 = ssub.s32 8064, 8064
          %477 = vsyncadd [#allocation12], %s476
          %s478 = sshll.u32 [#allocation13], 4
          %s479 = int_to_ptr.vmem [resolvable:$true] %s478
          %484 = dma.hbm_to_vmem [thread:$0]  %s4, 8064, %s479, [#allocation12], 384, 384, 24
        $region32: #{tpu_custom_call.1} parent=11 // pred_fallthru
          _
        // Predicated region
        $region33: #{tpu_custom_call.1} parent=11 // pred_check
          %p485 = pneg %p155
        $region34: #{tpu_custom_call.1} parent=11 // pred_check_branch
          %487 = sbr.rel (%p485) target = $region36
        $region35: #{tpu_custom_call.1} parent=11 // pred_region
          %s489 = ssub.s32 96, 96
          %490 = vsyncadd [#allocation15], %s489
          %s492 = sshll.u32 [#allocation14], 4
          %s493 = int_to_ptr.vmem [resolvable:$true] %s492
          %495 = dma.hbm_to_vmem [thread:$0]  %s5, 96, %s493, [#allocation15]
        $region36: #{tpu_custom_call.1} parent=11 // pred_fallthru
          _
        // Predicated region
        $region37: #{tpu_custom_call.1} parent=11 // pred_check
          %p496 = pneg %p306
        $region38: #{tpu_custom_call.1} parent=11 // pred_check_branch
          %498 = sbr.rel (%p496) target = $region40
        $region39: #{tpu_custom_call.1} parent=11 // pred_region
          %s500 = ssub.s32 64, 64
          %501 = vsyncadd [#allocation9], %s500
          %s503 = sshll.u32 [#allocation21], 4
          %s504 = int_to_ptr.vmem [resolvable:$true] %s503
          %506 = dma.hbm_to_vmem [thread:$0]  %s11, 64, %s504, [#allocation9]
        $region40: #{tpu_custom_call.1} parent=11 // pred_fallthru
          _
        // Predicated region
        $region41: #{tpu_custom_call.1} parent=11 // pred_check
          %p507 = pneg %p327
        $region42: #{tpu_custom_call.1} parent=11 // pred_check_branch
          %509 = sbr.rel (%p507) target = $region44
        $region43: #{tpu_custom_call.1} parent=11 // pred_region
          %s511 = ssub.s32 16384, 16384
          %512 = vsyncadd [#allocation12], %s511
          %s513 = sshll.u32 [#allocation22], 4
          %s514 = int_to_ptr.vmem [resolvable:$true] %s513
          %519 = dma.hbm_to_vmem [thread:$0]  %s12, 16384, %s514, [#allocation12], 256, 256, 16
        $region44: #{tpu_custom_call.1} parent=11 // pred_fallthru
          _
        // Predicated region
        $region45: #{tpu_custom_call.1} parent=11 // pred_check
          %p520 = pneg %p348
        $region46: #{tpu_custom_call.1} parent=11 // pred_check_branch
          %522 = sbr.rel (%p520) target = $region48
        $region47: #{tpu_custom_call.1} parent=11 // pred_region
          %s524 = ssub.s32 64, 64
          %525 = vsyncadd [#allocation15], %s524
          %s527 = sshll.u32 [#allocation23], 4
          %s528 = int_to_ptr.vmem [resolvable:$true] %s527
          %530 = dma.hbm_to_vmem [thread:$0]  %s13, 64, %s528, [#allocation15]
        $region48: #{tpu_custom_call.1} parent=11 // pred_fallthru
          _
        // Predicated region
        $region49: #{tpu_custom_call.1} parent=11 // pred_check
          %p531 = pneg %p369
        $region50: #{tpu_custom_call.1} parent=11 // pred_check_branch
          %533 = sbr.rel (%p531) target = $region52
        $region51: #{tpu_custom_call.1} parent=11 // pred_region
          %s535 = ssub.s32 64, 64
          %536 = vsyncadd [#allocation25], %s535
          %s538 = sshll.u32 [#allocation24], 4
          %s539 = int_to_ptr.vmem [resolvable:$true] %s538
          %541 = dma.hbm_to_vmem [thread:$0]  %s14, 64, %s539, [#allocation25]
        $region52: #{tpu_custom_call.1} parent=11 // pred_fallthru
          _
        // Predicated region
        $region53: #{tpu_custom_call.1} parent=11 // pred_check
          %p542 = pneg %p390
        $region54: #{tpu_custom_call.1} parent=11 // pred_check_branch
          %544 = sbr.rel (%p542) target = $region56
        $region55: #{tpu_custom_call.1} parent=11 // pred_region
          _
        $region56: #{tpu_custom_call.1} parent=11 // pred_fallthru
          _
      $region12: #{tpu_custom_call.1} parent=5 // pred_fallthru
        _
      %p545 = scmp.lt.s32.totalorder %s29, 2
      // Predicated region
      $region57: #{tpu_custom_call.1} parent=5 // pred_check
        %p546 = pneg %p545
      $region58: #{tpu_custom_call.1} parent=5 // pred_check_branch
        %548 = sbr.rel (%p546) target = $region60
      $region59: #{tpu_custom_call.1} parent=5 // pred_region
        // Predicated region
        $region61: #{tpu_custom_call.1} parent=59 // pred_check
          %p549 = pneg %p175
        $region62: #{tpu_custom_call.1} parent=59 // pred_check_branch
          %551 = sbr.rel (%p549) target = $region64
        $region63: #{tpu_custom_call.1} parent=59 // pred_region
          %s552 = sand.u32 %s29, 1
          %s553 = scalar_lea.sflag [#allocation7], %s552
          %s554 = sand.u32 %s165, 1
          %s555 = smul.addr %s554, 2560
          %s556 = scalar_lea.vmem [#allocation16], %s555
          %s557 = smul.u32 8, %s29
          %s559 = ssub.s32 40960, 40960
          %560 = vsyncadd %s553, %s559
          %s561 = smul.addr %s557, 64
          %s562 = scalar_lea.hbm %s6, %s561
          %s563 = sshll.u32 %s556, 4
          %s564 = int_to_ptr.vmem [resolvable:$true] %s563
          %569 = dma.hbm_to_vmem [thread:$0]  %s562, 40960, %s564, %s553, 1024, 512, 32
        $region64: #{tpu_custom_call.1} parent=59 // pred_fallthru
          _
        // Predicated region
        $region65: #{tpu_custom_call.1} parent=59 // pred_check
          %p570 = pneg %p201
        $region66: #{tpu_custom_call.1} parent=59 // pred_check_branch
          %572 = sbr.rel (%p570) target = $region68
        $region67: #{tpu_custom_call.1} parent=59 // pred_region
          %s573 = sand.u32 %s29, 1
          %s574 = scalar_lea.sflag [#allocation7], %s573
          %s575 = sand.u32 %s191, 1
          %s576 = smul.addr %s575, 8
          %s577 = scalar_lea.vmem [#allocation17], %s576
          %s578 = smul.u32 8, %s29
          %s580 = ssub.s32 128, 128
          %581 = vsyncadd %s574, %s580
          %s582 = smul.addr %s578, 16
          %s583 = scalar_lea.hbm %s7, %s582
          %s585 = sshll.u32 %s577, 4
          %s586 = int_to_ptr.vmem [resolvable:$true] %s585
          %588 = dma.hbm_to_vmem [thread:$0]  %s583, 128, %s586, %s574
        $region68: #{tpu_custom_call.1} parent=59 // pred_fallthru
          _
        // Predicated region
        $region69: #{tpu_custom_call.1} parent=59 // pred_check
          %p589 = pneg %p227
        $region70: #{tpu_custom_call.1} parent=59 // pred_check_branch
          %591 = sbr.rel (%p589) target = $region72
        $region71: #{tpu_custom_call.1} parent=59 // pred_region
          %s592 = sand.u32 %s29, 1
          %s593 = scalar_lea.sflag [#allocation7], %s592
          %s594 = sand.u32 %s217, 1
          %s595 = smul.addr %s594, 3072
          %s596 = scalar_lea.vmem [#allocation18], %s595
          %s597 = smul.u32 8, %s29
          %s599 = ssub.s32 49152, 49152
          %600 = vsyncadd %s593, %s599
          %s601 = smul.addr %s597, 64
          %s602 = scalar_lea.hbm %s8, %s601
          %s603 = sshll.u32 %s596, 4
          %s604 = int_to_ptr.vmem [resolvable:$true] %s603
          %609 = dma.hbm_to_vmem [thread:$0]  %s602, 49152, %s604, %s593, 1024, 512, 32
        $region72: #{tpu_custom_call.1} parent=59 // pred_fallthru
          _
        // Predicated region
        $region73: #{tpu_custom_call.1} parent=59 // pred_check
          %p610 = pneg %p253
        $region74: #{tpu_custom_call.1} parent=59 // pred_check_branch
          %612 = sbr.rel (%p610) target = $region76
        $region75: #{tpu_custom_call.1} parent=59 // pred_region
          %s613 = sand.u32 %s29, 1
          %s614 = scalar_lea.sflag [#allocation7], %s613
          %s615 = sand.u32 %s243, 1
          %s616 = smul.addr %s615, 8
          %s617 = scalar_lea.vmem [#allocation19], %s616
          %s618 = smul.u32 8, %s29
          %s620 = ssub.s32 128, 128
          %621 = vsyncadd %s614, %s620
          %s622 = smul.addr %s618, 16
          %s623 = scalar_lea.hbm %s9, %s622
          %s625 = sshll.u32 %s617, 4
          %s626 = int_to_ptr.vmem [resolvable:$true] %s625
          %628 = dma.hbm_to_vmem [thread:$0]  %s623, 128, %s626, %s614
        $region76: #{tpu_custom_call.1} parent=59 // pred_fallthru
          _
        // Predicated region
        $region77: #{tpu_custom_call.1} parent=59 // pred_check
          %p629 = pneg %p279
        $region78: #{tpu_custom_call.1} parent=59 // pred_check_branch
          %631 = sbr.rel (%p629) target = $region80
        $region79: #{tpu_custom_call.1} parent=59 // pred_region
          %s632 = sand.u32 %s29, 1
          %s633 = scalar_lea.sflag [#allocation7], %s632
          %s634 = sand.u32 %s269, 1
          %s635 = smul.addr %s634, 4096
          %s636 = scalar_lea.vmem [#allocation20], %s635
          %s637 = smul.u32 256, %s29
          %s639 = ssub.s32 65536, 65536
          %640 = vsyncadd %s633, %s639
          %s641 = smul.addr %s637, 4
          %s642 = smul.addr %s641, 64
          %s643 = scalar_lea.hbm %s10, %s642
          %s644 = sshll.u32 %s636, 4
          %s645 = int_to_ptr.vmem [resolvable:$true] %s644
          %650 = dma.hbm_to_vmem [thread:$0]  %s643, 65536, %s645, %s633, 256, 256, 16
        $region80: #{tpu_custom_call.1} parent=59 // pred_fallthru
          _
      $region60: #{tpu_custom_call.1} parent=5 // pred_fallthru
        _
      %p651 = scmp.le.s32.totalorder 1, %s29
      %p652 = scmp.lt.s32.totalorder %s29, 3
      %p653 = pnand %p651, %p652
      %p654 = pneg %p653
      // Predicated region
      $region81: #{tpu_custom_call.1} parent=5 // pred_check
        _
      $region82: #{tpu_custom_call.1} parent=5 // pred_check_branch
        %656 = sbr.rel (%p653) target = $region84
      $region83: #{tpu_custom_call.1} parent=5 // pred_region
        %s657 = ssub.s32 %s29, 1
        // Predicated region
        $region85: #{tpu_custom_call.1} parent=83 // pred_check
          %p658 = pneg %p50
        $region86: #{tpu_custom_call.1} parent=83 // pred_check_branch
          %660 = sbr.rel (%p658) target = $region88
        $region87: #{tpu_custom_call.1} parent=83 // pred_region
          %661 = dma.done [#allocation7], 32
        $region88: #{tpu_custom_call.1} parent=83 // pred_fallthru
          _
        // Predicated region
        $region89: #{tpu_custom_call.1} parent=83 // pred_check
          %p662 = pneg %p71
        $region90: #{tpu_custom_call.1} parent=83 // pred_check_branch
          %664 = sbr.rel (%p662) target = $region92
        $region91: #{tpu_custom_call.1} parent=83 // pred_region
          %665 = dma.done [#allocation9], 32
        $region92: #{tpu_custom_call.1} parent=83 // pred_fallthru
          _
        // Predicated region
        $region93: #{tpu_custom_call.1} parent=83 // pred_check
          %p666 = pneg %p92
        $region94: #{tpu_custom_call.1} parent=83 // pred_check_branch
          %668 = sbr.rel (%p666) target = $region96
        $region95: #{tpu_custom_call.1} parent=83 // pred_region
          %669 = dma.done [#allocation9], 6080
        $region96: #{tpu_custom_call.1} parent=83 // pred_fallthru
          _
        // Predicated region
        $region97: #{tpu_custom_call.1} parent=83 // pred_check
          %p670 = pneg %p113
        $region98: #{tpu_custom_call.1} parent=83 // pred_check_branch
          %672 = sbr.rel (%p670) target = $region100
        $region99: #{tpu_custom_call.1} parent=83 // pred_region
          %673 = dma.done [#allocation12], 80
        $region100: #{tpu_custom_call.1} parent=83 // pred_fallthru
          _
        // Predicated region
        $region101: #{tpu_custom_call.1} parent=83 // pred_check
          %p674 = pneg %p134
        $region102: #{tpu_custom_call.1} parent=83 // pred_check_branch
          %676 = sbr.rel (%p674) target = $region104
        $region103: #{tpu_custom_call.1} parent=83 // pred_region
          %677 = dma.done [#allocation12], 8064
        $region104: #{tpu_custom_call.1} parent=83 // pred_fallthru
          _
        // Predicated region
        $region105: #{tpu_custom_call.1} parent=83 // pred_check
          %p678 = pneg %p155
        $region106: #{tpu_custom_call.1} parent=83 // pred_check_branch
          %680 = sbr.rel (%p678) target = $region108
        $region107: #{tpu_custom_call.1} parent=83 // pred_region
          %681 = dma.done [#allocation15], 96
        $region108: #{tpu_custom_call.1} parent=83 // pred_fallthru
          _
        %s682 = sand.u32 %s34, 1
        %s683 = scalar_lea.sflag [#allocation7], %s682
        %s684 = sand.u32 %s168, 1
        %s685 = smul.addr %s684, 2560
        %s686 = scalar_lea.vmem [#allocation16], %s685
        // Predicated region
        $region109: #{tpu_custom_call.1} parent=83 // pred_check
          %p687 = pneg %p181
        $region110: #{tpu_custom_call.1} parent=83 // pred_check_branch
          %689 = sbr.rel (%p687) target = $region112
        $region111: #{tpu_custom_call.1} parent=83 // pred_region
          %690 = dma.done %s683, 40960
        $region112: #{tpu_custom_call.1} parent=83 // pred_fallthru
          _
        %s691 = sand.u32 %s34, 1
        %s692 = scalar_lea.sflag [#allocation7], %s691
        %s693 = sand.u32 %s194, 1
        %s694 = smul.addr %s693, 8
        %s695 = scalar_lea.vmem [#allocation17], %s694
        // Predicated region
        $region113: #{tpu_custom_call.1} parent=83 // pred_check
          %p696 = pneg %p207
        $region114: #{tpu_custom_call.1} parent=83 // pred_check_branch
          %698 = sbr.rel (%p696) target = $region116
        $region115: #{tpu_custom_call.1} parent=83 // pred_region
          %699 = dma.done %s692, 128
        $region116: #{tpu_custom_call.1} parent=83 // pred_fallthru
          _
        %s700 = sand.u32 %s34, 1
        %s701 = scalar_lea.sflag [#allocation7], %s700
        %s702 = sand.u32 %s220, 1
        %s703 = smul.addr %s702, 3072
        %s704 = scalar_lea.vmem [#allocation18], %s703
        // Predicated region
        $region117: #{tpu_custom_call.1} parent=83 // pred_check
          %p705 = pneg %p233
        $region118: #{tpu_custom_call.1} parent=83 // pred_check_branch
          %707 = sbr.rel (%p705) target = $region120
        $region119: #{tpu_custom_call.1} parent=83 // pred_region
          %708 = dma.done %s701, 49152
        $region120: #{tpu_custom_call.1} parent=83 // pred_fallthru
          _
        %s709 = sand.u32 %s34, 1
        %s710 = scalar_lea.sflag [#allocation7], %s709
        %s711 = sand.u32 %s246, 1
        %s712 = smul.addr %s711, 8
        %s713 = scalar_lea.vmem [#allocation19], %s712
        // Predicated region
        $region121: #{tpu_custom_call.1} parent=83 // pred_check
          %p714 = pneg %p259
        $region122: #{tpu_custom_call.1} parent=83 // pred_check_branch
          %716 = sbr.rel (%p714) target = $region124
        $region123: #{tpu_custom_call.1} parent=83 // pred_region
          %717 = dma.done %s710, 128
        $region124: #{tpu_custom_call.1} parent=83 // pred_fallthru
          _
        %s718 = sand.u32 %s34, 1
        %s719 = scalar_lea.sflag [#allocation7], %s718
        %s720 = sand.u32 %s272, 1
        %s721 = smul.addr %s720, 4096
        %s722 = scalar_lea.vmem [#allocation20], %s721
        // Predicated region
        $region125: #{tpu_custom_call.1} parent=83 // pred_check
          %p723 = pneg %p285
        $region126: #{tpu_custom_call.1} parent=83 // pred_check_branch
          %725 = sbr.rel (%p723) target = $region128
        $region127: #{tpu_custom_call.1} parent=83 // pred_region
          %726 = dma.done %s719, 65536
        $region128: #{tpu_custom_call.1} parent=83 // pred_fallthru
          _
        // Predicated region
        $region129: #{tpu_custom_call.1} parent=83 // pred_check
          %p727 = pneg %p306
        $region130: #{tpu_custom_call.1} parent=83 // pred_check_branch
          %729 = sbr.rel (%p727) target = $region132
        $region131: #{tpu_custom_call.1} parent=83 // pred_region
          %730 = dma.done [#allocation9], 64
        $region132: #{tpu_custom_call.1} parent=83 // pred_fallthru
          _
        // Predicated region
        $region133: #{tpu_custom_call.1} parent=83 // pred_check
          %p731 = pneg %p327
        $region134: #{tpu_custom_call.1} parent=83 // pred_check_branch
          %733 = sbr.rel (%p731) target = $region136
        $region135: #{tpu_custom_call.1} parent=83 // pred_region
          %734 = dma.done [#allocation12], 16384
        $region136: #{tpu_custom_call.1} parent=83 // pred_fallthru
          _
        // Predicated region
        $region137: #{tpu_custom_call.1} parent=83 // pred_check
          %p735 = pneg %p348
        $region138: #{tpu_custom_call.1} parent=83 // pred_check_branch
          %737 = sbr.rel (%p735) target = $region140
        $region139: #{tpu_custom_call.1} parent=83 // pred_region
          %738 = dma.done [#allocation15], 64
        $region140: #{tpu_custom_call.1} parent=83 // pred_fallthru
          _
        // Predicated region
        $region141: #{tpu_custom_call.1} parent=83 // pred_check
          %p739 = pneg %p369
        $region142: #{tpu_custom_call.1} parent=83 // pred_check_branch
          %741 = sbr.rel (%p739) target = $region144
        $region143: #{tpu_custom_call.1} parent=83 // pred_region
          %742 = dma.done [#allocation25], 64
        $region144: #{tpu_custom_call.1} parent=83 // pred_fallthru
          _
        %p743 = pneg %p50
        %p744 = pneg %p47
        %p745 = pneg %p71
        %p746 = pneg %p68
        %p747 = pneg %p92
        %p748 = pneg %p89
        %p749 = pneg %p113
        %p750 = pneg %p110
        %p751 = pneg %p134
        %p752 = pneg %p131
        %p753 = pneg %p155
        %p754 = pneg %p152
        %s755 = sand.u32 %s34, 1
        %s756 = scalar_lea.sflag [#allocation7], %s755
        %s757 = sand.u32 %s168, 1
        %s758 = smul.addr %s757, 2560
        %s759 = scalar_lea.vmem [#allocation16], %s758
        %p760 = pneg %p181
        %p761 = pneg %p178
        %s762 = sand.u32 %s34, 1
        %s763 = scalar_lea.sflag [#allocation7], %s762
        %s764 = sand.u32 %s194, 1
        %s765 = smul.addr %s764, 8
        %s766 = scalar_lea.vmem [#allocation17], %s765
        %p767 = pneg %p207
        %p768 = pneg %p204
        %s769 = sand.u32 %s34, 1
        %s770 = scalar_lea.sflag [#allocation7], %s769
        %s771 = sand.u32 %s220, 1
        %s772 = smul.addr %s771, 3072
        %s773 = scalar_lea.vmem [#allocation18], %s772
        %p774 = pneg %p233
        %p775 = pneg %p230
        %s776 = sand.u32 %s34, 1
        %s777 = scalar_lea.sflag [#allocation7], %s776
        %s778 = sand.u32 %s246, 1
        %s779 = smul.addr %s778, 8
        %s780 = scalar_lea.vmem [#allocation19], %s779
        %p781 = pneg %p259
        %p782 = pneg %p256
        %s783 = sand.u32 %s34, 1
        %s784 = scalar_lea.sflag [#allocation7], %s783
        %s785 = sand.u32 %s272, 1
        %s786 = smul.addr %s785, 4096
        %s787 = scalar_lea.vmem [#allocation20], %s786
        %p788 = pneg %p285
        %p789 = pneg %p282
        %p790 = pneg %p306
        %p791 = pneg %p303
        %p792 = pneg %p327
        %p793 = pneg %p324
        %p794 = pneg %p348
        %p795 = pneg %p345
        %p796 = pneg %p369
        %p797 = pneg %p366
        %p798 = pneg %p390
        %p799 = pneg %p387
        %p800 = pneg %p411
        %p801 = pneg %p408
        %s802 = smul.u32 8, %s34
        %s803 = smul.u32 8, %s34
        %s804 = smul.u32 8, %s34
        %s805 = smul.u32 8, %s34
        %s806 = smul.u32 256, %s34
        %p808 = scmp.eq.s32.totalorder %s34, 0
        // Predicated region
        $region145: #{tpu_custom_call.1} parent=83 // pred_check
          %p809 = pneg %p808
        $region146: #{tpu_custom_call.1} parent=83 // pred_check_branch
          %811 = sbr.rel (%p809) target = $region148
        $region147: #{tpu_custom_call.1} parent=83 // pred_region
          %v812 = vld [vmem:[#allocation6] sm:$0x3]
          %v813 = vld [vmem:[#allocation10] sm:$0xff]
          %v814 = vld [vmem:[#allocation10 + $0x8] sm:$0xff]
          %v815 = vld [vmem:[#allocation10 + $0x10] sm:$0xf]
          %v816 = vld [vmem:[#allocation10 + $0x14] sm:$0xff]
          %v817 = vld [vmem:[#allocation10 + $0x1c] sm:$0xff]
          %v818 = vld [vmem:[#allocation10 + $0x24] sm:$0xf]
          %v819 = vld [vmem:[#allocation10 + $0x28] sm:$0xff]
          %v820 = vld [vmem:[#allocation10 + $0x30] sm:$0xff]
          %v821 = vld [vmem:[#allocation10 + $0x38] sm:$0xf]
          %v822 = vld [vmem:[#allocation10 + $0x3c] sm:$0xff]
          %v823 = vld [vmem:[#allocation10 + $0x44] sm:$0xff]
          %v824 = vld [vmem:[#allocation10 + $0x4c] sm:$0xf]
          %v825 = vld [vmem:[#allocation10 + $0x50] sm:$0xff]
          %v826 = vld [vmem:[#allocation10 + $0x58] sm:$0xff]
          %v827 = vld [vmem:[#allocation10 + $0x60] sm:$0xf]
          %v828 = vld [vmem:[#allocation10 + $0x64] sm:$0xff]
          %v829 = vld [vmem:[#allocation10 + $0x6c] sm:$0xff]
          %v830 = vld [vmem:[#allocation10 + $0x74] sm:$0xf]
          %v831 = vld [vmem:[#allocation10 + $0x78] sm:$0xff]
          %v832 = vld [vmem:[#allocation10 + $0x80] sm:$0xff]
          %v833 = vld [vmem:[#allocation10 + $0x88] sm:$0xf]
          %v834 = vld [vmem:[#allocation10 + $0x8c] sm:$0xff]
          %v835 = vld [vmem:[#allocation10 + $0x94] sm:$0xff]
          %v836 = vld [vmem:[#allocation10 + $0x9c] sm:$0xf]
          %v837 = vld [vmem:[#allocation10 + $0xa0] sm:$0xff]
          %v838 = vld [vmem:[#allocation10 + $0xa8] sm:$0xff]
          %v839 = vld [vmem:[#allocation10 + $0xb0] sm:$0xf]
          %v840 = vld [vmem:[#allocation10 + $0xb4] sm:$0xff]
          %v841 = vld [vmem:[#allocation10 + $0xbc] sm:$0xff]
          %v842 = vld [vmem:[#allocation10 + $0xc4] sm:$0xf]
          %v843 = vld [vmem:[#allocation10 + $0xc8] sm:$0xff]
          %v844 = vld [vmem:[#allocation10 + $0xd0] sm:$0xff]
          %v845 = vld [vmem:[#allocation10 + $0xd8] sm:$0xf]
          %v846 = vld [vmem:[#allocation10 + $0xdc] sm:$0xff]
          %v847 = vld [vmem:[#allocation10 + $0xe4] sm:$0xff]
          %v848 = vld [vmem:[#allocation10 + $0xec] sm:$0xf]
          %v849 = vld [vmem:[#allocation10 + $0xf0] sm:$0xff]
          %v850 = vld [vmem:[#allocation10 + $0xf8] sm:$0xff]
          %v851 = vld [vmem:[#allocation10 + $0x100] sm:$0xf]
          %v852 = vld [vmem:[#allocation10 + $0x104] sm:$0xff]
          %v853 = vld [vmem:[#allocation10 + $0x10c] sm:$0xff]
          %v854 = vld [vmem:[#allocation10 + $0x114] sm:$0xf]
          %v855 = vld [vmem:[#allocation10 + $0x118] sm:$0xff]
          %v856 = vld [vmem:[#allocation10 + $0x120] sm:$0xff]
          %v857 = vld [vmem:[#allocation10 + $0x128] sm:$0xf]
          %v858 = vld [vmem:[#allocation10 + $0x12c] sm:$0xff]
          %v859 = vld [vmem:[#allocation10 + $0x134] sm:$0xff]
          %v860 = vld [vmem:[#allocation10 + $0x13c] sm:$0xf]
          %v861 = vld [vmem:[#allocation10 + $0x140] sm:$0xff]
          %v862 = vld [vmem:[#allocation10 + $0x148] sm:$0xff]
          %v863 = vld [vmem:[#allocation10 + $0x150] sm:$0xf]
          %v864 = vld [vmem:[#allocation10 + $0x154] sm:$0xff]
          %v865 = vld [vmem:[#allocation10 + $0x15c] sm:$0xff]
          %v866 = vld [vmem:[#allocation10 + $0x164] sm:$0xf]
          %v867 = vld [vmem:[#allocation10 + $0x168] sm:$0x77]
          %v868 = vld [vmem:[#allocation10 + $0x170] sm:$0x77]
          %v869 = vld [vmem:[#allocation10 + $0x178] sm:$0x7]
          %v870 = vld [vmem:[#allocation11] sm:$0x1f]
          %v872 = vlaneseq
          %v873 = vshrl.u32 %v872, 7
          %v874 = vsub.s32 0, %v873
          %v875 = vrot.slane %v870, %v874
          %v876 = vlaneseq
          %v877 = vshrl.u32 %v876, 7
          %v878 = vsub.s32 1, %v877
          %v879 = vrot.slane %v870, %v878
          %v880 = vlaneseq
          %v881 = vshrl.u32 %v880, 7
          %v882 = vsub.s32 2, %v881
          %v883 = vrot.slane %v870, %v882
          %v884 = vlaneseq
          %v885 = vshrl.u32 %v884, 7
          %v886 = vsub.s32 3, %v885
          %v887 = vrot.slane %v870, %v886
          %v888 = vlaneseq
          %v889 = vshrl.u32 %v888, 7
          %v890 = vsub.s32 4, %v889
          %v891 = vrot.slane %v870, %v890
          %v899 = vunpack.c.l.s4 1966171168
          %v900 = vunpack.c.0.s8 %v899
          %v901 = vlaneseq
          %v902 = vshrl.u32 %v901, 7
          %v903 = vsub.s32 %v900, %v902
          %v904 = vrot.slane %v812, %v903
          %v905 = vcombine.high %v904, %v904
          %v907 = vunpack.c.l.s4 1966171168
          %v908 = vunpack.c.0.s8 %v907
          %v909 = vlaneseq
          %v910 = vshrl.u32 %v909, 7
          %v911 = vsub.s32 %v908, %v910
          %v912 = vrot.slane %v904, %v911
          %v914 = vunpack.c.l.s4 1966171168
          %v915 = vunpack.c.0.s8 %v914
          %v916 = vlaneseq
          %v917 = vshrl.u32 %v916, 7
          %v918 = vsub.s32 %v915, %v917
          %v919 = vrot.slane %v905, %v918
          %v978 = vunpack.c.l.b16 %v813
          %v979 = vunpack.c.h.b16 %v813
          %v980 = vunpack.c.l.b16 %v814
          %v981 = vunpack.c.h.b16 %v814
          %v982 = vunpack.c.l.b16 %v815
          %v983 = vunpack.c.l.b16 %v816
          %v984 = vunpack.c.h.b16 %v816
          %v985 = vunpack.c.l.b16 %v817
          %v986 = vunpack.c.h.b16 %v817
          %v987 = vunpack.c.l.b16 %v818
          %v988 = vunpack.c.l.b16 %v819
          %v989 = vunpack.c.h.b16 %v819
          %v990 = vunpack.c.l.b16 %v820
          %v991 = vunpack.c.h.b16 %v820
          %v992 = vunpack.c.l.b16 %v821
          %v993 = vunpack.c.l.b16 %v822
          %v994 = vunpack.c.h.b16 %v822
          %v995 = vunpack.c.l.b16 %v823
          %v996 = vunpack.c.h.b16 %v823
          %v997 = vunpack.c.l.b16 %v824
          %v998 = vunpack.c.l.b16 %v825
          %v999 = vunpack.c.h.b16 %v825
          %v1000 = vunpack.c.l.b16 %v826
          %v1001 = vunpack.c.h.b16 %v826
          %v1002 = vunpack.c.l.b16 %v827
          %v1003 = vunpack.c.l.b16 %v828
          %v1004 = vunpack.c.h.b16 %v828
          %v1005 = vunpack.c.l.b16 %v829
          %v1006 = vunpack.c.h.b16 %v829
          %v1007 = vunpack.c.l.b16 %v830
          %v1008 = vunpack.c.l.b16 %v831
          %v1009 = vunpack.c.h.b16 %v831
          %v1010 = vunpack.c.l.b16 %v832
          %v1011 = vunpack.c.h.b16 %v832
          %v1012 = vunpack.c.l.b16 %v833
          %v1013 = vunpack.c.l.b16 %v834
          %v1014 = vunpack.c.h.b16 %v834
          %v1015 = vunpack.c.l.b16 %v835
          %v1016 = vunpack.c.h.b16 %v835
          %v1017 = vunpack.c.l.b16 %v836
          %v1018 = vunpack.c.l.b16 %v837
          %v1019 = vunpack.c.h.b16 %v837
          %v1020 = vunpack.c.l.b16 %v838
          %v1021 = vunpack.c.h.b16 %v838
          %v1022 = vunpack.c.l.b16 %v839
          %v1023 = vunpack.c.l.b16 %v840
          %v1024 = vunpack.c.h.b16 %v840
          %v1025 = vunpack.c.l.b16 %v841
          %v1026 = vunpack.c.h.b16 %v841
          %v1027 = vunpack.c.l.b16 %v842
          %v1028 = vunpack.c.l.b16 %v843
          %v1029 = vunpack.c.h.b16 %v843
          %v1030 = vunpack.c.l.b16 %v844
          %v1031 = vunpack.c.h.b16 %v844
          %v1032 = vunpack.c.l.b16 %v845
          %v1033 = vunpack.c.l.b16 %v846
          %v1034 = vunpack.c.h.b16 %v846
          %v1035 = vunpack.c.l.b16 %v847
          %v1036 = vunpack.c.h.b16 %v847
          %v1037 = vunpack.c.l.b16 %v848
          %v1038 = vunpack.c.l.b16 %v849
          %v1039 = vunpack.c.h.b16 %v849
          %v1040 = vunpack.c.l.b16 %v850
          %v1041 = vunpack.c.h.b16 %v850
          %v1042 = vunpack.c.l.b16 %v851
          %v1043 = vunpack.c.l.b16 %v852
          %v1044 = vunpack.c.h.b16 %v852
          %v1045 = vunpack.c.l.b16 %v853
          %v1046 = vunpack.c.h.b16 %v853
          %v1047 = vunpack.c.l.b16 %v854
          %v1048 = vunpack.c.l.b16 %v855
          %v1049 = vunpack.c.h.b16 %v855
          %v1050 = vunpack.c.l.b16 %v856
          %v1051 = vunpack.c.h.b16 %v856
          %v1052 = vunpack.c.l.b16 %v857
          %v1053 = vunpack.c.l.b16 %v858
          %v1054 = vunpack.c.h.b16 %v858
          %v1055 = vunpack.c.l.b16 %v859
          %v1056 = vunpack.c.h.b16 %v859
          %v1057 = vunpack.c.l.b16 %v860
          %v1058 = vunpack.c.l.b16 %v861
          %v1059 = vunpack.c.h.b16 %v861
          %v1060 = vunpack.c.l.b16 %v862
          %v1061 = vunpack.c.h.b16 %v862
          %v1062 = vunpack.c.l.b16 %v863
          %v1063 = vunpack.c.l.b16 %v864
          %v1064 = vunpack.c.h.b16 %v864
          %v1065 = vunpack.c.l.b16 %v865
          %v1066 = vunpack.c.h.b16 %v865
          %v1067 = vunpack.c.l.b16 %v866
          %v1068 = vunpack.c.l.b16 %v867
          %v1069 = vunpack.c.h.b16 %v867
          %v1070 = vunpack.c.l.b16 %v868
          %v1071 = vunpack.c.h.b16 %v868
          %v1072 = vunpack.c.l.b16 %v869
          %v1073 = vpack.c.b16 %v983, %v978
          %v1074 = vpack.c.b16 %v984, %v979
          %v1075 = vpack.c.b16 %v985, %v980
          %v1076 = vpack.c.b16 %v986, %v981
          %v1077 = vpack.c.b16 %v987, %v982
          %v1078 = vpack.c.b16 %v993, %v988
          %v1079 = vpack.c.b16 %v994, %v989
          %v1080 = vpack.c.b16 %v995, %v990
          %v1081 = vpack.c.b16 %v996, %v991
          %v1082 = vpack.c.b16 %v997, %v992
          %v1083 = vpack.c.b16 %v1003, %v998
          %v1084 = vpack.c.b16 %v1004, %v999
          %v1085 = vpack.c.b16 %v1005, %v1000
          %v1086 = vpack.c.b16 %v1006, %v1001
          %v1087 = vpack.c.b16 %v1007, %v1002
          %v1088 = vpack.c.b16 %v1013, %v1008
          %v1089 = vpack.c.b16 %v1014, %v1009
          %v1090 = vpack.c.b16 %v1015, %v1010
          %v1091 = vpack.c.b16 %v1016, %v1011
          %v1092 = vpack.c.b16 %v1017, %v1012
          %v1093 = vpack.c.b16 %v1023, %v1018
          %v1094 = vpack.c.b16 %v1024, %v1019
          %v1095 = vpack.c.b16 %v1025, %v1020
          %v1096 = vpack.c.b16 %v1026, %v1021
          %v1097 = vpack.c.b16 %v1027, %v1022
          %v1098 = vpack.c.b16 %v1033, %v1028
          %v1099 = vpack.c.b16 %v1034, %v1029
          %v1100 = vpack.c.b16 %v1035, %v1030
          %v1101 = vpack.c.b16 %v1036, %v1031
          %v1102 = vpack.c.b16 %v1037, %v1032
          %v1103 = vpack.c.b16 %v1043, %v1038
          %v1104 = vpack.c.b16 %v1044, %v1039
          %v1105 = vpack.c.b16 %v1045, %v1040
          %v1106 = vpack.c.b16 %v1046, %v1041
          %v1107 = vpack.c.b16 %v1047, %v1042
          %v1108 = vpack.c.b16 %v1053, %v1048
          %v1109 = vpack.c.b16 %v1054, %v1049
          %v1110 = vpack.c.b16 %v1055, %v1050
          %v1111 = vpack.c.b16 %v1056, %v1051
          %v1112 = vpack.c.b16 %v1057, %v1052
          %v1113 = vpack.c.b16 %v1063, %v1058
          %v1114 = vpack.c.b16 %v1064, %v1059
          %v1115 = vpack.c.b16 %v1065, %v1060
          %v1116 = vpack.c.b16 %v1066, %v1061
          %v1117 = vpack.c.b16 %v1067, %v1062
          %v1118 = vpack.c.b16 %v1068, %v1068
          %v1119 = vpack.c.b16 %v1069, %v1069
          %v1120 = vpack.c.b16 %v1070, %v1070
          %v1121 = vpack.c.b16 %v1071, %v1071
          %v1122 = vpack.c.b16 %v1072, %v1072
          %vm1168 = vcmask 171008
          %v1170 = vsel %vm1168, %v919, 0
          %vm1172 = vcmask 1041408
          %vm1173 = vcmask 1042432
          %v1174 = vsel %vm1172, 4294967295, 65535
          %v1175 = vsel %vm1173, %v1174, 0
          %v1177 = vand.u32 %v1118, %v1175
          %v1180 = vand.u32 %v1119, %v1175
          %v1183 = vand.u32 %v1120, %v1175
          %v1186 = vand.u32 %v1121, %v1175
          %v1189 = vand.u32 %v1122, %v1175
          %1191 = vmatprep.subr.bf16.mxu0 %v1109
          %1192 = vmatpush1.bf16.msra.mxu0 %v1108
          %1193 = vmatprep.subr.bf16.mxu0 %v1104
          %1194 = vmatpush1.bf16.msra.mxu0 %v1103
          %1195 = vmatprep.subr.bf16.mxu0 %v1099
          %1196 = vmatpush1.bf16.msra.mxu0 %v1098
          %1197 = vmatprep.subr.bf16.mxu0 %v1094
          %1198 = vmatpush1.bf16.msra.mxu0 %v1093
          %1199 = vmatprep.subr.bf16.mxu0 %v1089
          %1200 = vmatpush1.bf16.msra.mxu0 %v1088
          %1201 = vmatprep.subr.bf16.mxu0 %v1084
          %1202 = vmatpush1.bf16.msra.mxu0 %v1083
          %1203 = vmatprep.subr.bf16.mxu0 %v1079
          %1204 = vmatpush1.bf16.msra.mxu0 %v1078
          %1205 = vmatprep.subr.bf16.mxu0 %v1074
          %1206 = vmatpush1.bf16.msra.mxu0 %v1073
          %1207 = vmatprep.subr.bf16.mxu0 0
          %1208 = vmatpush2.bf16.msra.mxu0 0
          %1209 = vmatprep.subr.bf16.mxu0 0
          %1210 = vmatpush2.bf16.msra.mxu0 0
          %1211 = vmatprep.subr.bf16.mxu0 0
          %1212 = vmatpush2.bf16.msra.mxu0 0
          %1213 = vmatprep.subr.bf16.mxu0 0
          %1214 = vmatpush2.bf16.msra.mxu0 0
          %1215 = vmatprep.subr.bf16.mxu0 0
          %1216 = vmatpush2.bf16.msra.mxu0 0
          %1217 = vmatprep.subr.bf16.mxu0 0
          %1218 = vmatpush2.bf16.msra.mxu0 0
          %1219 = vmatprep.subr.bf16.mxu0 %v1180
          %1220 = vmatpush2.bf16.msra.mxu0 %v1177
          %1221 = vmatprep.subr.bf16.mxu0 %v1114
          %1222 = vmatpush2.bf16.msra.mxu0 %v1113
          %1223 = vmatprep.mubr.bf16.mxu0 %v1170
          %1224 = vmatmul.mubr.bf16.gmra.mxu0 %v912
          %v1225 = vpop.f32.mrf.mxu0
          %v1226 = vadd.f32 %v875, %v1225
          %v1227 = vpop.f32.mrf.mxu0
          %v1228 = vadd.f32 %v879, %v1227
          %v1229 = vpop.f32.mrf.mxu0
          %v1230 = vpop.f32.mrf.mxu0
          %1231 = vdwg.mxu0
          %1232 = vmatprep.subr.bf16.mxu0 %v1111
          %1233 = vmatpush1.bf16.msra.mxu0 %v1110
          %1234 = vmatprep.subr.bf16.mxu0 %v1106
          %1235 = vmatpush1.bf16.msra.mxu0 %v1105
          %1236 = vmatprep.subr.bf16.mxu0 %v1101
          %1237 = vmatpush1.bf16.msra.mxu0 %v1100
          %1238 = vmatprep.subr.bf16.mxu0 %v1096
          %1239 = vmatpush1.bf16.msra.mxu0 %v1095
          %1240 = vmatprep.subr.bf16.mxu0 %v1091
          %1241 = vmatpush1.bf16.msra.mxu0 %v1090
          %1242 = vmatprep.subr.bf16.mxu0 %v1086
          %1243 = vmatpush1.bf16.msra.mxu0 %v1085
          %1244 = vmatprep.subr.bf16.mxu0 %v1081
          %1245 = vmatpush1.bf16.msra.mxu0 %v1080
          %1246 = vmatprep.subr.bf16.mxu0 %v1076
          %1247 = vmatpush1.bf16.msra.mxu0 %v1075
          %1248 = vmatprep.subr.bf16.mxu0 0
          %1249 = vmatpush2.bf16.msra.mxu0 0
          %1250 = vmatprep.subr.bf16.mxu0 0
          %1251 = vmatpush2.bf16.msra.mxu0 0
          %1252 = vmatprep.subr.bf16.mxu0 0
          %1253 = vmatpush2.bf16.msra.mxu0 0
          %1254 = vmatprep.subr.bf16.mxu0 0
          %1255 = vmatpush2.bf16.msra.mxu0 0
          %1256 = vmatprep.subr.bf16.mxu0 0
          %1257 = vmatpush2.bf16.msra.mxu0 0
          %1258 = vmatprep.subr.bf16.mxu0 0
          %1259 = vmatpush2.bf16.msra.mxu0 0
          %1260 = vmatprep.subr.bf16.mxu0 %v1186
          %1261 = vmatpush2.bf16.msra.mxu0 %v1183
          %1262 = vmatprep.subr.bf16.mxu0 %v1116
          %1263 = vmatpush2.bf16.msra.mxu0 %v1115
          %1264 = vmatprep.mubr.bf16.mxu0 %v1170
          %1265 = vmatmul.mubr.bf16.gmra.mxu0 %v912
          %v1266 = vpop.f32.mrf.mxu0
          %v1267 = vadd.f32 %v883, %v1266
          %v1268 = vpop.f32.mrf.mxu0
          %v1269 = vadd.f32 %v887, %v1268
          %v1270 = vpop.f32.mrf.mxu0
          %v1271 = vpop.f32.mrf.mxu0
          %1272 = vdwg.mxu0
          %1273 = vmatprep.subr.bf16.mxu0 0
          %1274 = vmatpush1.bf16.msra.mxu0 %v1112
          %1275 = vmatprep.subr.bf16.mxu0 0
          %1276 = vmatpush1.bf16.msra.mxu0 %v1107
          %1277 = vmatprep.subr.bf16.mxu0 0
          %1278 = vmatpush1.bf16.msra.mxu0 %v1102
          %1279 = vmatprep.subr.bf16.mxu0 0
          %1280 = vmatpush1.bf16.msra.mxu0 %v1097
          %1281 = vmatprep.subr.bf16.mxu0 0
          %1282 = vmatpush1.bf16.msra.mxu0 %v1092
          %1283 = vmatprep.subr.bf16.mxu0 0
          %1284 = vmatpush1.bf16.msra.mxu0 %v1087
          %1285 = vmatprep.subr.bf16.mxu0 0
          %1286 = vmatpush1.bf16.msra.mxu0 %v1082
          %1287 = vmatprep.subr.bf16.mxu0 0
          %1288 = vmatpush1.bf16.msra.mxu0 %v1077
          %1289 = vmatprep.subr.bf16.mxu0 0
          %1290 = vmatpush2.bf16.msra.mxu0 0
          %1291 = vmatprep.subr.bf16.mxu0 0
          %1292 = vmatpush2.bf16.msra.mxu0 0
          %1293 = vmatprep.subr.bf16.mxu0 0
          %1294 = vmatpush2.bf16.msra.mxu0 0
          %1295 = vmatprep.subr.bf16.mxu0 0
          %1296 = vmatpush2.bf16.msra.mxu0 0
          %1297 = vmatprep.subr.bf16.mxu0 0
          %1298 = vmatpush2.bf16.msra.mxu0 0
          %1299 = vmatprep.subr.bf16.mxu0 0
          %1300 = vmatpush2.bf16.msra.mxu0 0
          %1301 = vmatprep.subr.bf16.mxu0 0
          %1302 = vmatpush2.bf16.msra.mxu0 %v1189
          %1303 = vmatprep.subr.bf16.mxu0 0
          %1304 = vmatpush2.bf16.msra.mxu0 %v1117
          %1305 = vmatprep.mubr.bf16.mxu0 %v1170
          %1306 = vmatmul.mubr.bf16.gmra.mxu0 %v912
          %v1307 = vpop.f32.mrf.mxu0
          %v1308 = vadd.f32 %v891, %v1307
          %v1309 = vpop.f32.mrf.mxu0
          %v1310 = vpop.f32.mrf.mxu0
          %v1311 = vpop.f32.mrf.mxu0
          %1312 = vdwg.mxu0
          %v1313 = vld [vmem:[#allocation8] sm:$0x3]
          %v1314 = vld [vmem:[#allocation13] sm:$0xff]
          %v1315 = vld [vmem:[#allocation13 + $0x8] sm:$0xff]
          %v1316 = vld [vmem:[#allocation13 + $0x10] sm:$0xff]
          %v1317 = vld [vmem:[#allocation13 + $0x18] sm:$0xff]
          %v1318 = vld [vmem:[#allocation13 + $0x20] sm:$0xff]
          %v1319 = vld [vmem:[#allocation13 + $0x28] sm:$0xff]
          %v1320 = vld [vmem:[#allocation13 + $0x30] sm:$0xff]
          %v1321 = vld [vmem:[#allocation13 + $0x38] sm:$0xff]
          %v1322 = vld [vmem:[#allocation13 + $0x40] sm:$0xff]
          %v1323 = vld [vmem:[#allocation13 + $0x48] sm:$0xff]
          %v1324 = vld [vmem:[#allocation13 + $0x50] sm:$0xff]
          %v1325 = vld [vmem:[#allocation13 + $0x58] sm:$0xff]
          %v1326 = vld [vmem:[#allocation13 + $0x60] sm:$0xff]
          %v1327 = vld [vmem:[#allocation13 + $0x68] sm:$0xff]
          %v1328 = vld [vmem:[#allocation13 + $0x70] sm:$0xff]
          %v1329 = vld [vmem:[#allocation13 + $0x78] sm:$0xff]
          %v1330 = vld [vmem:[#allocation13 + $0x80] sm:$0xff]
          %v1331 = vld [vmem:[#allocation13 + $0x88] sm:$0xff]
          %v1332 = vld [vmem:[#allocation13 + $0x90] sm:$0xff]
          %v1333 = vld [vmem:[#allocation13 + $0x98] sm:$0xff]
          %v1334 = vld [vmem:[#allocation13 + $0xa0] sm:$0xff]
          %v1335 = vld [vmem:[#allocation13 + $0xa8] sm:$0xff]
          %v1336 = vld [vmem:[#allocation13 + $0xb0] sm:$0xff]
          %v1337 = vld [vmem:[#allocation13 + $0xb8] sm:$0xff]
          %v1338 = vld [vmem:[#allocation13 + $0xc0] sm:$0xff]
          %v1339 = vld [vmem:[#allocation13 + $0xc8] sm:$0xff]
          %v1340 = vld [vmem:[#allocation13 + $0xd0] sm:$0xff]
          %v1341 = vld [vmem:[#allocation13 + $0xd8] sm:$0xff]
          %v1342 = vld [vmem:[#allocation13 + $0xe0] sm:$0xff]
          %v1343 = vld [vmem:[#allocation13 + $0xe8] sm:$0xff]
          %v1344 = vld [vmem:[#allocation13 + $0xf0] sm:$0xff]
          %v1345 = vld [vmem:[#allocation13 + $0xf8] sm:$0xff]
          %v1346 = vld [vmem:[#allocation13 + $0x100] sm:$0xff]
          %v1347 = vld [vmem:[#allocation13 + $0x108] sm:$0xff]
          %v1348 = vld [vmem:[#allocation13 + $0x110] sm:$0xff]
          %v1349 = vld [vmem:[#allocation13 + $0x118] sm:$0xff]
          %v1350 = vld [vmem:[#allocation13 + $0x120] sm:$0xff]
          %v1351 = vld [vmem:[#allocation13 + $0x128] sm:$0xff]
          %v1352 = vld [vmem:[#allocation13 + $0x130] sm:$0xff]
          %v1353 = vld [vmem:[#allocation13 + $0x138] sm:$0xff]
          %v1354 = vld [vmem:[#allocation13 + $0x140] sm:$0xff]
          %v1355 = vld [vmem:[#allocation13 + $0x148] sm:$0xff]
          %v1356 = vld [vmem:[#allocation13 + $0x150] sm:$0xff]
          %v1357 = vld [vmem:[#allocation13 + $0x158] sm:$0xff]
          %v1358 = vld [vmem:[#allocation13 + $0x160] sm:$0xff]
          %v1359 = vld [vmem:[#allocation13 + $0x168] sm:$0xff]
          %v1360 = vld [vmem:[#allocation13 + $0x170] sm:$0xff]
          %v1361 = vld [vmem:[#allocation13 + $0x178] sm:$0xff]
          %v1362 = vld [vmem:[#allocation13 + $0x180] sm:$0xff]
          %v1363 = vld [vmem:[#allocation13 + $0x188] sm:$0xff]
          %v1364 = vld [vmem:[#allocation13 + $0x190] sm:$0xff]
          %v1365 = vld [vmem:[#allocation13 + $0x198] sm:$0xff]
          %v1366 = vld [vmem:[#allocation13 + $0x1a0] sm:$0xff]
          %v1367 = vld [vmem:[#allocation13 + $0x1a8] sm:$0xff]
          %v1368 = vld [vmem:[#allocation13 + $0x1b0] sm:$0xff]
          %v1369 = vld [vmem:[#allocation13 + $0x1b8] sm:$0xff]
          %v1370 = vld [vmem:[#allocation13 + $0x1c0] sm:$0xff]
          %v1371 = vld [vmem:[#allocation13 + $0x1c8] sm:$0xff]
          %v1372 = vld [vmem:[#allocation13 + $0x1d0] sm:$0xff]
          %v1373 = vld [vmem:[#allocation13 + $0x1d8] sm:$0xff]
          %v1374 = vld [vmem:[#allocation13 + $0x1e0] sm:$0x33]
          %v1375 = vld [vmem:[#allocation13 + $0x1e8] sm:$0x33]
          %v1376 = vld [vmem:[#allocation13 + $0x1f0] sm:$0x33]
          %v1377 = vld [vmem:[#allocation14] sm:$0x3f]
          %v1379 = vlaneseq
          %v1380 = vshrl.u32 %v1379, 7
          %v1381 = vsub.s32 0, %v1380
          %v1382 = vrot.slane %v1377, %v1381
          %v1383 = vlaneseq
          %v1384 = vshrl.u32 %v1383, 7
          %v1385 = vsub.s32 1, %v1384
          %v1386 = vrot.slane %v1377, %v1385
          %v1387 = vlaneseq
          %v1388 = vshrl.u32 %v1387, 7
          %v1389 = vsub.s32 2, %v1388
          %v1390 = vrot.slane %v1377, %v1389
          %v1391 = vlaneseq
          %v1392 = vshrl.u32 %v1391, 7
          %v1393 = vsub.s32 3, %v1392
          %v1394 = vrot.slane %v1377, %v1393
          %v1395 = vlaneseq
          %v1396 = vshrl.u32 %v1395, 7
          %v1397 = vsub.s32 4, %v1396
          %v1398 = vrot.slane %v1377, %v1397
          %v1399 = vlaneseq
          %v1400 = vshrl.u32 %v1399, 7
          %v1401 = vsub.s32 5, %v1400
          %v1402 = vrot.slane %v1377, %v1401
          %v1411 = vunpack.c.l.s4 1966171168
          %v1412 = vunpack.c.0.s8 %v1411
          %v1413 = vlaneseq
          %v1414 = vshrl.u32 %v1413, 7
          %v1415 = vsub.s32 %v1412, %v1414
          %v1416 = vrot.slane %v1313, %v1415
          %v1417 = vcombine.high %v1416, %v1416
          %v1419 = vunpack.c.l.s4 1966171168
          %v1420 = vunpack.c.0.s8 %v1419
          %v1421 = vlaneseq
          %v1422 = vshrl.u32 %v1421, 7
          %v1423 = vsub.s32 %v1420, %v1422
          %v1424 = vrot.slane %v1416, %v1423
          %v1426 = vunpack.c.l.s4 1966171168
          %v1427 = vunpack.c.0.s8 %v1426
          %v1428 = vlaneseq
          %v1429 = vshrl.u32 %v1428, 7
          %v1430 = vsub.s32 %v1427, %v1429
          %v1431 = vrot.slane %v1417, %v1430
          %v1496 = vunpack.c.l.b16 %v1314
          %v1497 = vunpack.c.h.b16 %v1314
          %v1498 = vunpack.c.l.b16 %v1315
          %v1499 = vunpack.c.h.b16 %v1315
          %v1500 = vunpack.c.l.b16 %v1316
          %v1501 = vunpack.c.h.b16 %v1316
          %v1502 = vunpack.c.l.b16 %v1317
          %v1503 = vunpack.c.h.b16 %v1317
          %v1504 = vunpack.c.l.b16 %v1318
          %v1505 = vunpack.c.h.b16 %v1318
          %v1506 = vunpack.c.l.b16 %v1319
          %v1507 = vunpack.c.h.b16 %v1319
          %v1508 = vunpack.c.l.b16 %v1320
          %v1509 = vunpack.c.h.b16 %v1320
          %v1510 = vunpack.c.l.b16 %v1321
          %v1511 = vunpack.c.h.b16 %v1321
          %v1512 = vunpack.c.l.b16 %v1322
          %v1513 = vunpack.c.h.b16 %v1322
          %v1514 = vunpack.c.l.b16 %v1323
          %v1515 = vunpack.c.h.b16 %v1323
          %v1516 = vunpack.c.l.b16 %v1324
          %v1517 = vunpack.c.h.b16 %v1324
          %v1518 = vunpack.c.l.b16 %v1325
          %v1519 = vunpack.c.h.b16 %v1325
          %v1520 = vunpack.c.l.b16 %v1326
          %v1521 = vunpack.c.h.b16 %v1326
          %v1522 = vunpack.c.l.b16 %v1327
          %v1523 = vunpack.c.h.b16 %v1327
          %v1524 = vunpack.c.l.b16 %v1328
          %v1525 = vunpack.c.h.b16 %v1328
          %v1526 = vunpack.c.l.b16 %v1329
          %v1527 = vunpack.c.h.b16 %v1329
          %v1528 = vunpack.c.l.b16 %v1330
          %v1529 = vunpack.c.h.b16 %v1330
          %v1530 = vunpack.c.l.b16 %v1331
          %v1531 = vunpack.c.h.b16 %v1331
          %v1532 = vunpack.c.l.b16 %v1332
          %v1533 = vunpack.c.h.b16 %v1332
          %v1534 = vunpack.c.l.b16 %v1333
          %v1535 = vunpack.c.h.b16 %v1333
          %v1536 = vunpack.c.l.b16 %v1334
          %v1537 = vunpack.c.h.b16 %v1334
          %v1538 = vunpack.c.l.b16 %v1335
          %v1539 = vunpack.c.h.b16 %v1335
          %v1540 = vunpack.c.l.b16 %v1336
          %v1541 = vunpack.c.h.b16 %v1336
          %v1542 = vunpack.c.l.b16 %v1337
          %v1543 = vunpack.c.h.b16 %v1337
          %v1544 = vunpack.c.l.b16 %v1338
          %v1545 = vunpack.c.h.b16 %v1338
          %v1546 = vunpack.c.l.b16 %v1339
          %v1547 = vunpack.c.h.b16 %v1339
          %v1548 = vunpack.c.l.b16 %v1340
          %v1549 = vunpack.c.h.b16 %v1340
          %v1550 = vunpack.c.l.b16 %v1341
          %v1551 = vunpack.c.h.b16 %v1341
          %v1552 = vunpack.c.l.b16 %v1342
          %v1553 = vunpack.c.h.b16 %v1342
          %v1554 = vunpack.c.l.b16 %v1343
          %v1555 = vunpack.c.h.b16 %v1343
          %v1556 = vunpack.c.l.b16 %v1344
          %v1557 = vunpack.c.h.b16 %v1344
          %v1558 = vunpack.c.l.b16 %v1345
          %v1559 = vunpack.c.h.b16 %v1345
          %v1560 = vunpack.c.l.b16 %v1346
          %v1561 = vunpack.c.h.b16 %v1346
          %v1562 = vunpack.c.l.b16 %v1347
          %v1563 = vunpack.c.h.b16 %v1347
          %v1564 = vunpack.c.l.b16 %v1348
          %v1565 = vunpack.c.h.b16 %v1348
          %v1566 = vunpack.c.l.b16 %v1349
          %v1567 = vunpack.c.h.b16 %v1349
          %v1568 = vunpack.c.l.b16 %v1350
          %v1569 = vunpack.c.h.b16 %v1350
          %v1570 = vunpack.c.l.b16 %v1351
          %v1571 = vunpack.c.h.b16 %v1351
          %v1572 = vunpack.c.l.b16 %v1352
          %v1573 = vunpack.c.h.b16 %v1352
          %v1574 = vunpack.c.l.b16 %v1353
          %v1575 = vunpack.c.h.b16 %v1353
          %v1576 = vunpack.c.l.b16 %v1354
          %v1577 = vunpack.c.h.b16 %v1354
          %v1578 = vunpack.c.l.b16 %v1355
          %v1579 = vunpack.c.h.b16 %v1355
          %v1580 = vunpack.c.l.b16 %v1356
          %v1581 = vunpack.c.h.b16 %v1356
          %v1582 = vunpack.c.l.b16 %v1357
          %v1583 = vunpack.c.h.b16 %v1357
          %v1584 = vunpack.c.l.b16 %v1358
          %v1585 = vunpack.c.h.b16 %v1358
          %v1586 = vunpack.c.l.b16 %v1359
          %v1587 = vunpack.c.h.b16 %v1359
          %v1588 = vunpack.c.l.b16 %v1360
          %v1589 = vunpack.c.h.b16 %v1360
          %v1590 = vunpack.c.l.b16 %v1361
          %v1591 = vunpack.c.h.b16 %v1361
          %v1592 = vunpack.c.l.b16 %v1362
          %v1593 = vunpack.c.h.b16 %v1362
          %v1594 = vunpack.c.l.b16 %v1363
          %v1595 = vunpack.c.h.b16 %v1363
          %v1596 = vunpack.c.l.b16 %v1364
          %v1597 = vunpack.c.h.b16 %v1364
          %v1598 = vunpack.c.l.b16 %v1365
          %v1599 = vunpack.c.h.b16 %v1365
          %v1600 = vunpack.c.l.b16 %v1366
          %v1601 = vunpack.c.h.b16 %v1366
          %v1602 = vunpack.c.l.b16 %v1367
          %v1603 = vunpack.c.h.b16 %v1367
          %v1604 = vunpack.c.l.b16 %v1368
          %v1605 = vunpack.c.h.b16 %v1368
          %v1606 = vunpack.c.l.b16 %v1369
          %v1607 = vunpack.c.h.b16 %v1369
          %v1608 = vunpack.c.l.b16 %v1370
          %v1609 = vunpack.c.h.b16 %v1370
          %v1610 = vunpack.c.l.b16 %v1371
          %v1611 = vunpack.c.h.b16 %v1371
          %v1612 = vunpack.c.l.b16 %v1372
          %v1613 = vunpack.c.h.b16 %v1372
          %v1614 = vunpack.c.l.b16 %v1373
          %v1615 = vunpack.c.h.b16 %v1373
          %v1616 = vunpack.c.l.b16 %v1374
          %v1617 = vunpack.c.h.b16 %v1374
          %v1618 = vunpack.c.l.b16 %v1375
          %v1619 = vunpack.c.h.b16 %v1375
          %v1620 = vunpack.c.l.b16 %v1376
          %v1621 = vunpack.c.h.b16 %v1376
          %v1622 = vpack.c.b16 %v1502, %v1496
          %v1623 = vpack.c.b16 %v1503, %v1497
          %v1624 = vpack.c.b16 %v1504, %v1498
          %v1625 = vpack.c.b16 %v1505, %v1499
          %v1626 = vpack.c.b16 %v1506, %v1500
          %v1627 = vpack.c.b16 %v1507, %v1501
          %v1628 = vpack.c.b16 %v1514, %v1508
          %v1629 = vpack.c.b16 %v1515, %v1509
          %v1630 = vpack.c.b16 %v1516, %v1510
          %v1631 = vpack.c.b16 %v1517, %v1511
          %v1632 = vpack.c.b16 %v1518, %v1512
          %v1633 = vpack.c.b16 %v1519, %v1513
          %v1634 = vpack.c.b16 %v1526, %v1520
          %v1635 = vpack.c.b16 %v1527, %v1521
          %v1636 = vpack.c.b16 %v1528, %v1522
          %v1637 = vpack.c.b16 %v1529, %v1523
          %v1638 = vpack.c.b16 %v1530, %v1524
          %v1639 = vpack.c.b16 %v1531, %v1525
          %v1640 = vpack.c.b16 %v1538, %v1532
          %v1641 = vpack.c.b16 %v1539, %v1533
          %v1642 = vpack.c.b16 %v1540, %v1534
          %v1643 = vpack.c.b16 %v1541, %v1535
          %v1644 = vpack.c.b16 %v1542, %v1536
          %v1645 = vpack.c.b16 %v1543, %v1537
          %v1646 = vpack.c.b16 %v1550, %v1544
          %v1647 = vpack.c.b16 %v1551, %v1545
          %v1648 = vpack.c.b16 %v1552, %v1546
          %v1649 = vpack.c.b16 %v1553, %v1547
          %v1650 = vpack.c.b16 %v1554, %v1548
          %v1651 = vpack.c.b16 %v1555, %v1549
          %v1652 = vpack.c.b16 %v1562, %v1556
          %v1653 = vpack.c.b16 %v1563, %v1557
          %v1654 = vpack.c.b16 %v1564, %v1558
          %v1655 = vpack.c.b16 %v1565, %v1559
          %v1656 = vpack.c.b16 %v1566, %v1560
          %v1657 = vpack.c.b16 %v1567, %v1561
          %v1658 = vpack.c.b16 %v1574, %v1568
          %v1659 = vpack.c.b16 %v1575, %v1569
          %v1660 = vpack.c.b16 %v1576, %v1570
          %v1661 = vpack.c.b16 %v1577, %v1571
          %v1662 = vpack.c.b16 %v1578, %v1572
          %v1663 = vpack.c.b16 %v1579, %v1573
          %v1664 = vpack.c.b16 %v1586, %v1580
          %v1665 = vpack.c.b16 %v1587, %v1581
          %v1666 = vpack.c.b16 %v1588, %v1582
          %v1667 = vpack.c.b16 %v1589, %v1583
          %v1668 = vpack.c.b16 %v1590, %v1584
          %v1669 = vpack.c.b16 %v1591, %v1585
          %v1670 = vpack.c.b16 %v1598, %v1592
          %v1671 = vpack.c.b16 %v1599, %v1593
          %v1672 = vpack.c.b16 %v1600, %v1594
          %v1673 = vpack.c.b16 %v1601, %v1595
          %v1674 = vpack.c.b16 %v1602, %v1596
          %v1675 = vpack.c.b16 %v1603, %v1597
          %v1676 = vpack.c.b16 %v1610, %v1604
          %v1677 = vpack.c.b16 %v1611, %v1605
          %v1678 = vpack.c.b16 %v1612, %v1606
          %v1679 = vpack.c.b16 %v1613, %v1607
          %v1680 = vpack.c.b16 %v1614, %v1608
          %v1681 = vpack.c.b16 %v1615, %v1609
          %v1682 = vpack.c.b16 %v1616, %v1616
          %v1683 = vpack.c.b16 %v1617, %v1617
          %v1684 = vpack.c.b16 %v1618, %v1618
          %v1685 = vpack.c.b16 %v1619, %v1619
          %v1686 = vpack.c.b16 %v1620, %v1620
          %v1687 = vpack.c.b16 %v1621, %v1621
          %vm1748 = vcmask 293888
          %v1750 = vsel %vm1748, %v1431, 0
          %v1753 = vsel %vm1172, %v1682, 0
          %v1756 = vsel %vm1172, %v1683, 0
          %v1759 = vsel %vm1172, %v1684, 0
          %v1762 = vsel %vm1172, %v1685, 0
          %v1765 = vsel %vm1172, %v1686, 0
          %v1768 = vsel %vm1172, %v1687, 0
          %1770 = vmatprep.subr.bf16.mxu0 %v1665
          %1771 = vmatpush1.bf16.msra.mxu0 %v1664
          %1772 = vmatprep.subr.bf16.mxu0 %v1659
          %1773 = vmatpush1.bf16.msra.mxu0 %v1658
          %1774 = vmatprep.subr.bf16.mxu0 %v1653
          %1775 = vmatpush1.bf16.msra.mxu0 %v1652
          %1776 = vmatprep.subr.bf16.mxu0 %v1647
          %1777 = vmatpush1.bf16.msra.mxu0 %v1646
          %1778 = vmatprep.subr.bf16.mxu0 %v1641
          %1779 = vmatpush1.bf16.msra.mxu0 %v1640
          %1780 = vmatprep.subr.bf16.mxu0 %v1635
          %1781 = vmatpush1.bf16.msra.mxu0 %v1634
          %1782 = vmatprep.subr.bf16.mxu0 %v1629
          %1783 = vmatpush1.bf16.msra.mxu0 %v1628
          %1784 = vmatprep.subr.bf16.mxu0 %v1623
          %1785 = vmatpush1.bf16.msra.mxu0 %v1622
          %1786 = vmatprep.subr.bf16.mxu0 0
          %1787 = vmatpush2.bf16.msra.mxu0 0
          %1788 = vmatprep.subr.bf16.mxu0 0
          %1789 = vmatpush2.bf16.msra.mxu0 0
          %1790 = vmatprep.subr.bf16.mxu0 0
          %1791 = vmatpush2.bf16.msra.mxu0 0
          %1792 = vmatprep.subr.bf16.mxu0 0
          %1793 = vmatpush2.bf16.msra.mxu0 0
          %1794 = vmatprep.subr.bf16.mxu0 0
          %1795 = vmatpush2.bf16.msra.mxu0 0
          %1796 = vmatprep.subr.bf16.mxu0 %v1756
          %1797 = vmatpush2.bf16.msra.mxu0 %v1753
          %1798 = vmatprep.subr.bf16.mxu0 %v1677
          %1799 = vmatpush2.bf16.msra.mxu0 %v1676
          %1800 = vmatprep.subr.bf16.mxu0 %v1671
          %1801 = vmatpush2.bf16.msra.mxu0 %v1670
          %1802 = vmatprep.mubr.bf16.mxu0 %v1750
          %1803 = vmatmul.mubr.bf16.gmra.mxu0 %v1424
          %v1804 = vpop.f32.mrf.mxu0
          %v1805 = vadd.f32 %v1382, %v1804
          %v1806 = vpop.f32.mrf.mxu0
          %v1807 = vadd.f32 %v1386, %v1806
          %v1808 = vpop.f32.mrf.mxu0
          %v1809 = vpop.f32.mrf.mxu0
          %1810 = vdwg.mxu0
          %1811 = vmatprep.subr.bf16.mxu0 %v1667
          %1812 = vmatpush1.bf16.msra.mxu0 %v1666
          %1813 = vmatprep.subr.bf16.mxu0 %v1661
          %1814 = vmatpush1.bf16.msra.mxu0 %v1660
          %1815 = vmatprep.subr.bf16.mxu0 %v1655
          %1816 = vmatpush1.bf16.msra.mxu0 %v1654
          %1817 = vmatprep.subr.bf16.mxu0 %v1649
          %1818 = vmatpush1.bf16.msra.mxu0 %v1648
          %1819 = vmatprep.subr.bf16.mxu0 %v1643
          %1820 = vmatpush1.bf16.msra.mxu0 %v1642
          %1821 = vmatprep.subr.bf16.mxu0 %v1637
          %1822 = vmatpush1.bf16.msra.mxu0 %v1636
          %1823 = vmatprep.subr.bf16.mxu0 %v1631
          %1824 = vmatpush1.bf16.msra.mxu0 %v1630
          %1825 = vmatprep.subr.bf16.mxu0 %v1625
          %1826 = vmatpush1.bf16.msra.mxu0 %v1624
          %1827 = vmatprep.subr.bf16.mxu0 0
          %1828 = vmatpush2.bf16.msra.mxu0 0
          %1829 = vmatprep.subr.bf16.mxu0 0
          %1830 = vmatpush2.bf16.msra.mxu0 0
          %1831 = vmatprep.subr.bf16.mxu0 0
          %1832 = vmatpush2.bf16.msra.mxu0 0
          %1833 = vmatprep.subr.bf16.mxu0 0
          %1834 = vmatpush2.bf16.msra.mxu0 0
          %1835 = vmatprep.subr.bf16.mxu0 0
          %1836 = vmatpush2.bf16.msra.mxu0 0
          %1837 = vmatprep.subr.bf16.mxu0 %v1762
          %1838 = vmatpush2.bf16.msra.mxu0 %v1759
          %1839 = vmatprep.subr.bf16.mxu0 %v1679
          %1840 = vmatpush2.bf16.msra.mxu0 %v1678
          %1841 = vmatprep.subr.bf16.mxu0 %v1673
          %1842 = vmatpush2.bf16.msra.mxu0 %v1672
          %1843 = vmatprep.mubr.bf16.mxu0 %v1750
          %1844 = vmatmul.mubr.bf16.gmra.mxu0 %v1424
          %v1845 = vpop.f32.mrf.mxu0
          %v1846 = vadd.f32 %v1390, %v1845
          %v1847 = vpop.f32.mrf.mxu0
          %v1848 = vadd.f32 %v1394, %v1847
          %v1849 = vpop.f32.mrf.mxu0
          %v1850 = vpop.f32.mrf.mxu0
          %1851 = vdwg.mxu0
          %1852 = vmatprep.subr.bf16.mxu0 %v1669
          %1853 = vmatpush1.bf16.msra.mxu0 %v1668
          %1854 = vmatprep.subr.bf16.mxu0 %v1663
          %1855 = vmatpush1.bf16.msra.mxu0 %v1662
          %1856 = vmatprep.subr.bf16.mxu0 %v1657
          %1857 = vmatpush1.bf16.msra.mxu0 %v1656
          %1858 = vmatprep.subr.bf16.mxu0 %v1651
          %1859 = vmatpush1.bf16.msra.mxu0 %v1650
          %1860 = vmatprep.subr.bf16.mxu0 %v1645
          %1861 = vmatpush1.bf16.msra.mxu0 %v1644
          %1862 = vmatprep.subr.bf16.mxu0 %v1639
          %1863 = vmatpush1.bf16.msra.mxu0 %v1638
          %1864 = vmatprep.subr.bf16.mxu0 %v1633
          %1865 = vmatpush1.bf16.msra.mxu0 %v1632
          %1866 = vmatprep.subr.bf16.mxu0 %v1627
          %1867 = vmatpush1.bf16.msra.mxu0 %v1626
          %1868 = vmatprep.subr.bf16.mxu0 0
          %1869 = vmatpush2.bf16.msra.mxu0 0
          %1870 = vmatprep.subr.bf16.mxu0 0
          %1871 = vmatpush2.bf16.msra.mxu0 0
          %1872 = vmatprep.subr.bf16.mxu0 0
          %1873 = vmatpush2.bf16.msra.mxu0 0
          %1874 = vmatprep.subr.bf16.mxu0 0
          %1875 = vmatpush2.bf16.msra.mxu0 0
          %1876 = vmatprep.subr.bf16.mxu0 0
          %1877 = vmatpush2.bf16.msra.mxu0 0
          %1878 = vmatprep.subr.bf16.mxu0 %v1768
          %1879 = vmatpush2.bf16.msra.mxu0 %v1765
          %1880 = vmatprep.subr.bf16.mxu0 %v1681
          %1881 = vmatpush2.bf16.msra.mxu0 %v1680
          %1882 = vmatprep.subr.bf16.mxu0 %v1675
          %1883 = vmatpush2.bf16.msra.mxu0 %v1674
          %1884 = vmatprep.mubr.bf16.mxu0 %v1750
          %1885 = vmatmul.mubr.bf16.gmra.mxu0 %v1424
          %v1886 = vpop.f32.mrf.mxu0
          %v1887 = vadd.f32 %v1398, %v1886
          %v1888 = vpop.f32.mrf.mxu0
          %v1889 = vadd.f32 %v1402, %v1888
          %v1890 = vpop.f32.mrf.mxu0
          %v1891 = vpop.f32.mrf.mxu0
          %1892 = vdwg.mxu0
          %v1893 = vmax.f32 %v1226, 0.0
          %v1894 = vmax.f32 %v1228, 0.0
          %v1895 = vmax.f32 %v1267, 0.0
          %v1896 = vmax.f32 %v1269, 0.0
          %v1897 = vmax.f32 %v1308, 0.0
          %v1898 = vpack.c.bf16 %v1893, %v1893
          %v1899 = vpack.c.bf16 %v1894, %v1894
          %v1900 = vpack.c.bf16 %v1895, %v1895
          %v1901 = vpack.c.bf16 %v1896, %v1896
          %v1902 = vpack.c.bf16 %v1897, %v1897
          %v1908 = vcombine.low %v1898, %v1899
          %v1909 = vcombine.low %v1900, %v1901
          %v1911 = vunpack.c.l.s4 1966171168
          %v1912 = vunpack.c.0.s8 %v1911
          %v1913 = vlaneseq
          %v1914 = vshrl.u32 %v1913, 7
          %v1915 = vsub.s32 %v1912, %v1914
          %v1916 = vrot.slane %v1908, %v1915
          %v1918 = vunpack.c.l.s4 1966171168
          %v1919 = vunpack.c.0.s8 %v1918
          %v1920 = vlaneseq
          %v1921 = vshrl.u32 %v1920, 7
          %v1922 = vsub.s32 %v1919, %v1921
          %v1923 = vrot.slane %v1909, %v1922
          %v1925 = vunpack.c.l.s4 1966171168
          %v1926 = vunpack.c.0.s8 %v1925
          %v1927 = vlaneseq
          %v1928 = vshrl.u32 %v1927, 7
          %v1929 = vsub.s32 %v1926, %v1928
          %v1930 = vrot.slane %v1902, %v1929
          %v1931 = vcombine.low %v1916, %v1923
          %v1933 = vunpack.c.l.s4 1966171168
          %v1934 = vunpack.c.0.s8 %v1933
          %v1935 = vlaneseq
          %v1936 = vshrl.u32 %v1935, 7
          %v1937 = vsub.s32 %v1934, %v1936
          %v1938 = vrot.slane %v1931, %v1937
          %v1940 = vunpack.c.l.s4 1966171168
          %v1941 = vunpack.c.0.s8 %v1940
          %v1942 = vlaneseq
          %v1943 = vshrl.u32 %v1942, 7
          %v1944 = vsub.s32 %v1941, %v1943
          %v1945 = vrot.slane %v1930, %v1944
          %v1946 = vcombine.low %v1938, %v1945
          %1948 = vst [vmem:[#allocation2] sm:$0x1f] %v1946
          %v1949 = vmax.f32 %v1805, 0.0
          %v1950 = vmax.f32 %v1807, 0.0
          %v1951 = vmax.f32 %v1846, 0.0
          %v1952 = vmax.f32 %v1848, 0.0
          %v1953 = vmax.f32 %v1887, 0.0
          %v1954 = vmax.f32 %v1889, 0.0
          %v1955 = vpack.c.bf16 %v1949, %v1949
          %v1956 = vpack.c.bf16 %v1950, %v1950
          %v1957 = vpack.c.bf16 %v1951, %v1951
          %v1958 = vpack.c.bf16 %v1952, %v1952
          %v1959 = vpack.c.bf16 %v1953, %v1953
          %v1960 = vpack.c.bf16 %v1954, %v1954
          %v1967 = vcombine.low %v1955, %v1956
          %v1968 = vcombine.low %v1957, %v1958
          %v1969 = vcombine.low %v1959, %v1960
          %v1971 = vunpack.c.l.s4 1966171168
          %v1972 = vunpack.c.0.s8 %v1971
          %v1973 = vlaneseq
          %v1974 = vshrl.u32 %v1973, 7
          %v1975 = vsub.s32 %v1972, %v1974
          %v1976 = vrot.slane %v1967, %v1975
          %v1978 = vunpack.c.l.s4 1966171168
          %v1979 = vunpack.c.0.s8 %v1978
          %v1980 = vlaneseq
          %v1981 = vshrl.u32 %v1980, 7
          %v1982 = vsub.s32 %v1979, %v1981
          %v1983 = vrot.slane %v1968, %v1982
          %v1985 = vunpack.c.l.s4 1966171168
          %v1986 = vunpack.c.0.s8 %v1985
          %v1987 = vlaneseq
          %v1988 = vshrl.u32 %v1987, 7
          %v1989 = vsub.s32 %v1986, %v1988
          %v1990 = vrot.slane %v1969, %v1989
          %v1991 = vcombine.low %v1976, %v1983
          %v1993 = vunpack.c.l.s4 1966171168
          %v1994 = vunpack.c.0.s8 %v1993
          %v1995 = vlaneseq
          %v1996 = vshrl.u32 %v1995, 7
          %v1997 = vsub.s32 %v1994, %v1996
          %v1998 = vrot.slane %v1991, %v1997
          %v2000 = vunpack.c.l.s4 1966171168
          %v2001 = vunpack.c.0.s8 %v2000
          %v2002 = vlaneseq
          %v2003 = vshrl.u32 %v2002, 7
          %v2004 = vsub.s32 %v2001, %v2003
          %v2005 = vrot.slane %v1990, %v2004
          %v2006 = vcombine.low %v1998, %v2005
          %2008 = vst [vmem:[#allocation3] sm:$0x3f] %v2006
          %2009 = vst [vmem:[#allocation4] sm:$0xff] 0.0
        $region148: #{tpu_custom_call.1} parent=83 // pred_fallthru
          _
        %v2010 = vld [vmem:[#allocation2] sm:$0x1f]
        %v2011 = vld [vmem:[%s686] sm:$0xff]
        %v2012 = vld [vmem:[%s686 + $0x8] sm:$0xff]
        %v2013 = vld [vmem:[%s686 + $0x10] sm:$0xff]
        %v2014 = vld [vmem:[%s686 + $0x18] sm:$0xff]
        %v2015 = vld [vmem:[%s686 + $0x20] sm:$0xff]
        %v2016 = vld [vmem:[%s686 + $0x28] sm:$0xff]
        %v2017 = vld [vmem:[%s686 + $0x30] sm:$0xff]
        %v2018 = vld [vmem:[%s686 + $0x38] sm:$0xff]
        %v2019 = vld [vmem:[%s686 + $0x40] sm:$0xff]
        %v2020 = vld [vmem:[%s686 + $0x48] sm:$0xff]
        %v2021 = vld [vmem:[%s686 + $0x50] sm:$0xff]
        %v2022 = vld [vmem:[%s686 + $0x58] sm:$0xff]
        %v2023 = vld [vmem:[%s686 + $0x60] sm:$0xff]
        %v2024 = vld [vmem:[%s686 + $0x68] sm:$0xff]
        %v2025 = vld [vmem:[%s686 + $0x70] sm:$0xff]
        %v2026 = vld [vmem:[%s686 + $0x78] sm:$0xff]
        %v2027 = vld [vmem:[%s686 + $0x80] sm:$0xff]
        %v2028 = vld [vmem:[%s686 + $0x88] sm:$0xff]
        %v2029 = vld [vmem:[%s686 + $0x90] sm:$0xff]
        %v2030 = vld [vmem:[%s686 + $0x98] sm:$0xff]
        %v2031 = vld [vmem:[%s686 + $0xa0] sm:$0xff]
        %v2032 = vld [vmem:[%s686 + $0xa8] sm:$0xff]
        %v2033 = vld [vmem:[%s686 + $0xb0] sm:$0xff]
        %v2034 = vld [vmem:[%s686 + $0xb8] sm:$0xff]
        %v2035 = vld [vmem:[%s686 + $0xc0] sm:$0xff]
        %v2036 = vld [vmem:[%s686 + $0xc8] sm:$0xff]
        %v2037 = vld [vmem:[%s686 + $0xd0] sm:$0xff]
        %v2038 = vld [vmem:[%s686 + $0xd8] sm:$0xff]
        %v2039 = vld [vmem:[%s686 + $0xe0] sm:$0xff]
        %v2040 = vld [vmem:[%s686 + $0xe8] sm:$0xff]
        %v2041 = vld [vmem:[%s686 + $0xf0] sm:$0xff]
        %v2042 = vld [vmem:[%s686 + $0xf8] sm:$0xff]
        %v2043 = vld [vmem:[%s686 + $0x100] sm:$0xff]
        %v2044 = vld [vmem:[%s686 + $0x108] sm:$0xff]
        %v2045 = vld [vmem:[%s686 + $0x110] sm:$0xff]
        %v2046 = vld [vmem:[%s686 + $0x118] sm:$0xff]
        %v2047 = vld [vmem:[%s686 + $0x120] sm:$0xff]
        %v2048 = vld [vmem:[%s686 + $0x128] sm:$0xff]
        %v2049 = vld [vmem:[%s686 + $0x130] sm:$0xff]
        %v2050 = vld [vmem:[%s686 + $0x138] sm:$0xff]
        %v2051 = vld [vmem:[%s686 + $0x140] sm:$0xff]
        %v2052 = vld [vmem:[%s686 + $0x148] sm:$0xff]
        %v2053 = vld [vmem:[%s686 + $0x150] sm:$0xff]
        %v2054 = vld [vmem:[%s686 + $0x158] sm:$0xff]
        %v2055 = vld [vmem:[%s686 + $0x160] sm:$0xff]
        %v2056 = vld [vmem:[%s686 + $0x168] sm:$0xff]
        %v2057 = vld [vmem:[%s686 + $0x170] sm:$0xff]
        %v2058 = vld [vmem:[%s686 + $0x178] sm:$0xff]
        %v2059 = vld [vmem:[%s686 + $0x180] sm:$0xff]
        %v2060 = vld [vmem:[%s686 + $0x188] sm:$0xff]
        %v2061 = vld [vmem:[%s686 + $0x190] sm:$0xff]
        %v2062 = vld [vmem:[%s686 + $0x198] sm:$0xff]
        %v2063 = vld [vmem:[%s686 + $0x1a0] sm:$0xff]
        %v2064 = vld [vmem:[%s686 + $0x1a8] sm:$0xff]
        %v2065 = vld [vmem:[%s686 + $0x1b0] sm:$0xff]
        %v2066 = vld [vmem:[%s686 + $0x1b8] sm:$0xff]
        %v2067 = vld [vmem:[%s686 + $0x1c0] sm:$0xff]
        %v2068 = vld [vmem:[%s686 + $0x1c8] sm:$0xff]
        %v2069 = vld [vmem:[%s686 + $0x1d0] sm:$0xff]
        %v2070 = vld [vmem:[%s686 + $0x1d8] sm:$0xff]
        %v2071 = vld [vmem:[%s686 + $0x1e0] sm:$0xff]
        %v2072 = vld [vmem:[%s686 + $0x1e8] sm:$0xff]
        %v2073 = vld [vmem:[%s686 + $0x1f0] sm:$0xff]
        %v2074 = vld [vmem:[%s686 + $0x1f8] sm:$0xff]
        %v2075 = vld [vmem:[%s686 + $0x200] sm:$0xff]
        %v2076 = vld [vmem:[%s686 + $0x208] sm:$0xff]
        %v2077 = vld [vmem:[%s686 + $0x210] sm:$0xff]
        %v2078 = vld [vmem:[%s686 + $0x218] sm:$0xff]
        %v2079 = vld [vmem:[%s686 + $0x220] sm:$0xff]
        %v2080 = vld [vmem:[%s686 + $0x228] sm:$0xff]
        %v2081 = vld [vmem:[%s686 + $0x230] sm:$0xff]
        %v2082 = vld [vmem:[%s686 + $0x238] sm:$0xff]
        %v2083 = vld [vmem:[%s686 + $0x240] sm:$0xff]
        %v2084 = vld [vmem:[%s686 + $0x248] sm:$0xff]
        %v2085 = vld [vmem:[%s686 + $0x250] sm:$0xff]
        %v2086 = vld [vmem:[%s686 + $0x258] sm:$0xff]
        %v2087 = vld [vmem:[%s686 + $0x260] sm:$0xff]
        %v2088 = vld [vmem:[%s686 + $0x268] sm:$0xff]
        %v2089 = vld [vmem:[%s686 + $0x270] sm:$0xff]
        %v2090 = vld [vmem:[%s686 + $0x278] sm:$0xff]
        %v2091 = vld [vmem:[%s686 + $0x280] sm:$0xff]
        %v2092 = vld [vmem:[%s686 + $0x288] sm:$0xff]
        %v2093 = vld [vmem:[%s686 + $0x290] sm:$0xff]
        %v2094 = vld [vmem:[%s686 + $0x298] sm:$0xff]
        %v2095 = vld [vmem:[%s686 + $0x2a0] sm:$0xff]
        %v2096 = vld [vmem:[%s686 + $0x2a8] sm:$0xff]
        %v2097 = vld [vmem:[%s686 + $0x2b0] sm:$0xff]
        %v2098 = vld [vmem:[%s686 + $0x2b8] sm:$0xff]
        %v2099 = vld [vmem:[%s686 + $0x2c0] sm:$0xff]
        %v2100 = vld [vmem:[%s686 + $0x2c8] sm:$0xff]
        %v2101 = vld [vmem:[%s686 + $0x2d0] sm:$0xff]
        %v2102 = vld [vmem:[%s686 + $0x2d8] sm:$0xff]
        %v2103 = vld [vmem:[%s686 + $0x2e0] sm:$0xff]
        %v2104 = vld [vmem:[%s686 + $0x2e8] sm:$0xff]
        %v2105 = vld [vmem:[%s686 + $0x2f0] sm:$0xff]
        %v2106 = vld [vmem:[%s686 + $0x2f8] sm:$0xff]
        %v2107 = vld [vmem:[%s686 + $0x300] sm:$0xff]
        %v2108 = vld [vmem:[%s686 + $0x308] sm:$0xff]
        %v2109 = vld [vmem:[%s686 + $0x310] sm:$0xff]
        %v2110 = vld [vmem:[%s686 + $0x318] sm:$0xff]
        %v2111 = vld [vmem:[%s686 + $0x320] sm:$0xff]
        %v2112 = vld [vmem:[%s686 + $0x328] sm:$0xff]
        %v2113 = vld [vmem:[%s686 + $0x330] sm:$0xff]
        %v2114 = vld [vmem:[%s686 + $0x338] sm:$0xff]
        %v2115 = vld [vmem:[%s686 + $0x340] sm:$0xff]
        %v2116 = vld [vmem:[%s686 + $0x348] sm:$0xff]
        %v2117 = vld [vmem:[%s686 + $0x350] sm:$0xff]
        %v2118 = vld [vmem:[%s686 + $0x358] sm:$0xff]
        %v2119 = vld [vmem:[%s686 + $0x360] sm:$0xff]
        %v2120 = vld [vmem:[%s686 + $0x368] sm:$0xff]
        %v2121 = vld [vmem:[%s686 + $0x370] sm:$0xff]
        %v2122 = vld [vmem:[%s686 + $0x378] sm:$0xff]
        %v2123 = vld [vmem:[%s686 + $0x380] sm:$0xff]
        %v2124 = vld [vmem:[%s686 + $0x388] sm:$0xff]
        %v2125 = vld [vmem:[%s686 + $0x390] sm:$0xff]
        %v2126 = vld [vmem:[%s686 + $0x398] sm:$0xff]
        %v2127 = vld [vmem:[%s686 + $0x3a0] sm:$0xff]
        %v2128 = vld [vmem:[%s686 + $0x3a8] sm:$0xff]
        %v2129 = vld [vmem:[%s686 + $0x3b0] sm:$0xff]
        %v2130 = vld [vmem:[%s686 + $0x3b8] sm:$0xff]
        %v2131 = vld [vmem:[%s686 + $0x3c0] sm:$0xff]
        %v2132 = vld [vmem:[%s686 + $0x3c8] sm:$0xff]
        %v2133 = vld [vmem:[%s686 + $0x3d0] sm:$0xff]
        %v2134 = vld [vmem:[%s686 + $0x3d8] sm:$0xff]
        %v2135 = vld [vmem:[%s686 + $0x3e0] sm:$0xff]
        %v2136 = vld [vmem:[%s686 + $0x3e8] sm:$0xff]
        %v2137 = vld [vmem:[%s686 + $0x3f0] sm:$0xff]
        %v2138 = vld [vmem:[%s686 + $0x3f8] sm:$0xff]
        %v2139 = vld [vmem:[%s686 + $0x400] sm:$0xff]
        %v2140 = vld [vmem:[%s686 + $0x408] sm:$0xff]
        %v2141 = vld [vmem:[%s686 + $0x410] sm:$0xff]
        %v2142 = vld [vmem:[%s686 + $0x418] sm:$0xff]
        %v2143 = vld [vmem:[%s686 + $0x420] sm:$0xff]
        %v2144 = vld [vmem:[%s686 + $0x428] sm:$0xff]
        %v2145 = vld [vmem:[%s686 + $0x430] sm:$0xff]
        %v2146 = vld [vmem:[%s686 + $0x438] sm:$0xff]
        %v2147 = vld [vmem:[%s686 + $0x440] sm:$0xff]
        %v2148 = vld [vmem:[%s686 + $0x448] sm:$0xff]
        %v2149 = vld [vmem:[%s686 + $0x450] sm:$0xff]
        %v2150 = vld [vmem:[%s686 + $0x458] sm:$0xff]
        %v2151 = vld [vmem:[%s686 + $0x460] sm:$0xff]
        %v2152 = vld [vmem:[%s686 + $0x468] sm:$0xff]
        %v2153 = vld [vmem:[%s686 + $0x470] sm:$0xff]
        %v2154 = vld [vmem:[%s686 + $0x478] sm:$0xff]
        %v2155 = vld [vmem:[%s686 + $0x480] sm:$0xff]
        %v2156 = vld [vmem:[%s686 + $0x488] sm:$0xff]
        %v2157 = vld [vmem:[%s686 + $0x490] sm:$0xff]
        %v2158 = vld [vmem:[%s686 + $0x498] sm:$0xff]
        %v2159 = vld [vmem:[%s686 + $0x4a0] sm:$0xff]
        %v2160 = vld [vmem:[%s686 + $0x4a8] sm:$0xff]
        %v2161 = vld [vmem:[%s686 + $0x4b0] sm:$0xff]
        %v2162 = vld [vmem:[%s686 + $0x4b8] sm:$0xff]
        %v2163 = vld [vmem:[%s686 + $0x4c0] sm:$0xff]
        %v2164 = vld [vmem:[%s686 + $0x4c8] sm:$0xff]
        %v2165 = vld [vmem:[%s686 + $0x4d0] sm:$0xff]
        %v2166 = vld [vmem:[%s686 + $0x4d8] sm:$0xff]
        %v2167 = vld [vmem:[%s686 + $0x4e0] sm:$0xff]
        %v2168 = vld [vmem:[%s686 + $0x4e8] sm:$0xff]
        %v2169 = vld [vmem:[%s686 + $0x4f0] sm:$0xff]
        %v2170 = vld [vmem:[%s686 + $0x4f8] sm:$0xff]
        %v2171 = vld [vmem:[%s686 + $0x500] sm:$0xff]
        %v2172 = vld [vmem:[%s686 + $0x508] sm:$0xff]
        %v2173 = vld [vmem:[%s686 + $0x510] sm:$0xff]
        %v2174 = vld [vmem:[%s686 + $0x518] sm:$0xff]
        %v2175 = vld [vmem:[%s686 + $0x520] sm:$0xff]
        %v2176 = vld [vmem:[%s686 + $0x528] sm:$0xff]
        %v2177 = vld [vmem:[%s686 + $0x530] sm:$0xff]
        %v2178 = vld [vmem:[%s686 + $0x538] sm:$0xff]
        %v2179 = vld [vmem:[%s686 + $0x540] sm:$0xff]
        %v2180 = vld [vmem:[%s686 + $0x548] sm:$0xff]
        %v2181 = vld [vmem:[%s686 + $0x550] sm:$0xff]
        %v2182 = vld [vmem:[%s686 + $0x558] sm:$0xff]
        %v2183 = vld [vmem:[%s686 + $0x560] sm:$0xff]
        %v2184 = vld [vmem:[%s686 + $0x568] sm:$0xff]
        %v2185 = vld [vmem:[%s686 + $0x570] sm:$0xff]
        %v2186 = vld [vmem:[%s686 + $0x578] sm:$0xff]
        %v2187 = vld [vmem:[%s686 + $0x580] sm:$0xff]
        %v2188 = vld [vmem:[%s686 + $0x588] sm:$0xff]
        %v2189 = vld [vmem:[%s686 + $0x590] sm:$0xff]
        %v2190 = vld [vmem:[%s686 + $0x598] sm:$0xff]
        %v2191 = vld [vmem:[%s686 + $0x5a0] sm:$0xff]
        %v2192 = vld [vmem:[%s686 + $0x5a8] sm:$0xff]
        %v2193 = vld [vmem:[%s686 + $0x5b0] sm:$0xff]
        %v2194 = vld [vmem:[%s686 + $0x5b8] sm:$0xff]
        %v2195 = vld [vmem:[%s686 + $0x5c0] sm:$0xff]
        %v2196 = vld [vmem:[%s686 + $0x5c8] sm:$0xff]
        %v2197 = vld [vmem:[%s686 + $0x5d0] sm:$0xff]
        %v2198 = vld [vmem:[%s686 + $0x5d8] sm:$0xff]
        %v2199 = vld [vmem:[%s686 + $0x5e0] sm:$0xff]
        %v2200 = vld [vmem:[%s686 + $0x5e8] sm:$0xff]
        %v2201 = vld [vmem:[%s686 + $0x5f0] sm:$0xff]
        %v2202 = vld [vmem:[%s686 + $0x5f8] sm:$0xff]
        %v2203 = vld [vmem:[%s686 + $0x600] sm:$0xff]
        %v2204 = vld [vmem:[%s686 + $0x608] sm:$0xff]
        %v2205 = vld [vmem:[%s686 + $0x610] sm:$0xff]
        %v2206 = vld [vmem:[%s686 + $0x618] sm:$0xff]
        %v2207 = vld [vmem:[%s686 + $0x620] sm:$0xff]
        %v2208 = vld [vmem:[%s686 + $0x628] sm:$0xff]
        %v2209 = vld [vmem:[%s686 + $0x630] sm:$0xff]
        %v2210 = vld [vmem:[%s686 + $0x638] sm:$0xff]
        %v2211 = vld [vmem:[%s686 + $0x640] sm:$0xff]
        %v2212 = vld [vmem:[%s686 + $0x648] sm:$0xff]
        %v2213 = vld [vmem:[%s686 + $0x650] sm:$0xff]
        %v2214 = vld [vmem:[%s686 + $0x658] sm:$0xff]
        %v2215 = vld [vmem:[%s686 + $0x660] sm:$0xff]
        %v2216 = vld [vmem:[%s686 + $0x668] sm:$0xff]
        %v2217 = vld [vmem:[%s686 + $0x670] sm:$0xff]
        %v2218 = vld [vmem:[%s686 + $0x678] sm:$0xff]
        %v2219 = vld [vmem:[%s686 + $0x680] sm:$0xff]
        %v2220 = vld [vmem:[%s686 + $0x688] sm:$0xff]
        %v2221 = vld [vmem:[%s686 + $0x690] sm:$0xff]
        %v2222 = vld [vmem:[%s686 + $0x698] sm:$0xff]
        %v2223 = vld [vmem:[%s686 + $0x6a0] sm:$0xff]
        %v2224 = vld [vmem:[%s686 + $0x6a8] sm:$0xff]
        %v2225 = vld [vmem:[%s686 + $0x6b0] sm:$0xff]
        %v2226 = vld [vmem:[%s686 + $0x6b8] sm:$0xff]
        %v2227 = vld [vmem:[%s686 + $0x6c0] sm:$0xff]
        %v2228 = vld [vmem:[%s686 + $0x6c8] sm:$0xff]
        %v2229 = vld [vmem:[%s686 + $0x6d0] sm:$0xff]
        %v2230 = vld [vmem:[%s686 + $0x6d8] sm:$0xff]
        %v2231 = vld [vmem:[%s686 + $0x6e0] sm:$0xff]
        %v2232 = vld [vmem:[%s686 + $0x6e8] sm:$0xff]
        %v2233 = vld [vmem:[%s686 + $0x6f0] sm:$0xff]
        %v2234 = vld [vmem:[%s686 + $0x6f8] sm:$0xff]
        %v2235 = vld [vmem:[%s686 + $0x700] sm:$0xff]
        %v2236 = vld [vmem:[%s686 + $0x708] sm:$0xff]
        %v2237 = vld [vmem:[%s686 + $0x710] sm:$0xff]
        %v2238 = vld [vmem:[%s686 + $0x718] sm:$0xff]
        %v2239 = vld [vmem:[%s686 + $0x720] sm:$0xff]
        %v2240 = vld [vmem:[%s686 + $0x728] sm:$0xff]
        %v2241 = vld [vmem:[%s686 + $0x730] sm:$0xff]
        %v2242 = vld [vmem:[%s686 + $0x738] sm:$0xff]
        %v2243 = vld [vmem:[%s686 + $0x740] sm:$0xff]
        %v2244 = vld [vmem:[%s686 + $0x748] sm:$0xff]
        %v2245 = vld [vmem:[%s686 + $0x750] sm:$0xff]
        %v2246 = vld [vmem:[%s686 + $0x758] sm:$0xff]
        %v2247 = vld [vmem:[%s686 + $0x760] sm:$0xff]
        %v2248 = vld [vmem:[%s686 + $0x768] sm:$0xff]
        %v2249 = vld [vmem:[%s686 + $0x770] sm:$0xff]
        %v2250 = vld [vmem:[%s686 + $0x778] sm:$0xff]
        %v2251 = vld [vmem:[%s686 + $0x780] sm:$0xff]
        %v2252 = vld [vmem:[%s686 + $0x788] sm:$0xff]
        %v2253 = vld [vmem:[%s686 + $0x790] sm:$0xff]
        %v2254 = vld [vmem:[%s686 + $0x798] sm:$0xff]
        %v2255 = vld [vmem:[%s686 + $0x7a0] sm:$0xff]
        %v2256 = vld [vmem:[%s686 + $0x7a8] sm:$0xff]
        %v2257 = vld [vmem:[%s686 + $0x7b0] sm:$0xff]
        %v2258 = vld [vmem:[%s686 + $0x7b8] sm:$0xff]
        %v2259 = vld [vmem:[%s686 + $0x7c0] sm:$0xff]
        %v2260 = vld [vmem:[%s686 + $0x7c8] sm:$0xff]
        %v2261 = vld [vmem:[%s686 + $0x7d0] sm:$0xff]
        %v2262 = vld [vmem:[%s686 + $0x7d8] sm:$0xff]
        %v2263 = vld [vmem:[%s686 + $0x7e0] sm:$0xff]
        %v2264 = vld [vmem:[%s686 + $0x7e8] sm:$0xff]
        %v2265 = vld [vmem:[%s686 + $0x7f0] sm:$0xff]
        %v2266 = vld [vmem:[%s686 + $0x7f8] sm:$0xff]
        %v2267 = vld [vmem:[%s686 + $0x800] sm:$0xff]
        %v2268 = vld [vmem:[%s686 + $0x808] sm:$0xff]
        %v2269 = vld [vmem:[%s686 + $0x810] sm:$0xff]
        %v2270 = vld [vmem:[%s686 + $0x818] sm:$0xff]
        %v2271 = vld [vmem:[%s686 + $0x820] sm:$0xff]
        %v2272 = vld [vmem:[%s686 + $0x828] sm:$0xff]
        %v2273 = vld [vmem:[%s686 + $0x830] sm:$0xff]
        %v2274 = vld [vmem:[%s686 + $0x838] sm:$0xff]
        %v2275 = vld [vmem:[%s686 + $0x840] sm:$0xff]
        %v2276 = vld [vmem:[%s686 + $0x848] sm:$0xff]
        %v2277 = vld [vmem:[%s686 + $0x850] sm:$0xff]
        %v2278 = vld [vmem:[%s686 + $0x858] sm:$0xff]
        %v2279 = vld [vmem:[%s686 + $0x860] sm:$0xff]
        %v2280 = vld [vmem:[%s686 + $0x868] sm:$0xff]
        %v2281 = vld [vmem:[%s686 + $0x870] sm:$0xff]
        %v2282 = vld [vmem:[%s686 + $0x878] sm:$0xff]
        %v2283 = vld [vmem:[%s686 + $0x880] sm:$0xff]
        %v2284 = vld [vmem:[%s686 + $0x888] sm:$0xff]
        %v2285 = vld [vmem:[%s686 + $0x890] sm:$0xff]
        %v2286 = vld [vmem:[%s686 + $0x898] sm:$0xff]
        %v2287 = vld [vmem:[%s686 + $0x8a0] sm:$0xff]
        %v2288 = vld [vmem:[%s686 + $0x8a8] sm:$0xff]
        %v2289 = vld [vmem:[%s686 + $0x8b0] sm:$0xff]
        %v2290 = vld [vmem:[%s686 + $0x8b8] sm:$0xff]
        %v2291 = vld [vmem:[%s686 + $0x8c0] sm:$0xff]
        %v2292 = vld [vmem:[%s686 + $0x8c8] sm:$0xff]
        %v2293 = vld [vmem:[%s686 + $0x8d0] sm:$0xff]
        %v2294 = vld [vmem:[%s686 + $0x8d8] sm:$0xff]
        %v2295 = vld [vmem:[%s686 + $0x8e0] sm:$0xff]
        %v2296 = vld [vmem:[%s686 + $0x8e8] sm:$0xff]
        %v2297 = vld [vmem:[%s686 + $0x8f0] sm:$0xff]
        %v2298 = vld [vmem:[%s686 + $0x8f8] sm:$0xff]
        %v2299 = vld [vmem:[%s686 + $0x900] sm:$0xff]
        %v2300 = vld [vmem:[%s686 + $0x908] sm:$0xff]
        %v2301 = vld [vmem:[%s686 + $0x910] sm:$0xff]
        %v2302 = vld [vmem:[%s686 + $0x918] sm:$0xff]
        %v2303 = vld [vmem:[%s686 + $0x920] sm:$0xff]
        %v2304 = vld [vmem:[%s686 + $0x928] sm:$0xff]
        %v2305 = vld [vmem:[%s686 + $0x930] sm:$0xff]
        %v2306 = vld [vmem:[%s686 + $0x938] sm:$0xff]
        %v2307 = vld [vmem:[%s686 + $0x940] sm:$0xff]
        %v2308 = vld [vmem:[%s686 + $0x948] sm:$0xff]
        %v2309 = vld [vmem:[%s686 + $0x950] sm:$0xff]
        %v2310 = vld [vmem:[%s686 + $0x958] sm:$0xff]
        %v2311 = vld [vmem:[%s686 + $0x960] sm:$0xff]
        %v2312 = vld [vmem:[%s686 + $0x968] sm:$0xff]
        %v2313 = vld [vmem:[%s686 + $0x970] sm:$0xff]
        %v2314 = vld [vmem:[%s686 + $0x978] sm:$0xff]
        %v2315 = vld [vmem:[%s686 + $0x980] sm:$0xff]
        %v2316 = vld [vmem:[%s686 + $0x988] sm:$0xff]
        %v2317 = vld [vmem:[%s686 + $0x990] sm:$0xff]
        %v2318 = vld [vmem:[%s686 + $0x998] sm:$0xff]
        %v2319 = vld [vmem:[%s686 + $0x9a0] sm:$0xff]
        %v2320 = vld [vmem:[%s686 + $0x9a8] sm:$0xff]
        %v2321 = vld [vmem:[%s686 + $0x9b0] sm:$0xff]
        %v2322 = vld [vmem:[%s686 + $0x9b8] sm:$0xff]
        %v2323 = vld [vmem:[%s686 + $0x9c0] sm:$0xff]
        %v2324 = vld [vmem:[%s686 + $0x9c8] sm:$0xff]
        %v2325 = vld [vmem:[%s686 + $0x9d0] sm:$0xff]
        %v2326 = vld [vmem:[%s686 + $0x9d8] sm:$0xff]
        %v2327 = vld [vmem:[%s686 + $0x9e0] sm:$0xff]
        %v2328 = vld [vmem:[%s686 + $0x9e8] sm:$0xff]
        %v2329 = vld [vmem:[%s686 + $0x9f0] sm:$0xff]
        %v2330 = vld [vmem:[%s686 + $0x9f8] sm:$0xff]
        %v2331 = vld [vmem:[%s695] sm:$0xff]
        %v2333 = vlaneseq
        %v2334 = vshrl.u32 %v2333, 7
        %v2335 = vsub.s32 0, %v2334
        %v2336 = vrot.slane %v2331, %v2335
        %v2337 = vlaneseq
        %v2338 = vshrl.u32 %v2337, 7
        %v2339 = vsub.s32 1, %v2338
        %v2340 = vrot.slane %v2331, %v2339
        %v2341 = vlaneseq
        %v2342 = vshrl.u32 %v2341, 7
        %v2343 = vsub.s32 2, %v2342
        %v2344 = vrot.slane %v2331, %v2343
        %v2345 = vlaneseq
        %v2346 = vshrl.u32 %v2345, 7
        %v2347 = vsub.s32 3, %v2346
        %v2348 = vrot.slane %v2331, %v2347
        %v2349 = vlaneseq
        %v2350 = vshrl.u32 %v2349, 7
        %v2351 = vsub.s32 4, %v2350
        %v2352 = vrot.slane %v2331, %v2351
        %v2353 = vlaneseq
        %v2354 = vshrl.u32 %v2353, 7
        %v2355 = vsub.s32 5, %v2354
        %v2356 = vrot.slane %v2331, %v2355
        %v2357 = vlaneseq
        %v2358 = vshrl.u32 %v2357, 7
        %v2359 = vsub.s32 6, %v2358
        %v2360 = vrot.slane %v2331, %v2359
        %v2361 = vlaneseq
        %v2362 = vshrl.u32 %v2361, 7
        %v2363 = vsub.s32 7, %v2362
        %v2364 = vrot.slane %v2331, %v2363
        %v2374 = vcombine.high %v2010, %v2010
        %v2376 = vunpack.c.l.s4 1966171168
        %v2377 = vunpack.c.0.s8 %v2376
        %v2378 = vlaneseq
        %v2379 = vshrl.u32 %v2378, 7
        %v2380 = vsub.s32 %v2377, %v2379
        %v2381 = vrot.slane %v2010, %v2380
        %v2383 = vunpack.c.l.s4 1966171168
        %v2384 = vunpack.c.0.s8 %v2383
        %v2385 = vlaneseq
        %v2386 = vshrl.u32 %v2385, 7
        %v2387 = vsub.s32 %v2384, %v2386
        %v2388 = vrot.slane %v2374, %v2387
        %v2389 = vcombine.high %v2381, %v2381
        %v2391 = vunpack.c.l.s4 1966171168
        %v2392 = vunpack.c.0.s8 %v2391
        %v2393 = vlaneseq
        %v2394 = vshrl.u32 %v2393, 7
        %v2395 = vsub.s32 %v2392, %v2394
        %v2396 = vrot.slane %v2381, %v2395
        %v2398 = vunpack.c.l.s4 1966171168
        %v2399 = vunpack.c.0.s8 %v2398
        %v2400 = vlaneseq
        %v2401 = vshrl.u32 %v2400, 7
        %v2402 = vsub.s32 %v2399, %v2401
        %v2403 = vrot.slane %v2388, %v2402
        %v2405 = vunpack.c.l.s4 1966171168
        %v2406 = vunpack.c.0.s8 %v2405
        %v2407 = vlaneseq
        %v2408 = vshrl.u32 %v2407, 7
        %v2409 = vsub.s32 %v2406, %v2408
        %v2410 = vrot.slane %v2389, %v2409
        %v2411 = vcombine.high %v2396, %v2396
        %v2412 = vcombine.high %v2410, %v2410
        %v2738 = vunpack.c.l.b16 %v2011
        %v2739 = vunpack.c.h.b16 %v2011
        %v2740 = vunpack.c.l.b16 %v2012
        %v2741 = vunpack.c.h.b16 %v2012
        %v2742 = vunpack.c.l.b16 %v2013
        %v2743 = vunpack.c.h.b16 %v2013
        %v2744 = vunpack.c.l.b16 %v2014
        %v2745 = vunpack.c.h.b16 %v2014
        %v2746 = vunpack.c.l.b16 %v2015
        %v2747 = vunpack.c.h.b16 %v2015
        %v2748 = vunpack.c.l.b16 %v2016
        %v2749 = vunpack.c.h.b16 %v2016
        %v2750 = vunpack.c.l.b16 %v2017
        %v2751 = vunpack.c.h.b16 %v2017
        %v2752 = vunpack.c.l.b16 %v2018
        %v2753 = vunpack.c.h.b16 %v2018
        %v2754 = vunpack.c.l.b16 %v2019
        %v2755 = vunpack.c.h.b16 %v2019
        %v2756 = vunpack.c.l.b16 %v2020
        %v2757 = vunpack.c.h.b16 %v2020
        %v2758 = vunpack.c.l.b16 %v2021
        %v2759 = vunpack.c.h.b16 %v2021
        %v2760 = vunpack.c.l.b16 %v2022
        %v2761 = vunpack.c.h.b16 %v2022
        %v2762 = vunpack.c.l.b16 %v2023
        %v2763 = vunpack.c.h.b16 %v2023
        %v2764 = vunpack.c.l.b16 %v2024
        %v2765 = vunpack.c.h.b16 %v2024
        %v2766 = vunpack.c.l.b16 %v2025
        %v2767 = vunpack.c.h.b16 %v2025
        %v2768 = vunpack.c.l.b16 %v2026
        %v2769 = vunpack.c.h.b16 %v2026
        %v2770 = vunpack.c.l.b16 %v2027
        %v2771 = vunpack.c.h.b16 %v2027
        %v2772 = vunpack.c.l.b16 %v2028
        %v2773 = vunpack.c.h.b16 %v2028
        %v2774 = vunpack.c.l.b16 %v2029
        %v2775 = vunpack.c.h.b16 %v2029
        %v2776 = vunpack.c.l.b16 %v2030
        %v2777 = vunpack.c.h.b16 %v2030
        %v2778 = vunpack.c.l.b16 %v2031
        %v2779 = vunpack.c.h.b16 %v2031
        %v2780 = vunpack.c.l.b16 %v2032
        %v2781 = vunpack.c.h.b16 %v2032
        %v2782 = vunpack.c.l.b16 %v2033
        %v2783 = vunpack.c.h.b16 %v2033
        %v2784 = vunpack.c.l.b16 %v2034
        %v2785 = vunpack.c.h.b16 %v2034
        %v2786 = vunpack.c.l.b16 %v2035
        %v2787 = vunpack.c.h.b16 %v2035
        %v2788 = vunpack.c.l.b16 %v2036
        %v2789 = vunpack.c.h.b16 %v2036
        %v2790 = vunpack.c.l.b16 %v2037
        %v2791 = vunpack.c.h.b16 %v2037
        %v2792 = vunpack.c.l.b16 %v2038
        %v2793 = vunpack.c.h.b16 %v2038
        %v2794 = vunpack.c.l.b16 %v2039
        %v2795 = vunpack.c.h.b16 %v2039
        %v2796 = vunpack.c.l.b16 %v2040
        %v2797 = vunpack.c.h.b16 %v2040
        %v2798 = vunpack.c.l.b16 %v2041
        %v2799 = vunpack.c.h.b16 %v2041
        %v2800 = vunpack.c.l.b16 %v2042
        %v2801 = vunpack.c.h.b16 %v2042
        %v2802 = vunpack.c.l.b16 %v2043
        %v2803 = vunpack.c.h.b16 %v2043
        %v2804 = vunpack.c.l.b16 %v2044
        %v2805 = vunpack.c.h.b16 %v2044
        %v2806 = vunpack.c.l.b16 %v2045
        %v2807 = vunpack.c.h.b16 %v2045
        %v2808 = vunpack.c.l.b16 %v2046
        %v2809 = vunpack.c.h.b16 %v2046
        %v2810 = vunpack.c.l.b16 %v2047
        %v2811 = vunpack.c.h.b16 %v2047
        %v2812 = vunpack.c.l.b16 %v2048
        %v2813 = vunpack.c.h.b16 %v2048
        %v2814 = vunpack.c.l.b16 %v2049
        %v2815 = vunpack.c.h.b16 %v2049
        %v2816 = vunpack.c.l.b16 %v2050
        %v2817 = vunpack.c.h.b16 %v2050
        %v2818 = vunpack.c.l.b16 %v2051
        %v2819 = vunpack.c.h.b16 %v2051
        %v2820 = vunpack.c.l.b16 %v2052
        %v2821 = vunpack.c.h.b16 %v2052
        %v2822 = vunpack.c.l.b16 %v2053
        %v2823 = vunpack.c.h.b16 %v2053
        %v2824 = vunpack.c.l.b16 %v2054
        %v2825 = vunpack.c.h.b16 %v2054
        %v2826 = vunpack.c.l.b16 %v2055
        %v2827 = vunpack.c.h.b16 %v2055
        %v2828 = vunpack.c.l.b16 %v2056
        %v2829 = vunpack.c.h.b16 %v2056
        %v2830 = vunpack.c.l.b16 %v2057
        %v2831 = vunpack.c.h.b16 %v2057
        %v2832 = vunpack.c.l.b16 %v2058
        %v2833 = vunpack.c.h.b16 %v2058
        %v2834 = vunpack.c.l.b16 %v2059
        %v2835 = vunpack.c.h.b16 %v2059
        %v2836 = vunpack.c.l.b16 %v2060
        %v2837 = vunpack.c.h.b16 %v2060
        %v2838 = vunpack.c.l.b16 %v2061
        %v2839 = vunpack.c.h.b16 %v2061
        %v2840 = vunpack.c.l.b16 %v2062
        %v2841 = vunpack.c.h.b16 %v2062
        %v2842 = vunpack.c.l.b16 %v2063
        %v2843 = vunpack.c.h.b16 %v2063
        %v2844 = vunpack.c.l.b16 %v2064
        %v2845 = vunpack.c.h.b16 %v2064
        %v2846 = vunpack.c.l.b16 %v2065
        %v2847 = vunpack.c.h.b16 %v2065
        %v2848 = vunpack.c.l.b16 %v2066
        %v2849 = vunpack.c.h.b16 %v2066
        %v2850 = vunpack.c.l.b16 %v2067
        %v2851 = vunpack.c.h.b16 %v2067
        %v2852 = vunpack.c.l.b16 %v2068
        %v2853 = vunpack.c.h.b16 %v2068
        %v2854 = vunpack.c.l.b16 %v2069
        %v2855 = vunpack.c.h.b16 %v2069
        %v2856 = vunpack.c.l.b16 %v2070
        %v2857 = vunpack.c.h.b16 %v2070
        %v2858 = vunpack.c.l.b16 %v2071
        %v2859 = vunpack.c.h.b16 %v2071
        %v2860 = vunpack.c.l.b16 %v2072
        %v2861 = vunpack.c.h.b16 %v2072
        %v2862 = vunpack.c.l.b16 %v2073
        %v2863 = vunpack.c.h.b16 %v2073
        %v2864 = vunpack.c.l.b16 %v2074
        %v2865 = vunpack.c.h.b16 %v2074
        %v2866 = vunpack.c.l.b16 %v2075
        %v2867 = vunpack.c.h.b16 %v2075
        %v2868 = vunpack.c.l.b16 %v2076
        %v2869 = vunpack.c.h.b16 %v2076
        %v2870 = vunpack.c.l.b16 %v2077
        %v2871 = vunpack.c.h.b16 %v2077
        %v2872 = vunpack.c.l.b16 %v2078
        %v2873 = vunpack.c.h.b16 %v2078
        %v2874 = vunpack.c.l.b16 %v2079
        %v2875 = vunpack.c.h.b16 %v2079
        %v2876 = vunpack.c.l.b16 %v2080
        %v2877 = vunpack.c.h.b16 %v2080
        %v2878 = vunpack.c.l.b16 %v2081
        %v2879 = vunpack.c.h.b16 %v2081
        %v2880 = vunpack.c.l.b16 %v2082
        %v2881 = vunpack.c.h.b16 %v2082
        %v2882 = vunpack.c.l.b16 %v2083
        %v2883 = vunpack.c.h.b16 %v2083
        %v2884 = vunpack.c.l.b16 %v2084
        %v2885 = vunpack.c.h.b16 %v2084
        %v2886 = vunpack.c.l.b16 %v2085
        %v2887 = vunpack.c.h.b16 %v2085
        %v2888 = vunpack.c.l.b16 %v2086
        %v2889 = vunpack.c.h.b16 %v2086
        %v2890 = vunpack.c.l.b16 %v2087
        %v2891 = vunpack.c.h.b16 %v2087
        %v2892 = vunpack.c.l.b16 %v2088
        %v2893 = vunpack.c.h.b16 %v2088
        %v2894 = vunpack.c.l.b16 %v2089
        %v2895 = vunpack.c.h.b16 %v2089
        %v2896 = vunpack.c.l.b16 %v2090
        %v2897 = vunpack.c.h.b16 %v2090
        %v2898 = vunpack.c.l.b16 %v2091
        %v2899 = vunpack.c.h.b16 %v2091
        %v2900 = vunpack.c.l.b16 %v2092
        %v2901 = vunpack.c.h.b16 %v2092
        %v2902 = vunpack.c.l.b16 %v2093
        %v2903 = vunpack.c.h.b16 %v2093
        %v2904 = vunpack.c.l.b16 %v2094
        %v2905 = vunpack.c.h.b16 %v2094
        %v2906 = vunpack.c.l.b16 %v2095
        %v2907 = vunpack.c.h.b16 %v2095
        %v2908 = vunpack.c.l.b16 %v2096
        %v2909 = vunpack.c.h.b16 %v2096
        %v2910 = vunpack.c.l.b16 %v2097
        %v2911 = vunpack.c.h.b16 %v2097
        %v2912 = vunpack.c.l.b16 %v2098
        %v2913 = vunpack.c.h.b16 %v2098
        %v2914 = vunpack.c.l.b16 %v2099
        %v2915 = vunpack.c.h.b16 %v2099
        %v2916 = vunpack.c.l.b16 %v2100
        %v2917 = vunpack.c.h.b16 %v2100
        %v2918 = vunpack.c.l.b16 %v2101
        %v2919 = vunpack.c.h.b16 %v2101
        %v2920 = vunpack.c.l.b16 %v2102
        %v2921 = vunpack.c.h.b16 %v2102
        %v2922 = vunpack.c.l.b16 %v2103
        %v2923 = vunpack.c.h.b16 %v2103
        %v2924 = vunpack.c.l.b16 %v2104
        %v2925 = vunpack.c.h.b16 %v2104
        %v2926 = vunpack.c.l.b16 %v2105
        %v2927 = vunpack.c.h.b16 %v2105
        %v2928 = vunpack.c.l.b16 %v2106
        %v2929 = vunpack.c.h.b16 %v2106
        %v2930 = vunpack.c.l.b16 %v2107
        %v2931 = vunpack.c.h.b16 %v2107
        %v2932 = vunpack.c.l.b16 %v2108
        %v2933 = vunpack.c.h.b16 %v2108
        %v2934 = vunpack.c.l.b16 %v2109
        %v2935 = vunpack.c.h.b16 %v2109
        %v2936 = vunpack.c.l.b16 %v2110
        %v2937 = vunpack.c.h.b16 %v2110
        %v2938 = vunpack.c.l.b16 %v2111
        %v2939 = vunpack.c.h.b16 %v2111
        %v2940 = vunpack.c.l.b16 %v2112
        %v2941 = vunpack.c.h.b16 %v2112
        %v2942 = vunpack.c.l.b16 %v2113
        %v2943 = vunpack.c.h.b16 %v2113
        %v2944 = vunpack.c.l.b16 %v2114
        %v2945 = vunpack.c.h.b16 %v2114
        %v2946 = vunpack.c.l.b16 %v2115
        %v2947 = vunpack.c.h.b16 %v2115
        %v2948 = vunpack.c.l.b16 %v2116
        %v2949 = vunpack.c.h.b16 %v2116
        %v2950 = vunpack.c.l.b16 %v2117
        %v2951 = vunpack.c.h.b16 %v2117
        %v2952 = vunpack.c.l.b16 %v2118
        %v2953 = vunpack.c.h.b16 %v2118
        %v2954 = vunpack.c.l.b16 %v2119
        %v2955 = vunpack.c.h.b16 %v2119
        %v2956 = vunpack.c.l.b16 %v2120
        %v2957 = vunpack.c.h.b16 %v2120
        %v2958 = vunpack.c.l.b16 %v2121
        %v2959 = vunpack.c.h.b16 %v2121
        %v2960 = vunpack.c.l.b16 %v2122
        %v2961 = vunpack.c.h.b16 %v2122
        %v2962 = vunpack.c.l.b16 %v2123
        %v2963 = vunpack.c.h.b16 %v2123
        %v2964 = vunpack.c.l.b16 %v2124
        %v2965 = vunpack.c.h.b16 %v2124
        %v2966 = vunpack.c.l.b16 %v2125
        %v2967 = vunpack.c.h.b16 %v2125
        %v2968 = vunpack.c.l.b16 %v2126
        %v2969 = vunpack.c.h.b16 %v2126
        %v2970 = vunpack.c.l.b16 %v2127
        %v2971 = vunpack.c.h.b16 %v2127
        %v2972 = vunpack.c.l.b16 %v2128
        %v2973 = vunpack.c.h.b16 %v2128
        %v2974 = vunpack.c.l.b16 %v2129
        %v2975 = vunpack.c.h.b16 %v2129
        %v2976 = vunpack.c.l.b16 %v2130
        %v2977 = vunpack.c.h.b16 %v2130
        %v2978 = vunpack.c.l.b16 %v2131
        %v2979 = vunpack.c.h.b16 %v2131
        %v2980 = vunpack.c.l.b16 %v2132
        %v2981 = vunpack.c.h.b16 %v2132
        %v2982 = vunpack.c.l.b16 %v2133
        %v2983 = vunpack.c.h.b16 %v2133
        %v2984 = vunpack.c.l.b16 %v2134
        %v2985 = vunpack.c.h.b16 %v2134
        %v2986 = vunpack.c.l.b16 %v2135
        %v2987 = vunpack.c.h.b16 %v2135
        %v2988 = vunpack.c.l.b16 %v2136
        %v2989 = vunpack.c.h.b16 %v2136
        %v2990 = vunpack.c.l.b16 %v2137
        %v2991 = vunpack.c.h.b16 %v2137
        %v2992 = vunpack.c.l.b16 %v2138
        %v2993 = vunpack.c.h.b16 %v2138
        %v2994 = vunpack.c.l.b16 %v2139
        %v2995 = vunpack.c.h.b16 %v2139
        %v2996 = vunpack.c.l.b16 %v2140
        %v2997 = vunpack.c.h.b16 %v2140
        %v2998 = vunpack.c.l.b16 %v2141
        %v2999 = vunpack.c.h.b16 %v2141
        %v3000 = vunpack.c.l.b16 %v2142
        %v3001 = vunpack.c.h.b16 %v2142
        %v3002 = vunpack.c.l.b16 %v2143
        %v3003 = vunpack.c.h.b16 %v2143
        %v3004 = vunpack.c.l.b16 %v2144
        %v3005 = vunpack.c.h.b16 %v2144
        %v3006 = vunpack.c.l.b16 %v2145
        %v3007 = vunpack.c.h.b16 %v2145
        %v3008 = vunpack.c.l.b16 %v2146
        %v3009 = vunpack.c.h.b16 %v2146
        %v3010 = vunpack.c.l.b16 %v2147
        %v3011 = vunpack.c.h.b16 %v2147
        %v3012 = vunpack.c.l.b16 %v2148
        %v3013 = vunpack.c.h.b16 %v2148
        %v3014 = vunpack.c.l.b16 %v2149
        %v3015 = vunpack.c.h.b16 %v2149
        %v3016 = vunpack.c.l.b16 %v2150
        %v3017 = vunpack.c.h.b16 %v2150
        %v3018 = vunpack.c.l.b16 %v2151
        %v3019 = vunpack.c.h.b16 %v2151
        %v3020 = vunpack.c.l.b16 %v2152
        %v3021 = vunpack.c.h.b16 %v2152
        %v3022 = vunpack.c.l.b16 %v2153
        %v3023 = vunpack.c.h.b16 %v2153
        %v3024 = vunpack.c.l.b16 %v2154
        %v3025 = vunpack.c.h.b16 %v2154
        %v3026 = vunpack.c.l.b16 %v2155
        %v3027 = vunpack.c.h.b16 %v2155
        %v3028 = vunpack.c.l.b16 %v2156
        %v3029 = vunpack.c.h.b16 %v2156
        %v3030 = vunpack.c.l.b16 %v2157
        %v3031 = vunpack.c.h.b16 %v2157
        %v3032 = vunpack.c.l.b16 %v2158
        %v3033 = vunpack.c.h.b16 %v2158
        %v3034 = vunpack.c.l.b16 %v2159
        %v3035 = vunpack.c.h.b16 %v2159
        %v3036 = vunpack.c.l.b16 %v2160
        %v3037 = vunpack.c.h.b16 %v2160
        %v3038 = vunpack.c.l.b16 %v2161
        %v3039 = vunpack.c.h.b16 %v2161
        %v3040 = vunpack.c.l.b16 %v2162
        %v3041 = vunpack.c.h.b16 %v2162
        %v3042 = vunpack.c.l.b16 %v2163
        %v3043 = vunpack.c.h.b16 %v2163
        %v3044 = vunpack.c.l.b16 %v2164
        %v3045 = vunpack.c.h.b16 %v2164
        %v3046 = vunpack.c.l.b16 %v2165
        %v3047 = vunpack.c.h.b16 %v2165
        %v3048 = vunpack.c.l.b16 %v2166
        %v3049 = vunpack.c.h.b16 %v2166
        %v3050 = vunpack.c.l.b16 %v2167
        %v3051 = vunpack.c.h.b16 %v2167
        %v3052 = vunpack.c.l.b16 %v2168
        %v3053 = vunpack.c.h.b16 %v2168
        %v3054 = vunpack.c.l.b16 %v2169
        %v3055 = vunpack.c.h.b16 %v2169
        %v3056 = vunpack.c.l.b16 %v2170
        %v3057 = vunpack.c.h.b16 %v2170
        %v3058 = vunpack.c.l.b16 %v2171
        %v3059 = vunpack.c.h.b16 %v2171
        %v3060 = vunpack.c.l.b16 %v2172
        %v3061 = vunpack.c.h.b16 %v2172
        %v3062 = vunpack.c.l.b16 %v2173
        %v3063 = vunpack.c.h.b16 %v2173
        %v3064 = vunpack.c.l.b16 %v2174
        %v3065 = vunpack.c.h.b16 %v2174
        %v3066 = vunpack.c.l.b16 %v2175
        %v3067 = vunpack.c.h.b16 %v2175
        %v3068 = vunpack.c.l.b16 %v2176
        %v3069 = vunpack.c.h.b16 %v2176
        %v3070 = vunpack.c.l.b16 %v2177
        %v3071 = vunpack.c.h.b16 %v2177
        %v3072 = vunpack.c.l.b16 %v2178
        %v3073 = vunpack.c.h.b16 %v2178
        %v3074 = vunpack.c.l.b16 %v2179
        %v3075 = vunpack.c.h.b16 %v2179
        %v3076 = vunpack.c.l.b16 %v2180
        %v3077 = vunpack.c.h.b16 %v2180
        %v3078 = vunpack.c.l.b16 %v2181
        %v3079 = vunpack.c.h.b16 %v2181
        %v3080 = vunpack.c.l.b16 %v2182
        %v3081 = vunpack.c.h.b16 %v2182
        %v3082 = vunpack.c.l.b16 %v2183
        %v3083 = vunpack.c.h.b16 %v2183
        %v3084 = vunpack.c.l.b16 %v2184
        %v3085 = vunpack.c.h.b16 %v2184
        %v3086 = vunpack.c.l.b16 %v2185
        %v3087 = vunpack.c.h.b16 %v2185
        %v3088 = vunpack.c.l.b16 %v2186
        %v3089 = vunpack.c.h.b16 %v2186
        %v3090 = vunpack.c.l.b16 %v2187
        %v3091 = vunpack.c.h.b16 %v2187
        %v3092 = vunpack.c.l.b16 %v2188
        %v3093 = vunpack.c.h.b16 %v2188
        %v3094 = vunpack.c.l.b16 %v2189
        %v3095 = vunpack.c.h.b16 %v2189
        %v3096 = vunpack.c.l.b16 %v2190
        %v3097 = vunpack.c.h.b16 %v2190
        %v3098 = vunpack.c.l.b16 %v2191
        %v3099 = vunpack.c.h.b16 %v2191
        %v3100 = vunpack.c.l.b16 %v2192
        %v3101 = vunpack.c.h.b16 %v2192
        %v3102 = vunpack.c.l.b16 %v2193
        %v3103 = vunpack.c.h.b16 %v2193
        %v3104 = vunpack.c.l.b16 %v2194
        %v3105 = vunpack.c.h.b16 %v2194
        %v3106 = vunpack.c.l.b16 %v2195
        %v3107 = vunpack.c.h.b16 %v2195
        %v3108 = vunpack.c.l.b16 %v2196
        %v3109 = vunpack.c.h.b16 %v2196
        %v3110 = vunpack.c.l.b16 %v2197
        %v3111 = vunpack.c.h.b16 %v2197
        %v3112 = vunpack.c.l.b16 %v2198
        %v3113 = vunpack.c.h.b16 %v2198
        %v3114 = vunpack.c.l.b16 %v2199
        %v3115 = vunpack.c.h.b16 %v2199
        %v3116 = vunpack.c.l.b16 %v2200
        %v3117 = vunpack.c.h.b16 %v2200
        %v3118 = vunpack.c.l.b16 %v2201
        %v3119 = vunpack.c.h.b16 %v2201
        %v3120 = vunpack.c.l.b16 %v2202
        %v3121 = vunpack.c.h.b16 %v2202
        %v3122 = vunpack.c.l.b16 %v2203
        %v3123 = vunpack.c.h.b16 %v2203
        %v3124 = vunpack.c.l.b16 %v2204
        %v3125 = vunpack.c.h.b16 %v2204
        %v3126 = vunpack.c.l.b16 %v2205
        %v3127 = vunpack.c.h.b16 %v2205
        %v3128 = vunpack.c.l.b16 %v2206
        %v3129 = vunpack.c.h.b16 %v2206
        %v3130 = vunpack.c.l.b16 %v2207
        %v3131 = vunpack.c.h.b16 %v2207
        %v3132 = vunpack.c.l.b16 %v2208
        %v3133 = vunpack.c.h.b16 %v2208
        %v3134 = vunpack.c.l.b16 %v2209
        %v3135 = vunpack.c.h.b16 %v2209
        %v3136 = vunpack.c.l.b16 %v2210
        %v3137 = vunpack.c.h.b16 %v2210
        %v3138 = vunpack.c.l.b16 %v2211
        %v3139 = vunpack.c.h.b16 %v2211
        %v3140 = vunpack.c.l.b16 %v2212
        %v3141 = vunpack.c.h.b16 %v2212
        %v3142 = vunpack.c.l.b16 %v2213
        %v3143 = vunpack.c.h.b16 %v2213
        %v3144 = vunpack.c.l.b16 %v2214
        %v3145 = vunpack.c.h.b16 %v2214
        %v3146 = vunpack.c.l.b16 %v2215
        %v3147 = vunpack.c.h.b16 %v2215
        %v3148 = vunpack.c.l.b16 %v2216
        %v3149 = vunpack.c.h.b16 %v2216
        %v3150 = vunpack.c.l.b16 %v2217
        %v3151 = vunpack.c.h.b16 %v2217
        %v3152 = vunpack.c.l.b16 %v2218
        %v3153 = vunpack.c.h.b16 %v2218
        %v3154 = vunpack.c.l.b16 %v2219
        %v3155 = vunpack.c.h.b16 %v2219
        %v3156 = vunpack.c.l.b16 %v2220
        %v3157 = vunpack.c.h.b16 %v2220
        %v3158 = vunpack.c.l.b16 %v2221
        %v3159 = vunpack.c.h.b16 %v2221
        %v3160 = vunpack.c.l.b16 %v2222
        %v3161 = vunpack.c.h.b16 %v2222
        %v3162 = vunpack.c.l.b16 %v2223
        %v3163 = vunpack.c.h.b16 %v2223
        %v3164 = vunpack.c.l.b16 %v2224
        %v3165 = vunpack.c.h.b16 %v2224
        %v3166 = vunpack.c.l.b16 %v2225
        %v3167 = vunpack.c.h.b16 %v2225
        %v3168 = vunpack.c.l.b16 %v2226
        %v3169 = vunpack.c.h.b16 %v2226
        %v3170 = vunpack.c.l.b16 %v2227
        %v3171 = vunpack.c.h.b16 %v2227
        %v3172 = vunpack.c.l.b16 %v2228
        %v3173 = vunpack.c.h.b16 %v2228
        %v3174 = vunpack.c.l.b16 %v2229
        %v3175 = vunpack.c.h.b16 %v2229
        %v3176 = vunpack.c.l.b16 %v2230
        %v3177 = vunpack.c.h.b16 %v2230
        %v3178 = vunpack.c.l.b16 %v2231
        %v3179 = vunpack.c.h.b16 %v2231
        %v3180 = vunpack.c.l.b16 %v2232
        %v3181 = vunpack.c.h.b16 %v2232
        %v3182 = vunpack.c.l.b16 %v2233
        %v3183 = vunpack.c.h.b16 %v2233
        %v3184 = vunpack.c.l.b16 %v2234
        %v3185 = vunpack.c.h.b16 %v2234
        %v3186 = vunpack.c.l.b16 %v2235
        %v3187 = vunpack.c.h.b16 %v2235
        %v3188 = vunpack.c.l.b16 %v2236
        %v3189 = vunpack.c.h.b16 %v2236
        %v3190 = vunpack.c.l.b16 %v2237
        %v3191 = vunpack.c.h.b16 %v2237
        %v3192 = vunpack.c.l.b16 %v2238
        %v3193 = vunpack.c.h.b16 %v2238
        %v3194 = vunpack.c.l.b16 %v2239
        %v3195 = vunpack.c.h.b16 %v2239
        %v3196 = vunpack.c.l.b16 %v2240
        %v3197 = vunpack.c.h.b16 %v2240
        %v3198 = vunpack.c.l.b16 %v2241
        %v3199 = vunpack.c.h.b16 %v2241
        %v3200 = vunpack.c.l.b16 %v2242
        %v3201 = vunpack.c.h.b16 %v2242
        %v3202 = vunpack.c.l.b16 %v2243
        %v3203 = vunpack.c.h.b16 %v2243
        %v3204 = vunpack.c.l.b16 %v2244
        %v3205 = vunpack.c.h.b16 %v2244
        %v3206 = vunpack.c.l.b16 %v2245
        %v3207 = vunpack.c.h.b16 %v2245
        %v3208 = vunpack.c.l.b16 %v2246
        %v3209 = vunpack.c.h.b16 %v2246
        %v3210 = vunpack.c.l.b16 %v2247
        %v3211 = vunpack.c.h.b16 %v2247
        %v3212 = vunpack.c.l.b16 %v2248
        %v3213 = vunpack.c.h.b16 %v2248
        %v3214 = vunpack.c.l.b16 %v2249
        %v3215 = vunpack.c.h.b16 %v2249
        %v3216 = vunpack.c.l.b16 %v2250
        %v3217 = vunpack.c.h.b16 %v2250
        %v3218 = vunpack.c.l.b16 %v2251
        %v3219 = vunpack.c.h.b16 %v2251
        %v3220 = vunpack.c.l.b16 %v2252
        %v3221 = vunpack.c.h.b16 %v2252
        %v3222 = vunpack.c.l.b16 %v2253
        %v3223 = vunpack.c.h.b16 %v2253
        %v3224 = vunpack.c.l.b16 %v2254
        %v3225 = vunpack.c.h.b16 %v2254
        %v3226 = vunpack.c.l.b16 %v2255
        %v3227 = vunpack.c.h.b16 %v2255
        %v3228 = vunpack.c.l.b16 %v2256
        %v3229 = vunpack.c.h.b16 %v2256
        %v3230 = vunpack.c.l.b16 %v2257
        %v3231 = vunpack.c.h.b16 %v2257
        %v3232 = vunpack.c.l.b16 %v2258
        %v3233 = vunpack.c.h.b16 %v2258
        %v3234 = vunpack.c.l.b16 %v2259
        %v3235 = vunpack.c.h.b16 %v2259
        %v3236 = vunpack.c.l.b16 %v2260
        %v3237 = vunpack.c.h.b16 %v2260
        %v3238 = vunpack.c.l.b16 %v2261
        %v3239 = vunpack.c.h.b16 %v2261
        %v3240 = vunpack.c.l.b16 %v2262
        %v3241 = vunpack.c.h.b16 %v2262
        %v3242 = vunpack.c.l.b16 %v2263
        %v3243 = vunpack.c.h.b16 %v2263
        %v3244 = vunpack.c.l.b16 %v2264
        %v3245 = vunpack.c.h.b16 %v2264
        %v3246 = vunpack.c.l.b16 %v2265
        %v3247 = vunpack.c.h.b16 %v2265
        %v3248 = vunpack.c.l.b16 %v2266
        %v3249 = vunpack.c.h.b16 %v2266
        %v3250 = vunpack.c.l.b16 %v2267
        %v3251 = vunpack.c.h.b16 %v2267
        %v3252 = vunpack.c.l.b16 %v2268
        %v3253 = vunpack.c.h.b16 %v2268
        %v3254 = vunpack.c.l.b16 %v2269
        %v3255 = vunpack.c.h.b16 %v2269
        %v3256 = vunpack.c.l.b16 %v2270
        %v3257 = vunpack.c.h.b16 %v2270
        %v3258 = vunpack.c.l.b16 %v2271
        %v3259 = vunpack.c.h.b16 %v2271
        %v3260 = vunpack.c.l.b16 %v2272
        %v3261 = vunpack.c.h.b16 %v2272
        %v3262 = vunpack.c.l.b16 %v2273
        %v3263 = vunpack.c.h.b16 %v2273
        %v3264 = vunpack.c.l.b16 %v2274
        %v3265 = vunpack.c.h.b16 %v2274
        %v3266 = vunpack.c.l.b16 %v2275
        %v3267 = vunpack.c.h.b16 %v2275
        %v3268 = vunpack.c.l.b16 %v2276
        %v3269 = vunpack.c.h.b16 %v2276
        %v3270 = vunpack.c.l.b16 %v2277
        %v3271 = vunpack.c.h.b16 %v2277
        %v3272 = vunpack.c.l.b16 %v2278
        %v3273 = vunpack.c.h.b16 %v2278
        %v3274 = vunpack.c.l.b16 %v2279
        %v3275 = vunpack.c.h.b16 %v2279
        %v3276 = vunpack.c.l.b16 %v2280
        %v3277 = vunpack.c.h.b16 %v2280
        %v3278 = vunpack.c.l.b16 %v2281
        %v3279 = vunpack.c.h.b16 %v2281
        %v3280 = vunpack.c.l.b16 %v2282
        %v3281 = vunpack.c.h.b16 %v2282
        %v3282 = vunpack.c.l.b16 %v2283
        %v3283 = vunpack.c.h.b16 %v2283
        %v3284 = vunpack.c.l.b16 %v2284
        %v3285 = vunpack.c.h.b16 %v2284
        %v3286 = vunpack.c.l.b16 %v2285
        %v3287 = vunpack.c.h.b16 %v2285
        %v3288 = vunpack.c.l.b16 %v2286
        %v3289 = vunpack.c.h.b16 %v2286
        %v3290 = vunpack.c.l.b16 %v2287
        %v3291 = vunpack.c.h.b16 %v2287
        %v3292 = vunpack.c.l.b16 %v2288
        %v3293 = vunpack.c.h.b16 %v2288
        %v3294 = vunpack.c.l.b16 %v2289
        %v3295 = vunpack.c.h.b16 %v2289
        %v3296 = vunpack.c.l.b16 %v2290
        %v3297 = vunpack.c.h.b16 %v2290
        %v3298 = vunpack.c.l.b16 %v2291
        %v3299 = vunpack.c.h.b16 %v2291
        %v3300 = vunpack.c.l.b16 %v2292
        %v3301 = vunpack.c.h.b16 %v2292
        %v3302 = vunpack.c.l.b16 %v2293
        %v3303 = vunpack.c.h.b16 %v2293
        %v3304 = vunpack.c.l.b16 %v2294
        %v3305 = vunpack.c.h.b16 %v2294
        %v3306 = vunpack.c.l.b16 %v2295
        %v3307 = vunpack.c.h.b16 %v2295
        %v3308 = vunpack.c.l.b16 %v2296
        %v3309 = vunpack.c.h.b16 %v2296
        %v3310 = vunpack.c.l.b16 %v2297
        %v3311 = vunpack.c.h.b16 %v2297
        %v3312 = vunpack.c.l.b16 %v2298
        %v3313 = vunpack.c.h.b16 %v2298
        %v3314 = vunpack.c.l.b16 %v2299
        %v3315 = vunpack.c.h.b16 %v2299
        %v3316 = vunpack.c.l.b16 %v2300
        %v3317 = vunpack.c.h.b16 %v2300
        %v3318 = vunpack.c.l.b16 %v2301
        %v3319 = vunpack.c.h.b16 %v2301
        %v3320 = vunpack.c.l.b16 %v2302
        %v3321 = vunpack.c.h.b16 %v2302
        %v3322 = vunpack.c.l.b16 %v2303
        %v3323 = vunpack.c.h.b16 %v2303
        %v3324 = vunpack.c.l.b16 %v2304
        %v3325 = vunpack.c.h.b16 %v2304
        %v3326 = vunpack.c.l.b16 %v2305
        %v3327 = vunpack.c.h.b16 %v2305
        %v3328 = vunpack.c.l.b16 %v2306
        %v3329 = vunpack.c.h.b16 %v2306
        %v3330 = vunpack.c.l.b16 %v2307
        %v3331 = vunpack.c.h.b16 %v2307
        %v3332 = vunpack.c.l.b16 %v2308
        %v3333 = vunpack.c.h.b16 %v2308
        %v3334 = vunpack.c.l.b16 %v2309
        %v3335 = vunpack.c.h.b16 %v2309
        %v3336 = vunpack.c.l.b16 %v2310
        %v3337 = vunpack.c.h.b16 %v2310
        %v3338 = vunpack.c.l.b16 %v2311
        %v3339 = vunpack.c.h.b16 %v2311
        %v3340 = vunpack.c.l.b16 %v2312
        %v3341 = vunpack.c.h.b16 %v2312
        %v3342 = vunpack.c.l.b16 %v2313
        %v3343 = vunpack.c.h.b16 %v2313
        %v3344 = vunpack.c.l.b16 %v2314
        %v3345 = vunpack.c.h.b16 %v2314
        %v3346 = vunpack.c.l.b16 %v2315
        %v3347 = vunpack.c.h.b16 %v2315
        %v3348 = vunpack.c.l.b16 %v2316
        %v3349 = vunpack.c.h.b16 %v2316
        %v3350 = vunpack.c.l.b16 %v2317
        %v3351 = vunpack.c.h.b16 %v2317
        %v3352 = vunpack.c.l.b16 %v2318
        %v3353 = vunpack.c.h.b16 %v2318
        %v3354 = vunpack.c.l.b16 %v2319
        %v3355 = vunpack.c.h.b16 %v2319
        %v3356 = vunpack.c.l.b16 %v2320
        %v3357 = vunpack.c.h.b16 %v2320
        %v3358 = vunpack.c.l.b16 %v2321
        %v3359 = vunpack.c.h.b16 %v2321
        %v3360 = vunpack.c.l.b16 %v2322
        %v3361 = vunpack.c.h.b16 %v2322
        %v3362 = vunpack.c.l.b16 %v2323
        %v3363 = vunpack.c.h.b16 %v2323
        %v3364 = vunpack.c.l.b16 %v2324
        %v3365 = vunpack.c.h.b16 %v2324
        %v3366 = vunpack.c.l.b16 %v2325
        %v3367 = vunpack.c.h.b16 %v2325
        %v3368 = vunpack.c.l.b16 %v2326
        %v3369 = vunpack.c.h.b16 %v2326
        %v3370 = vunpack.c.l.b16 %v2327
        %v3371 = vunpack.c.h.b16 %v2327
        %v3372 = vunpack.c.l.b16 %v2328
        %v3373 = vunpack.c.h.b16 %v2328
        %v3374 = vunpack.c.l.b16 %v2329
        %v3375 = vunpack.c.h.b16 %v2329
        %v3376 = vunpack.c.l.b16 %v2330
        %v3377 = vunpack.c.h.b16 %v2330
        %v3378 = vpack.c.b16 %v2746, %v2738
        %v3379 = vpack.c.b16 %v2747, %v2739
        %v3380 = vpack.c.b16 %v2748, %v2740
        %v3381 = vpack.c.b16 %v2749, %v2741
        %v3382 = vpack.c.b16 %v2750, %v2742
        %v3383 = vpack.c.b16 %v2751, %v2743
        %v3384 = vpack.c.b16 %v2752, %v2744
        %v3385 = vpack.c.b16 %v2753, %v2745
        %v3386 = vpack.c.b16 %v2762, %v2754
        %v3387 = vpack.c.b16 %v2763, %v2755
        %v3388 = vpack.c.b16 %v2764, %v2756
        %v3389 = vpack.c.b16 %v2765, %v2757
        %v3390 = vpack.c.b16 %v2766, %v2758
        %v3391 = vpack.c.b16 %v2767, %v2759
        %v3392 = vpack.c.b16 %v2768, %v2760
        %v3393 = vpack.c.b16 %v2769, %v2761
        %v3394 = vpack.c.b16 %v2778, %v2770
        %v3395 = vpack.c.b16 %v2779, %v2771
        %v3396 = vpack.c.b16 %v2780, %v2772
        %v3397 = vpack.c.b16 %v2781, %v2773
        %v3398 = vpack.c.b16 %v2782, %v2774
        %v3399 = vpack.c.b16 %v2783, %v2775
        %v3400 = vpack.c.b16 %v2784, %v2776
        %v3401 = vpack.c.b16 %v2785, %v2777
        %v3402 = vpack.c.b16 %v2794, %v2786
        %v3403 = vpack.c.b16 %v2795, %v2787
        %v3404 = vpack.c.b16 %v2796, %v2788
        %v3405 = vpack.c.b16 %v2797, %v2789
        %v3406 = vpack.c.b16 %v2798, %v2790
        %v3407 = vpack.c.b16 %v2799, %v2791
        %v3408 = vpack.c.b16 %v2800, %v2792
        %v3409 = vpack.c.b16 %v2801, %v2793
        %v3410 = vpack.c.b16 %v2810, %v2802
        %v3411 = vpack.c.b16 %v2811, %v2803
        %v3412 = vpack.c.b16 %v2812, %v2804
        %v3413 = vpack.c.b16 %v2813, %v2805
        %v3414 = vpack.c.b16 %v2814, %v2806
        %v3415 = vpack.c.b16 %v2815, %v2807
        %v3416 = vpack.c.b16 %v2816, %v2808
        %v3417 = vpack.c.b16 %v2817, %v2809
        %v3418 = vpack.c.b16 %v2826, %v2818
        %v3419 = vpack.c.b16 %v2827, %v2819
        %v3420 = vpack.c.b16 %v2828, %v2820
        %v3421 = vpack.c.b16 %v2829, %v2821
        %v3422 = vpack.c.b16 %v2830, %v2822
        %v3423 = vpack.c.b16 %v2831, %v2823
        %v3424 = vpack.c.b16 %v2832, %v2824
        %v3425 = vpack.c.b16 %v2833, %v2825
        %v3426 = vpack.c.b16 %v2842, %v2834
        %v3427 = vpack.c.b16 %v2843, %v2835
        %v3428 = vpack.c.b16 %v2844, %v2836
        %v3429 = vpack.c.b16 %v2845, %v2837
        %v3430 = vpack.c.b16 %v2846, %v2838
        %v3431 = vpack.c.b16 %v2847, %v2839
        %v3432 = vpack.c.b16 %v2848, %v2840
        %v3433 = vpack.c.b16 %v2849, %v2841
        %v3434 = vpack.c.b16 %v2858, %v2850
        %v3435 = vpack.c.b16 %v2859, %v2851
        %v3436 = vpack.c.b16 %v2860, %v2852
        %v3437 = vpack.c.b16 %v2861, %v2853
        %v3438 = vpack.c.b16 %v2862, %v2854
        %v3439 = vpack.c.b16 %v2863, %v2855
        %v3440 = vpack.c.b16 %v2864, %v2856
        %v3441 = vpack.c.b16 %v2865, %v2857
        %v3442 = vpack.c.b16 %v2874, %v2866
        %v3443 = vpack.c.b16 %v2875, %v2867
        %v3444 = vpack.c.b16 %v2876, %v2868
        %v3445 = vpack.c.b16 %v2877, %v2869
        %v3446 = vpack.c.b16 %v2878, %v2870
        %v3447 = vpack.c.b16 %v2879, %v2871
        %v3448 = vpack.c.b16 %v2880, %v2872
        %v3449 = vpack.c.b16 %v2881, %v2873
        %v3450 = vpack.c.b16 %v2890, %v2882
        %v3451 = vpack.c.b16 %v2891, %v2883
        %v3452 = vpack.c.b16 %v2892, %v2884
        %v3453 = vpack.c.b16 %v2893, %v2885
        %v3454 = vpack.c.b16 %v2894, %v2886
        %v3455 = vpack.c.b16 %v2895, %v2887
        %v3456 = vpack.c.b16 %v2896, %v2888
        %v3457 = vpack.c.b16 %v2897, %v2889
        %v3458 = vpack.c.b16 %v2906, %v2898
        %v3459 = vpack.c.b16 %v2907, %v2899
        %v3460 = vpack.c.b16 %v2908, %v2900
        %v3461 = vpack.c.b16 %v2909, %v2901
        %v3462 = vpack.c.b16 %v2910, %v2902
        %v3463 = vpack.c.b16 %v2911, %v2903
        %v3464 = vpack.c.b16 %v2912, %v2904
        %v3465 = vpack.c.b16 %v2913, %v2905
        %v3466 = vpack.c.b16 %v2922, %v2914
        %v3467 = vpack.c.b16 %v2923, %v2915
        %v3468 = vpack.c.b16 %v2924, %v2916
        %v3469 = vpack.c.b16 %v2925, %v2917
        %v3470 = vpack.c.b16 %v2926, %v2918
        %v3471 = vpack.c.b16 %v2927, %v2919
        %v3472 = vpack.c.b16 %v2928, %v2920
        %v3473 = vpack.c.b16 %v2929, %v2921
        %v3474 = vpack.c.b16 %v2938, %v2930
        %v3475 = vpack.c.b16 %v2939, %v2931
        %v3476 = vpack.c.b16 %v2940, %v2932
        %v3477 = vpack.c.b16 %v2941, %v2933
        %v3478 = vpack.c.b16 %v2942, %v2934
        %v3479 = vpack.c.b16 %v2943, %v2935
        %v3480 = vpack.c.b16 %v2944, %v2936
        %v3481 = vpack.c.b16 %v2945, %v2937
        %v3482 = vpack.c.b16 %v2954, %v2946
        %v3483 = vpack.c.b16 %v2955, %v2947
        %v3484 = vpack.c.b16 %v2956, %v2948
        %v3485 = vpack.c.b16 %v2957, %v2949
        %v3486 = vpack.c.b16 %v2958, %v2950
        %v3487 = vpack.c.b16 %v2959, %v2951
        %v3488 = vpack.c.b16 %v2960, %v2952
        %v3489 = vpack.c.b16 %v2961, %v2953
        %v3490 = vpack.c.b16 %v2970, %v2962
        %v3491 = vpack.c.b16 %v2971, %v2963
        %v3492 = vpack.c.b16 %v2972, %v2964
        %v3493 = vpack.c.b16 %v2973, %v2965
        %v3494 = vpack.c.b16 %v2974, %v2966
        %v3495 = vpack.c.b16 %v2975, %v2967
        %v3496 = vpack.c.b16 %v2976, %v2968
        %v3497 = vpack.c.b16 %v2977, %v2969
        %v3498 = vpack.c.b16 %v2986, %v2978
        %v3499 = vpack.c.b16 %v2987, %v2979
        %v3500 = vpack.c.b16 %v2988, %v2980
        %v3501 = vpack.c.b16 %v2989, %v2981
        %v3502 = vpack.c.b16 %v2990, %v2982
        %v3503 = vpack.c.b16 %v2991, %v2983
        %v3504 = vpack.c.b16 %v2992, %v2984
        %v3505 = vpack.c.b16 %v2993, %v2985
        %v3506 = vpack.c.b16 %v3002, %v2994
        %v3507 = vpack.c.b16 %v3003, %v2995
        %v3508 = vpack.c.b16 %v3004, %v2996
        %v3509 = vpack.c.b16 %v3005, %v2997
        %v3510 = vpack.c.b16 %v3006, %v2998
        %v3511 = vpack.c.b16 %v3007, %v2999
        %v3512 = vpack.c.b16 %v3008, %v3000
        %v3513 = vpack.c.b16 %v3009, %v3001
        %v3514 = vpack.c.b16 %v3018, %v3010
        %v3515 = vpack.c.b16 %v3019, %v3011
        %v3516 = vpack.c.b16 %v3020, %v3012
        %v3517 = vpack.c.b16 %v3021, %v3013
        %v3518 = vpack.c.b16 %v3022, %v3014
        %v3519 = vpack.c.b16 %v3023, %v3015
        %v3520 = vpack.c.b16 %v3024, %v3016
        %v3521 = vpack.c.b16 %v3025, %v3017
        %v3522 = vpack.c.b16 %v3034, %v3026
        %v3523 = vpack.c.b16 %v3035, %v3027
        %v3524 = vpack.c.b16 %v3036, %v3028
        %v3525 = vpack.c.b16 %v3037, %v3029
        %v3526 = vpack.c.b16 %v3038, %v3030
        %v3527 = vpack.c.b16 %v3039, %v3031
        %v3528 = vpack.c.b16 %v3040, %v3032
        %v3529 = vpack.c.b16 %v3041, %v3033
        %v3530 = vpack.c.b16 %v3050, %v3042
        %v3531 = vpack.c.b16 %v3051, %v3043
        %v3532 = vpack.c.b16 %v3052, %v3044
        %v3533 = vpack.c.b16 %v3053, %v3045
        %v3534 = vpack.c.b16 %v3054, %v3046
        %v3535 = vpack.c.b16 %v3055, %v3047
        %v3536 = vpack.c.b16 %v3056, %v3048
        %v3537 = vpack.c.b16 %v3057, %v3049
        %v3538 = vpack.c.b16 %v3066, %v3058
        %v3539 = vpack.c.b16 %v3067, %v3059
        %v3540 = vpack.c.b16 %v3068, %v3060
        %v3541 = vpack.c.b16 %v3069, %v3061
        %v3542 = vpack.c.b16 %v3070, %v3062
        %v3543 = vpack.c.b16 %v3071, %v3063
        %v3544 = vpack.c.b16 %v3072, %v3064
        %v3545 = vpack.c.b16 %v3073, %v3065
        %v3546 = vpack.c.b16 %v3082, %v3074
        %v3547 = vpack.c.b16 %v3083, %v3075
        %v3548 = vpack.c.b16 %v3084, %v3076
        %v3549 = vpack.c.b16 %v3085, %v3077
        %v3550 = vpack.c.b16 %v3086, %v3078
        %v3551 = vpack.c.b16 %v3087, %v3079
        %v3552 = vpack.c.b16 %v3088, %v3080
        %v3553 = vpack.c.b16 %v3089, %v3081
        %v3554 = vpack.c.b16 %v3098, %v3090
        %v3555 = vpack.c.b16 %v3099, %v3091
        %v3556 = vpack.c.b16 %v3100, %v3092
        %v3557 = vpack.c.b16 %v3101, %v3093
        %v3558 = vpack.c.b16 %v3102, %v3094
        %v3559 = vpack.c.b16 %v3103, %v3095
        %v3560 = vpack.c.b16 %v3104, %v3096
        %v3561 = vpack.c.b16 %v3105, %v3097
        %v3562 = vpack.c.b16 %v3114, %v3106
        %v3563 = vpack.c.b16 %v3115, %v3107
        %v3564 = vpack.c.b16 %v3116, %v3108
        %v3565 = vpack.c.b16 %v3117, %v3109
        %v3566 = vpack.c.b16 %v3118, %v3110
        %v3567 = vpack.c.b16 %v3119, %v3111
        %v3568 = vpack.c.b16 %v3120, %v3112
        %v3569 = vpack.c.b16 %v3121, %v3113
        %v3570 = vpack.c.b16 %v3130, %v3122
        %v3571 = vpack.c.b16 %v3131, %v3123
        %v3572 = vpack.c.b16 %v3132, %v3124
        %v3573 = vpack.c.b16 %v3133, %v3125
        %v3574 = vpack.c.b16 %v3134, %v3126
        %v3575 = vpack.c.b16 %v3135, %v3127
        %v3576 = vpack.c.b16 %v3136, %v3128
        %v3577 = vpack.c.b16 %v3137, %v3129
        %v3578 = vpack.c.b16 %v3146, %v3138
        %v3579 = vpack.c.b16 %v3147, %v3139
        %v3580 = vpack.c.b16 %v3148, %v3140
        %v3581 = vpack.c.b16 %v3149, %v3141
        %v3582 = vpack.c.b16 %v3150, %v3142
        %v3583 = vpack.c.b16 %v3151, %v3143
        %v3584 = vpack.c.b16 %v3152, %v3144
        %v3585 = vpack.c.b16 %v3153, %v3145
        %v3586 = vpack.c.b16 %v3162, %v3154
        %v3587 = vpack.c.b16 %v3163, %v3155
        %v3588 = vpack.c.b16 %v3164, %v3156
        %v3589 = vpack.c.b16 %v3165, %v3157
        %v3590 = vpack.c.b16 %v3166, %v3158
        %v3591 = vpack.c.b16 %v3167, %v3159
        %v3592 = vpack.c.b16 %v3168, %v3160
        %v3593 = vpack.c.b16 %v3169, %v3161
        %v3594 = vpack.c.b16 %v3178, %v3170
        %v3595 = vpack.c.b16 %v3179, %v3171
        %v3596 = vpack.c.b16 %v3180, %v3172
        %v3597 = vpack.c.b16 %v3181, %v3173
        %v3598 = vpack.c.b16 %v3182, %v3174
        %v3599 = vpack.c.b16 %v3183, %v3175
        %v3600 = vpack.c.b16 %v3184, %v3176
        %v3601 = vpack.c.b16 %v3185, %v3177
        %v3602 = vpack.c.b16 %v3194, %v3186
        %v3603 = vpack.c.b16 %v3195, %v3187
        %v3604 = vpack.c.b16 %v3196, %v3188
        %v3605 = vpack.c.b16 %v3197, %v3189
        %v3606 = vpack.c.b16 %v3198, %v3190
        %v3607 = vpack.c.b16 %v3199, %v3191
        %v3608 = vpack.c.b16 %v3200, %v3192
        %v3609 = vpack.c.b16 %v3201, %v3193
        %v3610 = vpack.c.b16 %v3210, %v3202
        %v3611 = vpack.c.b16 %v3211, %v3203
        %v3612 = vpack.c.b16 %v3212, %v3204
        %v3613 = vpack.c.b16 %v3213, %v3205
        %v3614 = vpack.c.b16 %v3214, %v3206
        %v3615 = vpack.c.b16 %v3215, %v3207
        %v3616 = vpack.c.b16 %v3216, %v3208
        %v3617 = vpack.c.b16 %v3217, %v3209
        %v3618 = vpack.c.b16 %v3226, %v3218
        %v3619 = vpack.c.b16 %v3227, %v3219
        %v3620 = vpack.c.b16 %v3228, %v3220
        %v3621 = vpack.c.b16 %v3229, %v3221
        %v3622 = vpack.c.b16 %v3230, %v3222
        %v3623 = vpack.c.b16 %v3231, %v3223
        %v3624 = vpack.c.b16 %v3232, %v3224
        %v3625 = vpack.c.b16 %v3233, %v3225
        %v3626 = vpack.c.b16 %v3242, %v3234
        %v3627 = vpack.c.b16 %v3243, %v3235
        %v3628 = vpack.c.b16 %v3244, %v3236
        %v3629 = vpack.c.b16 %v3245, %v3237
        %v3630 = vpack.c.b16 %v3246, %v3238
        %v3631 = vpack.c.b16 %v3247, %v3239
        %v3632 = vpack.c.b16 %v3248, %v3240
        %v3633 = vpack.c.b16 %v3249, %v3241
        %v3634 = vpack.c.b16 %v3258, %v3250
        %v3635 = vpack.c.b16 %v3259, %v3251
        %v3636 = vpack.c.b16 %v3260, %v3252
        %v3637 = vpack.c.b16 %v3261, %v3253
        %v3638 = vpack.c.b16 %v3262, %v3254
        %v3639 = vpack.c.b16 %v3263, %v3255
        %v3640 = vpack.c.b16 %v3264, %v3256
        %v3641 = vpack.c.b16 %v3265, %v3257
        %v3642 = vpack.c.b16 %v3274, %v3266
        %v3643 = vpack.c.b16 %v3275, %v3267
        %v3644 = vpack.c.b16 %v3276, %v3268
        %v3645 = vpack.c.b16 %v3277, %v3269
        %v3646 = vpack.c.b16 %v3278, %v3270
        %v3647 = vpack.c.b16 %v3279, %v3271
        %v3648 = vpack.c.b16 %v3280, %v3272
        %v3649 = vpack.c.b16 %v3281, %v3273
        %v3650 = vpack.c.b16 %v3290, %v3282
        %v3651 = vpack.c.b16 %v3291, %v3283
        %v3652 = vpack.c.b16 %v3292, %v3284
        %v3653 = vpack.c.b16 %v3293, %v3285
        %v3654 = vpack.c.b16 %v3294, %v3286
        %v3655 = vpack.c.b16 %v3295, %v3287
        %v3656 = vpack.c.b16 %v3296, %v3288
        %v3657 = vpack.c.b16 %v3297, %v3289
        %v3658 = vpack.c.b16 %v3306, %v3298
        %v3659 = vpack.c.b16 %v3307, %v3299
        %v3660 = vpack.c.b16 %v3308, %v3300
        %v3661 = vpack.c.b16 %v3309, %v3301
        %v3662 = vpack.c.b16 %v3310, %v3302
        %v3663 = vpack.c.b16 %v3311, %v3303
        %v3664 = vpack.c.b16 %v3312, %v3304
        %v3665 = vpack.c.b16 %v3313, %v3305
        %v3666 = vpack.c.b16 %v3322, %v3314
        %v3667 = vpack.c.b16 %v3323, %v3315
        %v3668 = vpack.c.b16 %v3324, %v3316
        %v3669 = vpack.c.b16 %v3325, %v3317
        %v3670 = vpack.c.b16 %v3326, %v3318
        %v3671 = vpack.c.b16 %v3327, %v3319
        %v3672 = vpack.c.b16 %v3328, %v3320
        %v3673 = vpack.c.b16 %v3329, %v3321
        %v3674 = vpack.c.b16 %v3338, %v3330
        %v3675 = vpack.c.b16 %v3339, %v3331
        %v3676 = vpack.c.b16 %v3340, %v3332
        %v3677 = vpack.c.b16 %v3341, %v3333
        %v3678 = vpack.c.b16 %v3342, %v3334
        %v3679 = vpack.c.b16 %v3343, %v3335
        %v3680 = vpack.c.b16 %v3344, %v3336
        %v3681 = vpack.c.b16 %v3345, %v3337
        %v3682 = vpack.c.b16 %v3354, %v3346
        %v3683 = vpack.c.b16 %v3355, %v3347
        %v3684 = vpack.c.b16 %v3356, %v3348
        %v3685 = vpack.c.b16 %v3357, %v3349
        %v3686 = vpack.c.b16 %v3358, %v3350
        %v3687 = vpack.c.b16 %v3359, %v3351
        %v3688 = vpack.c.b16 %v3360, %v3352
        %v3689 = vpack.c.b16 %v3361, %v3353
        %v3690 = vpack.c.b16 %v3370, %v3362
        %v3691 = vpack.c.b16 %v3371, %v3363
        %v3692 = vpack.c.b16 %v3372, %v3364
        %v3693 = vpack.c.b16 %v3373, %v3365
        %v3694 = vpack.c.b16 %v3374, %v3366
        %v3695 = vpack.c.b16 %v3375, %v3367
        %v3696 = vpack.c.b16 %v3376, %v3368
        %v3697 = vpack.c.b16 %v3377, %v3369
        %4018 = vmatprep.subr.bf16.mxu0 %v3435
        %4019 = vmatpush1.bf16.msra.mxu0 %v3434
        %4020 = vmatprep.subr.bf16.mxu0 %v3427
        %4021 = vmatpush1.bf16.msra.mxu0 %v3426
        %4022 = vmatprep.subr.bf16.mxu0 %v3419
        %4023 = vmatpush1.bf16.msra.mxu0 %v3418
        %4024 = vmatprep.subr.bf16.mxu0 %v3411
        %4025 = vmatpush1.bf16.msra.mxu0 %v3410
        %4026 = vmatprep.subr.bf16.mxu0 %v3403
        %4027 = vmatpush1.bf16.msra.mxu0 %v3402
        %4028 = vmatprep.subr.bf16.mxu0 %v3395
        %4029 = vmatpush1.bf16.msra.mxu0 %v3394
        %4030 = vmatprep.subr.bf16.mxu0 %v3387
        %4031 = vmatpush1.bf16.msra.mxu0 %v3386
        %4032 = vmatprep.subr.bf16.mxu0 %v3379
        %4033 = vmatpush1.bf16.msra.mxu0 %v3378
        %4034 = vmatprep.subr.bf16.mxu0 %v3499
        %4035 = vmatpush2.bf16.msra.mxu0 %v3498
        %4036 = vmatprep.subr.bf16.mxu0 %v3491
        %4037 = vmatpush2.bf16.msra.mxu0 %v3490
        %4038 = vmatprep.subr.bf16.mxu0 %v3483
        %4039 = vmatpush2.bf16.msra.mxu0 %v3482
        %4040 = vmatprep.subr.bf16.mxu0 %v3475
        %4041 = vmatpush2.bf16.msra.mxu0 %v3474
        %4042 = vmatprep.subr.bf16.mxu0 %v3467
        %4043 = vmatpush2.bf16.msra.mxu0 %v3466
        %4044 = vmatprep.subr.bf16.mxu0 %v3459
        %4045 = vmatpush2.bf16.msra.mxu0 %v3458
        %4046 = vmatprep.subr.bf16.mxu0 %v3451
        %4047 = vmatpush2.bf16.msra.mxu0 %v3450
        %4048 = vmatprep.subr.bf16.mxu0 %v3443
        %4049 = vmatpush2.bf16.msra.mxu0 %v3442
        %4050 = vmatprep.mubr.bf16.mxu0 %v2410
        %4051 = vmatmul.mubr.bf16.gmra.mxu0 %v2396
        %v4052 = vpop.f32.mrf.mxu0
        %v4053 = vadd.f32 %v2336, %v4052
        %v4054 = vpop.f32.mrf.mxu0
        %v4055 = vadd.f32 %v2340, %v4054
        %v4056 = vpop.f32.mrf.mxu0
        %v4057 = vpop.f32.mrf.mxu0
        %4058 = vdwg.mxu0
        %4059 = vmatprep.subr.bf16.mxu0 %v3563
        %4060 = vmatpush1.bf16.msra.mxu0 %v3562
        %4061 = vmatprep.subr.bf16.mxu0 %v3555
        %4062 = vmatpush1.bf16.msra.mxu0 %v3554
        %4063 = vmatprep.subr.bf16.mxu0 %v3547
        %4064 = vmatpush1.bf16.msra.mxu0 %v3546
        %4065 = vmatprep.subr.bf16.mxu0 %v3539
        %4066 = vmatpush1.bf16.msra.mxu0 %v3538
        %4067 = vmatprep.subr.bf16.mxu0 %v3531
        %4068 = vmatpush1.bf16.msra.mxu0 %v3530
        %4069 = vmatprep.subr.bf16.mxu0 %v3523
        %4070 = vmatpush1.bf16.msra.mxu0 %v3522
        %4071 = vmatprep.subr.bf16.mxu0 %v3515
        %4072 = vmatpush1.bf16.msra.mxu0 %v3514
        %4073 = vmatprep.subr.bf16.mxu0 %v3507
        %4074 = vmatpush1.bf16.msra.mxu0 %v3506
        %4075 = vmatprep.subr.bf16.mxu0 %v3627
        %4076 = vmatpush2.bf16.msra.mxu0 %v3626
        %4077 = vmatprep.subr.bf16.mxu0 %v3619
        %4078 = vmatpush2.bf16.msra.mxu0 %v3618
        %4079 = vmatprep.subr.bf16.mxu0 %v3611
        %4080 = vmatpush2.bf16.msra.mxu0 %v3610
        %4081 = vmatprep.subr.bf16.mxu0 %v3603
        %4082 = vmatpush2.bf16.msra.mxu0 %v3602
        %4083 = vmatprep.subr.bf16.mxu0 %v3595
        %4084 = vmatpush2.bf16.msra.mxu0 %v3594
        %4085 = vmatprep.subr.bf16.mxu0 %v3587
        %4086 = vmatpush2.bf16.msra.mxu0 %v3586
        %4087 = vmatprep.subr.bf16.mxu0 %v3579
        %4088 = vmatpush2.bf16.msra.mxu0 %v3578
        %4089 = vmatprep.subr.bf16.mxu0 %v3571
        %4090 = vmatpush2.bf16.msra.mxu0 %v3570
        %4091 = vmatprep.mubr.bf16.mxu0 %v2412
        %4092 = vmatmul.mubr.bf16.gmra.mxu0 %v2411
        %v4093 = vpop.f32.mrf.mxu0
        %v4094 = vadd.f32 %v4053, %v4093
        %v4095 = vpop.f32.mrf.mxu0
        %v4096 = vadd.f32 %v4055, %v4095
        %v4097 = vpop.f32.mrf.mxu0
        %v4098 = vpop.f32.mrf.mxu0
        %4099 = vdwg.mxu0
        %4100 = vmatprep.subr.bf16.mxu0 %v3691
        %4101 = vmatpush1.bf16.msra.mxu0 %v3690
        %4102 = vmatprep.subr.bf16.mxu0 %v3683
        %4103 = vmatpush1.bf16.msra.mxu0 %v3682
        %4104 = vmatprep.subr.bf16.mxu0 %v3675
        %4105 = vmatpush1.bf16.msra.mxu0 %v3674
        %4106 = vmatprep.subr.bf16.mxu0 %v3667
        %4107 = vmatpush1.bf16.msra.mxu0 %v3666
        %4108 = vmatprep.subr.bf16.mxu0 %v3659
        %4109 = vmatpush1.bf16.msra.mxu0 %v3658
        %4110 = vmatprep.subr.bf16.mxu0 %v3651
        %4111 = vmatpush1.bf16.msra.mxu0 %v3650
        %4112 = vmatprep.subr.bf16.mxu0 %v3643
        %4113 = vmatpush1.bf16.msra.mxu0 %v3642
        %4114 = vmatprep.subr.bf16.mxu0 %v3635
        %4115 = vmatpush1.bf16.msra.mxu0 %v3634
        %4116 = vmatprep.subr.bf16.mxu0 0
        %4117 = vmatpush2.bf16.msra.mxu0 0
        %4118 = vmatprep.subr.bf16.mxu0 0
        %4119 = vmatpush2.bf16.msra.mxu0 0
        %4120 = vmatprep.subr.bf16.mxu0 0
        %4121 = vmatpush2.bf16.msra.mxu0 0
        %4122 = vmatprep.subr.bf16.mxu0 0
        %4123 = vmatpush2.bf16.msra.mxu0 0
        %4124 = vmatprep.subr.bf16.mxu0 0
        %4125 = vmatpush2.bf16.msra.mxu0 0
        %4126 = vmatprep.subr.bf16.mxu0 0
        %4127 = vmatpush2.bf16.msra.mxu0 0
        %4128 = vmatprep.subr.bf16.mxu0 0
        %4129 = vmatpush2.bf16.msra.mxu0 0
        %4130 = vmatprep.subr.bf16.mxu0 0
        %4131 = vmatpush2.bf16.msra.mxu0 0
        %4132 = vmatprep.mubr.bf16.mxu0 0
        %4133 = vmatmul.mubr.bf16.gmra.mxu0 %v2403
        %v4134 = vpop.f32.mrf.mxu0
        %v4135 = vadd.f32 %v4094, %v4134
        %v4136 = vpop.f32.mrf.mxu0
        %v4137 = vadd.f32 %v4096, %v4136
        %v4138 = vpop.f32.mrf.mxu0
        %v4139 = vpop.f32.mrf.mxu0
        %4140 = vdwg.mxu0
        %4141 = vmatprep.subr.bf16.mxu0 %v3437
        %4142 = vmatpush1.bf16.msra.mxu0 %v3436
        %4143 = vmatprep.subr.bf16.mxu0 %v3429
        %4144 = vmatpush1.bf16.msra.mxu0 %v3428
        %4145 = vmatprep.subr.bf16.mxu0 %v3421
        %4146 = vmatpush1.bf16.msra.mxu0 %v3420
        %4147 = vmatprep.subr.bf16.mxu0 %v3413
        %4148 = vmatpush1.bf16.msra.mxu0 %v3412
        %4149 = vmatprep.subr.bf16.mxu0 %v3405
        %4150 = vmatpush1.bf16.msra.mxu0 %v3404
        %4151 = vmatprep.subr.bf16.mxu0 %v3397
        %4152 = vmatpush1.bf16.msra.mxu0 %v3396
        %4153 = vmatprep.subr.bf16.mxu0 %v3389
        %4154 = vmatpush1.bf16.msra.mxu0 %v3388
        %4155 = vmatprep.subr.bf16.mxu0 %v3381
        %4156 = vmatpush1.bf16.msra.mxu0 %v3380
        %4157 = vmatprep.subr.bf16.mxu0 %v3501
        %4158 = vmatpush2.bf16.msra.mxu0 %v3500
        %4159 = vmatprep.subr.bf16.mxu0 %v3493
        %4160 = vmatpush2.bf16.msra.mxu0 %v3492
        %4161 = vmatprep.subr.bf16.mxu0 %v3485
        %4162 = vmatpush2.bf16.msra.mxu0 %v3484
        %4163 = vmatprep.subr.bf16.mxu0 %v3477
        %4164 = vmatpush2.bf16.msra.mxu0 %v3476
        %4165 = vmatprep.subr.bf16.mxu0 %v3469
        %4166 = vmatpush2.bf16.msra.mxu0 %v3468
        %4167 = vmatprep.subr.bf16.mxu0 %v3461
        %4168 = vmatpush2.bf16.msra.mxu0 %v3460
        %4169 = vmatprep.subr.bf16.mxu0 %v3453
        %4170 = vmatpush2.bf16.msra.mxu0 %v3452
        %4171 = vmatprep.subr.bf16.mxu0 %v3445
        %4172 = vmatpush2.bf16.msra.mxu0 %v3444
        %4173 = vmatprep.mubr.bf16.mxu0 %v2410
        %4174 = vmatmul.mubr.bf16.gmra.mxu0 %v2396
        %v4175 = vpop.f32.mrf.mxu0
        %v4176 = vadd.f32 %v2344, %v4175
        %v4177 = vpop.f32.mrf.mxu0
        %v4178 = vadd.f32 %v2348, %v4177
        %v4179 = vpop.f32.mrf.mxu0
        %v4180 = vpop.f32.mrf.mxu0
        %4181 = vdwg.mxu0
        %4182 = vmatprep.subr.bf16.mxu0 %v3565
        %4183 = vmatpush1.bf16.msra.mxu0 %v3564
        %4184 = vmatprep.subr.bf16.mxu0 %v3557
        %4185 = vmatpush1.bf16.msra.mxu0 %v3556
        %4186 = vmatprep.subr.bf16.mxu0 %v3549
        %4187 = vmatpush1.bf16.msra.mxu0 %v3548
        %4188 = vmatprep.subr.bf16.mxu0 %v3541
        %4189 = vmatpush1.bf16.msra.mxu0 %v3540
        %4190 = vmatprep.subr.bf16.mxu0 %v3533
        %4191 = vmatpush1.bf16.msra.mxu0 %v3532
        %4192 = vmatprep.subr.bf16.mxu0 %v3525
        %4193 = vmatpush1.bf16.msra.mxu0 %v3524
        %4194 = vmatprep.subr.bf16.mxu0 %v3517
        %4195 = vmatpush1.bf16.msra.mxu0 %v3516
        %4196 = vmatprep.subr.bf16.mxu0 %v3509
        %4197 = vmatpush1.bf16.msra.mxu0 %v3508
        %4198 = vmatprep.subr.bf16.mxu0 %v3629
        %4199 = vmatpush2.bf16.msra.mxu0 %v3628
        %4200 = vmatprep.subr.bf16.mxu0 %v3621
        %4201 = vmatpush2.bf16.msra.mxu0 %v3620
        %4202 = vmatprep.subr.bf16.mxu0 %v3613
        %4203 = vmatpush2.bf16.msra.mxu0 %v3612
        %4204 = vmatprep.subr.bf16.mxu0 %v3605
        %4205 = vmatpush2.bf16.msra.mxu0 %v3604
        %4206 = vmatprep.subr.bf16.mxu0 %v3597
        %4207 = vmatpush2.bf16.msra.mxu0 %v3596
        %4208 = vmatprep.subr.bf16.mxu0 %v3589
        %4209 = vmatpush2.bf16.msra.mxu0 %v3588
        %4210 = vmatprep.subr.bf16.mxu0 %v3581
        %4211 = vmatpush2.bf16.msra.mxu0 %v3580
        %4212 = vmatprep.subr.bf16.mxu0 %v3573
        %4213 = vmatpush2.bf16.msra.mxu0 %v3572
        %4214 = vmatprep.mubr.bf16.mxu0 %v2412
        %4215 = vmatmul.mubr.bf16.gmra.mxu0 %v2411
        %v4216 = vpop.f32.mrf.mxu0
        %v4217 = vadd.f32 %v4176, %v4216
        %v4218 = vpop.f32.mrf.mxu0
        %v4219 = vadd.f32 %v4178, %v4218
        %v4220 = vpop.f32.mrf.mxu0
        %v4221 = vpop.f32.mrf.mxu0
        %4222 = vdwg.mxu0
        %4223 = vmatprep.subr.bf16.mxu0 %v3693
        %4224 = vmatpush1.bf16.msra.mxu0 %v3692
        %4225 = vmatprep.subr.bf16.mxu0 %v3685
        %4226 = vmatpush1.bf16.msra.mxu0 %v3684
        %4227 = vmatprep.subr.bf16.mxu0 %v3677
        %4228 = vmatpush1.bf16.msra.mxu0 %v3676
        %4229 = vmatprep.subr.bf16.mxu0 %v3669
        %4230 = vmatpush1.bf16.msra.mxu0 %v3668
        %4231 = vmatprep.subr.bf16.mxu0 %v3661
        %4232 = vmatpush1.bf16.msra.mxu0 %v3660
        %4233 = vmatprep.subr.bf16.mxu0 %v3653
        %4234 = vmatpush1.bf16.msra.mxu0 %v3652
        %4235 = vmatprep.subr.bf16.mxu0 %v3645
        %4236 = vmatpush1.bf16.msra.mxu0 %v3644
        %4237 = vmatprep.subr.bf16.mxu0 %v3637
        %4238 = vmatpush1.bf16.msra.mxu0 %v3636
        %4239 = vmatprep.subr.bf16.mxu0 0
        %4240 = vmatpush2.bf16.msra.mxu0 0
        %4241 = vmatprep.subr.bf16.mxu0 0
        %4242 = vmatpush2.bf16.msra.mxu0 0
        %4243 = vmatprep.subr.bf16.mxu0 0
        %4244 = vmatpush2.bf16.msra.mxu0 0
        %4245 = vmatprep.subr.bf16.mxu0 0
        %4246 = vmatpush2.bf16.msra.mxu0 0
        %4247 = vmatprep.subr.bf16.mxu0 0
        %4248 = vmatpush2.bf16.msra.mxu0 0
        %4249 = vmatprep.subr.bf16.mxu0 0
        %4250 = vmatpush2.bf16.msra.mxu0 0
        %4251 = vmatprep.subr.bf16.mxu0 0
        %4252 = vmatpush2.bf16.msra.mxu0 0
        %4253 = vmatprep.subr.bf16.mxu0 0
        %4254 = vmatpush2.bf16.msra.mxu0 0
        %4255 = vmatprep.mubr.bf16.mxu0 0
        %4256 = vmatmul.mubr.bf16.gmra.mxu0 %v2403
        %v4257 = vpop.f32.mrf.mxu0
        %v4258 = vadd.f32 %v4217, %v4257
        %v4259 = vpop.f32.mrf.mxu0
        %v4260 = vadd.f32 %v4219, %v4259
        %v4261 = vpop.f32.mrf.mxu0
        %v4262 = vpop.f32.mrf.mxu0
        %4263 = vdwg.mxu0
        %4264 = vmatprep.subr.bf16.mxu0 %v3439
        %4265 = vmatpush1.bf16.msra.mxu0 %v3438
        %4266 = vmatprep.subr.bf16.mxu0 %v3431
        %4267 = vmatpush1.bf16.msra.mxu0 %v3430
        %4268 = vmatprep.subr.bf16.mxu0 %v3423
        %4269 = vmatpush1.bf16.msra.mxu0 %v3422
        %4270 = vmatprep.subr.bf16.mxu0 %v3415
        %4271 = vmatpush1.bf16.msra.mxu0 %v3414
        %4272 = vmatprep.subr.bf16.mxu0 %v3407
        %4273 = vmatpush1.bf16.msra.mxu0 %v3406
        %4274 = vmatprep.subr.bf16.mxu0 %v3399
        %4275 = vmatpush1.bf16.msra.mxu0 %v3398
        %4276 = vmatprep.subr.bf16.mxu0 %v3391
        %4277 = vmatpush1.bf16.msra.mxu0 %v3390
        %4278 = vmatprep.subr.bf16.mxu0 %v3383
        %4279 = vmatpush1.bf16.msra.mxu0 %v3382
        %4280 = vmatprep.subr.bf16.mxu0 %v3503
        %4281 = vmatpush2.bf16.msra.mxu0 %v3502
        %4282 = vmatprep.subr.bf16.mxu0 %v3495
        %4283 = vmatpush2.bf16.msra.mxu0 %v3494
        %4284 = vmatprep.subr.bf16.mxu0 %v3487
        %4285 = vmatpush2.bf16.msra.mxu0 %v3486
        %4286 = vmatprep.subr.bf16.mxu0 %v3479
        %4287 = vmatpush2.bf16.msra.mxu0 %v3478
        %4288 = vmatprep.subr.bf16.mxu0 %v3471
        %4289 = vmatpush2.bf16.msra.mxu0 %v3470
        %4290 = vmatprep.subr.bf16.mxu0 %v3463
        %4291 = vmatpush2.bf16.msra.mxu0 %v3462
        %4292 = vmatprep.subr.bf16.mxu0 %v3455
        %4293 = vmatpush2.bf16.msra.mxu0 %v3454
        %4294 = vmatprep.subr.bf16.mxu0 %v3447
        %4295 = vmatpush2.bf16.msra.mxu0 %v3446
        %4296 = vmatprep.mubr.bf16.mxu0 %v2410
        %4297 = vmatmul.mubr.bf16.gmra.mxu0 %v2396
        %v4298 = vpop.f32.mrf.mxu0
        %v4299 = vadd.f32 %v2352, %v4298
        %v4300 = vpop.f32.mrf.mxu0
        %v4301 = vadd.f32 %v2356, %v4300
        %v4302 = vpop.f32.mrf.mxu0
        %v4303 = vpop.f32.mrf.mxu0
        %4304 = vdwg.mxu0
        %4305 = vmatprep.subr.bf16.mxu0 %v3567
        %4306 = vmatpush1.bf16.msra.mxu0 %v3566
        %4307 = vmatprep.subr.bf16.mxu0 %v3559
        %4308 = vmatpush1.bf16.msra.mxu0 %v3558
        %4309 = vmatprep.subr.bf16.mxu0 %v3551
        %4310 = vmatpush1.bf16.msra.mxu0 %v3550
        %4311 = vmatprep.subr.bf16.mxu0 %v3543
        %4312 = vmatpush1.bf16.msra.mxu0 %v3542
        %4313 = vmatprep.subr.bf16.mxu0 %v3535
        %4314 = vmatpush1.bf16.msra.mxu0 %v3534
        %4315 = vmatprep.subr.bf16.mxu0 %v3527
        %4316 = vmatpush1.bf16.msra.mxu0 %v3526
        %4317 = vmatprep.subr.bf16.mxu0 %v3519
        %4318 = vmatpush1.bf16.msra.mxu0 %v3518
        %4319 = vmatprep.subr.bf16.mxu0 %v3511
        %4320 = vmatpush1.bf16.msra.mxu0 %v3510
        %4321 = vmatprep.subr.bf16.mxu0 %v3631
        %4322 = vmatpush2.bf16.msra.mxu0 %v3630
        %4323 = vmatprep.subr.bf16.mxu0 %v3623
        %4324 = vmatpush2.bf16.msra.mxu0 %v3622
        %4325 = vmatprep.subr.bf16.mxu0 %v3615
        %4326 = vmatpush2.bf16.msra.mxu0 %v3614
        %4327 = vmatprep.subr.bf16.mxu0 %v3607
        %4328 = vmatpush2.bf16.msra.mxu0 %v3606
        %4329 = vmatprep.subr.bf16.mxu0 %v3599
        %4330 = vmatpush2.bf16.msra.mxu0 %v3598
        %4331 = vmatprep.subr.bf16.mxu0 %v3591
        %4332 = vmatpush2.bf16.msra.mxu0 %v3590
        %4333 = vmatprep.subr.bf16.mxu0 %v3583
        %4334 = vmatpush2.bf16.msra.mxu0 %v3582
        %4335 = vmatprep.subr.bf16.mxu0 %v3575
        %4336 = vmatpush2.bf16.msra.mxu0 %v3574
        %4337 = vmatprep.mubr.bf16.mxu0 %v2412
        %4338 = vmatmul.mubr.bf16.gmra.mxu0 %v2411
        %v4339 = vpop.f32.mrf.mxu0
        %v4340 = vadd.f32 %v4299, %v4339
        %v4341 = vpop.f32.mrf.mxu0
        %v4342 = vadd.f32 %v4301, %v4341
        %v4343 = vpop.f32.mrf.mxu0
        %v4344 = vpop.f32.mrf.mxu0
        %4345 = vdwg.mxu0
        %4346 = vmatprep.subr.bf16.mxu0 %v3695
        %4347 = vmatpush1.bf16.msra.mxu0 %v3694
        %4348 = vmatprep.subr.bf16.mxu0 %v3687
        %4349 = vmatpush1.bf16.msra.mxu0 %v3686
        %4350 = vmatprep.subr.bf16.mxu0 %v3679
        %4351 = vmatpush1.bf16.msra.mxu0 %v3678
        %4352 = vmatprep.subr.bf16.mxu0 %v3671
        %4353 = vmatpush1.bf16.msra.mxu0 %v3670
        %4354 = vmatprep.subr.bf16.mxu0 %v3663
        %4355 = vmatpush1.bf16.msra.mxu0 %v3662
        %4356 = vmatprep.subr.bf16.mxu0 %v3655
        %4357 = vmatpush1.bf16.msra.mxu0 %v3654
        %4358 = vmatprep.subr.bf16.mxu0 %v3647
        %4359 = vmatpush1.bf16.msra.mxu0 %v3646
        %4360 = vmatprep.subr.bf16.mxu0 %v3639
        %4361 = vmatpush1.bf16.msra.mxu0 %v3638
        %4362 = vmatprep.subr.bf16.mxu0 0
        %4363 = vmatpush2.bf16.msra.mxu0 0
        %4364 = vmatprep.subr.bf16.mxu0 0
        %4365 = vmatpush2.bf16.msra.mxu0 0
        %4366 = vmatprep.subr.bf16.mxu0 0
        %4367 = vmatpush2.bf16.msra.mxu0 0
        %4368 = vmatprep.subr.bf16.mxu0 0
        %4369 = vmatpush2.bf16.msra.mxu0 0
        %4370 = vmatprep.subr.bf16.mxu0 0
        %4371 = vmatpush2.bf16.msra.mxu0 0
        %4372 = vmatprep.subr.bf16.mxu0 0
        %4373 = vmatpush2.bf16.msra.mxu0 0
        %4374 = vmatprep.subr.bf16.mxu0 0
        %4375 = vmatpush2.bf16.msra.mxu0 0
        %4376 = vmatprep.subr.bf16.mxu0 0
        %4377 = vmatpush2.bf16.msra.mxu0 0
        %4378 = vmatprep.mubr.bf16.mxu0 0
        %4379 = vmatmul.mubr.bf16.gmra.mxu0 %v2403
        %v4380 = vpop.f32.mrf.mxu0
        %v4381 = vadd.f32 %v4340, %v4380
        %v4382 = vpop.f32.mrf.mxu0
        %v4383 = vadd.f32 %v4342, %v4382
        %v4384 = vpop.f32.mrf.mxu0
        %v4385 = vpop.f32.mrf.mxu0
        %4386 = vdwg.mxu0
        %4387 = vmatprep.subr.bf16.mxu0 %v3441
        %4388 = vmatpush1.bf16.msra.mxu0 %v3440
        %4389 = vmatprep.subr.bf16.mxu0 %v3433
        %4390 = vmatpush1.bf16.msra.mxu0 %v3432
        %4391 = vmatprep.subr.bf16.mxu0 %v3425
        %4392 = vmatpush1.bf16.msra.mxu0 %v3424
        %4393 = vmatprep.subr.bf16.mxu0 %v3417
        %4394 = vmatpush1.bf16.msra.mxu0 %v3416
        %4395 = vmatprep.subr.bf16.mxu0 %v3409
        %4396 = vmatpush1.bf16.msra.mxu0 %v3408
        %4397 = vmatprep.subr.bf16.mxu0 %v3401
        %4398 = vmatpush1.bf16.msra.mxu0 %v3400
        %4399 = vmatprep.subr.bf16.mxu0 %v3393
        %4400 = vmatpush1.bf16.msra.mxu0 %v3392
        %4401 = vmatprep.subr.bf16.mxu0 %v3385
        %4402 = vmatpush1.bf16.msra.mxu0 %v3384
        %4403 = vmatprep.subr.bf16.mxu0 %v3505
        %4404 = vmatpush2.bf16.msra.mxu0 %v3504
        %4405 = vmatprep.subr.bf16.mxu0 %v3497
        %4406 = vmatpush2.bf16.msra.mxu0 %v3496
        %4407 = vmatprep.subr.bf16.mxu0 %v3489
        %4408 = vmatpush2.bf16.msra.mxu0 %v3488
        %4409 = vmatprep.subr.bf16.mxu0 %v3481
        %4410 = vmatpush2.bf16.msra.mxu0 %v3480
        %4411 = vmatprep.subr.bf16.mxu0 %v3473
        %4412 = vmatpush2.bf16.msra.mxu0 %v3472
        %4413 = vmatprep.subr.bf16.mxu0 %v3465
        %4414 = vmatpush2.bf16.msra.mxu0 %v3464
        %4415 = vmatprep.subr.bf16.mxu0 %v3457
        %4416 = vmatpush2.bf16.msra.mxu0 %v3456
        %4417 = vmatprep.subr.bf16.mxu0 %v3449
        %4418 = vmatpush2.bf16.msra.mxu0 %v3448
        %4419 = vmatprep.mubr.bf16.mxu0 %v2410
        %4420 = vmatmul.mubr.bf16.gmra.mxu0 %v2396
        %v4421 = vpop.f32.mrf.mxu0
        %v4422 = vadd.f32 %v2360, %v4421
        %v4423 = vpop.f32.mrf.mxu0
        %v4424 = vadd.f32 %v2364, %v4423
        %v4425 = vpop.f32.mrf.mxu0
        %v4426 = vpop.f32.mrf.mxu0
        %4427 = vdwg.mxu0
        %4428 = vmatprep.subr.bf16.mxu0 %v3569
        %4429 = vmatpush1.bf16.msra.mxu0 %v3568
        %4430 = vmatprep.subr.bf16.mxu0 %v3561
        %4431 = vmatpush1.bf16.msra.mxu0 %v3560
        %4432 = vmatprep.subr.bf16.mxu0 %v3553
        %4433 = vmatpush1.bf16.msra.mxu0 %v3552
        %4434 = vmatprep.subr.bf16.mxu0 %v3545
        %4435 = vmatpush1.bf16.msra.mxu0 %v3544
        %4436 = vmatprep.subr.bf16.mxu0 %v3537
        %4437 = vmatpush1.bf16.msra.mxu0 %v3536
        %4438 = vmatprep.subr.bf16.mxu0 %v3529
        %4439 = vmatpush1.bf16.msra.mxu0 %v3528
        %4440 = vmatprep.subr.bf16.mxu0 %v3521
        %4441 = vmatpush1.bf16.msra.mxu0 %v3520
        %4442 = vmatprep.subr.bf16.mxu0 %v3513
        %4443 = vmatpush1.bf16.msra.mxu0 %v3512
        %4444 = vmatprep.subr.bf16.mxu0 %v3633
        %4445 = vmatpush2.bf16.msra.mxu0 %v3632
        %4446 = vmatprep.subr.bf16.mxu0 %v3625
        %4447 = vmatpush2.bf16.msra.mxu0 %v3624
        %4448 = vmatprep.subr.bf16.mxu0 %v3617
        %4449 = vmatpush2.bf16.msra.mxu0 %v3616
        %4450 = vmatprep.subr.bf16.mxu0 %v3609
        %4451 = vmatpush2.bf16.msra.mxu0 %v3608
        %4452 = vmatprep.subr.bf16.mxu0 %v3601
        %4453 = vmatpush2.bf16.msra.mxu0 %v3600
        %4454 = vmatprep.subr.bf16.mxu0 %v3593
        %4455 = vmatpush2.bf16.msra.mxu0 %v3592
        %4456 = vmatprep.subr.bf16.mxu0 %v3585
        %4457 = vmatpush2.bf16.msra.mxu0 %v3584
        %4458 = vmatprep.subr.bf16.mxu0 %v3577
        %4459 = vmatpush2.bf16.msra.mxu0 %v3576
        %4460 = vmatprep.mubr.bf16.mxu0 %v2412
        %4461 = vmatmul.mubr.bf16.gmra.mxu0 %v2411
        %v4462 = vpop.f32.mrf.mxu0
        %v4463 = vadd.f32 %v4422, %v4462
        %v4464 = vpop.f32.mrf.mxu0
        %v4465 = vadd.f32 %v4424, %v4464
        %v4466 = vpop.f32.mrf.mxu0
        %v4467 = vpop.f32.mrf.mxu0
        %4468 = vdwg.mxu0
        %4469 = vmatprep.subr.bf16.mxu0 %v3697
        %4470 = vmatpush1.bf16.msra.mxu0 %v3696
        %4471 = vmatprep.subr.bf16.mxu0 %v3689
        %4472 = vmatpush1.bf16.msra.mxu0 %v3688
        %4473 = vmatprep.subr.bf16.mxu0 %v3681
        %4474 = vmatpush1.bf16.msra.mxu0 %v3680
        %4475 = vmatprep.subr.bf16.mxu0 %v3673
        %4476 = vmatpush1.bf16.msra.mxu0 %v3672
        %4477 = vmatprep.subr.bf16.mxu0 %v3665
        %4478 = vmatpush1.bf16.msra.mxu0 %v3664
        %4479 = vmatprep.subr.bf16.mxu0 %v3657
        %4480 = vmatpush1.bf16.msra.mxu0 %v3656
        %4481 = vmatprep.subr.bf16.mxu0 %v3649
        %4482 = vmatpush1.bf16.msra.mxu0 %v3648
        %4483 = vmatprep.subr.bf16.mxu0 %v3641
        %4484 = vmatpush1.bf16.msra.mxu0 %v3640
        %4485 = vmatprep.subr.bf16.mxu0 0
        %4486 = vmatpush2.bf16.msra.mxu0 0
        %4487 = vmatprep.subr.bf16.mxu0 0
        %4488 = vmatpush2.bf16.msra.mxu0 0
        %4489 = vmatprep.subr.bf16.mxu0 0
        %4490 = vmatpush2.bf16.msra.mxu0 0
        %4491 = vmatprep.subr.bf16.mxu0 0
        %4492 = vmatpush2.bf16.msra.mxu0 0
        %4493 = vmatprep.subr.bf16.mxu0 0
        %4494 = vmatpush2.bf16.msra.mxu0 0
        %4495 = vmatprep.subr.bf16.mxu0 0
        %4496 = vmatpush2.bf16.msra.mxu0 0
        %4497 = vmatprep.subr.bf16.mxu0 0
        %4498 = vmatpush2.bf16.msra.mxu0 0
        %4499 = vmatprep.subr.bf16.mxu0 0
        %4500 = vmatpush2.bf16.msra.mxu0 0
        %4501 = vmatprep.mubr.bf16.mxu0 0
        %4502 = vmatmul.mubr.bf16.gmra.mxu0 %v2403
        %v4503 = vpop.f32.mrf.mxu0
        %v4504 = vadd.f32 %v4463, %v4503
        %v4505 = vpop.f32.mrf.mxu0
        %v4506 = vadd.f32 %v4465, %v4505
        %v4507 = vpop.f32.mrf.mxu0
        %v4508 = vpop.f32.mrf.mxu0
        %4509 = vdwg.mxu0
        %v4510 = vmax.f32 %v4135, 0.0
        %v4511 = vmax.f32 %v4137, 0.0
        %v4512 = vmax.f32 %v4258, 0.0
        %v4513 = vmax.f32 %v4260, 0.0
        %v4514 = vmax.f32 %v4381, 0.0
        %v4515 = vmax.f32 %v4383, 0.0
        %v4516 = vmax.f32 %v4504, 0.0
        %v4517 = vmax.f32 %v4506, 0.0
        %v4518 = vld [vmem:[#allocation3] sm:$0x3f]
        %v4519 = vld [vmem:[%s704] sm:$0xff]
        %v4520 = vld [vmem:[%s704 + $0x8] sm:$0xff]
        %v4521 = vld [vmem:[%s704 + $0x10] sm:$0xff]
        %v4522 = vld [vmem:[%s704 + $0x18] sm:$0xff]
        %v4523 = vld [vmem:[%s704 + $0x20] sm:$0xff]
        %v4524 = vld [vmem:[%s704 + $0x28] sm:$0xff]
        %v4525 = vld [vmem:[%s704 + $0x30] sm:$0xff]
        %v4526 = vld [vmem:[%s704 + $0x38] sm:$0xff]
        %v4527 = vld [vmem:[%s704 + $0x40] sm:$0xff]
        %v4528 = vld [vmem:[%s704 + $0x48] sm:$0xff]
        %v4529 = vld [vmem:[%s704 + $0x50] sm:$0xff]
        %v4530 = vld [vmem:[%s704 + $0x58] sm:$0xff]
        %v4531 = vld [vmem:[%s704 + $0x60] sm:$0xff]
        %v4532 = vld [vmem:[%s704 + $0x68] sm:$0xff]
        %v4533 = vld [vmem:[%s704 + $0x70] sm:$0xff]
        %v4534 = vld [vmem:[%s704 + $0x78] sm:$0xff]
        %v4535 = vld [vmem:[%s704 + $0x80] sm:$0xff]
        %v4536 = vld [vmem:[%s704 + $0x88] sm:$0xff]
        %v4537 = vld [vmem:[%s704 + $0x90] sm:$0xff]
        %v4538 = vld [vmem:[%s704 + $0x98] sm:$0xff]
        %v4539 = vld [vmem:[%s704 + $0xa0] sm:$0xff]
        %v4540 = vld [vmem:[%s704 + $0xa8] sm:$0xff]
        %v4541 = vld [vmem:[%s704 + $0xb0] sm:$0xff]
        %v4542 = vld [vmem:[%s704 + $0xb8] sm:$0xff]
        %v4543 = vld [vmem:[%s704 + $0xc0] sm:$0xff]
        %v4544 = vld [vmem:[%s704 + $0xc8] sm:$0xff]
        %v4545 = vld [vmem:[%s704 + $0xd0] sm:$0xff]
        %v4546 = vld [vmem:[%s704 + $0xd8] sm:$0xff]
        %v4547 = vld [vmem:[%s704 + $0xe0] sm:$0xff]
        %v4548 = vld [vmem:[%s704 + $0xe8] sm:$0xff]
        %v4549 = vld [vmem:[%s704 + $0xf0] sm:$0xff]
        %v4550 = vld [vmem:[%s704 + $0xf8] sm:$0xff]
        %v4551 = vld [vmem:[%s704 + $0x100] sm:$0xff]
        %v4552 = vld [vmem:[%s704 + $0x108] sm:$0xff]
        %v4553 = vld [vmem:[%s704 + $0x110] sm:$0xff]
        %v4554 = vld [vmem:[%s704 + $0x118] sm:$0xff]
        %v4555 = vld [vmem:[%s704 + $0x120] sm:$0xff]
        %v4556 = vld [vmem:[%s704 + $0x128] sm:$0xff]
        %v4557 = vld [vmem:[%s704 + $0x130] sm:$0xff]
        %v4558 = vld [vmem:[%s704 + $0x138] sm:$0xff]
        %v4559 = vld [vmem:[%s704 + $0x140] sm:$0xff]
        %v4560 = vld [vmem:[%s704 + $0x148] sm:$0xff]
        %v4561 = vld [vmem:[%s704 + $0x150] sm:$0xff]
        %v4562 = vld [vmem:[%s704 + $0x158] sm:$0xff]
        %v4563 = vld [vmem:[%s704 + $0x160] sm:$0xff]
        %v4564 = vld [vmem:[%s704 + $0x168] sm:$0xff]
        %v4565 = vld [vmem:[%s704 + $0x170] sm:$0xff]
        %v4566 = vld [vmem:[%s704 + $0x178] sm:$0xff]
        %v4567 = vld [vmem:[%s704 + $0x180] sm:$0xff]
        %v4568 = vld [vmem:[%s704 + $0x188] sm:$0xff]
        %v4569 = vld [vmem:[%s704 + $0x190] sm:$0xff]
        %v4570 = vld [vmem:[%s704 + $0x198] sm:$0xff]
        %v4571 = vld [vmem:[%s704 + $0x1a0] sm:$0xff]
        %v4572 = vld [vmem:[%s704 + $0x1a8] sm:$0xff]
        %v4573 = vld [vmem:[%s704 + $0x1b0] sm:$0xff]
        %v4574 = vld [vmem:[%s704 + $0x1b8] sm:$0xff]
        %v4575 = vld [vmem:[%s704 + $0x1c0] sm:$0xff]
        %v4576 = vld [vmem:[%s704 + $0x1c8] sm:$0xff]
        %v4577 = vld [vmem:[%s704 + $0x1d0] sm:$0xff]
        %v4578 = vld [vmem:[%s704 + $0x1d8] sm:$0xff]
        %v4579 = vld [vmem:[%s704 + $0x1e0] sm:$0xff]
        %v4580 = vld [vmem:[%s704 + $0x1e8] sm:$0xff]
        %v4581 = vld [vmem:[%s704 + $0x1f0] sm:$0xff]
        %v4582 = vld [vmem:[%s704 + $0x1f8] sm:$0xff]
        %v4583 = vld [vmem:[%s704 + $0x200] sm:$0xff]
        %v4584 = vld [vmem:[%s704 + $0x208] sm:$0xff]
        %v4585 = vld [vmem:[%s704 + $0x210] sm:$0xff]
        %v4586 = vld [vmem:[%s704 + $0x218] sm:$0xff]
        %v4587 = vld [vmem:[%s704 + $0x220] sm:$0xff]
        %v4588 = vld [vmem:[%s704 + $0x228] sm:$0xff]
        %v4589 = vld [vmem:[%s704 + $0x230] sm:$0xff]
        %v4590 = vld [vmem:[%s704 + $0x238] sm:$0xff]
        %v4591 = vld [vmem:[%s704 + $0x240] sm:$0xff]
        %v4592 = vld [vmem:[%s704 + $0x248] sm:$0xff]
        %v4593 = vld [vmem:[%s704 + $0x250] sm:$0xff]
        %v4594 = vld [vmem:[%s704 + $0x258] sm:$0xff]
        %v4595 = vld [vmem:[%s704 + $0x260] sm:$0xff]
        %v4596 = vld [vmem:[%s704 + $0x268] sm:$0xff]
        %v4597 = vld [vmem:[%s704 + $0x270] sm:$0xff]
        %v4598 = vld [vmem:[%s704 + $0x278] sm:$0xff]
        %v4599 = vld [vmem:[%s704 + $0x280] sm:$0xff]
        %v4600 = vld [vmem:[%s704 + $0x288] sm:$0xff]
        %v4601 = vld [vmem:[%s704 + $0x290] sm:$0xff]
        %v4602 = vld [vmem:[%s704 + $0x298] sm:$0xff]
        %v4603 = vld [vmem:[%s704 + $0x2a0] sm:$0xff]
        %v4604 = vld [vmem:[%s704 + $0x2a8] sm:$0xff]
        %v4605 = vld [vmem:[%s704 + $0x2b0] sm:$0xff]
        %v4606 = vld [vmem:[%s704 + $0x2b8] sm:$0xff]
        %v4607 = vld [vmem:[%s704 + $0x2c0] sm:$0xff]
        %v4608 = vld [vmem:[%s704 + $0x2c8] sm:$0xff]
        %v4609 = vld [vmem:[%s704 + $0x2d0] sm:$0xff]
        %v4610 = vld [vmem:[%s704 + $0x2d8] sm:$0xff]
        %v4611 = vld [vmem:[%s704 + $0x2e0] sm:$0xff]
        %v4612 = vld [vmem:[%s704 + $0x2e8] sm:$0xff]
        %v4613 = vld [vmem:[%s704 + $0x2f0] sm:$0xff]
        %v4614 = vld [vmem:[%s704 + $0x2f8] sm:$0xff]
        %v4615 = vld [vmem:[%s704 + $0x300] sm:$0xff]
        %v4616 = vld [vmem:[%s704 + $0x308] sm:$0xff]
        %v4617 = vld [vmem:[%s704 + $0x310] sm:$0xff]
        %v4618 = vld [vmem:[%s704 + $0x318] sm:$0xff]
        %v4619 = vld [vmem:[%s704 + $0x320] sm:$0xff]
        %v4620 = vld [vmem:[%s704 + $0x328] sm:$0xff]
        %v4621 = vld [vmem:[%s704 + $0x330] sm:$0xff]
        %v4622 = vld [vmem:[%s704 + $0x338] sm:$0xff]
        %v4623 = vld [vmem:[%s704 + $0x340] sm:$0xff]
        %v4624 = vld [vmem:[%s704 + $0x348] sm:$0xff]
        %v4625 = vld [vmem:[%s704 + $0x350] sm:$0xff]
        %v4626 = vld [vmem:[%s704 + $0x358] sm:$0xff]
        %v4627 = vld [vmem:[%s704 + $0x360] sm:$0xff]
        %v4628 = vld [vmem:[%s704 + $0x368] sm:$0xff]
        %v4629 = vld [vmem:[%s704 + $0x370] sm:$0xff]
        %v4630 = vld [vmem:[%s704 + $0x378] sm:$0xff]
        %v4631 = vld [vmem:[%s704 + $0x380] sm:$0xff]
        %v4632 = vld [vmem:[%s704 + $0x388] sm:$0xff]
        %v4633 = vld [vmem:[%s704 + $0x390] sm:$0xff]
        %v4634 = vld [vmem:[%s704 + $0x398] sm:$0xff]
        %v4635 = vld [vmem:[%s704 + $0x3a0] sm:$0xff]
        %v4636 = vld [vmem:[%s704 + $0x3a8] sm:$0xff]
        %v4637 = vld [vmem:[%s704 + $0x3b0] sm:$0xff]
        %v4638 = vld [vmem:[%s704 + $0x3b8] sm:$0xff]
        %v4639 = vld [vmem:[%s704 + $0x3c0] sm:$0xff]
        %v4640 = vld [vmem:[%s704 + $0x3c8] sm:$0xff]
        %v4641 = vld [vmem:[%s704 + $0x3d0] sm:$0xff]
        %v4642 = vld [vmem:[%s704 + $0x3d8] sm:$0xff]
        %v4643 = vld [vmem:[%s704 + $0x3e0] sm:$0xff]
        %v4644 = vld [vmem:[%s704 + $0x3e8] sm:$0xff]
        %v4645 = vld [vmem:[%s704 + $0x3f0] sm:$0xff]
        %v4646 = vld [vmem:[%s704 + $0x3f8] sm:$0xff]
        %v4647 = vld [vmem:[%s704 + $0x400] sm:$0xff]
        %v4648 = vld [vmem:[%s704 + $0x408] sm:$0xff]
        %v4649 = vld [vmem:[%s704 + $0x410] sm:$0xff]
        %v4650 = vld [vmem:[%s704 + $0x418] sm:$0xff]
        %v4651 = vld [vmem:[%s704 + $0x420] sm:$0xff]
        %v4652 = vld [vmem:[%s704 + $0x428] sm:$0xff]
        %v4653 = vld [vmem:[%s704 + $0x430] sm:$0xff]
        %v4654 = vld [vmem:[%s704 + $0x438] sm:$0xff]
        %v4655 = vld [vmem:[%s704 + $0x440] sm:$0xff]
        %v4656 = vld [vmem:[%s704 + $0x448] sm:$0xff]
        %v4657 = vld [vmem:[%s704 + $0x450] sm:$0xff]
        %v4658 = vld [vmem:[%s704 + $0x458] sm:$0xff]
        %v4659 = vld [vmem:[%s704 + $0x460] sm:$0xff]
        %v4660 = vld [vmem:[%s704 + $0x468] sm:$0xff]
        %v4661 = vld [vmem:[%s704 + $0x470] sm:$0xff]
        %v4662 = vld [vmem:[%s704 + $0x478] sm:$0xff]
        %v4663 = vld [vmem:[%s704 + $0x480] sm:$0xff]
        %v4664 = vld [vmem:[%s704 + $0x488] sm:$0xff]
        %v4665 = vld [vmem:[%s704 + $0x490] sm:$0xff]
        %v4666 = vld [vmem:[%s704 + $0x498] sm:$0xff]
        %v4667 = vld [vmem:[%s704 + $0x4a0] sm:$0xff]
        %v4668 = vld [vmem:[%s704 + $0x4a8] sm:$0xff]
        %v4669 = vld [vmem:[%s704 + $0x4b0] sm:$0xff]
        %v4670 = vld [vmem:[%s704 + $0x4b8] sm:$0xff]
        %v4671 = vld [vmem:[%s704 + $0x4c0] sm:$0xff]
        %v4672 = vld [vmem:[%s704 + $0x4c8] sm:$0xff]
        %v4673 = vld [vmem:[%s704 + $0x4d0] sm:$0xff]
        %v4674 = vld [vmem:[%s704 + $0x4d8] sm:$0xff]
        %v4675 = vld [vmem:[%s704 + $0x4e0] sm:$0xff]
        %v4676 = vld [vmem:[%s704 + $0x4e8] sm:$0xff]
        %v4677 = vld [vmem:[%s704 + $0x4f0] sm:$0xff]
        %v4678 = vld [vmem:[%s704 + $0x4f8] sm:$0xff]
        %v4679 = vld [vmem:[%s704 + $0x500] sm:$0xff]
        %v4680 = vld [vmem:[%s704 + $0x508] sm:$0xff]
        %v4681 = vld [vmem:[%s704 + $0x510] sm:$0xff]
        %v4682 = vld [vmem:[%s704 + $0x518] sm:$0xff]
        %v4683 = vld [vmem:[%s704 + $0x520] sm:$0xff]
        %v4684 = vld [vmem:[%s704 + $0x528] sm:$0xff]
        %v4685 = vld [vmem:[%s704 + $0x530] sm:$0xff]
        %v4686 = vld [vmem:[%s704 + $0x538] sm:$0xff]
        %v4687 = vld [vmem:[%s704 + $0x540] sm:$0xff]
        %v4688 = vld [vmem:[%s704 + $0x548] sm:$0xff]
        %v4689 = vld [vmem:[%s704 + $0x550] sm:$0xff]
        %v4690 = vld [vmem:[%s704 + $0x558] sm:$0xff]
        %v4691 = vld [vmem:[%s704 + $0x560] sm:$0xff]
        %v4692 = vld [vmem:[%s704 + $0x568] sm:$0xff]
        %v4693 = vld [vmem:[%s704 + $0x570] sm:$0xff]
        %v4694 = vld [vmem:[%s704 + $0x578] sm:$0xff]
        %v4695 = vld [vmem:[%s704 + $0x580] sm:$0xff]
        %v4696 = vld [vmem:[%s704 + $0x588] sm:$0xff]
        %v4697 = vld [vmem:[%s704 + $0x590] sm:$0xff]
        %v4698 = vld [vmem:[%s704 + $0x598] sm:$0xff]
        %v4699 = vld [vmem:[%s704 + $0x5a0] sm:$0xff]
        %v4700 = vld [vmem:[%s704 + $0x5a8] sm:$0xff]
        %v4701 = vld [vmem:[%s704 + $0x5b0] sm:$0xff]
        %v4702 = vld [vmem:[%s704 + $0x5b8] sm:$0xff]
        %v4703 = vld [vmem:[%s704 + $0x5c0] sm:$0xff]
        %v4704 = vld [vmem:[%s704 + $0x5c8] sm:$0xff]
        %v4705 = vld [vmem:[%s704 + $0x5d0] sm:$0xff]
        %v4706 = vld [vmem:[%s704 + $0x5d8] sm:$0xff]
        %v4707 = vld [vmem:[%s704 + $0x5e0] sm:$0xff]
        %v4708 = vld [vmem:[%s704 + $0x5e8] sm:$0xff]
        %v4709 = vld [vmem:[%s704 + $0x5f0] sm:$0xff]
        %v4710 = vld [vmem:[%s704 + $0x5f8] sm:$0xff]
        %v4711 = vld [vmem:[%s704 + $0x600] sm:$0xff]
        %v4712 = vld [vmem:[%s704 + $0x608] sm:$0xff]
        %v4713 = vld [vmem:[%s704 + $0x610] sm:$0xff]
        %v4714 = vld [vmem:[%s704 + $0x618] sm:$0xff]
        %v4715 = vld [vmem:[%s704 + $0x620] sm:$0xff]
        %v4716 = vld [vmem:[%s704 + $0x628] sm:$0xff]
        %v4717 = vld [vmem:[%s704 + $0x630] sm:$0xff]
        %v4718 = vld [vmem:[%s704 + $0x638] sm:$0xff]
        %v4719 = vld [vmem:[%s704 + $0x640] sm:$0xff]
        %v4720 = vld [vmem:[%s704 + $0x648] sm:$0xff]
        %v4721 = vld [vmem:[%s704 + $0x650] sm:$0xff]
        %v4722 = vld [vmem:[%s704 + $0x658] sm:$0xff]
        %v4723 = vld [vmem:[%s704 + $0x660] sm:$0xff]
        %v4724 = vld [vmem:[%s704 + $0x668] sm:$0xff]
        %v4725 = vld [vmem:[%s704 + $0x670] sm:$0xff]
        %v4726 = vld [vmem:[%s704 + $0x678] sm:$0xff]
        %v4727 = vld [vmem:[%s704 + $0x680] sm:$0xff]
        %v4728 = vld [vmem:[%s704 + $0x688] sm:$0xff]
        %v4729 = vld [vmem:[%s704 + $0x690] sm:$0xff]
        %v4730 = vld [vmem:[%s704 + $0x698] sm:$0xff]
        %v4731 = vld [vmem:[%s704 + $0x6a0] sm:$0xff]
        %v4732 = vld [vmem:[%s704 + $0x6a8] sm:$0xff]
        %v4733 = vld [vmem:[%s704 + $0x6b0] sm:$0xff]
        %v4734 = vld [vmem:[%s704 + $0x6b8] sm:$0xff]
        %v4735 = vld [vmem:[%s704 + $0x6c0] sm:$0xff]
        %v4736 = vld [vmem:[%s704 + $0x6c8] sm:$0xff]
        %v4737 = vld [vmem:[%s704 + $0x6d0] sm:$0xff]
        %v4738 = vld [vmem:[%s704 + $0x6d8] sm:$0xff]
        %v4739 = vld [vmem:[%s704 + $0x6e0] sm:$0xff]
        %v4740 = vld [vmem:[%s704 + $0x6e8] sm:$0xff]
        %v4741 = vld [vmem:[%s704 + $0x6f0] sm:$0xff]
        %v4742 = vld [vmem:[%s704 + $0x6f8] sm:$0xff]
        %v4743 = vld [vmem:[%s704 + $0x700] sm:$0xff]
        %v4744 = vld [vmem:[%s704 + $0x708] sm:$0xff]
        %v4745 = vld [vmem:[%s704 + $0x710] sm:$0xff]
        %v4746 = vld [vmem:[%s704 + $0x718] sm:$0xff]
        %v4747 = vld [vmem:[%s704 + $0x720] sm:$0xff]
        %v4748 = vld [vmem:[%s704 + $0x728] sm:$0xff]
        %v4749 = vld [vmem:[%s704 + $0x730] sm:$0xff]
        %v4750 = vld [vmem:[%s704 + $0x738] sm:$0xff]
        %v4751 = vld [vmem:[%s704 + $0x740] sm:$0xff]
        %v4752 = vld [vmem:[%s704 + $0x748] sm:$0xff]
        %v4753 = vld [vmem:[%s704 + $0x750] sm:$0xff]
        %v4754 = vld [vmem:[%s704 + $0x758] sm:$0xff]
        %v4755 = vld [vmem:[%s704 + $0x760] sm:$0xff]
        %v4756 = vld [vmem:[%s704 + $0x768] sm:$0xff]
        %v4757 = vld [vmem:[%s704 + $0x770] sm:$0xff]
        %v4758 = vld [vmem:[%s704 + $0x778] sm:$0xff]
        %v4759 = vld [vmem:[%s704 + $0x780] sm:$0xff]
        %v4760 = vld [vmem:[%s704 + $0x788] sm:$0xff]
        %v4761 = vld [vmem:[%s704 + $0x790] sm:$0xff]
        %v4762 = vld [vmem:[%s704 + $0x798] sm:$0xff]
        %v4763 = vld [vmem:[%s704 + $0x7a0] sm:$0xff]
        %v4764 = vld [vmem:[%s704 + $0x7a8] sm:$0xff]
        %v4765 = vld [vmem:[%s704 + $0x7b0] sm:$0xff]
        %v4766 = vld [vmem:[%s704 + $0x7b8] sm:$0xff]
        %v4767 = vld [vmem:[%s704 + $0x7c0] sm:$0xff]
        %v4768 = vld [vmem:[%s704 + $0x7c8] sm:$0xff]
        %v4769 = vld [vmem:[%s704 + $0x7d0] sm:$0xff]
        %v4770 = vld [vmem:[%s704 + $0x7d8] sm:$0xff]
        %v4771 = vld [vmem:[%s704 + $0x7e0] sm:$0xff]
        %v4772 = vld [vmem:[%s704 + $0x7e8] sm:$0xff]
        %v4773 = vld [vmem:[%s704 + $0x7f0] sm:$0xff]
        %v4774 = vld [vmem:[%s704 + $0x7f8] sm:$0xff]
        %v4775 = vld [vmem:[%s704 + $0x800] sm:$0xff]
        %v4776 = vld [vmem:[%s704 + $0x808] sm:$0xff]
        %v4777 = vld [vmem:[%s704 + $0x810] sm:$0xff]
        %v4778 = vld [vmem:[%s704 + $0x818] sm:$0xff]
        %v4779 = vld [vmem:[%s704 + $0x820] sm:$0xff]
        %v4780 = vld [vmem:[%s704 + $0x828] sm:$0xff]
        %v4781 = vld [vmem:[%s704 + $0x830] sm:$0xff]
        %v4782 = vld [vmem:[%s704 + $0x838] sm:$0xff]
        %v4783 = vld [vmem:[%s704 + $0x840] sm:$0xff]
        %v4784 = vld [vmem:[%s704 + $0x848] sm:$0xff]
        %v4785 = vld [vmem:[%s704 + $0x850] sm:$0xff]
        %v4786 = vld [vmem:[%s704 + $0x858] sm:$0xff]
        %v4787 = vld [vmem:[%s704 + $0x860] sm:$0xff]
        %v4788 = vld [vmem:[%s704 + $0x868] sm:$0xff]
        %v4789 = vld [vmem:[%s704 + $0x870] sm:$0xff]
        %v4790 = vld [vmem:[%s704 + $0x878] sm:$0xff]
        %v4791 = vld [vmem:[%s704 + $0x880] sm:$0xff]
        %v4792 = vld [vmem:[%s704 + $0x888] sm:$0xff]
        %v4793 = vld [vmem:[%s704 + $0x890] sm:$0xff]
        %v4794 = vld [vmem:[%s704 + $0x898] sm:$0xff]
        %v4795 = vld [vmem:[%s704 + $0x8a0] sm:$0xff]
        %v4796 = vld [vmem:[%s704 + $0x8a8] sm:$0xff]
        %v4797 = vld [vmem:[%s704 + $0x8b0] sm:$0xff]
        %v4798 = vld [vmem:[%s704 + $0x8b8] sm:$0xff]
        %v4799 = vld [vmem:[%s704 + $0x8c0] sm:$0xff]
        %v4800 = vld [vmem:[%s704 + $0x8c8] sm:$0xff]
        %v4801 = vld [vmem:[%s704 + $0x8d0] sm:$0xff]
        %v4802 = vld [vmem:[%s704 + $0x8d8] sm:$0xff]
        %v4803 = vld [vmem:[%s704 + $0x8e0] sm:$0xff]
        %v4804 = vld [vmem:[%s704 + $0x8e8] sm:$0xff]
        %v4805 = vld [vmem:[%s704 + $0x8f0] sm:$0xff]
        %v4806 = vld [vmem:[%s704 + $0x8f8] sm:$0xff]
        %v4807 = vld [vmem:[%s704 + $0x900] sm:$0xff]
        %v4808 = vld [vmem:[%s704 + $0x908] sm:$0xff]
        %v4809 = vld [vmem:[%s704 + $0x910] sm:$0xff]
        %v4810 = vld [vmem:[%s704 + $0x918] sm:$0xff]
        %v4811 = vld [vmem:[%s704 + $0x920] sm:$0xff]
        %v4812 = vld [vmem:[%s704 + $0x928] sm:$0xff]
        %v4813 = vld [vmem:[%s704 + $0x930] sm:$0xff]
        %v4814 = vld [vmem:[%s704 + $0x938] sm:$0xff]
        %v4815 = vld [vmem:[%s704 + $0x940] sm:$0xff]
        %v4816 = vld [vmem:[%s704 + $0x948] sm:$0xff]
        %v4817 = vld [vmem:[%s704 + $0x950] sm:$0xff]
        %v4818 = vld [vmem:[%s704 + $0x958] sm:$0xff]
        %v4819 = vld [vmem:[%s704 + $0x960] sm:$0xff]
        %v4820 = vld [vmem:[%s704 + $0x968] sm:$0xff]
        %v4821 = vld [vmem:[%s704 + $0x970] sm:$0xff]
        %v4822 = vld [vmem:[%s704 + $0x978] sm:$0xff]
        %v4823 = vld [vmem:[%s704 + $0x980] sm:$0xff]
        %v4824 = vld [vmem:[%s704 + $0x988] sm:$0xff]
        %v4825 = vld [vmem:[%s704 + $0x990] sm:$0xff]
        %v4826 = vld [vmem:[%s704 + $0x998] sm:$0xff]
        %v4827 = vld [vmem:[%s704 + $0x9a0] sm:$0xff]
        %v4828 = vld [vmem:[%s704 + $0x9a8] sm:$0xff]
        %v4829 = vld [vmem:[%s704 + $0x9b0] sm:$0xff]
        %v4830 = vld [vmem:[%s704 + $0x9b8] sm:$0xff]
        %v4831 = vld [vmem:[%s704 + $0x9c0] sm:$0xff]
        %v4832 = vld [vmem:[%s704 + $0x9c8] sm:$0xff]
        %v4833 = vld [vmem:[%s704 + $0x9d0] sm:$0xff]
        %v4834 = vld [vmem:[%s704 + $0x9d8] sm:$0xff]
        %v4835 = vld [vmem:[%s704 + $0x9e0] sm:$0xff]
        %v4836 = vld [vmem:[%s704 + $0x9e8] sm:$0xff]
        %v4837 = vld [vmem:[%s704 + $0x9f0] sm:$0xff]
        %v4838 = vld [vmem:[%s704 + $0x9f8] sm:$0xff]
        %v4839 = vld [vmem:[%s704 + $0xa00] sm:$0xff]
        %v4840 = vld [vmem:[%s704 + $0xa08] sm:$0xff]
        %v4841 = vld [vmem:[%s704 + $0xa10] sm:$0xff]
        %v4842 = vld [vmem:[%s704 + $0xa18] sm:$0xff]
        %v4843 = vld [vmem:[%s704 + $0xa20] sm:$0xff]
        %v4844 = vld [vmem:[%s704 + $0xa28] sm:$0xff]
        %v4845 = vld [vmem:[%s704 + $0xa30] sm:$0xff]
        %v4846 = vld [vmem:[%s704 + $0xa38] sm:$0xff]
        %v4847 = vld [vmem:[%s704 + $0xa40] sm:$0xff]
        %v4848 = vld [vmem:[%s704 + $0xa48] sm:$0xff]
        %v4849 = vld [vmem:[%s704 + $0xa50] sm:$0xff]
        %v4850 = vld [vmem:[%s704 + $0xa58] sm:$0xff]
        %v4851 = vld [vmem:[%s704 + $0xa60] sm:$0xff]
        %v4852 = vld [vmem:[%s704 + $0xa68] sm:$0xff]
        %v4853 = vld [vmem:[%s704 + $0xa70] sm:$0xff]
        %v4854 = vld [vmem:[%s704 + $0xa78] sm:$0xff]
        %v4855 = vld [vmem:[%s704 + $0xa80] sm:$0xff]
        %v4856 = vld [vmem:[%s704 + $0xa88] sm:$0xff]
        %v4857 = vld [vmem:[%s704 + $0xa90] sm:$0xff]
        %v4858 = vld [vmem:[%s704 + $0xa98] sm:$0xff]
        %v4859 = vld [vmem:[%s704 + $0xaa0] sm:$0xff]
        %v4860 = vld [vmem:[%s704 + $0xaa8] sm:$0xff]
        %v4861 = vld [vmem:[%s704 + $0xab0] sm:$0xff]
        %v4862 = vld [vmem:[%s704 + $0xab8] sm:$0xff]
        %v4863 = vld [vmem:[%s704 + $0xac0] sm:$0xff]
        %v4864 = vld [vmem:[%s704 + $0xac8] sm:$0xff]
        %v4865 = vld [vmem:[%s704 + $0xad0] sm:$0xff]
        %v4866 = vld [vmem:[%s704 + $0xad8] sm:$0xff]
        %v4867 = vld [vmem:[%s704 + $0xae0] sm:$0xff]
        %v4868 = vld [vmem:[%s704 + $0xae8] sm:$0xff]
        %v4869 = vld [vmem:[%s704 + $0xaf0] sm:$0xff]
        %v4870 = vld [vmem:[%s704 + $0xaf8] sm:$0xff]
        %v4871 = vld [vmem:[%s704 + $0xb00] sm:$0xff]
        %v4872 = vld [vmem:[%s704 + $0xb08] sm:$0xff]
        %v4873 = vld [vmem:[%s704 + $0xb10] sm:$0xff]
        %v4874 = vld [vmem:[%s704 + $0xb18] sm:$0xff]
        %v4875 = vld [vmem:[%s704 + $0xb20] sm:$0xff]
        %v4876 = vld [vmem:[%s704 + $0xb28] sm:$0xff]
        %v4877 = vld [vmem:[%s704 + $0xb30] sm:$0xff]
        %v4878 = vld [vmem:[%s704 + $0xb38] sm:$0xff]
        %v4879 = vld [vmem:[%s704 + $0xb40] sm:$0xff]
        %v4880 = vld [vmem:[%s704 + $0xb48] sm:$0xff]
        %v4881 = vld [vmem:[%s704 + $0xb50] sm:$0xff]
        %v4882 = vld [vmem:[%s704 + $0xb58] sm:$0xff]
        %v4883 = vld [vmem:[%s704 + $0xb60] sm:$0xff]
        %v4884 = vld [vmem:[%s704 + $0xb68] sm:$0xff]
        %v4885 = vld [vmem:[%s704 + $0xb70] sm:$0xff]
        %v4886 = vld [vmem:[%s704 + $0xb78] sm:$0xff]
        %v4887 = vld [vmem:[%s704 + $0xb80] sm:$0xff]
        %v4888 = vld [vmem:[%s704 + $0xb88] sm:$0xff]
        %v4889 = vld [vmem:[%s704 + $0xb90] sm:$0xff]
        %v4890 = vld [vmem:[%s704 + $0xb98] sm:$0xff]
        %v4891 = vld [vmem:[%s704 + $0xba0] sm:$0xff]
        %v4892 = vld [vmem:[%s704 + $0xba8] sm:$0xff]
        %v4893 = vld [vmem:[%s704 + $0xbb0] sm:$0xff]
        %v4894 = vld [vmem:[%s704 + $0xbb8] sm:$0xff]
        %v4895 = vld [vmem:[%s704 + $0xbc0] sm:$0xff]
        %v4896 = vld [vmem:[%s704 + $0xbc8] sm:$0xff]
        %v4897 = vld [vmem:[%s704 + $0xbd0] sm:$0xff]
        %v4898 = vld [vmem:[%s704 + $0xbd8] sm:$0xff]
        %v4899 = vld [vmem:[%s704 + $0xbe0] sm:$0xff]
        %v4900 = vld [vmem:[%s704 + $0xbe8] sm:$0xff]
        %v4901 = vld [vmem:[%s704 + $0xbf0] sm:$0xff]
        %v4902 = vld [vmem:[%s704 + $0xbf8] sm:$0xff]
        %v4903 = vld [vmem:[%s713] sm:$0xff]
        %v4905 = vlaneseq
        %v4906 = vshrl.u32 %v4905, 7
        %v4907 = vsub.s32 0, %v4906
        %v4908 = vrot.slane %v4903, %v4907
        %v4909 = vlaneseq
        %v4910 = vshrl.u32 %v4909, 7
        %v4911 = vsub.s32 1, %v4910
        %v4912 = vrot.slane %v4903, %v4911
        %v4913 = vlaneseq
        %v4914 = vshrl.u32 %v4913, 7
        %v4915 = vsub.s32 2, %v4914
        %v4916 = vrot.slane %v4903, %v4915
        %v4917 = vlaneseq
        %v4918 = vshrl.u32 %v4917, 7
        %v4919 = vsub.s32 3, %v4918
        %v4920 = vrot.slane %v4903, %v4919
        %v4921 = vlaneseq
        %v4922 = vshrl.u32 %v4921, 7
        %v4923 = vsub.s32 4, %v4922
        %v4924 = vrot.slane %v4903, %v4923
        %v4925 = vlaneseq
        %v4926 = vshrl.u32 %v4925, 7
        %v4927 = vsub.s32 5, %v4926
        %v4928 = vrot.slane %v4903, %v4927
        %v4929 = vlaneseq
        %v4930 = vshrl.u32 %v4929, 7
        %v4931 = vsub.s32 6, %v4930
        %v4932 = vrot.slane %v4903, %v4931
        %v4933 = vlaneseq
        %v4934 = vshrl.u32 %v4933, 7
        %v4935 = vsub.s32 7, %v4934
        %v4936 = vrot.slane %v4903, %v4935
        %v4946 = vcombine.high %v4518, %v4518
        %v4948 = vunpack.c.l.s4 1966171168
        %v4949 = vunpack.c.0.s8 %v4948
        %v4950 = vlaneseq
        %v4951 = vshrl.u32 %v4950, 7
        %v4952 = vsub.s32 %v4949, %v4951
        %v4953 = vrot.slane %v4518, %v4952
        %v4955 = vunpack.c.l.s4 1966171168
        %v4956 = vunpack.c.0.s8 %v4955
        %v4957 = vlaneseq
        %v4958 = vshrl.u32 %v4957, 7
        %v4959 = vsub.s32 %v4956, %v4958
        %v4960 = vrot.slane %v4946, %v4959
        %v4961 = vcombine.high %v4953, %v4953
        %v4962 = vcombine.high %v4960, %v4960
        %v4964 = vunpack.c.l.s4 1966171168
        %v4965 = vunpack.c.0.s8 %v4964
        %v4966 = vlaneseq
        %v4967 = vshrl.u32 %v4966, 7
        %v4968 = vsub.s32 %v4965, %v4967
        %v4969 = vrot.slane %v4953, %v4968
        %v4971 = vunpack.c.l.s4 1966171168
        %v4972 = vunpack.c.0.s8 %v4971
        %v4973 = vlaneseq
        %v4974 = vshrl.u32 %v4973, 7
        %v4975 = vsub.s32 %v4972, %v4974
        %v4976 = vrot.slane %v4960, %v4975
        %v4978 = vunpack.c.l.s4 1966171168
        %v4979 = vunpack.c.0.s8 %v4978
        %v4980 = vlaneseq
        %v4981 = vshrl.u32 %v4980, 7
        %v4982 = vsub.s32 %v4979, %v4981
        %v4983 = vrot.slane %v4961, %v4982
        %v4985 = vunpack.c.l.s4 1966171168
        %v4986 = vunpack.c.0.s8 %v4985
        %v4987 = vlaneseq
        %v4988 = vshrl.u32 %v4987, 7
        %v4989 = vsub.s32 %v4986, %v4988
        %v4990 = vrot.slane %v4962, %v4989
        %v4991 = vcombine.high %v4969, %v4969
        %v4992 = vcombine.high %v4983, %v4983
        %v5383 = vunpack.c.l.b16 %v4519
        %v5384 = vunpack.c.h.b16 %v4519
        %v5385 = vunpack.c.l.b16 %v4520
        %v5386 = vunpack.c.h.b16 %v4520
        %v5387 = vunpack.c.l.b16 %v4521
        %v5388 = vunpack.c.h.b16 %v4521
        %v5389 = vunpack.c.l.b16 %v4522
        %v5390 = vunpack.c.h.b16 %v4522
        %v5391 = vunpack.c.l.b16 %v4523
        %v5392 = vunpack.c.h.b16 %v4523
        %v5393 = vunpack.c.l.b16 %v4524
        %v5394 = vunpack.c.h.b16 %v4524
        %v5395 = vunpack.c.l.b16 %v4525
        %v5396 = vunpack.c.h.b16 %v4525
        %v5397 = vunpack.c.l.b16 %v4526
        %v5398 = vunpack.c.h.b16 %v4526
        %v5399 = vunpack.c.l.b16 %v4527
        %v5400 = vunpack.c.h.b16 %v4527
        %v5401 = vunpack.c.l.b16 %v4528
        %v5402 = vunpack.c.h.b16 %v4528
        %v5403 = vunpack.c.l.b16 %v4529
        %v5404 = vunpack.c.h.b16 %v4529
        %v5405 = vunpack.c.l.b16 %v4530
        %v5406 = vunpack.c.h.b16 %v4530
        %v5407 = vunpack.c.l.b16 %v4531
        %v5408 = vunpack.c.h.b16 %v4531
        %v5409 = vunpack.c.l.b16 %v4532
        %v5410 = vunpack.c.h.b16 %v4532
        %v5411 = vunpack.c.l.b16 %v4533
        %v5412 = vunpack.c.h.b16 %v4533
        %v5413 = vunpack.c.l.b16 %v4534
        %v5414 = vunpack.c.h.b16 %v4534
        %v5415 = vunpack.c.l.b16 %v4535
        %v5416 = vunpack.c.h.b16 %v4535
        %v5417 = vunpack.c.l.b16 %v4536
        %v5418 = vunpack.c.h.b16 %v4536
        %v5419 = vunpack.c.l.b16 %v4537
        %v5420 = vunpack.c.h.b16 %v4537
        %v5421 = vunpack.c.l.b16 %v4538
        %v5422 = vunpack.c.h.b16 %v4538
        %v5423 = vunpack.c.l.b16 %v4539
        %v5424 = vunpack.c.h.b16 %v4539
        %v5425 = vunpack.c.l.b16 %v4540
        %v5426 = vunpack.c.h.b16 %v4540
        %v5427 = vunpack.c.l.b16 %v4541
        %v5428 = vunpack.c.h.b16 %v4541
        %v5429 = vunpack.c.l.b16 %v4542
        %v5430 = vunpack.c.h.b16 %v4542
        %v5431 = vunpack.c.l.b16 %v4543
        %v5432 = vunpack.c.h.b16 %v4543
        %v5433 = vunpack.c.l.b16 %v4544
        %v5434 = vunpack.c.h.b16 %v4544
        %v5435 = vunpack.c.l.b16 %v4545
        %v5436 = vunpack.c.h.b16 %v4545
        %v5437 = vunpack.c.l.b16 %v4546
        %v5438 = vunpack.c.h.b16 %v4546
        %v5439 = vunpack.c.l.b16 %v4547
        %v5440 = vunpack.c.h.b16 %v4547
        %v5441 = vunpack.c.l.b16 %v4548
        %v5442 = vunpack.c.h.b16 %v4548
        %v5443 = vunpack.c.l.b16 %v4549
        %v5444 = vunpack.c.h.b16 %v4549
        %v5445 = vunpack.c.l.b16 %v4550
        %v5446 = vunpack.c.h.b16 %v4550
        %v5447 = vunpack.c.l.b16 %v4551
        %v5448 = vunpack.c.h.b16 %v4551
        %v5449 = vunpack.c.l.b16 %v4552
        %v5450 = vunpack.c.h.b16 %v4552
        %v5451 = vunpack.c.l.b16 %v4553
        %v5452 = vunpack.c.h.b16 %v4553
        %v5453 = vunpack.c.l.b16 %v4554
        %v5454 = vunpack.c.h.b16 %v4554
        %v5455 = vunpack.c.l.b16 %v4555
        %v5456 = vunpack.c.h.b16 %v4555
        %v5457 = vunpack.c.l.b16 %v4556
        %v5458 = vunpack.c.h.b16 %v4556
        %v5459 = vunpack.c.l.b16 %v4557
        %v5460 = vunpack.c.h.b16 %v4557
        %v5461 = vunpack.c.l.b16 %v4558
        %v5462 = vunpack.c.h.b16 %v4558
        %v5463 = vunpack.c.l.b16 %v4559
        %v5464 = vunpack.c.h.b16 %v4559
        %v5465 = vunpack.c.l.b16 %v4560
        %v5466 = vunpack.c.h.b16 %v4560
        %v5467 = vunpack.c.l.b16 %v4561
        %v5468 = vunpack.c.h.b16 %v4561
        %v5469 = vunpack.c.l.b16 %v4562
        %v5470 = vunpack.c.h.b16 %v4562
        %v5471 = vunpack.c.l.b16 %v4563
        %v5472 = vunpack.c.h.b16 %v4563
        %v5473 = vunpack.c.l.b16 %v4564
        %v5474 = vunpack.c.h.b16 %v4564
        %v5475 = vunpack.c.l.b16 %v4565
        %v5476 = vunpack.c.h.b16 %v4565
        %v5477 = vunpack.c.l.b16 %v4566
        %v5478 = vunpack.c.h.b16 %v4566
        %v5479 = vunpack.c.l.b16 %v4567
        %v5480 = vunpack.c.h.b16 %v4567
        %v5481 = vunpack.c.l.b16 %v4568
        %v5482 = vunpack.c.h.b16 %v4568
        %v5483 = vunpack.c.l.b16 %v4569
        %v5484 = vunpack.c.h.b16 %v4569
        %v5485 = vunpack.c.l.b16 %v4570
        %v5486 = vunpack.c.h.b16 %v4570
        %v5487 = vunpack.c.l.b16 %v4571
        %v5488 = vunpack.c.h.b16 %v4571
        %v5489 = vunpack.c.l.b16 %v4572
        %v5490 = vunpack.c.h.b16 %v4572
        %v5491 = vunpack.c.l.b16 %v4573
        %v5492 = vunpack.c.h.b16 %v4573
        %v5493 = vunpack.c.l.b16 %v4574
        %v5494 = vunpack.c.h.b16 %v4574
        %v5495 = vunpack.c.l.b16 %v4575
        %v5496 = vunpack.c.h.b16 %v4575
        %v5497 = vunpack.c.l.b16 %v4576
        %v5498 = vunpack.c.h.b16 %v4576
        %v5499 = vunpack.c.l.b16 %v4577
        %v5500 = vunpack.c.h.b16 %v4577
        %v5501 = vunpack.c.l.b16 %v4578
        %v5502 = vunpack.c.h.b16 %v4578
        %v5503 = vunpack.c.l.b16 %v4579
        %v5504 = vunpack.c.h.b16 %v4579
        %v5505 = vunpack.c.l.b16 %v4580
        %v5506 = vunpack.c.h.b16 %v4580
        %v5507 = vunpack.c.l.b16 %v4581
        %v5508 = vunpack.c.h.b16 %v4581
        %v5509 = vunpack.c.l.b16 %v4582
        %v5510 = vunpack.c.h.b16 %v4582
        %v5511 = vunpack.c.l.b16 %v4583
        %v5512 = vunpack.c.h.b16 %v4583
        %v5513 = vunpack.c.l.b16 %v4584
        %v5514 = vunpack.c.h.b16 %v4584
        %v5515 = vunpack.c.l.b16 %v4585
        %v5516 = vunpack.c.h.b16 %v4585
        %v5517 = vunpack.c.l.b16 %v4586
        %v5518 = vunpack.c.h.b16 %v4586
        %v5519 = vunpack.c.l.b16 %v4587
        %v5520 = vunpack.c.h.b16 %v4587
        %v5521 = vunpack.c.l.b16 %v4588
        %v5522 = vunpack.c.h.b16 %v4588
        %v5523 = vunpack.c.l.b16 %v4589
        %v5524 = vunpack.c.h.b16 %v4589
        %v5525 = vunpack.c.l.b16 %v4590
        %v5526 = vunpack.c.h.b16 %v4590
        %v5527 = vunpack.c.l.b16 %v4591
        %v5528 = vunpack.c.h.b16 %v4591
        %v5529 = vunpack.c.l.b16 %v4592
        %v5530 = vunpack.c.h.b16 %v4592
        %v5531 = vunpack.c.l.b16 %v4593
        %v5532 = vunpack.c.h.b16 %v4593
        %v5533 = vunpack.c.l.b16 %v4594
        %v5534 = vunpack.c.h.b16 %v4594
        %v5535 = vunpack.c.l.b16 %v4595
        %v5536 = vunpack.c.h.b16 %v4595
        %v5537 = vunpack.c.l.b16 %v4596
        %v5538 = vunpack.c.h.b16 %v4596
        %v5539 = vunpack.c.l.b16 %v4597
        %v5540 = vunpack.c.h.b16 %v4597
        %v5541 = vunpack.c.l.b16 %v4598
        %v5542 = vunpack.c.h.b16 %v4598
        %v5543 = vunpack.c.l.b16 %v4599
        %v5544 = vunpack.c.h.b16 %v4599
        %v5545 = vunpack.c.l.b16 %v4600
        %v5546 = vunpack.c.h.b16 %v4600
        %v5547 = vunpack.c.l.b16 %v4601
        %v5548 = vunpack.c.h.b16 %v4601
        %v5549 = vunpack.c.l.b16 %v4602
        %v5550 = vunpack.c.h.b16 %v4602
        %v5551 = vunpack.c.l.b16 %v4603
        %v5552 = vunpack.c.h.b16 %v4603
        %v5553 = vunpack.c.l.b16 %v4604
        %v5554 = vunpack.c.h.b16 %v4604
        %v5555 = vunpack.c.l.b16 %v4605
        %v5556 = vunpack.c.h.b16 %v4605
        %v5557 = vunpack.c.l.b16 %v4606
        %v5558 = vunpack.c.h.b16 %v4606
        %v5559 = vunpack.c.l.b16 %v4607
        %v5560 = vunpack.c.h.b16 %v4607
        %v5561 = vunpack.c.l.b16 %v4608
        %v5562 = vunpack.c.h.b16 %v4608
        %v5563 = vunpack.c.l.b16 %v4609
        %v5564 = vunpack.c.h.b16 %v4609
        %v5565 = vunpack.c.l.b16 %v4610
        %v5566 = vunpack.c.h.b16 %v4610
        %v5567 = vunpack.c.l.b16 %v4611
        %v5568 = vunpack.c.h.b16 %v4611
        %v5569 = vunpack.c.l.b16 %v4612
        %v5570 = vunpack.c.h.b16 %v4612
        %v5571 = vunpack.c.l.b16 %v4613
        %v5572 = vunpack.c.h.b16 %v4613
        %v5573 = vunpack.c.l.b16 %v4614
        %v5574 = vunpack.c.h.b16 %v4614
        %v5575 = vunpack.c.l.b16 %v4615
        %v5576 = vunpack.c.h.b16 %v4615
        %v5577 = vunpack.c.l.b16 %v4616
        %v5578 = vunpack.c.h.b16 %v4616
        %v5579 = vunpack.c.l.b16 %v4617
        %v5580 = vunpack.c.h.b16 %v4617
        %v5581 = vunpack.c.l.b16 %v4618
        %v5582 = vunpack.c.h.b16 %v4618
        %v5583 = vunpack.c.l.b16 %v4619
        %v5584 = vunpack.c.h.b16 %v4619
        %v5585 = vunpack.c.l.b16 %v4620
        %v5586 = vunpack.c.h.b16 %v4620
        %v5587 = vunpack.c.l.b16 %v4621
        %v5588 = vunpack.c.h.b16 %v4621
        %v5589 = vunpack.c.l.b16 %v4622
        %v5590 = vunpack.c.h.b16 %v4622
        %v5591 = vunpack.c.l.b16 %v4623
        %v5592 = vunpack.c.h.b16 %v4623
        %v5593 = vunpack.c.l.b16 %v4624
        %v5594 = vunpack.c.h.b16 %v4624
        %v5595 = vunpack.c.l.b16 %v4625
        %v5596 = vunpack.c.h.b16 %v4625
        %v5597 = vunpack.c.l.b16 %v4626
        %v5598 = vunpack.c.h.b16 %v4626
        %v5599 = vunpack.c.l.b16 %v4627
        %v5600 = vunpack.c.h.b16 %v4627
        %v5601 = vunpack.c.l.b16 %v4628
        %v5602 = vunpack.c.h.b16 %v4628
        %v5603 = vunpack.c.l.b16 %v4629
        %v5604 = vunpack.c.h.b16 %v4629
        %v5605 = vunpack.c.l.b16 %v4630
        %v5606 = vunpack.c.h.b16 %v4630
        %v5607 = vunpack.c.l.b16 %v4631
        %v5608 = vunpack.c.h.b16 %v4631
        %v5609 = vunpack.c.l.b16 %v4632
        %v5610 = vunpack.c.h.b16 %v4632
        %v5611 = vunpack.c.l.b16 %v4633
        %v5612 = vunpack.c.h.b16 %v4633
        %v5613 = vunpack.c.l.b16 %v4634
        %v5614 = vunpack.c.h.b16 %v4634
        %v5615 = vunpack.c.l.b16 %v4635
        %v5616 = vunpack.c.h.b16 %v4635
        %v5617 = vunpack.c.l.b16 %v4636
        %v5618 = vunpack.c.h.b16 %v4636
        %v5619 = vunpack.c.l.b16 %v4637
        %v5620 = vunpack.c.h.b16 %v4637
        %v5621 = vunpack.c.l.b16 %v4638
        %v5622 = vunpack.c.h.b16 %v4638
        %v5623 = vunpack.c.l.b16 %v4639
        %v5624 = vunpack.c.h.b16 %v4639
        %v5625 = vunpack.c.l.b16 %v4640
        %v5626 = vunpack.c.h.b16 %v4640
        %v5627 = vunpack.c.l.b16 %v4641
        %v5628 = vunpack.c.h.b16 %v4641
        %v5629 = vunpack.c.l.b16 %v4642
        %v5630 = vunpack.c.h.b16 %v4642
        %v5631 = vunpack.c.l.b16 %v4643
        %v5632 = vunpack.c.h.b16 %v4643
        %v5633 = vunpack.c.l.b16 %v4644
        %v5634 = vunpack.c.h.b16 %v4644
        %v5635 = vunpack.c.l.b16 %v4645
        %v5636 = vunpack.c.h.b16 %v4645
        %v5637 = vunpack.c.l.b16 %v4646
        %v5638 = vunpack.c.h.b16 %v4646
        %v5639 = vunpack.c.l.b16 %v4647
        %v5640 = vunpack.c.h.b16 %v4647
        %v5641 = vunpack.c.l.b16 %v4648
        %v5642 = vunpack.c.h.b16 %v4648
        %v5643 = vunpack.c.l.b16 %v4649
        %v5644 = vunpack.c.h.b16 %v4649
        %v5645 = vunpack.c.l.b16 %v4650
        %v5646 = vunpack.c.h.b16 %v4650
        %v5647 = vunpack.c.l.b16 %v4651
        %v5648 = vunpack.c.h.b16 %v4651
        %v5649 = vunpack.c.l.b16 %v4652
        %v5650 = vunpack.c.h.b16 %v4652
        %v5651 = vunpack.c.l.b16 %v4653
        %v5652 = vunpack.c.h.b16 %v4653
        %v5653 = vunpack.c.l.b16 %v4654
        %v5654 = vunpack.c.h.b16 %v4654
        %v5655 = vunpack.c.l.b16 %v4655
        %v5656 = vunpack.c.h.b16 %v4655
        %v5657 = vunpack.c.l.b16 %v4656
        %v5658 = vunpack.c.h.b16 %v4656
        %v5659 = vunpack.c.l.b16 %v4657
        %v5660 = vunpack.c.h.b16 %v4657
        %v5661 = vunpack.c.l.b16 %v4658
        %v5662 = vunpack.c.h.b16 %v4658
        %v5663 = vunpack.c.l.b16 %v4659
        %v5664 = vunpack.c.h.b16 %v4659
        %v5665 = vunpack.c.l.b16 %v4660
        %v5666 = vunpack.c.h.b16 %v4660
        %v5667 = vunpack.c.l.b16 %v4661
        %v5668 = vunpack.c.h.b16 %v4661
        %v5669 = vunpack.c.l.b16 %v4662
        %v5670 = vunpack.c.h.b16 %v4662
        %v5671 = vunpack.c.l.b16 %v4663
        %v5672 = vunpack.c.h.b16 %v4663
        %v5673 = vunpack.c.l.b16 %v4664
        %v5674 = vunpack.c.h.b16 %v4664
        %v5675 = vunpack.c.l.b16 %v4665
        %v5676 = vunpack.c.h.b16 %v4665
        %v5677 = vunpack.c.l.b16 %v4666
        %v5678 = vunpack.c.h.b16 %v4666
        %v5679 = vunpack.c.l.b16 %v4667
        %v5680 = vunpack.c.h.b16 %v4667
        %v5681 = vunpack.c.l.b16 %v4668
        %v5682 = vunpack.c.h.b16 %v4668
        %v5683 = vunpack.c.l.b16 %v4669
        %v5684 = vunpack.c.h.b16 %v4669
        %v5685 = vunpack.c.l.b16 %v4670
        %v5686 = vunpack.c.h.b16 %v4670
        %v5687 = vunpack.c.l.b16 %v4671
        %v5688 = vunpack.c.h.b16 %v4671
        %v5689 = vunpack.c.l.b16 %v4672
        %v5690 = vunpack.c.h.b16 %v4672
        %v5691 = vunpack.c.l.b16 %v4673
        %v5692 = vunpack.c.h.b16 %v4673
        %v5693 = vunpack.c.l.b16 %v4674
        %v5694 = vunpack.c.h.b16 %v4674
        %v5695 = vunpack.c.l.b16 %v4675
        %v5696 = vunpack.c.h.b16 %v4675
        %v5697 = vunpack.c.l.b16 %v4676
        %v5698 = vunpack.c.h.b16 %v4676
        %v5699 = vunpack.c.l.b16 %v4677
        %v5700 = vunpack.c.h.b16 %v4677
        %v5701 = vunpack.c.l.b16 %v4678
        %v5702 = vunpack.c.h.b16 %v4678
        %v5703 = vunpack.c.l.b16 %v4679
        %v5704 = vunpack.c.h.b16 %v4679
        %v5705 = vunpack.c.l.b16 %v4680
        %v5706 = vunpack.c.h.b16 %v4680
        %v5707 = vunpack.c.l.b16 %v4681
        %v5708 = vunpack.c.h.b16 %v4681
        %v5709 = vunpack.c.l.b16 %v4682
        %v5710 = vunpack.c.h.b16 %v4682
        %v5711 = vunpack.c.l.b16 %v4683
        %v5712 = vunpack.c.h.b16 %v4683
        %v5713 = vunpack.c.l.b16 %v4684
        %v5714 = vunpack.c.h.b16 %v4684
        %v5715 = vunpack.c.l.b16 %v4685
        %v5716 = vunpack.c.h.b16 %v4685
        %v5717 = vunpack.c.l.b16 %v4686
        %v5718 = vunpack.c.h.b16 %v4686
        %v5719 = vunpack.c.l.b16 %v4687
        %v5720 = vunpack.c.h.b16 %v4687
        %v5721 = vunpack.c.l.b16 %v4688
        %v5722 = vunpack.c.h.b16 %v4688
        %v5723 = vunpack.c.l.b16 %v4689
        %v5724 = vunpack.c.h.b16 %v4689
        %v5725 = vunpack.c.l.b16 %v4690
        %v5726 = vunpack.c.h.b16 %v4690
        %v5727 = vunpack.c.l.b16 %v4691
        %v5728 = vunpack.c.h.b16 %v4691
        %v5729 = vunpack.c.l.b16 %v4692
        %v5730 = vunpack.c.h.b16 %v4692
        %v5731 = vunpack.c.l.b16 %v4693
        %v5732 = vunpack.c.h.b16 %v4693
        %v5733 = vunpack.c.l.b16 %v4694
        %v5734 = vunpack.c.h.b16 %v4694
        %v5735 = vunpack.c.l.b16 %v4695
        %v5736 = vunpack.c.h.b16 %v4695
        %v5737 = vunpack.c.l.b16 %v4696
        %v5738 = vunpack.c.h.b16 %v4696
        %v5739 = vunpack.c.l.b16 %v4697
        %v5740 = vunpack.c.h.b16 %v4697
        %v5741 = vunpack.c.l.b16 %v4698
        %v5742 = vunpack.c.h.b16 %v4698
        %v5743 = vunpack.c.l.b16 %v4699
        %v5744 = vunpack.c.h.b16 %v4699
        %v5745 = vunpack.c.l.b16 %v4700
        %v5746 = vunpack.c.h.b16 %v4700
        %v5747 = vunpack.c.l.b16 %v4701
        %v5748 = vunpack.c.h.b16 %v4701
        %v5749 = vunpack.c.l.b16 %v4702
        %v5750 = vunpack.c.h.b16 %v4702
        %v5751 = vunpack.c.l.b16 %v4703
        %v5752 = vunpack.c.h.b16 %v4703
        %v5753 = vunpack.c.l.b16 %v4704
        %v5754 = vunpack.c.h.b16 %v4704
        %v5755 = vunpack.c.l.b16 %v4705
        %v5756 = vunpack.c.h.b16 %v4705
        %v5757 = vunpack.c.l.b16 %v4706
        %v5758 = vunpack.c.h.b16 %v4706
        %v5759 = vunpack.c.l.b16 %v4707
        %v5760 = vunpack.c.h.b16 %v4707
        %v5761 = vunpack.c.l.b16 %v4708
        %v5762 = vunpack.c.h.b16 %v4708
        %v5763 = vunpack.c.l.b16 %v4709
        %v5764 = vunpack.c.h.b16 %v4709
        %v5765 = vunpack.c.l.b16 %v4710
        %v5766 = vunpack.c.h.b16 %v4710
        %v5767 = vunpack.c.l.b16 %v4711
        %v5768 = vunpack.c.h.b16 %v4711
        %v5769 = vunpack.c.l.b16 %v4712
        %v5770 = vunpack.c.h.b16 %v4712
        %v5771 = vunpack.c.l.b16 %v4713
        %v5772 = vunpack.c.h.b16 %v4713
        %v5773 = vunpack.c.l.b16 %v4714
        %v5774 = vunpack.c.h.b16 %v4714
        %v5775 = vunpack.c.l.b16 %v4715
        %v5776 = vunpack.c.h.b16 %v4715
        %v5777 = vunpack.c.l.b16 %v4716
        %v5778 = vunpack.c.h.b16 %v4716
        %v5779 = vunpack.c.l.b16 %v4717
        %v5780 = vunpack.c.h.b16 %v4717
        %v5781 = vunpack.c.l.b16 %v4718
        %v5782 = vunpack.c.h.b16 %v4718
        %v5783 = vunpack.c.l.b16 %v4719
        %v5784 = vunpack.c.h.b16 %v4719
        %v5785 = vunpack.c.l.b16 %v4720
        %v5786 = vunpack.c.h.b16 %v4720
        %v5787 = vunpack.c.l.b16 %v4721
        %v5788 = vunpack.c.h.b16 %v4721
        %v5789 = vunpack.c.l.b16 %v4722
        %v5790 = vunpack.c.h.b16 %v4722
        %v5791 = vunpack.c.l.b16 %v4723
        %v5792 = vunpack.c.h.b16 %v4723
        %v5793 = vunpack.c.l.b16 %v4724
        %v5794 = vunpack.c.h.b16 %v4724
        %v5795 = vunpack.c.l.b16 %v4725
        %v5796 = vunpack.c.h.b16 %v4725
        %v5797 = vunpack.c.l.b16 %v4726
        %v5798 = vunpack.c.h.b16 %v4726
        %v5799 = vunpack.c.l.b16 %v4727
        %v5800 = vunpack.c.h.b16 %v4727
        %v5801 = vunpack.c.l.b16 %v4728
        %v5802 = vunpack.c.h.b16 %v4728
        %v5803 = vunpack.c.l.b16 %v4729
        %v5804 = vunpack.c.h.b16 %v4729
        %v5805 = vunpack.c.l.b16 %v4730
        %v5806 = vunpack.c.h.b16 %v4730
        %v5807 = vunpack.c.l.b16 %v4731
        %v5808 = vunpack.c.h.b16 %v4731
        %v5809 = vunpack.c.l.b16 %v4732
        %v5810 = vunpack.c.h.b16 %v4732
        %v5811 = vunpack.c.l.b16 %v4733
        %v5812 = vunpack.c.h.b16 %v4733
        %v5813 = vunpack.c.l.b16 %v4734
        %v5814 = vunpack.c.h.b16 %v4734
        %v5815 = vunpack.c.l.b16 %v4735
        %v5816 = vunpack.c.h.b16 %v4735
        %v5817 = vunpack.c.l.b16 %v4736
        %v5818 = vunpack.c.h.b16 %v4736
        %v5819 = vunpack.c.l.b16 %v4737
        %v5820 = vunpack.c.h.b16 %v4737
        %v5821 = vunpack.c.l.b16 %v4738
        %v5822 = vunpack.c.h.b16 %v4738
        %v5823 = vunpack.c.l.b16 %v4739
        %v5824 = vunpack.c.h.b16 %v4739
        %v5825 = vunpack.c.l.b16 %v4740
        %v5826 = vunpack.c.h.b16 %v4740
        %v5827 = vunpack.c.l.b16 %v4741
        %v5828 = vunpack.c.h.b16 %v4741
        %v5829 = vunpack.c.l.b16 %v4742
        %v5830 = vunpack.c.h.b16 %v4742
        %v5831 = vunpack.c.l.b16 %v4743
        %v5832 = vunpack.c.h.b16 %v4743
        %v5833 = vunpack.c.l.b16 %v4744
        %v5834 = vunpack.c.h.b16 %v4744
        %v5835 = vunpack.c.l.b16 %v4745
        %v5836 = vunpack.c.h.b16 %v4745
        %v5837 = vunpack.c.l.b16 %v4746
        %v5838 = vunpack.c.h.b16 %v4746
        %v5839 = vunpack.c.l.b16 %v4747
        %v5840 = vunpack.c.h.b16 %v4747
        %v5841 = vunpack.c.l.b16 %v4748
        %v5842 = vunpack.c.h.b16 %v4748
        %v5843 = vunpack.c.l.b16 %v4749
        %v5844 = vunpack.c.h.b16 %v4749
        %v5845 = vunpack.c.l.b16 %v4750
        %v5846 = vunpack.c.h.b16 %v4750
        %v5847 = vunpack.c.l.b16 %v4751
        %v5848 = vunpack.c.h.b16 %v4751
        %v5849 = vunpack.c.l.b16 %v4752
        %v5850 = vunpack.c.h.b16 %v4752
        %v5851 = vunpack.c.l.b16 %v4753
        %v5852 = vunpack.c.h.b16 %v4753
        %v5853 = vunpack.c.l.b16 %v4754
        %v5854 = vunpack.c.h.b16 %v4754
        %v5855 = vunpack.c.l.b16 %v4755
        %v5856 = vunpack.c.h.b16 %v4755
        %v5857 = vunpack.c.l.b16 %v4756
        %v5858 = vunpack.c.h.b16 %v4756
        %v5859 = vunpack.c.l.b16 %v4757
        %v5860 = vunpack.c.h.b16 %v4757
        %v5861 = vunpack.c.l.b16 %v4758
        %v5862 = vunpack.c.h.b16 %v4758
        %v5863 = vunpack.c.l.b16 %v4759
        %v5864 = vunpack.c.h.b16 %v4759
        %v5865 = vunpack.c.l.b16 %v4760
        %v5866 = vunpack.c.h.b16 %v4760
        %v5867 = vunpack.c.l.b16 %v4761
        %v5868 = vunpack.c.h.b16 %v4761
        %v5869 = vunpack.c.l.b16 %v4762
        %v5870 = vunpack.c.h.b16 %v4762
        %v5871 = vunpack.c.l.b16 %v4763
        %v5872 = vunpack.c.h.b16 %v4763
        %v5873 = vunpack.c.l.b16 %v4764
        %v5874 = vunpack.c.h.b16 %v4764
        %v5875 = vunpack.c.l.b16 %v4765
        %v5876 = vunpack.c.h.b16 %v4765
        %v5877 = vunpack.c.l.b16 %v4766
        %v5878 = vunpack.c.h.b16 %v4766
        %v5879 = vunpack.c.l.b16 %v4767
        %v5880 = vunpack.c.h.b16 %v4767
        %v5881 = vunpack.c.l.b16 %v4768
        %v5882 = vunpack.c.h.b16 %v4768
        %v5883 = vunpack.c.l.b16 %v4769
        %v5884 = vunpack.c.h.b16 %v4769
        %v5885 = vunpack.c.l.b16 %v4770
        %v5886 = vunpack.c.h.b16 %v4770
        %v5887 = vunpack.c.l.b16 %v4771
        %v5888 = vunpack.c.h.b16 %v4771
        %v5889 = vunpack.c.l.b16 %v4772
        %v5890 = vunpack.c.h.b16 %v4772
        %v5891 = vunpack.c.l.b16 %v4773
        %v5892 = vunpack.c.h.b16 %v4773
        %v5893 = vunpack.c.l.b16 %v4774
        %v5894 = vunpack.c.h.b16 %v4774
        %v5895 = vunpack.c.l.b16 %v4775
        %v5896 = vunpack.c.h.b16 %v4775
        %v5897 = vunpack.c.l.b16 %v4776
        %v5898 = vunpack.c.h.b16 %v4776
        %v5899 = vunpack.c.l.b16 %v4777
        %v5900 = vunpack.c.h.b16 %v4777
        %v5901 = vunpack.c.l.b16 %v4778
        %v5902 = vunpack.c.h.b16 %v4778
        %v5903 = vunpack.c.l.b16 %v4779
        %v5904 = vunpack.c.h.b16 %v4779
        %v5905 = vunpack.c.l.b16 %v4780
        %v5906 = vunpack.c.h.b16 %v4780
        %v5907 = vunpack.c.l.b16 %v4781
        %v5908 = vunpack.c.h.b16 %v4781
        %v5909 = vunpack.c.l.b16 %v4782
        %v5910 = vunpack.c.h.b16 %v4782
        %v5911 = vunpack.c.l.b16 %v4783
        %v5912 = vunpack.c.h.b16 %v4783
        %v5913 = vunpack.c.l.b16 %v4784
        %v5914 = vunpack.c.h.b16 %v4784
        %v5915 = vunpack.c.l.b16 %v4785
        %v5916 = vunpack.c.h.b16 %v4785
        %v5917 = vunpack.c.l.b16 %v4786
        %v5918 = vunpack.c.h.b16 %v4786
        %v5919 = vunpack.c.l.b16 %v4787
        %v5920 = vunpack.c.h.b16 %v4787
        %v5921 = vunpack.c.l.b16 %v4788
        %v5922 = vunpack.c.h.b16 %v4788
        %v5923 = vunpack.c.l.b16 %v4789
        %v5924 = vunpack.c.h.b16 %v4789
        %v5925 = vunpack.c.l.b16 %v4790
        %v5926 = vunpack.c.h.b16 %v4790
        %v5927 = vunpack.c.l.b16 %v4791
        %v5928 = vunpack.c.h.b16 %v4791
        %v5929 = vunpack.c.l.b16 %v4792
        %v5930 = vunpack.c.h.b16 %v4792
        %v5931 = vunpack.c.l.b16 %v4793
        %v5932 = vunpack.c.h.b16 %v4793
        %v5933 = vunpack.c.l.b16 %v4794
        %v5934 = vunpack.c.h.b16 %v4794
        %v5935 = vunpack.c.l.b16 %v4795
        %v5936 = vunpack.c.h.b16 %v4795
        %v5937 = vunpack.c.l.b16 %v4796
        %v5938 = vunpack.c.h.b16 %v4796
        %v5939 = vunpack.c.l.b16 %v4797
        %v5940 = vunpack.c.h.b16 %v4797
        %v5941 = vunpack.c.l.b16 %v4798
        %v5942 = vunpack.c.h.b16 %v4798
        %v5943 = vunpack.c.l.b16 %v4799
        %v5944 = vunpack.c.h.b16 %v4799
        %v5945 = vunpack.c.l.b16 %v4800
        %v5946 = vunpack.c.h.b16 %v4800
        %v5947 = vunpack.c.l.b16 %v4801
        %v5948 = vunpack.c.h.b16 %v4801
        %v5949 = vunpack.c.l.b16 %v4802
        %v5950 = vunpack.c.h.b16 %v4802
        %v5951 = vunpack.c.l.b16 %v4803
        %v5952 = vunpack.c.h.b16 %v4803
        %v5953 = vunpack.c.l.b16 %v4804
        %v5954 = vunpack.c.h.b16 %v4804
        %v5955 = vunpack.c.l.b16 %v4805
        %v5956 = vunpack.c.h.b16 %v4805
        %v5957 = vunpack.c.l.b16 %v4806
        %v5958 = vunpack.c.h.b16 %v4806
        %v5959 = vunpack.c.l.b16 %v4807
        %v5960 = vunpack.c.h.b16 %v4807
        %v5961 = vunpack.c.l.b16 %v4808
        %v5962 = vunpack.c.h.b16 %v4808
        %v5963 = vunpack.c.l.b16 %v4809
        %v5964 = vunpack.c.h.b16 %v4809
        %v5965 = vunpack.c.l.b16 %v4810
        %v5966 = vunpack.c.h.b16 %v4810
        %v5967 = vunpack.c.l.b16 %v4811
        %v5968 = vunpack.c.h.b16 %v4811
        %v5969 = vunpack.c.l.b16 %v4812
        %v5970 = vunpack.c.h.b16 %v4812
        %v5971 = vunpack.c.l.b16 %v4813
        %v5972 = vunpack.c.h.b16 %v4813
        %v5973 = vunpack.c.l.b16 %v4814
        %v5974 = vunpack.c.h.b16 %v4814
        %v5975 = vunpack.c.l.b16 %v4815
        %v5976 = vunpack.c.h.b16 %v4815
        %v5977 = vunpack.c.l.b16 %v4816
        %v5978 = vunpack.c.h.b16 %v4816
        %v5979 = vunpack.c.l.b16 %v4817
        %v5980 = vunpack.c.h.b16 %v4817
        %v5981 = vunpack.c.l.b16 %v4818
        %v5982 = vunpack.c.h.b16 %v4818
        %v5983 = vunpack.c.l.b16 %v4819
        %v5984 = vunpack.c.h.b16 %v4819
        %v5985 = vunpack.c.l.b16 %v4820
        %v5986 = vunpack.c.h.b16 %v4820
        %v5987 = vunpack.c.l.b16 %v4821
        %v5988 = vunpack.c.h.b16 %v4821
        %v5989 = vunpack.c.l.b16 %v4822
        %v5990 = vunpack.c.h.b16 %v4822
        %v5991 = vunpack.c.l.b16 %v4823
        %v5992 = vunpack.c.h.b16 %v4823
        %v5993 = vunpack.c.l.b16 %v4824
        %v5994 = vunpack.c.h.b16 %v4824
        %v5995 = vunpack.c.l.b16 %v4825
        %v5996 = vunpack.c.h.b16 %v4825
        %v5997 = vunpack.c.l.b16 %v4826
        %v5998 = vunpack.c.h.b16 %v4826
        %v5999 = vunpack.c.l.b16 %v4827
        %v6000 = vunpack.c.h.b16 %v4827
        %v6001 = vunpack.c.l.b16 %v4828
        %v6002 = vunpack.c.h.b16 %v4828
        %v6003 = vunpack.c.l.b16 %v4829
        %v6004 = vunpack.c.h.b16 %v4829
        %v6005 = vunpack.c.l.b16 %v4830
        %v6006 = vunpack.c.h.b16 %v4830
        %v6007 = vunpack.c.l.b16 %v4831
        %v6008 = vunpack.c.h.b16 %v4831
        %v6009 = vunpack.c.l.b16 %v4832
        %v6010 = vunpack.c.h.b16 %v4832
        %v6011 = vunpack.c.l.b16 %v4833
        %v6012 = vunpack.c.h.b16 %v4833
        %v6013 = vunpack.c.l.b16 %v4834
        %v6014 = vunpack.c.h.b16 %v4834
        %v6015 = vunpack.c.l.b16 %v4835
        %v6016 = vunpack.c.h.b16 %v4835
        %v6017 = vunpack.c.l.b16 %v4836
        %v6018 = vunpack.c.h.b16 %v4836
        %v6019 = vunpack.c.l.b16 %v4837
        %v6020 = vunpack.c.h.b16 %v4837
        %v6021 = vunpack.c.l.b16 %v4838
        %v6022 = vunpack.c.h.b16 %v4838
        %v6023 = vunpack.c.l.b16 %v4839
        %v6024 = vunpack.c.h.b16 %v4839
        %v6025 = vunpack.c.l.b16 %v4840
        %v6026 = vunpack.c.h.b16 %v4840
        %v6027 = vunpack.c.l.b16 %v4841
        %v6028 = vunpack.c.h.b16 %v4841
        %v6029 = vunpack.c.l.b16 %v4842
        %v6030 = vunpack.c.h.b16 %v4842
        %v6031 = vunpack.c.l.b16 %v4843
        %v6032 = vunpack.c.h.b16 %v4843
        %v6033 = vunpack.c.l.b16 %v4844
        %v6034 = vunpack.c.h.b16 %v4844
        %v6035 = vunpack.c.l.b16 %v4845
        %v6036 = vunpack.c.h.b16 %v4845
        %v6037 = vunpack.c.l.b16 %v4846
        %v6038 = vunpack.c.h.b16 %v4846
        %v6039 = vunpack.c.l.b16 %v4847
        %v6040 = vunpack.c.h.b16 %v4847
        %v6041 = vunpack.c.l.b16 %v4848
        %v6042 = vunpack.c.h.b16 %v4848
        %v6043 = vunpack.c.l.b16 %v4849
        %v6044 = vunpack.c.h.b16 %v4849
        %v6045 = vunpack.c.l.b16 %v4850
        %v6046 = vunpack.c.h.b16 %v4850
        %v6047 = vunpack.c.l.b16 %v4851
        %v6048 = vunpack.c.h.b16 %v4851
        %v6049 = vunpack.c.l.b16 %v4852
        %v6050 = vunpack.c.h.b16 %v4852
        %v6051 = vunpack.c.l.b16 %v4853
        %v6052 = vunpack.c.h.b16 %v4853
        %v6053 = vunpack.c.l.b16 %v4854
        %v6054 = vunpack.c.h.b16 %v4854
        %v6055 = vunpack.c.l.b16 %v4855
        %v6056 = vunpack.c.h.b16 %v4855
        %v6057 = vunpack.c.l.b16 %v4856
        %v6058 = vunpack.c.h.b16 %v4856
        %v6059 = vunpack.c.l.b16 %v4857
        %v6060 = vunpack.c.h.b16 %v4857
        %v6061 = vunpack.c.l.b16 %v4858
        %v6062 = vunpack.c.h.b16 %v4858
        %v6063 = vunpack.c.l.b16 %v4859
        %v6064 = vunpack.c.h.b16 %v4859
        %v6065 = vunpack.c.l.b16 %v4860
        %v6066 = vunpack.c.h.b16 %v4860
        %v6067 = vunpack.c.l.b16 %v4861
        %v6068 = vunpack.c.h.b16 %v4861
        %v6069 = vunpack.c.l.b16 %v4862
        %v6070 = vunpack.c.h.b16 %v4862
        %v6071 = vunpack.c.l.b16 %v4863
        %v6072 = vunpack.c.h.b16 %v4863
        %v6073 = vunpack.c.l.b16 %v4864
        %v6074 = vunpack.c.h.b16 %v4864
        %v6075 = vunpack.c.l.b16 %v4865
        %v6076 = vunpack.c.h.b16 %v4865
        %v6077 = vunpack.c.l.b16 %v4866
        %v6078 = vunpack.c.h.b16 %v4866
        %v6079 = vunpack.c.l.b16 %v4867
        %v6080 = vunpack.c.h.b16 %v4867
        %v6081 = vunpack.c.l.b16 %v4868
        %v6082 = vunpack.c.h.b16 %v4868
        %v6083 = vunpack.c.l.b16 %v4869
        %v6084 = vunpack.c.h.b16 %v4869
        %v6085 = vunpack.c.l.b16 %v4870
        %v6086 = vunpack.c.h.b16 %v4870
        %v6087 = vunpack.c.l.b16 %v4871
        %v6088 = vunpack.c.h.b16 %v4871
        %v6089 = vunpack.c.l.b16 %v4872
        %v6090 = vunpack.c.h.b16 %v4872
        %v6091 = vunpack.c.l.b16 %v4873
        %v6092 = vunpack.c.h.b16 %v4873
        %v6093 = vunpack.c.l.b16 %v4874
        %v6094 = vunpack.c.h.b16 %v4874
        %v6095 = vunpack.c.l.b16 %v4875
        %v6096 = vunpack.c.h.b16 %v4875
        %v6097 = vunpack.c.l.b16 %v4876
        %v6098 = vunpack.c.h.b16 %v4876
        %v6099 = vunpack.c.l.b16 %v4877
        %v6100 = vunpack.c.h.b16 %v4877
        %v6101 = vunpack.c.l.b16 %v4878
        %v6102 = vunpack.c.h.b16 %v4878
        %v6103 = vunpack.c.l.b16 %v4879
        %v6104 = vunpack.c.h.b16 %v4879
        %v6105 = vunpack.c.l.b16 %v4880
        %v6106 = vunpack.c.h.b16 %v4880
        %v6107 = vunpack.c.l.b16 %v4881
        %v6108 = vunpack.c.h.b16 %v4881
        %v6109 = vunpack.c.l.b16 %v4882
        %v6110 = vunpack.c.h.b16 %v4882
        %v6111 = vunpack.c.l.b16 %v4883
        %v6112 = vunpack.c.h.b16 %v4883
        %v6113 = vunpack.c.l.b16 %v4884
        %v6114 = vunpack.c.h.b16 %v4884
        %v6115 = vunpack.c.l.b16 %v4885
        %v6116 = vunpack.c.h.b16 %v4885
        %v6117 = vunpack.c.l.b16 %v4886
        %v6118 = vunpack.c.h.b16 %v4886
        %v6119 = vunpack.c.l.b16 %v4887
        %v6120 = vunpack.c.h.b16 %v4887
        %v6121 = vunpack.c.l.b16 %v4888
        %v6122 = vunpack.c.h.b16 %v4888
        %v6123 = vunpack.c.l.b16 %v4889
        %v6124 = vunpack.c.h.b16 %v4889
        %v6125 = vunpack.c.l.b16 %v4890
        %v6126 = vunpack.c.h.b16 %v4890
        %v6127 = vunpack.c.l.b16 %v4891
        %v6128 = vunpack.c.h.b16 %v4891
        %v6129 = vunpack.c.l.b16 %v4892
        %v6130 = vunpack.c.h.b16 %v4892
        %v6131 = vunpack.c.l.b16 %v4893
        %v6132 = vunpack.c.h.b16 %v4893
        %v6133 = vunpack.c.l.b16 %v4894
        %v6134 = vunpack.c.h.b16 %v4894
        %v6135 = vunpack.c.l.b16 %v4895
        %v6136 = vunpack.c.h.b16 %v4895
        %v6137 = vunpack.c.l.b16 %v4896
        %v6138 = vunpack.c.h.b16 %v4896
        %v6139 = vunpack.c.l.b16 %v4897
        %v6140 = vunpack.c.h.b16 %v4897
        %v6141 = vunpack.c.l.b16 %v4898
        %v6142 = vunpack.c.h.b16 %v4898
        %v6143 = vunpack.c.l.b16 %v4899
        %v6144 = vunpack.c.h.b16 %v4899
        %v6145 = vunpack.c.l.b16 %v4900
        %v6146 = vunpack.c.h.b16 %v4900
        %v6147 = vunpack.c.l.b16 %v4901
        %v6148 = vunpack.c.h.b16 %v4901
        %v6149 = vunpack.c.l.b16 %v4902
        %v6150 = vunpack.c.h.b16 %v4902
        %v6151 = vpack.c.b16 %v5391, %v5383
        %v6152 = vpack.c.b16 %v5392, %v5384
        %v6153 = vpack.c.b16 %v5393, %v5385
        %v6154 = vpack.c.b16 %v5394, %v5386
        %v6155 = vpack.c.b16 %v5395, %v5387
        %v6156 = vpack.c.b16 %v5396, %v5388
        %v6157 = vpack.c.b16 %v5397, %v5389
        %v6158 = vpack.c.b16 %v5398, %v5390
        %v6159 = vpack.c.b16 %v5407, %v5399
        %v6160 = vpack.c.b16 %v5408, %v5400
        %v6161 = vpack.c.b16 %v5409, %v5401
        %v6162 = vpack.c.b16 %v5410, %v5402
        %v6163 = vpack.c.b16 %v5411, %v5403
        %v6164 = vpack.c.b16 %v5412, %v5404
        %v6165 = vpack.c.b16 %v5413, %v5405
        %v6166 = vpack.c.b16 %v5414, %v5406
        %v6167 = vpack.c.b16 %v5423, %v5415
        %v6168 = vpack.c.b16 %v5424, %v5416
        %v6169 = vpack.c.b16 %v5425, %v5417
        %v6170 = vpack.c.b16 %v5426, %v5418
        %v6171 = vpack.c.b16 %v5427, %v5419
        %v6172 = vpack.c.b16 %v5428, %v5420
        %v6173 = vpack.c.b16 %v5429, %v5421
        %v6174 = vpack.c.b16 %v5430, %v5422
        %v6175 = vpack.c.b16 %v5439, %v5431
        %v6176 = vpack.c.b16 %v5440, %v5432
        %v6177 = vpack.c.b16 %v5441, %v5433
        %v6178 = vpack.c.b16 %v5442, %v5434
        %v6179 = vpack.c.b16 %v5443, %v5435
        %v6180 = vpack.c.b16 %v5444, %v5436
        %v6181 = vpack.c.b16 %v5445, %v5437
        %v6182 = vpack.c.b16 %v5446, %v5438
        %v6183 = vpack.c.b16 %v5455, %v5447
        %v6184 = vpack.c.b16 %v5456, %v5448
        %v6185 = vpack.c.b16 %v5457, %v5449
        %v6186 = vpack.c.b16 %v5458, %v5450
        %v6187 = vpack.c.b16 %v5459, %v5451
        %v6188 = vpack.c.b16 %v5460, %v5452
        %v6189 = vpack.c.b16 %v5461, %v5453
        %v6190 = vpack.c.b16 %v5462, %v5454
        %v6191 = vpack.c.b16 %v5471, %v5463
        %v6192 = vpack.c.b16 %v5472, %v5464
        %v6193 = vpack.c.b16 %v5473, %v5465
        %v6194 = vpack.c.b16 %v5474, %v5466
        %v6195 = vpack.c.b16 %v5475, %v5467
        %v6196 = vpack.c.b16 %v5476, %v5468
        %v6197 = vpack.c.b16 %v5477, %v5469
        %v6198 = vpack.c.b16 %v5478, %v5470
        %v6199 = vpack.c.b16 %v5487, %v5479
        %v6200 = vpack.c.b16 %v5488, %v5480
        %v6201 = vpack.c.b16 %v5489, %v5481
        %v6202 = vpack.c.b16 %v5490, %v5482
        %v6203 = vpack.c.b16 %v5491, %v5483
        %v6204 = vpack.c.b16 %v5492, %v5484
        %v6205 = vpack.c.b16 %v5493, %v5485
        %v6206 = vpack.c.b16 %v5494, %v5486
        %v6207 = vpack.c.b16 %v5503, %v5495
        %v6208 = vpack.c.b16 %v5504, %v5496
        %v6209 = vpack.c.b16 %v5505, %v5497
        %v6210 = vpack.c.b16 %v5506, %v5498
        %v6211 = vpack.c.b16 %v5507, %v5499
        %v6212 = vpack.c.b16 %v5508, %v5500
        %v6213 = vpack.c.b16 %v5509, %v5501
        %v6214 = vpack.c.b16 %v5510, %v5502
        %v6215 = vpack.c.b16 %v5519, %v5511
        %v6216 = vpack.c.b16 %v5520, %v5512
        %v6217 = vpack.c.b16 %v5521, %v5513
        %v6218 = vpack.c.b16 %v5522, %v5514
        %v6219 = vpack.c.b16 %v5523, %v5515
        %v6220 = vpack.c.b16 %v5524, %v5516
        %v6221 = vpack.c.b16 %v5525, %v5517
        %v6222 = vpack.c.b16 %v5526, %v5518
        %v6223 = vpack.c.b16 %v5535, %v5527
        %v6224 = vpack.c.b16 %v5536, %v5528
        %v6225 = vpack.c.b16 %v5537, %v5529
        %v6226 = vpack.c.b16 %v5538, %v5530
        %v6227 = vpack.c.b16 %v5539, %v5531
        %v6228 = vpack.c.b16 %v5540, %v5532
        %v6229 = vpack.c.b16 %v5541, %v5533
        %v6230 = vpack.c.b16 %v5542, %v5534
        %v6231 = vpack.c.b16 %v5551, %v5543
        %v6232 = vpack.c.b16 %v5552, %v5544
        %v6233 = vpack.c.b16 %v5553, %v5545
        %v6234 = vpack.c.b16 %v5554, %v5546
        %v6235 = vpack.c.b16 %v5555, %v5547
        %v6236 = vpack.c.b16 %v5556, %v5548
        %v6237 = vpack.c.b16 %v5557, %v5549
        %v6238 = vpack.c.b16 %v5558, %v5550
        %v6239 = vpack.c.b16 %v5567, %v5559
        %v6240 = vpack.c.b16 %v5568, %v5560
        %v6241 = vpack.c.b16 %v5569, %v5561
        %v6242 = vpack.c.b16 %v5570, %v5562
        %v6243 = vpack.c.b16 %v5571, %v5563
        %v6244 = vpack.c.b16 %v5572, %v5564
        %v6245 = vpack.c.b16 %v5573, %v5565
        %v6246 = vpack.c.b16 %v5574, %v5566
        %v6247 = vpack.c.b16 %v5583, %v5575
        %v6248 = vpack.c.b16 %v5584, %v5576
        %v6249 = vpack.c.b16 %v5585, %v5577
        %v6250 = vpack.c.b16 %v5586, %v5578
        %v6251 = vpack.c.b16 %v5587, %v5579
        %v6252 = vpack.c.b16 %v5588, %v5580
        %v6253 = vpack.c.b16 %v5589, %v5581
        %v6254 = vpack.c.b16 %v5590, %v5582
        %v6255 = vpack.c.b16 %v5599, %v5591
        %v6256 = vpack.c.b16 %v5600, %v5592
        %v6257 = vpack.c.b16 %v5601, %v5593
        %v6258 = vpack.c.b16 %v5602, %v5594
        %v6259 = vpack.c.b16 %v5603, %v5595
        %v6260 = vpack.c.b16 %v5604, %v5596
        %v6261 = vpack.c.b16 %v5605, %v5597
        %v6262 = vpack.c.b16 %v5606, %v5598
        %v6263 = vpack.c.b16 %v5615, %v5607
        %v6264 = vpack.c.b16 %v5616, %v5608
        %v6265 = vpack.c.b16 %v5617, %v5609
        %v6266 = vpack.c.b16 %v5618, %v5610
        %v6267 = vpack.c.b16 %v5619, %v5611
        %v6268 = vpack.c.b16 %v5620, %v5612
        %v6269 = vpack.c.b16 %v5621, %v5613
        %v6270 = vpack.c.b16 %v5622, %v5614
        %v6271 = vpack.c.b16 %v5631, %v5623
        %v6272 = vpack.c.b16 %v5632, %v5624
        %v6273 = vpack.c.b16 %v5633, %v5625
        %v6274 = vpack.c.b16 %v5634, %v5626
        %v6275 = vpack.c.b16 %v5635, %v5627
        %v6276 = vpack.c.b16 %v5636, %v5628
        %v6277 = vpack.c.b16 %v5637, %v5629
        %v6278 = vpack.c.b16 %v5638, %v5630
        %v6279 = vpack.c.b16 %v5647, %v5639
        %v6280 = vpack.c.b16 %v5648, %v5640
        %v6281 = vpack.c.b16 %v5649, %v5641
        %v6282 = vpack.c.b16 %v5650, %v5642
        %v6283 = vpack.c.b16 %v5651, %v5643
        %v6284 = vpack.c.b16 %v5652, %v5644
        %v6285 = vpack.c.b16 %v5653, %v5645
        %v6286 = vpack.c.b16 %v5654, %v5646
        %v6287 = vpack.c.b16 %v5663, %v5655
        %v6288 = vpack.c.b16 %v5664, %v5656
        %v6289 = vpack.c.b16 %v5665, %v5657
        %v6290 = vpack.c.b16 %v5666, %v5658
        %v6291 = vpack.c.b16 %v5667, %v5659
        %v6292 = vpack.c.b16 %v5668, %v5660
        %v6293 = vpack.c.b16 %v5669, %v5661
        %v6294 = vpack.c.b16 %v5670, %v5662
        %v6295 = vpack.c.b16 %v5679, %v5671
        %v6296 = vpack.c.b16 %v5680, %v5672
        %v6297 = vpack.c.b16 %v5681, %v5673
        %v6298 = vpack.c.b16 %v5682, %v5674
        %v6299 = vpack.c.b16 %v5683, %v5675
        %v6300 = vpack.c.b16 %v5684, %v5676
        %v6301 = vpack.c.b16 %v5685, %v5677
        %v6302 = vpack.c.b16 %v5686, %v5678
        %v6303 = vpack.c.b16 %v5695, %v5687
        %v6304 = vpack.c.b16 %v5696, %v5688
        %v6305 = vpack.c.b16 %v5697, %v5689
        %v6306 = vpack.c.b16 %v5698, %v5690
        %v6307 = vpack.c.b16 %v5699, %v5691
        %v6308 = vpack.c.b16 %v5700, %v5692
        %v6309 = vpack.c.b16 %v5701, %v5693
        %v6310 = vpack.c.b16 %v5702, %v5694
        %v6311 = vpack.c.b16 %v5711, %v5703
        %v6312 = vpack.c.b16 %v5712, %v5704
        %v6313 = vpack.c.b16 %v5713, %v5705
        %v6314 = vpack.c.b16 %v5714, %v5706
        %v6315 = vpack.c.b16 %v5715, %v5707
        %v6316 = vpack.c.b16 %v5716, %v5708
        %v6317 = vpack.c.b16 %v5717, %v5709
        %v6318 = vpack.c.b16 %v5718, %v5710
        %v6319 = vpack.c.b16 %v5727, %v5719
        %v6320 = vpack.c.b16 %v5728, %v5720
        %v6321 = vpack.c.b16 %v5729, %v5721
        %v6322 = vpack.c.b16 %v5730, %v5722
        %v6323 = vpack.c.b16 %v5731, %v5723
        %v6324 = vpack.c.b16 %v5732, %v5724
        %v6325 = vpack.c.b16 %v5733, %v5725
        %v6326 = vpack.c.b16 %v5734, %v5726
        %v6327 = vpack.c.b16 %v5743, %v5735
        %v6328 = vpack.c.b16 %v5744, %v5736
        %v6329 = vpack.c.b16 %v5745, %v5737
        %v6330 = vpack.c.b16 %v5746, %v5738
        %v6331 = vpack.c.b16 %v5747, %v5739
        %v6332 = vpack.c.b16 %v5748, %v5740
        %v6333 = vpack.c.b16 %v5749, %v5741
        %v6334 = vpack.c.b16 %v5750, %v5742
        %v6335 = vpack.c.b16 %v5759, %v5751
        %v6336 = vpack.c.b16 %v5760, %v5752
        %v6337 = vpack.c.b16 %v5761, %v5753
        %v6338 = vpack.c.b16 %v5762, %v5754
        %v6339 = vpack.c.b16 %v5763, %v5755
        %v6340 = vpack.c.b16 %v5764, %v5756
        %v6341 = vpack.c.b16 %v5765, %v5757
        %v6342 = vpack.c.b16 %v5766, %v5758
        %v6343 = vpack.c.b16 %v5775, %v5767
        %v6344 = vpack.c.b16 %v5776, %v5768
        %v6345 = vpack.c.b16 %v5777, %v5769
        %v6346 = vpack.c.b16 %v5778, %v5770
        %v6347 = vpack.c.b16 %v5779, %v5771
        %v6348 = vpack.c.b16 %v5780, %v5772
        %v6349 = vpack.c.b16 %v5781, %v5773
        %v6350 = vpack.c.b16 %v5782, %v5774
        %v6351 = vpack.c.b16 %v5791, %v5783
        %v6352 = vpack.c.b16 %v5792, %v5784
        %v6353 = vpack.c.b16 %v5793, %v5785
        %v6354 = vpack.c.b16 %v5794, %v5786
        %v6355 = vpack.c.b16 %v5795, %v5787
        %v6356 = vpack.c.b16 %v5796, %v5788
        %v6357 = vpack.c.b16 %v5797, %v5789
        %v6358 = vpack.c.b16 %v5798, %v5790
        %v6359 = vpack.c.b16 %v5807, %v5799
        %v6360 = vpack.c.b16 %v5808, %v5800
        %v6361 = vpack.c.b16 %v5809, %v5801
        %v6362 = vpack.c.b16 %v5810, %v5802
        %v6363 = vpack.c.b16 %v5811, %v5803
        %v6364 = vpack.c.b16 %v5812, %v5804
        %v6365 = vpack.c.b16 %v5813, %v5805
        %v6366 = vpack.c.b16 %v5814, %v5806
        %v6367 = vpack.c.b16 %v5823, %v5815
        %v6368 = vpack.c.b16 %v5824, %v5816
        %v6369 = vpack.c.b16 %v5825, %v5817
        %v6370 = vpack.c.b16 %v5826, %v5818
        %v6371 = vpack.c.b16 %v5827, %v5819
        %v6372 = vpack.c.b16 %v5828, %v5820
        %v6373 = vpack.c.b16 %v5829, %v5821
        %v6374 = vpack.c.b16 %v5830, %v5822
        %v6375 = vpack.c.b16 %v5839, %v5831
        %v6376 = vpack.c.b16 %v5840, %v5832
        %v6377 = vpack.c.b16 %v5841, %v5833
        %v6378 = vpack.c.b16 %v5842, %v5834
        %v6379 = vpack.c.b16 %v5843, %v5835
        %v6380 = vpack.c.b16 %v5844, %v5836
        %v6381 = vpack.c.b16 %v5845, %v5837
        %v6382 = vpack.c.b16 %v5846, %v5838
        %v6383 = vpack.c.b16 %v5855, %v5847
        %v6384 = vpack.c.b16 %v5856, %v5848
        %v6385 = vpack.c.b16 %v5857, %v5849
        %v6386 = vpack.c.b16 %v5858, %v5850
        %v6387 = vpack.c.b16 %v5859, %v5851
        %v6388 = vpack.c.b16 %v5860, %v5852
        %v6389 = vpack.c.b16 %v5861, %v5853
        %v6390 = vpack.c.b16 %v5862, %v5854
        %v6391 = vpack.c.b16 %v5871, %v5863
        %v6392 = vpack.c.b16 %v5872, %v5864
        %v6393 = vpack.c.b16 %v5873, %v5865
        %v6394 = vpack.c.b16 %v5874, %v5866
        %v6395 = vpack.c.b16 %v5875, %v5867
        %v6396 = vpack.c.b16 %v5876, %v5868
        %v6397 = vpack.c.b16 %v5877, %v5869
        %v6398 = vpack.c.b16 %v5878, %v5870
        %v6399 = vpack.c.b16 %v5887, %v5879
        %v6400 = vpack.c.b16 %v5888, %v5880
        %v6401 = vpack.c.b16 %v5889, %v5881
        %v6402 = vpack.c.b16 %v5890, %v5882
        %v6403 = vpack.c.b16 %v5891, %v5883
        %v6404 = vpack.c.b16 %v5892, %v5884
        %v6405 = vpack.c.b16 %v5893, %v5885
        %v6406 = vpack.c.b16 %v5894, %v5886
        %v6407 = vpack.c.b16 %v5903, %v5895
        %v6408 = vpack.c.b16 %v5904, %v5896
        %v6409 = vpack.c.b16 %v5905, %v5897
        %v6410 = vpack.c.b16 %v5906, %v5898
        %v6411 = vpack.c.b16 %v5907, %v5899
        %v6412 = vpack.c.b16 %v5908, %v5900
        %v6413 = vpack.c.b16 %v5909, %v5901
        %v6414 = vpack.c.b16 %v5910, %v5902
        %v6415 = vpack.c.b16 %v5919, %v5911
        %v6416 = vpack.c.b16 %v5920, %v5912
        %v6417 = vpack.c.b16 %v5921, %v5913
        %v6418 = vpack.c.b16 %v5922, %v5914
        %v6419 = vpack.c.b16 %v5923, %v5915
        %v6420 = vpack.c.b16 %v5924, %v5916
        %v6421 = vpack.c.b16 %v5925, %v5917
        %v6422 = vpack.c.b16 %v5926, %v5918
        %v6423 = vpack.c.b16 %v5935, %v5927
        %v6424 = vpack.c.b16 %v5936, %v5928
        %v6425 = vpack.c.b16 %v5937, %v5929
        %v6426 = vpack.c.b16 %v5938, %v5930
        %v6427 = vpack.c.b16 %v5939, %v5931
        %v6428 = vpack.c.b16 %v5940, %v5932
        %v6429 = vpack.c.b16 %v5941, %v5933
        %v6430 = vpack.c.b16 %v5942, %v5934
        %v6431 = vpack.c.b16 %v5951, %v5943
        %v6432 = vpack.c.b16 %v5952, %v5944
        %v6433 = vpack.c.b16 %v5953, %v5945
        %v6434 = vpack.c.b16 %v5954, %v5946
        %v6435 = vpack.c.b16 %v5955, %v5947
        %v6436 = vpack.c.b16 %v5956, %v5948
        %v6437 = vpack.c.b16 %v5957, %v5949
        %v6438 = vpack.c.b16 %v5958, %v5950
        %v6439 = vpack.c.b16 %v5967, %v5959
        %v6440 = vpack.c.b16 %v5968, %v5960
        %v6441 = vpack.c.b16 %v5969, %v5961
        %v6442 = vpack.c.b16 %v5970, %v5962
        %v6443 = vpack.c.b16 %v5971, %v5963
        %v6444 = vpack.c.b16 %v5972, %v5964
        %v6445 = vpack.c.b16 %v5973, %v5965
        %v6446 = vpack.c.b16 %v5974, %v5966
        %v6447 = vpack.c.b16 %v5983, %v5975
        %v6448 = vpack.c.b16 %v5984, %v5976
        %v6449 = vpack.c.b16 %v5985, %v5977
        %v6450 = vpack.c.b16 %v5986, %v5978
        %v6451 = vpack.c.b16 %v5987, %v5979
        %v6452 = vpack.c.b16 %v5988, %v5980
        %v6453 = vpack.c.b16 %v5989, %v5981
        %v6454 = vpack.c.b16 %v5990, %v5982
        %v6455 = vpack.c.b16 %v5999, %v5991
        %v6456 = vpack.c.b16 %v6000, %v5992
        %v6457 = vpack.c.b16 %v6001, %v5993
        %v6458 = vpack.c.b16 %v6002, %v5994
        %v6459 = vpack.c.b16 %v6003, %v5995
        %v6460 = vpack.c.b16 %v6004, %v5996
        %v6461 = vpack.c.b16 %v6005, %v5997
        %v6462 = vpack.c.b16 %v6006, %v5998
        %v6463 = vpack.c.b16 %v6015, %v6007
        %v6464 = vpack.c.b16 %v6016, %v6008
        %v6465 = vpack.c.b16 %v6017, %v6009
        %v6466 = vpack.c.b16 %v6018, %v6010
        %v6467 = vpack.c.b16 %v6019, %v6011
        %v6468 = vpack.c.b16 %v6020, %v6012
        %v6469 = vpack.c.b16 %v6021, %v6013
        %v6470 = vpack.c.b16 %v6022, %v6014
        %v6471 = vpack.c.b16 %v6031, %v6023
        %v6472 = vpack.c.b16 %v6032, %v6024
        %v6473 = vpack.c.b16 %v6033, %v6025
        %v6474 = vpack.c.b16 %v6034, %v6026
        %v6475 = vpack.c.b16 %v6035, %v6027
        %v6476 = vpack.c.b16 %v6036, %v6028
        %v6477 = vpack.c.b16 %v6037, %v6029
        %v6478 = vpack.c.b16 %v6038, %v6030
        %v6479 = vpack.c.b16 %v6047, %v6039
        %v6480 = vpack.c.b16 %v6048, %v6040
        %v6481 = vpack.c.b16 %v6049, %v6041
        %v6482 = vpack.c.b16 %v6050, %v6042
        %v6483 = vpack.c.b16 %v6051, %v6043
        %v6484 = vpack.c.b16 %v6052, %v6044
        %v6485 = vpack.c.b16 %v6053, %v6045
        %v6486 = vpack.c.b16 %v6054, %v6046
        %v6487 = vpack.c.b16 %v6063, %v6055
        %v6488 = vpack.c.b16 %v6064, %v6056
        %v6489 = vpack.c.b16 %v6065, %v6057
        %v6490 = vpack.c.b16 %v6066, %v6058
        %v6491 = vpack.c.b16 %v6067, %v6059
        %v6492 = vpack.c.b16 %v6068, %v6060
        %v6493 = vpack.c.b16 %v6069, %v6061
        %v6494 = vpack.c.b16 %v6070, %v6062
        %v6495 = vpack.c.b16 %v6079, %v6071
        %v6496 = vpack.c.b16 %v6080, %v6072
        %v6497 = vpack.c.b16 %v6081, %v6073
        %v6498 = vpack.c.b16 %v6082, %v6074
        %v6499 = vpack.c.b16 %v6083, %v6075
        %v6500 = vpack.c.b16 %v6084, %v6076
        %v6501 = vpack.c.b16 %v6085, %v6077
        %v6502 = vpack.c.b16 %v6086, %v6078
        %v6503 = vpack.c.b16 %v6095, %v6087
        %v6504 = vpack.c.b16 %v6096, %v6088
        %v6505 = vpack.c.b16 %v6097, %v6089
        %v6506 = vpack.c.b16 %v6098, %v6090
        %v6507 = vpack.c.b16 %v6099, %v6091
        %v6508 = vpack.c.b16 %v6100, %v6092
        %v6509 = vpack.c.b16 %v6101, %v6093
        %v6510 = vpack.c.b16 %v6102, %v6094
        %v6511 = vpack.c.b16 %v6111, %v6103
        %v6512 = vpack.c.b16 %v6112, %v6104
        %v6513 = vpack.c.b16 %v6113, %v6105
        %v6514 = vpack.c.b16 %v6114, %v6106
        %v6515 = vpack.c.b16 %v6115, %v6107
        %v6516 = vpack.c.b16 %v6116, %v6108
        %v6517 = vpack.c.b16 %v6117, %v6109
        %v6518 = vpack.c.b16 %v6118, %v6110
        %v6519 = vpack.c.b16 %v6127, %v6119
        %v6520 = vpack.c.b16 %v6128, %v6120
        %v6521 = vpack.c.b16 %v6129, %v6121
        %v6522 = vpack.c.b16 %v6130, %v6122
        %v6523 = vpack.c.b16 %v6131, %v6123
        %v6524 = vpack.c.b16 %v6132, %v6124
        %v6525 = vpack.c.b16 %v6133, %v6125
        %v6526 = vpack.c.b16 %v6134, %v6126
        %v6527 = vpack.c.b16 %v6143, %v6135
        %v6528 = vpack.c.b16 %v6144, %v6136
        %v6529 = vpack.c.b16 %v6145, %v6137
        %v6530 = vpack.c.b16 %v6146, %v6138
        %v6531 = vpack.c.b16 %v6147, %v6139
        %v6532 = vpack.c.b16 %v6148, %v6140
        %v6533 = vpack.c.b16 %v6149, %v6141
        %v6534 = vpack.c.b16 %v6150, %v6142
        %6919 = vmatprep.subr.bf16.mxu0 %v6208
        %6920 = vmatpush1.bf16.msra.mxu0 %v6207
        %6921 = vmatprep.subr.bf16.mxu0 %v6200
        %6922 = vmatpush1.bf16.msra.mxu0 %v6199
        %6923 = vmatprep.subr.bf16.mxu0 %v6192
        %6924 = vmatpush1.bf16.msra.mxu0 %v6191
        %6925 = vmatprep.subr.bf16.mxu0 %v6184
        %6926 = vmatpush1.bf16.msra.mxu0 %v6183
        %6927 = vmatprep.subr.bf16.mxu0 %v6176
        %6928 = vmatpush1.bf16.msra.mxu0 %v6175
        %6929 = vmatprep.subr.bf16.mxu0 %v6168
        %6930 = vmatpush1.bf16.msra.mxu0 %v6167
        %6931 = vmatprep.subr.bf16.mxu0 %v6160
        %6932 = vmatpush1.bf16.msra.mxu0 %v6159
        %6933 = vmatprep.subr.bf16.mxu0 %v6152
        %6934 = vmatpush1.bf16.msra.mxu0 %v6151
        %6935 = vmatprep.subr.bf16.mxu0 %v6272
        %6936 = vmatpush2.bf16.msra.mxu0 %v6271
        %6937 = vmatprep.subr.bf16.mxu0 %v6264
        %6938 = vmatpush2.bf16.msra.mxu0 %v6263
        %6939 = vmatprep.subr.bf16.mxu0 %v6256
        %6940 = vmatpush2.bf16.msra.mxu0 %v6255
        %6941 = vmatprep.subr.bf16.mxu0 %v6248
        %6942 = vmatpush2.bf16.msra.mxu0 %v6247
        %6943 = vmatprep.subr.bf16.mxu0 %v6240
        %6944 = vmatpush2.bf16.msra.mxu0 %v6239
        %6945 = vmatprep.subr.bf16.mxu0 %v6232
        %6946 = vmatpush2.bf16.msra.mxu0 %v6231
        %6947 = vmatprep.subr.bf16.mxu0 %v6224
        %6948 = vmatpush2.bf16.msra.mxu0 %v6223
        %6949 = vmatprep.subr.bf16.mxu0 %v6216
        %6950 = vmatpush2.bf16.msra.mxu0 %v6215
        %6951 = vmatprep.mubr.bf16.mxu0 %v4983
        %6952 = vmatmul.mubr.bf16.gmra.mxu0 %v4969
        %v6953 = vpop.f32.mrf.mxu0
        %v6954 = vadd.f32 %v4908, %v6953
        %v6955 = vpop.f32.mrf.mxu0
        %v6956 = vadd.f32 %v4912, %v6955
        %v6957 = vpop.f32.mrf.mxu0
        %v6958 = vpop.f32.mrf.mxu0
        %6959 = vdwg.mxu0
        %6960 = vmatprep.subr.bf16.mxu0 %v6336
        %6961 = vmatpush1.bf16.msra.mxu0 %v6335
        %6962 = vmatprep.subr.bf16.mxu0 %v6328
        %6963 = vmatpush1.bf16.msra.mxu0 %v6327
        %6964 = vmatprep.subr.bf16.mxu0 %v6320
        %6965 = vmatpush1.bf16.msra.mxu0 %v6319
        %6966 = vmatprep.subr.bf16.mxu0 %v6312
        %6967 = vmatpush1.bf16.msra.mxu0 %v6311
        %6968 = vmatprep.subr.bf16.mxu0 %v6304
        %6969 = vmatpush1.bf16.msra.mxu0 %v6303
        %6970 = vmatprep.subr.bf16.mxu0 %v6296
        %6971 = vmatpush1.bf16.msra.mxu0 %v6295
        %6972 = vmatprep.subr.bf16.mxu0 %v6288
        %6973 = vmatpush1.bf16.msra.mxu0 %v6287
        %6974 = vmatprep.subr.bf16.mxu0 %v6280
        %6975 = vmatpush1.bf16.msra.mxu0 %v6279
        %6976 = vmatprep.subr.bf16.mxu0 %v6400
        %6977 = vmatpush2.bf16.msra.mxu0 %v6399
        %6978 = vmatprep.subr.bf16.mxu0 %v6392
        %6979 = vmatpush2.bf16.msra.mxu0 %v6391
        %6980 = vmatprep.subr.bf16.mxu0 %v6384
        %6981 = vmatpush2.bf16.msra.mxu0 %v6383
        %6982 = vmatprep.subr.bf16.mxu0 %v6376
        %6983 = vmatpush2.bf16.msra.mxu0 %v6375
        %6984 = vmatprep.subr.bf16.mxu0 %v6368
        %6985 = vmatpush2.bf16.msra.mxu0 %v6367
        %6986 = vmatprep.subr.bf16.mxu0 %v6360
        %6987 = vmatpush2.bf16.msra.mxu0 %v6359
        %6988 = vmatprep.subr.bf16.mxu0 %v6352
        %6989 = vmatpush2.bf16.msra.mxu0 %v6351
        %6990 = vmatprep.subr.bf16.mxu0 %v6344
        %6991 = vmatpush2.bf16.msra.mxu0 %v6343
        %6992 = vmatprep.mubr.bf16.mxu0 %v4992
        %6993 = vmatmul.mubr.bf16.gmra.mxu0 %v4991
        %v6994 = vpop.f32.mrf.mxu0
        %v6995 = vadd.f32 %v6954, %v6994
        %v6996 = vpop.f32.mrf.mxu0
        %v6997 = vadd.f32 %v6956, %v6996
        %v6998 = vpop.f32.mrf.mxu0
        %v6999 = vpop.f32.mrf.mxu0
        %7000 = vdwg.mxu0
        %7001 = vmatprep.subr.bf16.mxu0 %v6464
        %7002 = vmatpush1.bf16.msra.mxu0 %v6463
        %7003 = vmatprep.subr.bf16.mxu0 %v6456
        %7004 = vmatpush1.bf16.msra.mxu0 %v6455
        %7005 = vmatprep.subr.bf16.mxu0 %v6448
        %7006 = vmatpush1.bf16.msra.mxu0 %v6447
        %7007 = vmatprep.subr.bf16.mxu0 %v6440
        %7008 = vmatpush1.bf16.msra.mxu0 %v6439
        %7009 = vmatprep.subr.bf16.mxu0 %v6432
        %7010 = vmatpush1.bf16.msra.mxu0 %v6431
        %7011 = vmatprep.subr.bf16.mxu0 %v6424
        %7012 = vmatpush1.bf16.msra.mxu0 %v6423
        %7013 = vmatprep.subr.bf16.mxu0 %v6416
        %7014 = vmatpush1.bf16.msra.mxu0 %v6415
        %7015 = vmatprep.subr.bf16.mxu0 %v6408
        %7016 = vmatpush1.bf16.msra.mxu0 %v6407
        %7017 = vmatprep.subr.bf16.mxu0 %v6528
        %7018 = vmatpush2.bf16.msra.mxu0 %v6527
        %7019 = vmatprep.subr.bf16.mxu0 %v6520
        %7020 = vmatpush2.bf16.msra.mxu0 %v6519
        %7021 = vmatprep.subr.bf16.mxu0 %v6512
        %7022 = vmatpush2.bf16.msra.mxu0 %v6511
        %7023 = vmatprep.subr.bf16.mxu0 %v6504
        %7024 = vmatpush2.bf16.msra.mxu0 %v6503
        %7025 = vmatprep.subr.bf16.mxu0 %v6496
        %7026 = vmatpush2.bf16.msra.mxu0 %v6495
        %7027 = vmatprep.subr.bf16.mxu0 %v6488
        %7028 = vmatpush2.bf16.msra.mxu0 %v6487
        %7029 = vmatprep.subr.bf16.mxu0 %v6480
        %7030 = vmatpush2.bf16.msra.mxu0 %v6479
        %7031 = vmatprep.subr.bf16.mxu0 %v6472
        %7032 = vmatpush2.bf16.msra.mxu0 %v6471
        %7033 = vmatprep.mubr.bf16.mxu0 %v4990
        %7034 = vmatmul.mubr.bf16.gmra.mxu0 %v4976
        %v7035 = vpop.f32.mrf.mxu0
        %v7036 = vadd.f32 %v6995, %v7035
        %v7037 = vpop.f32.mrf.mxu0
        %v7038 = vadd.f32 %v6997, %v7037
        %v7039 = vpop.f32.mrf.mxu0
        %v7040 = vpop.f32.mrf.mxu0
        %7041 = vdwg.mxu0
        %7042 = vmatprep.subr.bf16.mxu0 %v6210
        %7043 = vmatpush1.bf16.msra.mxu0 %v6209
        %7044 = vmatprep.subr.bf16.mxu0 %v6202
        %7045 = vmatpush1.bf16.msra.mxu0 %v6201
        %7046 = vmatprep.subr.bf16.mxu0 %v6194
        %7047 = vmatpush1.bf16.msra.mxu0 %v6193
        %7048 = vmatprep.subr.bf16.mxu0 %v6186
        %7049 = vmatpush1.bf16.msra.mxu0 %v6185
        %7050 = vmatprep.subr.bf16.mxu0 %v6178
        %7051 = vmatpush1.bf16.msra.mxu0 %v6177
        %7052 = vmatprep.subr.bf16.mxu0 %v6170
        %7053 = vmatpush1.bf16.msra.mxu0 %v6169
        %7054 = vmatprep.subr.bf16.mxu0 %v6162
        %7055 = vmatpush1.bf16.msra.mxu0 %v6161
        %7056 = vmatprep.subr.bf16.mxu0 %v6154
        %7057 = vmatpush1.bf16.msra.mxu0 %v6153
        %7058 = vmatprep.subr.bf16.mxu0 %v6274
        %7059 = vmatpush2.bf16.msra.mxu0 %v6273
        %7060 = vmatprep.subr.bf16.mxu0 %v6266
        %7061 = vmatpush2.bf16.msra.mxu0 %v6265
        %7062 = vmatprep.subr.bf16.mxu0 %v6258
        %7063 = vmatpush2.bf16.msra.mxu0 %v6257
        %7064 = vmatprep.subr.bf16.mxu0 %v6250
        %7065 = vmatpush2.bf16.msra.mxu0 %v6249
        %7066 = vmatprep.subr.bf16.mxu0 %v6242
        %7067 = vmatpush2.bf16.msra.mxu0 %v6241
        %7068 = vmatprep.subr.bf16.mxu0 %v6234
        %7069 = vmatpush2.bf16.msra.mxu0 %v6233
        %7070 = vmatprep.subr.bf16.mxu0 %v6226
        %7071 = vmatpush2.bf16.msra.mxu0 %v6225
        %7072 = vmatprep.subr.bf16.mxu0 %v6218
        %7073 = vmatpush2.bf16.msra.mxu0 %v6217
        %7074 = vmatprep.mubr.bf16.mxu0 %v4983
        %7075 = vmatmul.mubr.bf16.gmra.mxu0 %v4969
        %v7076 = vpop.f32.mrf.mxu0
        %v7077 = vadd.f32 %v4916, %v7076
        %v7078 = vpop.f32.mrf.mxu0
        %v7079 = vadd.f32 %v4920, %v7078
        %v7080 = vpop.f32.mrf.mxu0
        %v7081 = vpop.f32.mrf.mxu0
        %7082 = vdwg.mxu0
        %7083 = vmatprep.subr.bf16.mxu0 %v6338
        %7084 = vmatpush1.bf16.msra.mxu0 %v6337
        %7085 = vmatprep.subr.bf16.mxu0 %v6330
        %7086 = vmatpush1.bf16.msra.mxu0 %v6329
        %7087 = vmatprep.subr.bf16.mxu0 %v6322
        %7088 = vmatpush1.bf16.msra.mxu0 %v6321
        %7089 = vmatprep.subr.bf16.mxu0 %v6314
        %7090 = vmatpush1.bf16.msra.mxu0 %v6313
        %7091 = vmatprep.subr.bf16.mxu0 %v6306
        %7092 = vmatpush1.bf16.msra.mxu0 %v6305
        %7093 = vmatprep.subr.bf16.mxu0 %v6298
        %7094 = vmatpush1.bf16.msra.mxu0 %v6297
        %7095 = vmatprep.subr.bf16.mxu0 %v6290
        %7096 = vmatpush1.bf16.msra.mxu0 %v6289
        %7097 = vmatprep.subr.bf16.mxu0 %v6282
        %7098 = vmatpush1.bf16.msra.mxu0 %v6281
        %7099 = vmatprep.subr.bf16.mxu0 %v6402
        %7100 = vmatpush2.bf16.msra.mxu0 %v6401
        %7101 = vmatprep.subr.bf16.mxu0 %v6394
        %7102 = vmatpush2.bf16.msra.mxu0 %v6393
        %7103 = vmatprep.subr.bf16.mxu0 %v6386
        %7104 = vmatpush2.bf16.msra.mxu0 %v6385
        %7105 = vmatprep.subr.bf16.mxu0 %v6378
        %7106 = vmatpush2.bf16.msra.mxu0 %v6377
        %7107 = vmatprep.subr.bf16.mxu0 %v6370
        %7108 = vmatpush2.bf16.msra.mxu0 %v6369
        %7109 = vmatprep.subr.bf16.mxu0 %v6362
        %7110 = vmatpush2.bf16.msra.mxu0 %v6361
        %7111 = vmatprep.subr.bf16.mxu0 %v6354
        %7112 = vmatpush2.bf16.msra.mxu0 %v6353
        %7113 = vmatprep.subr.bf16.mxu0 %v6346
        %7114 = vmatpush2.bf16.msra.mxu0 %v6345
        %7115 = vmatprep.mubr.bf16.mxu0 %v4992
        %7116 = vmatmul.mubr.bf16.gmra.mxu0 %v4991
        %v7117 = vpop.f32.mrf.mxu0
        %v7118 = vadd.f32 %v7077, %v7117
        %v7119 = vpop.f32.mrf.mxu0
        %v7120 = vadd.f32 %v7079, %v7119
        %v7121 = vpop.f32.mrf.mxu0
        %v7122 = vpop.f32.mrf.mxu0
        %7123 = vdwg.mxu0
        %7124 = vmatprep.subr.bf16.mxu0 %v6466
        %7125 = vmatpush1.bf16.msra.mxu0 %v6465
        %7126 = vmatprep.subr.bf16.mxu0 %v6458
        %7127 = vmatpush1.bf16.msra.mxu0 %v6457
        %7128 = vmatprep.subr.bf16.mxu0 %v6450
        %7129 = vmatpush1.bf16.msra.mxu0 %v6449
        %7130 = vmatprep.subr.bf16.mxu0 %v6442
        %7131 = vmatpush1.bf16.msra.mxu0 %v6441
        %7132 = vmatprep.subr.bf16.mxu0 %v6434
        %7133 = vmatpush1.bf16.msra.mxu0 %v6433
        %7134 = vmatprep.subr.bf16.mxu0 %v6426
        %7135 = vmatpush1.bf16.msra.mxu0 %v6425
        %7136 = vmatprep.subr.bf16.mxu0 %v6418
        %7137 = vmatpush1.bf16.msra.mxu0 %v6417
        %7138 = vmatprep.subr.bf16.mxu0 %v6410
        %7139 = vmatpush1.bf16.msra.mxu0 %v6409
        %7140 = vmatprep.subr.bf16.mxu0 %v6530
        %7141 = vmatpush2.bf16.msra.mxu0 %v6529
        %7142 = vmatprep.subr.bf16.mxu0 %v6522
        %7143 = vmatpush2.bf16.msra.mxu0 %v6521
        %7144 = vmatprep.subr.bf16.mxu0 %v6514
        %7145 = vmatpush2.bf16.msra.mxu0 %v6513
        %7146 = vmatprep.subr.bf16.mxu0 %v6506
        %7147 = vmatpush2.bf16.msra.mxu0 %v6505
        %7148 = vmatprep.subr.bf16.mxu0 %v6498
        %7149 = vmatpush2.bf16.msra.mxu0 %v6497
        %7150 = vmatprep.subr.bf16.mxu0 %v6490
        %7151 = vmatpush2.bf16.msra.mxu0 %v6489
        %7152 = vmatprep.subr.bf16.mxu0 %v6482
        %7153 = vmatpush2.bf16.msra.mxu0 %v6481
        %7154 = vmatprep.subr.bf16.mxu0 %v6474
        %7155 = vmatpush2.bf16.msra.mxu0 %v6473
        %7156 = vmatprep.mubr.bf16.mxu0 %v4990
        %7157 = vmatmul.mubr.bf16.gmra.mxu0 %v4976
        %v7158 = vpop.f32.mrf.mxu0
        %v7159 = vadd.f32 %v7118, %v7158
        %v7160 = vpop.f32.mrf.mxu0
        %v7161 = vadd.f32 %v7120, %v7160
        %v7162 = vpop.f32.mrf.mxu0
        %v7163 = vpop.f32.mrf.mxu0
        %7164 = vdwg.mxu0
        %7165 = vmatprep.subr.bf16.mxu0 %v6212
        %7166 = vmatpush1.bf16.msra.mxu0 %v6211
        %7167 = vmatprep.subr.bf16.mxu0 %v6204
        %7168 = vmatpush1.bf16.msra.mxu0 %v6203
        %7169 = vmatprep.subr.bf16.mxu0 %v6196
        %7170 = vmatpush1.bf16.msra.mxu0 %v6195
        %7171 = vmatprep.subr.bf16.mxu0 %v6188
        %7172 = vmatpush1.bf16.msra.mxu0 %v6187
        %7173 = vmatprep.subr.bf16.mxu0 %v6180
        %7174 = vmatpush1.bf16.msra.mxu0 %v6179
        %7175 = vmatprep.subr.bf16.mxu0 %v6172
        %7176 = vmatpush1.bf16.msra.mxu0 %v6171
        %7177 = vmatprep.subr.bf16.mxu0 %v6164
        %7178 = vmatpush1.bf16.msra.mxu0 %v6163
        %7179 = vmatprep.subr.bf16.mxu0 %v6156
        %7180 = vmatpush1.bf16.msra.mxu0 %v6155
        %7181 = vmatprep.subr.bf16.mxu0 %v6276
        %7182 = vmatpush2.bf16.msra.mxu0 %v6275
        %7183 = vmatprep.subr.bf16.mxu0 %v6268
        %7184 = vmatpush2.bf16.msra.mxu0 %v6267
        %7185 = vmatprep.subr.bf16.mxu0 %v6260
        %7186 = vmatpush2.bf16.msra.mxu0 %v6259
        %7187 = vmatprep.subr.bf16.mxu0 %v6252
        %7188 = vmatpush2.bf16.msra.mxu0 %v6251
        %7189 = vmatprep.subr.bf16.mxu0 %v6244
        %7190 = vmatpush2.bf16.msra.mxu0 %v6243
        %7191 = vmatprep.subr.bf16.mxu0 %v6236
        %7192 = vmatpush2.bf16.msra.mxu0 %v6235
        %7193 = vmatprep.subr.bf16.mxu0 %v6228
        %7194 = vmatpush2.bf16.msra.mxu0 %v6227
        %7195 = vmatprep.subr.bf16.mxu0 %v6220
        %7196 = vmatpush2.bf16.msra.mxu0 %v6219
        %7197 = vmatprep.mubr.bf16.mxu0 %v4983
        %7198 = vmatmul.mubr.bf16.gmra.mxu0 %v4969
        %v7199 = vpop.f32.mrf.mxu0
        %v7200 = vadd.f32 %v4924, %v7199
        %v7201 = vpop.f32.mrf.mxu0
        %v7202 = vadd.f32 %v4928, %v7201
        %v7203 = vpop.f32.mrf.mxu0
        %v7204 = vpop.f32.mrf.mxu0
        %7205 = vdwg.mxu0
        %7206 = vmatprep.subr.bf16.mxu0 %v6340
        %7207 = vmatpush1.bf16.msra.mxu0 %v6339
        %7208 = vmatprep.subr.bf16.mxu0 %v6332
        %7209 = vmatpush1.bf16.msra.mxu0 %v6331
        %7210 = vmatprep.subr.bf16.mxu0 %v6324
        %7211 = vmatpush1.bf16.msra.mxu0 %v6323
        %7212 = vmatprep.subr.bf16.mxu0 %v6316
        %7213 = vmatpush1.bf16.msra.mxu0 %v6315
        %7214 = vmatprep.subr.bf16.mxu0 %v6308
        %7215 = vmatpush1.bf16.msra.mxu0 %v6307
        %7216 = vmatprep.subr.bf16.mxu0 %v6300
        %7217 = vmatpush1.bf16.msra.mxu0 %v6299
        %7218 = vmatprep.subr.bf16.mxu0 %v6292
        %7219 = vmatpush1.bf16.msra.mxu0 %v6291
        %7220 = vmatprep.subr.bf16.mxu0 %v6284
        %7221 = vmatpush1.bf16.msra.mxu0 %v6283
        %7222 = vmatprep.subr.bf16.mxu0 %v6404
        %7223 = vmatpush2.bf16.msra.mxu0 %v6403
        %7224 = vmatprep.subr.bf16.mxu0 %v6396
        %7225 = vmatpush2.bf16.msra.mxu0 %v6395
        %7226 = vmatprep.subr.bf16.mxu0 %v6388
        %7227 = vmatpush2.bf16.msra.mxu0 %v6387
        %7228 = vmatprep.subr.bf16.mxu0 %v6380
        %7229 = vmatpush2.bf16.msra.mxu0 %v6379
        %7230 = vmatprep.subr.bf16.mxu0 %v6372
        %7231 = vmatpush2.bf16.msra.mxu0 %v6371
        %7232 = vmatprep.subr.bf16.mxu0 %v6364
        %7233 = vmatpush2.bf16.msra.mxu0 %v6363
        %7234 = vmatprep.subr.bf16.mxu0 %v6356
        %7235 = vmatpush2.bf16.msra.mxu0 %v6355
        %7236 = vmatprep.subr.bf16.mxu0 %v6348
        %7237 = vmatpush2.bf16.msra.mxu0 %v6347
        %7238 = vmatprep.mubr.bf16.mxu0 %v4992
        %7239 = vmatmul.mubr.bf16.gmra.mxu0 %v4991
        %v7240 = vpop.f32.mrf.mxu0
        %v7241 = vadd.f32 %v7200, %v7240
        %v7242 = vpop.f32.mrf.mxu0
        %v7243 = vadd.f32 %v7202, %v7242
        %v7244 = vpop.f32.mrf.mxu0
        %v7245 = vpop.f32.mrf.mxu0
        %7246 = vdwg.mxu0
        %7247 = vmatprep.subr.bf16.mxu0 %v6468
        %7248 = vmatpush1.bf16.msra.mxu0 %v6467
        %7249 = vmatprep.subr.bf16.mxu0 %v6460
        %7250 = vmatpush1.bf16.msra.mxu0 %v6459
        %7251 = vmatprep.subr.bf16.mxu0 %v6452
        %7252 = vmatpush1.bf16.msra.mxu0 %v6451
        %7253 = vmatprep.subr.bf16.mxu0 %v6444
        %7254 = vmatpush1.bf16.msra.mxu0 %v6443
        %7255 = vmatprep.subr.bf16.mxu0 %v6436
        %7256 = vmatpush1.bf16.msra.mxu0 %v6435
        %7257 = vmatprep.subr.bf16.mxu0 %v6428
        %7258 = vmatpush1.bf16.msra.mxu0 %v6427
        %7259 = vmatprep.subr.bf16.mxu0 %v6420
        %7260 = vmatpush1.bf16.msra.mxu0 %v6419
        %7261 = vmatprep.subr.bf16.mxu0 %v6412
        %7262 = vmatpush1.bf16.msra.mxu0 %v6411
        %7263 = vmatprep.subr.bf16.mxu0 %v6532
        %7264 = vmatpush2.bf16.msra.mxu0 %v6531
        %7265 = vmatprep.subr.bf16.mxu0 %v6524
        %7266 = vmatpush2.bf16.msra.mxu0 %v6523
        %7267 = vmatprep.subr.bf16.mxu0 %v6516
        %7268 = vmatpush2.bf16.msra.mxu0 %v6515
        %7269 = vmatprep.subr.bf16.mxu0 %v6508
        %7270 = vmatpush2.bf16.msra.mxu0 %v6507
        %7271 = vmatprep.subr.bf16.mxu0 %v6500
        %7272 = vmatpush2.bf16.msra.mxu0 %v6499
        %7273 = vmatprep.subr.bf16.mxu0 %v6492
        %7274 = vmatpush2.bf16.msra.mxu0 %v6491
        %7275 = vmatprep.subr.bf16.mxu0 %v6484
        %7276 = vmatpush2.bf16.msra.mxu0 %v6483
        %7277 = vmatprep.subr.bf16.mxu0 %v6476
        %7278 = vmatpush2.bf16.msra.mxu0 %v6475
        %7279 = vmatprep.mubr.bf16.mxu0 %v4990
        %7280 = vmatmul.mubr.bf16.gmra.mxu0 %v4976
        %v7281 = vpop.f32.mrf.mxu0
        %v7282 = vadd.f32 %v7241, %v7281
        %v7283 = vpop.f32.mrf.mxu0
        %v7284 = vadd.f32 %v7243, %v7283
        %v7285 = vpop.f32.mrf.mxu0
        %v7286 = vpop.f32.mrf.mxu0
        %7287 = vdwg.mxu0
        %7288 = vmatprep.subr.bf16.mxu0 %v6214
        %7289 = vmatpush1.bf16.msra.mxu0 %v6213
        %7290 = vmatprep.subr.bf16.mxu0 %v6206
        %7291 = vmatpush1.bf16.msra.mxu0 %v6205
        %7292 = vmatprep.subr.bf16.mxu0 %v6198
        %7293 = vmatpush1.bf16.msra.mxu0 %v6197
        %7294 = vmatprep.subr.bf16.mxu0 %v6190
        %7295 = vmatpush1.bf16.msra.mxu0 %v6189
        %7296 = vmatprep.subr.bf16.mxu0 %v6182
        %7297 = vmatpush1.bf16.msra.mxu0 %v6181
        %7298 = vmatprep.subr.bf16.mxu0 %v6174
        %7299 = vmatpush1.bf16.msra.mxu0 %v6173
        %7300 = vmatprep.subr.bf16.mxu0 %v6166
        %7301 = vmatpush1.bf16.msra.mxu0 %v6165
        %7302 = vmatprep.subr.bf16.mxu0 %v6158
        %7303 = vmatpush1.bf16.msra.mxu0 %v6157
        %7304 = vmatprep.subr.bf16.mxu0 %v6278
        %7305 = vmatpush2.bf16.msra.mxu0 %v6277
        %7306 = vmatprep.subr.bf16.mxu0 %v6270
        %7307 = vmatpush2.bf16.msra.mxu0 %v6269
        %7308 = vmatprep.subr.bf16.mxu0 %v6262
        %7309 = vmatpush2.bf16.msra.mxu0 %v6261
        %7310 = vmatprep.subr.bf16.mxu0 %v6254
        %7311 = vmatpush2.bf16.msra.mxu0 %v6253
        %7312 = vmatprep.subr.bf16.mxu0 %v6246
        %7313 = vmatpush2.bf16.msra.mxu0 %v6245
        %7314 = vmatprep.subr.bf16.mxu0 %v6238
        %7315 = vmatpush2.bf16.msra.mxu0 %v6237
        %7316 = vmatprep.subr.bf16.mxu0 %v6230
        %7317 = vmatpush2.bf16.msra.mxu0 %v6229
        %7318 = vmatprep.subr.bf16.mxu0 %v6222
        %7319 = vmatpush2.bf16.msra.mxu0 %v6221
        %7320 = vmatprep.mubr.bf16.mxu0 %v4983
        %7321 = vmatmul.mubr.bf16.gmra.mxu0 %v4969
        %v7322 = vpop.f32.mrf.mxu0
        %v7323 = vadd.f32 %v4932, %v7322
        %v7324 = vpop.f32.mrf.mxu0
        %v7325 = vadd.f32 %v4936, %v7324
        %v7326 = vpop.f32.mrf.mxu0
        %v7327 = vpop.f32.mrf.mxu0
        %7328 = vdwg.mxu0
        %7329 = vmatprep.subr.bf16.mxu0 %v6342
        %7330 = vmatpush1.bf16.msra.mxu0 %v6341
        %7331 = vmatprep.subr.bf16.mxu0 %v6334
        %7332 = vmatpush1.bf16.msra.mxu0 %v6333
        %7333 = vmatprep.subr.bf16.mxu0 %v6326
        %7334 = vmatpush1.bf16.msra.mxu0 %v6325
        %7335 = vmatprep.subr.bf16.mxu0 %v6318
        %7336 = vmatpush1.bf16.msra.mxu0 %v6317
        %7337 = vmatprep.subr.bf16.mxu0 %v6310
        %7338 = vmatpush1.bf16.msra.mxu0 %v6309
        %7339 = vmatprep.subr.bf16.mxu0 %v6302
        %7340 = vmatpush1.bf16.msra.mxu0 %v6301
        %7341 = vmatprep.subr.bf16.mxu0 %v6294
        %7342 = vmatpush1.bf16.msra.mxu0 %v6293
        %7343 = vmatprep.subr.bf16.mxu0 %v6286
        %7344 = vmatpush1.bf16.msra.mxu0 %v6285
        %7345 = vmatprep.subr.bf16.mxu0 %v6406
        %7346 = vmatpush2.bf16.msra.mxu0 %v6405
        %7347 = vmatprep.subr.bf16.mxu0 %v6398
        %7348 = vmatpush2.bf16.msra.mxu0 %v6397
        %7349 = vmatprep.subr.bf16.mxu0 %v6390
        %7350 = vmatpush2.bf16.msra.mxu0 %v6389
        %7351 = vmatprep.subr.bf16.mxu0 %v6382
        %7352 = vmatpush2.bf16.msra.mxu0 %v6381
        %7353 = vmatprep.subr.bf16.mxu0 %v6374
        %7354 = vmatpush2.bf16.msra.mxu0 %v6373
        %7355 = vmatprep.subr.bf16.mxu0 %v6366
        %7356 = vmatpush2.bf16.msra.mxu0 %v6365
        %7357 = vmatprep.subr.bf16.mxu0 %v6358
        %7358 = vmatpush2.bf16.msra.mxu0 %v6357
        %7359 = vmatprep.subr.bf16.mxu0 %v6350
        %7360 = vmatpush2.bf16.msra.mxu0 %v6349
        %7361 = vmatprep.mubr.bf16.mxu0 %v4992
        %7362 = vmatmul.mubr.bf16.gmra.mxu0 %v4991
        %v7363 = vpop.f32.mrf.mxu0
        %v7364 = vadd.f32 %v7323, %v7363
        %v7365 = vpop.f32.mrf.mxu0
        %v7366 = vadd.f32 %v7325, %v7365
        %v7367 = vpop.f32.mrf.mxu0
        %v7368 = vpop.f32.mrf.mxu0
        %7369 = vdwg.mxu0
        %7370 = vmatprep.subr.bf16.mxu0 %v6470
        %7371 = vmatpush1.bf16.msra.mxu0 %v6469
        %7372 = vmatprep.subr.bf16.mxu0 %v6462
        %7373 = vmatpush1.bf16.msra.mxu0 %v6461
        %7374 = vmatprep.subr.bf16.mxu0 %v6454
        %7375 = vmatpush1.bf16.msra.mxu0 %v6453
        %7376 = vmatprep.subr.bf16.mxu0 %v6446
        %7377 = vmatpush1.bf16.msra.mxu0 %v6445
        %7378 = vmatprep.subr.bf16.mxu0 %v6438
        %7379 = vmatpush1.bf16.msra.mxu0 %v6437
        %7380 = vmatprep.subr.bf16.mxu0 %v6430
        %7381 = vmatpush1.bf16.msra.mxu0 %v6429
        %7382 = vmatprep.subr.bf16.mxu0 %v6422
        %7383 = vmatpush1.bf16.msra.mxu0 %v6421
        %7384 = vmatprep.subr.bf16.mxu0 %v6414
        %7385 = vmatpush1.bf16.msra.mxu0 %v6413
        %7386 = vmatprep.subr.bf16.mxu0 %v6534
        %7387 = vmatpush2.bf16.msra.mxu0 %v6533
        %7388 = vmatprep.subr.bf16.mxu0 %v6526
        %7389 = vmatpush2.bf16.msra.mxu0 %v6525
        %7390 = vmatprep.subr.bf16.mxu0 %v6518
        %7391 = vmatpush2.bf16.msra.mxu0 %v6517
        %7392 = vmatprep.subr.bf16.mxu0 %v6510
        %7393 = vmatpush2.bf16.msra.mxu0 %v6509
        %7394 = vmatprep.subr.bf16.mxu0 %v6502
        %7395 = vmatpush2.bf16.msra.mxu0 %v6501
        %7396 = vmatprep.subr.bf16.mxu0 %v6494
        %7397 = vmatpush2.bf16.msra.mxu0 %v6493
        %7398 = vmatprep.subr.bf16.mxu0 %v6486
        %7399 = vmatpush2.bf16.msra.mxu0 %v6485
        %7400 = vmatprep.subr.bf16.mxu0 %v6478
        %7401 = vmatpush2.bf16.msra.mxu0 %v6477
        %7402 = vmatprep.mubr.bf16.mxu0 %v4990
        %7403 = vmatmul.mubr.bf16.gmra.mxu0 %v4976
        %v7404 = vpop.f32.mrf.mxu0
        %v7405 = vadd.f32 %v7364, %v7404
        %v7406 = vpop.f32.mrf.mxu0
        %v7407 = vadd.f32 %v7366, %v7406
        %v7408 = vpop.f32.mrf.mxu0
        %v7409 = vpop.f32.mrf.mxu0
        %7410 = vdwg.mxu0
        %v7411 = vmax.f32 %v7036, 0.0
        %v7412 = vmax.f32 %v7038, 0.0
        %v7413 = vmax.f32 %v7159, 0.0
        %v7414 = vmax.f32 %v7161, 0.0
        %v7415 = vmax.f32 %v7282, 0.0
        %v7416 = vmax.f32 %v7284, 0.0
        %v7417 = vmax.f32 %v7405, 0.0
        %v7418 = vmax.f32 %v7407, 0.0
        %v7419 = vpack.c.bf16 %v4510, %v4510
        %v7420 = vpack.c.bf16 %v4511, %v4511
        %v7421 = vpack.c.bf16 %v4512, %v4512
        %v7422 = vpack.c.bf16 %v4513, %v4513
        %v7423 = vpack.c.bf16 %v4514, %v4514
        %v7424 = vpack.c.bf16 %v4515, %v4515
        %v7425 = vpack.c.bf16 %v4516, %v4516
        %v7426 = vpack.c.bf16 %v4517, %v4517
        %v7427 = vpack.c.bf16 %v7411, %v7411
        %v7428 = vpack.c.bf16 %v7412, %v7412
        %v7429 = vpack.c.bf16 %v7413, %v7413
        %v7430 = vpack.c.bf16 %v7414, %v7414
        %v7431 = vpack.c.bf16 %v7415, %v7415
        %v7432 = vpack.c.bf16 %v7416, %v7416
        %v7433 = vpack.c.bf16 %v7417, %v7417
        %v7434 = vpack.c.bf16 %v7418, %v7418
        %v7435 = vld [vmem:[#allocation4] sm:$0xff]
        %v7436 = vld [vmem:[%s722] sm:$0xff]
        %v7437 = vld [vmem:[%s722 + $0x8] sm:$0xff]
        %v7438 = vld [vmem:[%s722 + $0x10] sm:$0xff]
        %v7439 = vld [vmem:[%s722 + $0x18] sm:$0xff]
        %v7440 = vld [vmem:[%s722 + $0x20] sm:$0xff]
        %v7441 = vld [vmem:[%s722 + $0x28] sm:$0xff]
        %v7442 = vld [vmem:[%s722 + $0x30] sm:$0xff]
        %v7443 = vld [vmem:[%s722 + $0x38] sm:$0xff]
        %v7444 = vld [vmem:[%s722 + $0x40] sm:$0xff]
        %v7445 = vld [vmem:[%s722 + $0x48] sm:$0xff]
        %v7446 = vld [vmem:[%s722 + $0x50] sm:$0xff]
        %v7447 = vld [vmem:[%s722 + $0x58] sm:$0xff]
        %v7448 = vld [vmem:[%s722 + $0x60] sm:$0xff]
        %v7449 = vld [vmem:[%s722 + $0x68] sm:$0xff]
        %v7450 = vld [vmem:[%s722 + $0x70] sm:$0xff]
        %v7451 = vld [vmem:[%s722 + $0x78] sm:$0xff]
        %v7452 = vld [vmem:[%s722 + $0x80] sm:$0xff]
        %v7453 = vld [vmem:[%s722 + $0x88] sm:$0xff]
        %v7454 = vld [vmem:[%s722 + $0x90] sm:$0xff]
        %v7455 = vld [vmem:[%s722 + $0x98] sm:$0xff]
        %v7456 = vld [vmem:[%s722 + $0xa0] sm:$0xff]
        %v7457 = vld [vmem:[%s722 + $0xa8] sm:$0xff]
        %v7458 = vld [vmem:[%s722 + $0xb0] sm:$0xff]
        %v7459 = vld [vmem:[%s722 + $0xb8] sm:$0xff]
        %v7460 = vld [vmem:[%s722 + $0xc0] sm:$0xff]
        %v7461 = vld [vmem:[%s722 + $0xc8] sm:$0xff]
        %v7462 = vld [vmem:[%s722 + $0xd0] sm:$0xff]
        %v7463 = vld [vmem:[%s722 + $0xd8] sm:$0xff]
        %v7464 = vld [vmem:[%s722 + $0xe0] sm:$0xff]
        %v7465 = vld [vmem:[%s722 + $0xe8] sm:$0xff]
        %v7466 = vld [vmem:[%s722 + $0xf0] sm:$0xff]
        %v7467 = vld [vmem:[%s722 + $0xf8] sm:$0xff]
        %v7468 = vld [vmem:[%s722 + $0x100] sm:$0xff]
        %v7469 = vld [vmem:[%s722 + $0x108] sm:$0xff]
        %v7470 = vld [vmem:[%s722 + $0x110] sm:$0xff]
        %v7471 = vld [vmem:[%s722 + $0x118] sm:$0xff]
        %v7472 = vld [vmem:[%s722 + $0x120] sm:$0xff]
        %v7473 = vld [vmem:[%s722 + $0x128] sm:$0xff]
        %v7474 = vld [vmem:[%s722 + $0x130] sm:$0xff]
        %v7475 = vld [vmem:[%s722 + $0x138] sm:$0xff]
        %v7476 = vld [vmem:[%s722 + $0x140] sm:$0xff]
        %v7477 = vld [vmem:[%s722 + $0x148] sm:$0xff]
        %v7478 = vld [vmem:[%s722 + $0x150] sm:$0xff]
        %v7479 = vld [vmem:[%s722 + $0x158] sm:$0xff]
        %v7480 = vld [vmem:[%s722 + $0x160] sm:$0xff]
        %v7481 = vld [vmem:[%s722 + $0x168] sm:$0xff]
        %v7482 = vld [vmem:[%s722 + $0x170] sm:$0xff]
        %v7483 = vld [vmem:[%s722 + $0x178] sm:$0xff]
        %v7484 = vld [vmem:[%s722 + $0x180] sm:$0xff]
        %v7485 = vld [vmem:[%s722 + $0x188] sm:$0xff]
        %v7486 = vld [vmem:[%s722 + $0x190] sm:$0xff]
        %v7487 = vld [vmem:[%s722 + $0x198] sm:$0xff]
        %v7488 = vld [vmem:[%s722 + $0x1a0] sm:$0xff]
        %v7489 = vld [vmem:[%s722 + $0x1a8] sm:$0xff]
        %v7490 = vld [vmem:[%s722 + $0x1b0] sm:$0xff]
        %v7491 = vld [vmem:[%s722 + $0x1b8] sm:$0xff]
        %v7492 = vld [vmem:[%s722 + $0x1c0] sm:$0xff]
        %v7493 = vld [vmem:[%s722 + $0x1c8] sm:$0xff]
        %v7494 = vld [vmem:[%s722 + $0x1d0] sm:$0xff]
        %v7495 = vld [vmem:[%s722 + $0x1d8] sm:$0xff]
        %v7496 = vld [vmem:[%s722 + $0x1e0] sm:$0xff]
        %v7497 = vld [vmem:[%s722 + $0x1e8] sm:$0xff]
        %v7498 = vld [vmem:[%s722 + $0x1f0] sm:$0xff]
        %v7499 = vld [vmem:[%s722 + $0x1f8] sm:$0xff]
        %v7500 = vld [vmem:[%s722 + $0x200] sm:$0xff]
        %v7501 = vld [vmem:[%s722 + $0x208] sm:$0xff]
        %v7502 = vld [vmem:[%s722 + $0x210] sm:$0xff]
        %v7503 = vld [vmem:[%s722 + $0x218] sm:$0xff]
        %v7504 = vld [vmem:[%s722 + $0x220] sm:$0xff]
        %v7505 = vld [vmem:[%s722 + $0x228] sm:$0xff]
        %v7506 = vld [vmem:[%s722 + $0x230] sm:$0xff]
        %v7507 = vld [vmem:[%s722 + $0x238] sm:$0xff]
        %v7508 = vld [vmem:[%s722 + $0x240] sm:$0xff]
        %v7509 = vld [vmem:[%s722 + $0x248] sm:$0xff]
        %v7510 = vld [vmem:[%s722 + $0x250] sm:$0xff]
        %v7511 = vld [vmem:[%s722 + $0x258] sm:$0xff]
        %v7512 = vld [vmem:[%s722 + $0x260] sm:$0xff]
        %v7513 = vld [vmem:[%s722 + $0x268] sm:$0xff]
        %v7514 = vld [vmem:[%s722 + $0x270] sm:$0xff]
        %v7515 = vld [vmem:[%s722 + $0x278] sm:$0xff]
        %v7516 = vld [vmem:[%s722 + $0x280] sm:$0xff]
        %v7517 = vld [vmem:[%s722 + $0x288] sm:$0xff]
        %v7518 = vld [vmem:[%s722 + $0x290] sm:$0xff]
        %v7519 = vld [vmem:[%s722 + $0x298] sm:$0xff]
        %v7520 = vld [vmem:[%s722 + $0x2a0] sm:$0xff]
        %v7521 = vld [vmem:[%s722 + $0x2a8] sm:$0xff]
        %v7522 = vld [vmem:[%s722 + $0x2b0] sm:$0xff]
        %v7523 = vld [vmem:[%s722 + $0x2b8] sm:$0xff]
        %v7524 = vld [vmem:[%s722 + $0x2c0] sm:$0xff]
        %v7525 = vld [vmem:[%s722 + $0x2c8] sm:$0xff]
        %v7526 = vld [vmem:[%s722 + $0x2d0] sm:$0xff]
        %v7527 = vld [vmem:[%s722 + $0x2d8] sm:$0xff]
        %v7528 = vld [vmem:[%s722 + $0x2e0] sm:$0xff]
        %v7529 = vld [vmem:[%s722 + $0x2e8] sm:$0xff]
        %v7530 = vld [vmem:[%s722 + $0x2f0] sm:$0xff]
        %v7531 = vld [vmem:[%s722 + $0x2f8] sm:$0xff]
        %v7532 = vld [vmem:[%s722 + $0x300] sm:$0xff]
        %v7533 = vld [vmem:[%s722 + $0x308] sm:$0xff]
        %v7534 = vld [vmem:[%s722 + $0x310] sm:$0xff]
        %v7535 = vld [vmem:[%s722 + $0x318] sm:$0xff]
        %v7536 = vld [vmem:[%s722 + $0x320] sm:$0xff]
        %v7537 = vld [vmem:[%s722 + $0x328] sm:$0xff]
        %v7538 = vld [vmem:[%s722 + $0x330] sm:$0xff]
        %v7539 = vld [vmem:[%s722 + $0x338] sm:$0xff]
        %v7540 = vld [vmem:[%s722 + $0x340] sm:$0xff]
        %v7541 = vld [vmem:[%s722 + $0x348] sm:$0xff]
        %v7542 = vld [vmem:[%s722 + $0x350] sm:$0xff]
        %v7543 = vld [vmem:[%s722 + $0x358] sm:$0xff]
        %v7544 = vld [vmem:[%s722 + $0x360] sm:$0xff]
        %v7545 = vld [vmem:[%s722 + $0x368] sm:$0xff]
        %v7546 = vld [vmem:[%s722 + $0x370] sm:$0xff]
        %v7547 = vld [vmem:[%s722 + $0x378] sm:$0xff]
        %v7548 = vld [vmem:[%s722 + $0x380] sm:$0xff]
        %v7549 = vld [vmem:[%s722 + $0x388] sm:$0xff]
        %v7550 = vld [vmem:[%s722 + $0x390] sm:$0xff]
        %v7551 = vld [vmem:[%s722 + $0x398] sm:$0xff]
        %v7552 = vld [vmem:[%s722 + $0x3a0] sm:$0xff]
        %v7553 = vld [vmem:[%s722 + $0x3a8] sm:$0xff]
        %v7554 = vld [vmem:[%s722 + $0x3b0] sm:$0xff]
        %v7555 = vld [vmem:[%s722 + $0x3b8] sm:$0xff]
        %v7556 = vld [vmem:[%s722 + $0x3c0] sm:$0xff]
        %v7557 = vld [vmem:[%s722 + $0x3c8] sm:$0xff]
        %v7558 = vld [vmem:[%s722 + $0x3d0] sm:$0xff]
        %v7559 = vld [vmem:[%s722 + $0x3d8] sm:$0xff]
        %v7560 = vld [vmem:[%s722 + $0x3e0] sm:$0xff]
        %v7561 = vld [vmem:[%s722 + $0x3e8] sm:$0xff]
        %v7562 = vld [vmem:[%s722 + $0x3f0] sm:$0xff]
        %v7563 = vld [vmem:[%s722 + $0x3f8] sm:$0xff]
        %v7564 = vld [vmem:[%s722 + $0x400] sm:$0xff]
        %v7565 = vld [vmem:[%s722 + $0x408] sm:$0xff]
        %v7566 = vld [vmem:[%s722 + $0x410] sm:$0xff]
        %v7567 = vld [vmem:[%s722 + $0x418] sm:$0xff]
        %v7568 = vld [vmem:[%s722 + $0x420] sm:$0xff]
        %v7569 = vld [vmem:[%s722 + $0x428] sm:$0xff]
        %v7570 = vld [vmem:[%s722 + $0x430] sm:$0xff]
        %v7571 = vld [vmem:[%s722 + $0x438] sm:$0xff]
        %v7572 = vld [vmem:[%s722 + $0x440] sm:$0xff]
        %v7573 = vld [vmem:[%s722 + $0x448] sm:$0xff]
        %v7574 = vld [vmem:[%s722 + $0x450] sm:$0xff]
        %v7575 = vld [vmem:[%s722 + $0x458] sm:$0xff]
        %v7576 = vld [vmem:[%s722 + $0x460] sm:$0xff]
        %v7577 = vld [vmem:[%s722 + $0x468] sm:$0xff]
        %v7578 = vld [vmem:[%s722 + $0x470] sm:$0xff]
        %v7579 = vld [vmem:[%s722 + $0x478] sm:$0xff]
        %v7580 = vld [vmem:[%s722 + $0x480] sm:$0xff]
        %v7581 = vld [vmem:[%s722 + $0x488] sm:$0xff]
        %v7582 = vld [vmem:[%s722 + $0x490] sm:$0xff]
        %v7583 = vld [vmem:[%s722 + $0x498] sm:$0xff]
        %v7584 = vld [vmem:[%s722 + $0x4a0] sm:$0xff]
        %v7585 = vld [vmem:[%s722 + $0x4a8] sm:$0xff]
        %v7586 = vld [vmem:[%s722 + $0x4b0] sm:$0xff]
        %v7587 = vld [vmem:[%s722 + $0x4b8] sm:$0xff]
        %v7588 = vld [vmem:[%s722 + $0x4c0] sm:$0xff]
        %v7589 = vld [vmem:[%s722 + $0x4c8] sm:$0xff]
        %v7590 = vld [vmem:[%s722 + $0x4d0] sm:$0xff]
        %v7591 = vld [vmem:[%s722 + $0x4d8] sm:$0xff]
        %v7592 = vld [vmem:[%s722 + $0x4e0] sm:$0xff]
        %v7593 = vld [vmem:[%s722 + $0x4e8] sm:$0xff]
        %v7594 = vld [vmem:[%s722 + $0x4f0] sm:$0xff]
        %v7595 = vld [vmem:[%s722 + $0x4f8] sm:$0xff]
        %v7596 = vld [vmem:[%s722 + $0x500] sm:$0xff]
        %v7597 = vld [vmem:[%s722 + $0x508] sm:$0xff]
        %v7598 = vld [vmem:[%s722 + $0x510] sm:$0xff]
        %v7599 = vld [vmem:[%s722 + $0x518] sm:$0xff]
        %v7600 = vld [vmem:[%s722 + $0x520] sm:$0xff]
        %v7601 = vld [vmem:[%s722 + $0x528] sm:$0xff]
        %v7602 = vld [vmem:[%s722 + $0x530] sm:$0xff]
        %v7603 = vld [vmem:[%s722 + $0x538] sm:$0xff]
        %v7604 = vld [vmem:[%s722 + $0x540] sm:$0xff]
        %v7605 = vld [vmem:[%s722 + $0x548] sm:$0xff]
        %v7606 = vld [vmem:[%s722 + $0x550] sm:$0xff]
        %v7607 = vld [vmem:[%s722 + $0x558] sm:$0xff]
        %v7608 = vld [vmem:[%s722 + $0x560] sm:$0xff]
        %v7609 = vld [vmem:[%s722 + $0x568] sm:$0xff]
        %v7610 = vld [vmem:[%s722 + $0x570] sm:$0xff]
        %v7611 = vld [vmem:[%s722 + $0x578] sm:$0xff]
        %v7612 = vld [vmem:[%s722 + $0x580] sm:$0xff]
        %v7613 = vld [vmem:[%s722 + $0x588] sm:$0xff]
        %v7614 = vld [vmem:[%s722 + $0x590] sm:$0xff]
        %v7615 = vld [vmem:[%s722 + $0x598] sm:$0xff]
        %v7616 = vld [vmem:[%s722 + $0x5a0] sm:$0xff]
        %v7617 = vld [vmem:[%s722 + $0x5a8] sm:$0xff]
        %v7618 = vld [vmem:[%s722 + $0x5b0] sm:$0xff]
        %v7619 = vld [vmem:[%s722 + $0x5b8] sm:$0xff]
        %v7620 = vld [vmem:[%s722 + $0x5c0] sm:$0xff]
        %v7621 = vld [vmem:[%s722 + $0x5c8] sm:$0xff]
        %v7622 = vld [vmem:[%s722 + $0x5d0] sm:$0xff]
        %v7623 = vld [vmem:[%s722 + $0x5d8] sm:$0xff]
        %v7624 = vld [vmem:[%s722 + $0x5e0] sm:$0xff]
        %v7625 = vld [vmem:[%s722 + $0x5e8] sm:$0xff]
        %v7626 = vld [vmem:[%s722 + $0x5f0] sm:$0xff]
        %v7627 = vld [vmem:[%s722 + $0x5f8] sm:$0xff]
        %v7628 = vld [vmem:[%s722 + $0x600] sm:$0xff]
        %v7629 = vld [vmem:[%s722 + $0x608] sm:$0xff]
        %v7630 = vld [vmem:[%s722 + $0x610] sm:$0xff]
        %v7631 = vld [vmem:[%s722 + $0x618] sm:$0xff]
        %v7632 = vld [vmem:[%s722 + $0x620] sm:$0xff]
        %v7633 = vld [vmem:[%s722 + $0x628] sm:$0xff]
        %v7634 = vld [vmem:[%s722 + $0x630] sm:$0xff]
        %v7635 = vld [vmem:[%s722 + $0x638] sm:$0xff]
        %v7636 = vld [vmem:[%s722 + $0x640] sm:$0xff]
        %v7637 = vld [vmem:[%s722 + $0x648] sm:$0xff]
        %v7638 = vld [vmem:[%s722 + $0x650] sm:$0xff]
        %v7639 = vld [vmem:[%s722 + $0x658] sm:$0xff]
        %v7640 = vld [vmem:[%s722 + $0x660] sm:$0xff]
        %v7641 = vld [vmem:[%s722 + $0x668] sm:$0xff]
        %v7642 = vld [vmem:[%s722 + $0x670] sm:$0xff]
        %v7643 = vld [vmem:[%s722 + $0x678] sm:$0xff]
        %v7644 = vld [vmem:[%s722 + $0x680] sm:$0xff]
        %v7645 = vld [vmem:[%s722 + $0x688] sm:$0xff]
        %v7646 = vld [vmem:[%s722 + $0x690] sm:$0xff]
        %v7647 = vld [vmem:[%s722 + $0x698] sm:$0xff]
        %v7648 = vld [vmem:[%s722 + $0x6a0] sm:$0xff]
        %v7649 = vld [vmem:[%s722 + $0x6a8] sm:$0xff]
        %v7650 = vld [vmem:[%s722 + $0x6b0] sm:$0xff]
        %v7651 = vld [vmem:[%s722 + $0x6b8] sm:$0xff]
        %v7652 = vld [vmem:[%s722 + $0x6c0] sm:$0xff]
        %v7653 = vld [vmem:[%s722 + $0x6c8] sm:$0xff]
        %v7654 = vld [vmem:[%s722 + $0x6d0] sm:$0xff]
        %v7655 = vld [vmem:[%s722 + $0x6d8] sm:$0xff]
        %v7656 = vld [vmem:[%s722 + $0x6e0] sm:$0xff]
        %v7657 = vld [vmem:[%s722 + $0x6e8] sm:$0xff]
        %v7658 = vld [vmem:[%s722 + $0x6f0] sm:$0xff]
        %v7659 = vld [vmem:[%s722 + $0x6f8] sm:$0xff]
        %v7660 = vld [vmem:[%s722 + $0x700] sm:$0xff]
        %v7661 = vld [vmem:[%s722 + $0x708] sm:$0xff]
        %v7662 = vld [vmem:[%s722 + $0x710] sm:$0xff]
        %v7663 = vld [vmem:[%s722 + $0x718] sm:$0xff]
        %v7664 = vld [vmem:[%s722 + $0x720] sm:$0xff]
        %v7665 = vld [vmem:[%s722 + $0x728] sm:$0xff]
        %v7666 = vld [vmem:[%s722 + $0x730] sm:$0xff]
        %v7667 = vld [vmem:[%s722 + $0x738] sm:$0xff]
        %v7668 = vld [vmem:[%s722 + $0x740] sm:$0xff]
        %v7669 = vld [vmem:[%s722 + $0x748] sm:$0xff]
        %v7670 = vld [vmem:[%s722 + $0x750] sm:$0xff]
        %v7671 = vld [vmem:[%s722 + $0x758] sm:$0xff]
        %v7672 = vld [vmem:[%s722 + $0x760] sm:$0xff]
        %v7673 = vld [vmem:[%s722 + $0x768] sm:$0xff]
        %v7674 = vld [vmem:[%s722 + $0x770] sm:$0xff]
        %v7675 = vld [vmem:[%s722 + $0x778] sm:$0xff]
        %v7676 = vld [vmem:[%s722 + $0x780] sm:$0xff]
        %v7677 = vld [vmem:[%s722 + $0x788] sm:$0xff]
        %v7678 = vld [vmem:[%s722 + $0x790] sm:$0xff]
        %v7679 = vld [vmem:[%s722 + $0x798] sm:$0xff]
        %v7680 = vld [vmem:[%s722 + $0x7a0] sm:$0xff]
        %v7681 = vld [vmem:[%s722 + $0x7a8] sm:$0xff]
        %v7682 = vld [vmem:[%s722 + $0x7b0] sm:$0xff]
        %v7683 = vld [vmem:[%s722 + $0x7b8] sm:$0xff]
        %v7684 = vld [vmem:[%s722 + $0x7c0] sm:$0xff]
        %v7685 = vld [vmem:[%s722 + $0x7c8] sm:$0xff]
        %v7686 = vld [vmem:[%s722 + $0x7d0] sm:$0xff]
        %v7687 = vld [vmem:[%s722 + $0x7d8] sm:$0xff]
        %v7688 = vld [vmem:[%s722 + $0x7e0] sm:$0xff]
        %v7689 = vld [vmem:[%s722 + $0x7e8] sm:$0xff]
        %v7690 = vld [vmem:[%s722 + $0x7f0] sm:$0xff]
        %v7691 = vld [vmem:[%s722 + $0x7f8] sm:$0xff]
        %v7692 = vld [vmem:[%s722 + $0x800] sm:$0xff]
        %v7693 = vld [vmem:[%s722 + $0x808] sm:$0xff]
        %v7694 = vld [vmem:[%s722 + $0x810] sm:$0xff]
        %v7695 = vld [vmem:[%s722 + $0x818] sm:$0xff]
        %v7696 = vld [vmem:[%s722 + $0x820] sm:$0xff]
        %v7697 = vld [vmem:[%s722 + $0x828] sm:$0xff]
        %v7698 = vld [vmem:[%s722 + $0x830] sm:$0xff]
        %v7699 = vld [vmem:[%s722 + $0x838] sm:$0xff]
        %v7700 = vld [vmem:[%s722 + $0x840] sm:$0xff]
        %v7701 = vld [vmem:[%s722 + $0x848] sm:$0xff]
        %v7702 = vld [vmem:[%s722 + $0x850] sm:$0xff]
        %v7703 = vld [vmem:[%s722 + $0x858] sm:$0xff]
        %v7704 = vld [vmem:[%s722 + $0x860] sm:$0xff]
        %v7705 = vld [vmem:[%s722 + $0x868] sm:$0xff]
        %v7706 = vld [vmem:[%s722 + $0x870] sm:$0xff]
        %v7707 = vld [vmem:[%s722 + $0x878] sm:$0xff]
        %v7708 = vld [vmem:[%s722 + $0x880] sm:$0xff]
        %v7709 = vld [vmem:[%s722 + $0x888] sm:$0xff]
        %v7710 = vld [vmem:[%s722 + $0x890] sm:$0xff]
        %v7711 = vld [vmem:[%s722 + $0x898] sm:$0xff]
        %v7712 = vld [vmem:[%s722 + $0x8a0] sm:$0xff]
        %v7713 = vld [vmem:[%s722 + $0x8a8] sm:$0xff]
        %v7714 = vld [vmem:[%s722 + $0x8b0] sm:$0xff]
        %v7715 = vld [vmem:[%s722 + $0x8b8] sm:$0xff]
        %v7716 = vld [vmem:[%s722 + $0x8c0] sm:$0xff]
        %v7717 = vld [vmem:[%s722 + $0x8c8] sm:$0xff]
        %v7718 = vld [vmem:[%s722 + $0x8d0] sm:$0xff]
        %v7719 = vld [vmem:[%s722 + $0x8d8] sm:$0xff]
        %v7720 = vld [vmem:[%s722 + $0x8e0] sm:$0xff]
        %v7721 = vld [vmem:[%s722 + $0x8e8] sm:$0xff]
        %v7722 = vld [vmem:[%s722 + $0x8f0] sm:$0xff]
        %v7723 = vld [vmem:[%s722 + $0x8f8] sm:$0xff]
        %v7724 = vld [vmem:[%s722 + $0x900] sm:$0xff]
        %v7725 = vld [vmem:[%s722 + $0x908] sm:$0xff]
        %v7726 = vld [vmem:[%s722 + $0x910] sm:$0xff]
        %v7727 = vld [vmem:[%s722 + $0x918] sm:$0xff]
        %v7728 = vld [vmem:[%s722 + $0x920] sm:$0xff]
        %v7729 = vld [vmem:[%s722 + $0x928] sm:$0xff]
        %v7730 = vld [vmem:[%s722 + $0x930] sm:$0xff]
        %v7731 = vld [vmem:[%s722 + $0x938] sm:$0xff]
        %v7732 = vld [vmem:[%s722 + $0x940] sm:$0xff]
        %v7733 = vld [vmem:[%s722 + $0x948] sm:$0xff]
        %v7734 = vld [vmem:[%s722 + $0x950] sm:$0xff]
        %v7735 = vld [vmem:[%s722 + $0x958] sm:$0xff]
        %v7736 = vld [vmem:[%s722 + $0x960] sm:$0xff]
        %v7737 = vld [vmem:[%s722 + $0x968] sm:$0xff]
        %v7738 = vld [vmem:[%s722 + $0x970] sm:$0xff]
        %v7739 = vld [vmem:[%s722 + $0x978] sm:$0xff]
        %v7740 = vld [vmem:[%s722 + $0x980] sm:$0xff]
        %v7741 = vld [vmem:[%s722 + $0x988] sm:$0xff]
        %v7742 = vld [vmem:[%s722 + $0x990] sm:$0xff]
        %v7743 = vld [vmem:[%s722 + $0x998] sm:$0xff]
        %v7744 = vld [vmem:[%s722 + $0x9a0] sm:$0xff]
        %v7745 = vld [vmem:[%s722 + $0x9a8] sm:$0xff]
        %v7746 = vld [vmem:[%s722 + $0x9b0] sm:$0xff]
        %v7747 = vld [vmem:[%s722 + $0x9b8] sm:$0xff]
        %v7748 = vld [vmem:[%s722 + $0x9c0] sm:$0xff]
        %v7749 = vld [vmem:[%s722 + $0x9c8] sm:$0xff]
        %v7750 = vld [vmem:[%s722 + $0x9d0] sm:$0xff]
        %v7751 = vld [vmem:[%s722 + $0x9d8] sm:$0xff]
        %v7752 = vld [vmem:[%s722 + $0x9e0] sm:$0xff]
        %v7753 = vld [vmem:[%s722 + $0x9e8] sm:$0xff]
        %v7754 = vld [vmem:[%s722 + $0x9f0] sm:$0xff]
        %v7755 = vld [vmem:[%s722 + $0x9f8] sm:$0xff]
        %v7756 = vld [vmem:[%s722 + $0xa00] sm:$0xff]
        %v7757 = vld [vmem:[%s722 + $0xa08] sm:$0xff]
        %v7758 = vld [vmem:[%s722 + $0xa10] sm:$0xff]
        %v7759 = vld [vmem:[%s722 + $0xa18] sm:$0xff]
        %v7760 = vld [vmem:[%s722 + $0xa20] sm:$0xff]
        %v7761 = vld [vmem:[%s722 + $0xa28] sm:$0xff]
        %v7762 = vld [vmem:[%s722 + $0xa30] sm:$0xff]
        %v7763 = vld [vmem:[%s722 + $0xa38] sm:$0xff]
        %v7764 = vld [vmem:[%s722 + $0xa40] sm:$0xff]
        %v7765 = vld [vmem:[%s722 + $0xa48] sm:$0xff]
        %v7766 = vld [vmem:[%s722 + $0xa50] sm:$0xff]
        %v7767 = vld [vmem:[%s722 + $0xa58] sm:$0xff]
        %v7768 = vld [vmem:[%s722 + $0xa60] sm:$0xff]
        %v7769 = vld [vmem:[%s722 + $0xa68] sm:$0xff]
        %v7770 = vld [vmem:[%s722 + $0xa70] sm:$0xff]
        %v7771 = vld [vmem:[%s722 + $0xa78] sm:$0xff]
        %v7772 = vld [vmem:[%s722 + $0xa80] sm:$0xff]
        %v7773 = vld [vmem:[%s722 + $0xa88] sm:$0xff]
        %v7774 = vld [vmem:[%s722 + $0xa90] sm:$0xff]
        %v7775 = vld [vmem:[%s722 + $0xa98] sm:$0xff]
        %v7776 = vld [vmem:[%s722 + $0xaa0] sm:$0xff]
        %v7777 = vld [vmem:[%s722 + $0xaa8] sm:$0xff]
        %v7778 = vld [vmem:[%s722 + $0xab0] sm:$0xff]
        %v7779 = vld [vmem:[%s722 + $0xab8] sm:$0xff]
        %v7780 = vld [vmem:[%s722 + $0xac0] sm:$0xff]
        %v7781 = vld [vmem:[%s722 + $0xac8] sm:$0xff]
        %v7782 = vld [vmem:[%s722 + $0xad0] sm:$0xff]
        %v7783 = vld [vmem:[%s722 + $0xad8] sm:$0xff]
        %v7784 = vld [vmem:[%s722 + $0xae0] sm:$0xff]
        %v7785 = vld [vmem:[%s722 + $0xae8] sm:$0xff]
        %v7786 = vld [vmem:[%s722 + $0xaf0] sm:$0xff]
        %v7787 = vld [vmem:[%s722 + $0xaf8] sm:$0xff]
        %v7788 = vld [vmem:[%s722 + $0xb00] sm:$0xff]
        %v7789 = vld [vmem:[%s722 + $0xb08] sm:$0xff]
        %v7790 = vld [vmem:[%s722 + $0xb10] sm:$0xff]
        %v7791 = vld [vmem:[%s722 + $0xb18] sm:$0xff]
        %v7792 = vld [vmem:[%s722 + $0xb20] sm:$0xff]
        %v7793 = vld [vmem:[%s722 + $0xb28] sm:$0xff]
        %v7794 = vld [vmem:[%s722 + $0xb30] sm:$0xff]
        %v7795 = vld [vmem:[%s722 + $0xb38] sm:$0xff]
        %v7796 = vld [vmem:[%s722 + $0xb40] sm:$0xff]
        %v7797 = vld [vmem:[%s722 + $0xb48] sm:$0xff]
        %v7798 = vld [vmem:[%s722 + $0xb50] sm:$0xff]
        %v7799 = vld [vmem:[%s722 + $0xb58] sm:$0xff]
        %v7800 = vld [vmem:[%s722 + $0xb60] sm:$0xff]
        %v7801 = vld [vmem:[%s722 + $0xb68] sm:$0xff]
        %v7802 = vld [vmem:[%s722 + $0xb70] sm:$0xff]
        %v7803 = vld [vmem:[%s722 + $0xb78] sm:$0xff]
        %v7804 = vld [vmem:[%s722 + $0xb80] sm:$0xff]
        %v7805 = vld [vmem:[%s722 + $0xb88] sm:$0xff]
        %v7806 = vld [vmem:[%s722 + $0xb90] sm:$0xff]
        %v7807 = vld [vmem:[%s722 + $0xb98] sm:$0xff]
        %v7808 = vld [vmem:[%s722 + $0xba0] sm:$0xff]
        %v7809 = vld [vmem:[%s722 + $0xba8] sm:$0xff]
        %v7810 = vld [vmem:[%s722 + $0xbb0] sm:$0xff]
        %v7811 = vld [vmem:[%s722 + $0xbb8] sm:$0xff]
        %v7812 = vld [vmem:[%s722 + $0xbc0] sm:$0xff]
        %v7813 = vld [vmem:[%s722 + $0xbc8] sm:$0xff]
        %v7814 = vld [vmem:[%s722 + $0xbd0] sm:$0xff]
        %v7815 = vld [vmem:[%s722 + $0xbd8] sm:$0xff]
        %v7816 = vld [vmem:[%s722 + $0xbe0] sm:$0xff]
        %v7817 = vld [vmem:[%s722 + $0xbe8] sm:$0xff]
        %v7818 = vld [vmem:[%s722 + $0xbf0] sm:$0xff]
        %v7819 = vld [vmem:[%s722 + $0xbf8] sm:$0xff]
        %v7820 = vld [vmem:[%s722 + $0xc00] sm:$0xff]
        %v7821 = vld [vmem:[%s722 + $0xc08] sm:$0xff]
        %v7822 = vld [vmem:[%s722 + $0xc10] sm:$0xff]
        %v7823 = vld [vmem:[%s722 + $0xc18] sm:$0xff]
        %v7824 = vld [vmem:[%s722 + $0xc20] sm:$0xff]
        %v7825 = vld [vmem:[%s722 + $0xc28] sm:$0xff]
        %v7826 = vld [vmem:[%s722 + $0xc30] sm:$0xff]
        %v7827 = vld [vmem:[%s722 + $0xc38] sm:$0xff]
        %v7828 = vld [vmem:[%s722 + $0xc40] sm:$0xff]
        %v7829 = vld [vmem:[%s722 + $0xc48] sm:$0xff]
        %v7830 = vld [vmem:[%s722 + $0xc50] sm:$0xff]
        %v7831 = vld [vmem:[%s722 + $0xc58] sm:$0xff]
        %v7832 = vld [vmem:[%s722 + $0xc60] sm:$0xff]
        %v7833 = vld [vmem:[%s722 + $0xc68] sm:$0xff]
        %v7834 = vld [vmem:[%s722 + $0xc70] sm:$0xff]
        %v7835 = vld [vmem:[%s722 + $0xc78] sm:$0xff]
        %v7836 = vld [vmem:[%s722 + $0xc80] sm:$0xff]
        %v7837 = vld [vmem:[%s722 + $0xc88] sm:$0xff]
        %v7838 = vld [vmem:[%s722 + $0xc90] sm:$0xff]
        %v7839 = vld [vmem:[%s722 + $0xc98] sm:$0xff]
        %v7840 = vld [vmem:[%s722 + $0xca0] sm:$0xff]
        %v7841 = vld [vmem:[%s722 + $0xca8] sm:$0xff]
        %v7842 = vld [vmem:[%s722 + $0xcb0] sm:$0xff]
        %v7843 = vld [vmem:[%s722 + $0xcb8] sm:$0xff]
        %v7844 = vld [vmem:[%s722 + $0xcc0] sm:$0xff]
        %v7845 = vld [vmem:[%s722 + $0xcc8] sm:$0xff]
        %v7846 = vld [vmem:[%s722 + $0xcd0] sm:$0xff]
        %v7847 = vld [vmem:[%s722 + $0xcd8] sm:$0xff]
        %v7848 = vld [vmem:[%s722 + $0xce0] sm:$0xff]
        %v7849 = vld [vmem:[%s722 + $0xce8] sm:$0xff]
        %v7850 = vld [vmem:[%s722 + $0xcf0] sm:$0xff]
        %v7851 = vld [vmem:[%s722 + $0xcf8] sm:$0xff]
        %v7852 = vld [vmem:[%s722 + $0xd00] sm:$0xff]
        %v7853 = vld [vmem:[%s722 + $0xd08] sm:$0xff]
        %v7854 = vld [vmem:[%s722 + $0xd10] sm:$0xff]
        %v7855 = vld [vmem:[%s722 + $0xd18] sm:$0xff]
        %v7856 = vld [vmem:[%s722 + $0xd20] sm:$0xff]
        %v7857 = vld [vmem:[%s722 + $0xd28] sm:$0xff]
        %v7858 = vld [vmem:[%s722 + $0xd30] sm:$0xff]
        %v7859 = vld [vmem:[%s722 + $0xd38] sm:$0xff]
        %v7860 = vld [vmem:[%s722 + $0xd40] sm:$0xff]
        %v7861 = vld [vmem:[%s722 + $0xd48] sm:$0xff]
        %v7862 = vld [vmem:[%s722 + $0xd50] sm:$0xff]
        %v7863 = vld [vmem:[%s722 + $0xd58] sm:$0xff]
        %v7864 = vld [vmem:[%s722 + $0xd60] sm:$0xff]
        %v7865 = vld [vmem:[%s722 + $0xd68] sm:$0xff]
        %v7866 = vld [vmem:[%s722 + $0xd70] sm:$0xff]
        %v7867 = vld [vmem:[%s722 + $0xd78] sm:$0xff]
        %v7868 = vld [vmem:[%s722 + $0xd80] sm:$0xff]
        %v7869 = vld [vmem:[%s722 + $0xd88] sm:$0xff]
        %v7870 = vld [vmem:[%s722 + $0xd90] sm:$0xff]
        %v7871 = vld [vmem:[%s722 + $0xd98] sm:$0xff]
        %v7872 = vld [vmem:[%s722 + $0xda0] sm:$0xff]
        %v7873 = vld [vmem:[%s722 + $0xda8] sm:$0xff]
        %v7874 = vld [vmem:[%s722 + $0xdb0] sm:$0xff]
        %v7875 = vld [vmem:[%s722 + $0xdb8] sm:$0xff]
        %v7876 = vld [vmem:[%s722 + $0xdc0] sm:$0xff]
        %v7877 = vld [vmem:[%s722 + $0xdc8] sm:$0xff]
        %v7878 = vld [vmem:[%s722 + $0xdd0] sm:$0xff]
        %v7879 = vld [vmem:[%s722 + $0xdd8] sm:$0xff]
        %v7880 = vld [vmem:[%s722 + $0xde0] sm:$0xff]
        %v7881 = vld [vmem:[%s722 + $0xde8] sm:$0xff]
        %v7882 = vld [vmem:[%s722 + $0xdf0] sm:$0xff]
        %v7883 = vld [vmem:[%s722 + $0xdf8] sm:$0xff]
        %v7884 = vld [vmem:[%s722 + $0xe00] sm:$0xff]
        %v7885 = vld [vmem:[%s722 + $0xe08] sm:$0xff]
        %v7886 = vld [vmem:[%s722 + $0xe10] sm:$0xff]
        %v7887 = vld [vmem:[%s722 + $0xe18] sm:$0xff]
        %v7888 = vld [vmem:[%s722 + $0xe20] sm:$0xff]
        %v7889 = vld [vmem:[%s722 + $0xe28] sm:$0xff]
        %v7890 = vld [vmem:[%s722 + $0xe30] sm:$0xff]
        %v7891 = vld [vmem:[%s722 + $0xe38] sm:$0xff]
        %v7892 = vld [vmem:[%s722 + $0xe40] sm:$0xff]
        %v7893 = vld [vmem:[%s722 + $0xe48] sm:$0xff]
        %v7894 = vld [vmem:[%s722 + $0xe50] sm:$0xff]
        %v7895 = vld [vmem:[%s722 + $0xe58] sm:$0xff]
        %v7896 = vld [vmem:[%s722 + $0xe60] sm:$0xff]
        %v7897 = vld [vmem:[%s722 + $0xe68] sm:$0xff]
        %v7898 = vld [vmem:[%s722 + $0xe70] sm:$0xff]
        %v7899 = vld [vmem:[%s722 + $0xe78] sm:$0xff]
        %v7900 = vld [vmem:[%s722 + $0xe80] sm:$0xff]
        %v7901 = vld [vmem:[%s722 + $0xe88] sm:$0xff]
        %v7902 = vld [vmem:[%s722 + $0xe90] sm:$0xff]
        %v7903 = vld [vmem:[%s722 + $0xe98] sm:$0xff]
        %v7904 = vld [vmem:[%s722 + $0xea0] sm:$0xff]
        %v7905 = vld [vmem:[%s722 + $0xea8] sm:$0xff]
        %v7906 = vld [vmem:[%s722 + $0xeb0] sm:$0xff]
        %v7907 = vld [vmem:[%s722 + $0xeb8] sm:$0xff]
        %v7908 = vld [vmem:[%s722 + $0xec0] sm:$0xff]
        %v7909 = vld [vmem:[%s722 + $0xec8] sm:$0xff]
        %v7910 = vld [vmem:[%s722 + $0xed0] sm:$0xff]
        %v7911 = vld [vmem:[%s722 + $0xed8] sm:$0xff]
        %v7912 = vld [vmem:[%s722 + $0xee0] sm:$0xff]
        %v7913 = vld [vmem:[%s722 + $0xee8] sm:$0xff]
        %v7914 = vld [vmem:[%s722 + $0xef0] sm:$0xff]
        %v7915 = vld [vmem:[%s722 + $0xef8] sm:$0xff]
        %v7916 = vld [vmem:[%s722 + $0xf00] sm:$0xff]
        %v7917 = vld [vmem:[%s722 + $0xf08] sm:$0xff]
        %v7918 = vld [vmem:[%s722 + $0xf10] sm:$0xff]
        %v7919 = vld [vmem:[%s722 + $0xf18] sm:$0xff]
        %v7920 = vld [vmem:[%s722 + $0xf20] sm:$0xff]
        %v7921 = vld [vmem:[%s722 + $0xf28] sm:$0xff]
        %v7922 = vld [vmem:[%s722 + $0xf30] sm:$0xff]
        %v7923 = vld [vmem:[%s722 + $0xf38] sm:$0xff]
        %v7924 = vld [vmem:[%s722 + $0xf40] sm:$0xff]
        %v7925 = vld [vmem:[%s722 + $0xf48] sm:$0xff]
        %v7926 = vld [vmem:[%s722 + $0xf50] sm:$0xff]
        %v7927 = vld [vmem:[%s722 + $0xf58] sm:$0xff]
        %v7928 = vld [vmem:[%s722 + $0xf60] sm:$0xff]
        %v7929 = vld [vmem:[%s722 + $0xf68] sm:$0xff]
        %v7930 = vld [vmem:[%s722 + $0xf70] sm:$0xff]
        %v7931 = vld [vmem:[%s722 + $0xf78] sm:$0xff]
        %v7932 = vld [vmem:[%s722 + $0xf80] sm:$0xff]
        %v7933 = vld [vmem:[%s722 + $0xf88] sm:$0xff]
        %v7934 = vld [vmem:[%s722 + $0xf90] sm:$0xff]
        %v7935 = vld [vmem:[%s722 + $0xf98] sm:$0xff]
        %v7936 = vld [vmem:[%s722 + $0xfa0] sm:$0xff]
        %v7937 = vld [vmem:[%s722 + $0xfa8] sm:$0xff]
        %v7938 = vld [vmem:[%s722 + $0xfb0] sm:$0xff]
        %v7939 = vld [vmem:[%s722 + $0xfb8] sm:$0xff]
        %v7940 = vld [vmem:[%s722 + $0xfc0] sm:$0xff]
        %v7941 = vld [vmem:[%s722 + $0xfc8] sm:$0xff]
        %v7942 = vld [vmem:[%s722 + $0xfd0] sm:$0xff]
        %v7943 = vld [vmem:[%s722 + $0xfd8] sm:$0xff]
        %v7944 = vld [vmem:[%s722 + $0xfe0] sm:$0xff]
        %v7945 = vld [vmem:[%s722 + $0xfe8] sm:$0xff]
        %v7946 = vld [vmem:[%s722 + $0xff0] sm:$0xff]
        %v7947 = vld [vmem:[%s722 + $0xff8] sm:$0xff]
        %v8460 = vunpack.c.l.b16 %v7436
        %v8461 = vunpack.c.h.b16 %v7436
        %v8462 = vunpack.c.l.b16 %v7437
        %v8463 = vunpack.c.h.b16 %v7437
        %v8464 = vunpack.c.l.b16 %v7438
        %v8465 = vunpack.c.h.b16 %v7438
        %v8466 = vunpack.c.l.b16 %v7439
        %v8467 = vunpack.c.h.b16 %v7439
        %v8468 = vunpack.c.l.b16 %v7440
        %v8469 = vunpack.c.h.b16 %v7440
        %v8470 = vunpack.c.l.b16 %v7441
        %v8471 = vunpack.c.h.b16 %v7441
        %v8472 = vunpack.c.l.b16 %v7442
        %v8473 = vunpack.c.h.b16 %v7442
        %v8474 = vunpack.c.l.b16 %v7443
        %v8475 = vunpack.c.h.b16 %v7443
        %v8476 = vunpack.c.l.b16 %v7444
        %v8477 = vunpack.c.h.b16 %v7444
        %v8478 = vunpack.c.l.b16 %v7445
        %v8479 = vunpack.c.h.b16 %v7445
        %v8480 = vunpack.c.l.b16 %v7446
        %v8481 = vunpack.c.h.b16 %v7446
        %v8482 = vunpack.c.l.b16 %v7447
        %v8483 = vunpack.c.h.b16 %v7447
        %v8484 = vunpack.c.l.b16 %v7448
        %v8485 = vunpack.c.h.b16 %v7448
        %v8486 = vunpack.c.l.b16 %v7449
        %v8487 = vunpack.c.h.b16 %v7449
        %v8488 = vunpack.c.l.b16 %v7450
        %v8489 = vunpack.c.h.b16 %v7450
        %v8490 = vunpack.c.l.b16 %v7451
        %v8491 = vunpack.c.h.b16 %v7451
        %v8492 = vunpack.c.l.b16 %v7452
        %v8493 = vunpack.c.h.b16 %v7452
        %v8494 = vunpack.c.l.b16 %v7453
        %v8495 = vunpack.c.h.b16 %v7453
        %v8496 = vunpack.c.l.b16 %v7454
        %v8497 = vunpack.c.h.b16 %v7454
        %v8498 = vunpack.c.l.b16 %v7455
        %v8499 = vunpack.c.h.b16 %v7455
        %v8500 = vunpack.c.l.b16 %v7456
        %v8501 = vunpack.c.h.b16 %v7456
        %v8502 = vunpack.c.l.b16 %v7457
        %v8503 = vunpack.c.h.b16 %v7457
        %v8504 = vunpack.c.l.b16 %v7458
        %v8505 = vunpack.c.h.b16 %v7458
        %v8506 = vunpack.c.l.b16 %v7459
        %v8507 = vunpack.c.h.b16 %v7459
        %v8508 = vunpack.c.l.b16 %v7460
        %v8509 = vunpack.c.h.b16 %v7460
        %v8510 = vunpack.c.l.b16 %v7461
        %v8511 = vunpack.c.h.b16 %v7461
        %v8512 = vunpack.c.l.b16 %v7462
        %v8513 = vunpack.c.h.b16 %v7462
        %v8514 = vunpack.c.l.b16 %v7463
        %v8515 = vunpack.c.h.b16 %v7463
        %v8516 = vunpack.c.l.b16 %v7464
        %v8517 = vunpack.c.h.b16 %v7464
        %v8518 = vunpack.c.l.b16 %v7465
        %v8519 = vunpack.c.h.b16 %v7465
        %v8520 = vunpack.c.l.b16 %v7466
        %v8521 = vunpack.c.h.b16 %v7466
        %v8522 = vunpack.c.l.b16 %v7467
        %v8523 = vunpack.c.h.b16 %v7467
        %v8524 = vunpack.c.l.b16 %v7468
        %v8525 = vunpack.c.h.b16 %v7468
        %v8526 = vunpack.c.l.b16 %v7469
        %v8527 = vunpack.c.h.b16 %v7469
        %v8528 = vunpack.c.l.b16 %v7470
        %v8529 = vunpack.c.h.b16 %v7470
        %v8530 = vunpack.c.l.b16 %v7471
        %v8531 = vunpack.c.h.b16 %v7471
        %v8532 = vunpack.c.l.b16 %v7472
        %v8533 = vunpack.c.h.b16 %v7472
        %v8534 = vunpack.c.l.b16 %v7473
        %v8535 = vunpack.c.h.b16 %v7473
        %v8536 = vunpack.c.l.b16 %v7474
        %v8537 = vunpack.c.h.b16 %v7474
        %v8538 = vunpack.c.l.b16 %v7475
        %v8539 = vunpack.c.h.b16 %v7475
        %v8540 = vunpack.c.l.b16 %v7476
        %v8541 = vunpack.c.h.b16 %v7476
        %v8542 = vunpack.c.l.b16 %v7477
        %v8543 = vunpack.c.h.b16 %v7477
        %v8544 = vunpack.c.l.b16 %v7478
        %v8545 = vunpack.c.h.b16 %v7478
        %v8546 = vunpack.c.l.b16 %v7479
        %v8547 = vunpack.c.h.b16 %v7479
        %v8548 = vunpack.c.l.b16 %v7480
        %v8549 = vunpack.c.h.b16 %v7480
        %v8550 = vunpack.c.l.b16 %v7481
        %v8551 = vunpack.c.h.b16 %v7481
        %v8552 = vunpack.c.l.b16 %v7482
        %v8553 = vunpack.c.h.b16 %v7482
        %v8554 = vunpack.c.l.b16 %v7483
        %v8555 = vunpack.c.h.b16 %v7483
        %v8556 = vunpack.c.l.b16 %v7484
        %v8557 = vunpack.c.h.b16 %v7484
        %v8558 = vunpack.c.l.b16 %v7485
        %v8559 = vunpack.c.h.b16 %v7485
        %v8560 = vunpack.c.l.b16 %v7486
        %v8561 = vunpack.c.h.b16 %v7486
        %v8562 = vunpack.c.l.b16 %v7487
        %v8563 = vunpack.c.h.b16 %v7487
        %v8564 = vunpack.c.l.b16 %v7488
        %v8565 = vunpack.c.h.b16 %v7488
        %v8566 = vunpack.c.l.b16 %v7489
        %v8567 = vunpack.c.h.b16 %v7489
        %v8568 = vunpack.c.l.b16 %v7490
        %v8569 = vunpack.c.h.b16 %v7490
        %v8570 = vunpack.c.l.b16 %v7491
        %v8571 = vunpack.c.h.b16 %v7491
        %v8572 = vunpack.c.l.b16 %v7492
        %v8573 = vunpack.c.h.b16 %v7492
        %v8574 = vunpack.c.l.b16 %v7493
        %v8575 = vunpack.c.h.b16 %v7493
        %v8576 = vunpack.c.l.b16 %v7494
        %v8577 = vunpack.c.h.b16 %v7494
        %v8578 = vunpack.c.l.b16 %v7495
        %v8579 = vunpack.c.h.b16 %v7495
        %v8580 = vunpack.c.l.b16 %v7496
        %v8581 = vunpack.c.h.b16 %v7496
        %v8582 = vunpack.c.l.b16 %v7497
        %v8583 = vunpack.c.h.b16 %v7497
        %v8584 = vunpack.c.l.b16 %v7498
        %v8585 = vunpack.c.h.b16 %v7498
        %v8586 = vunpack.c.l.b16 %v7499
        %v8587 = vunpack.c.h.b16 %v7499
        %v8588 = vunpack.c.l.b16 %v7500
        %v8589 = vunpack.c.h.b16 %v7500
        %v8590 = vunpack.c.l.b16 %v7501
        %v8591 = vunpack.c.h.b16 %v7501
        %v8592 = vunpack.c.l.b16 %v7502
        %v8593 = vunpack.c.h.b16 %v7502
        %v8594 = vunpack.c.l.b16 %v7503
        %v8595 = vunpack.c.h.b16 %v7503
        %v8596 = vunpack.c.l.b16 %v7504
        %v8597 = vunpack.c.h.b16 %v7504
        %v8598 = vunpack.c.l.b16 %v7505
        %v8599 = vunpack.c.h.b16 %v7505
        %v8600 = vunpack.c.l.b16 %v7506
        %v8601 = vunpack.c.h.b16 %v7506
        %v8602 = vunpack.c.l.b16 %v7507
        %v8603 = vunpack.c.h.b16 %v7507
        %v8604 = vunpack.c.l.b16 %v7508
        %v8605 = vunpack.c.h.b16 %v7508
        %v8606 = vunpack.c.l.b16 %v7509
        %v8607 = vunpack.c.h.b16 %v7509
        %v8608 = vunpack.c.l.b16 %v7510
        %v8609 = vunpack.c.h.b16 %v7510
        %v8610 = vunpack.c.l.b16 %v7511
        %v8611 = vunpack.c.h.b16 %v7511
        %v8612 = vunpack.c.l.b16 %v7512
        %v8613 = vunpack.c.h.b16 %v7512
        %v8614 = vunpack.c.l.b16 %v7513
        %v8615 = vunpack.c.h.b16 %v7513
        %v8616 = vunpack.c.l.b16 %v7514
        %v8617 = vunpack.c.h.b16 %v7514
        %v8618 = vunpack.c.l.b16 %v7515
        %v8619 = vunpack.c.h.b16 %v7515
        %v8620 = vunpack.c.l.b16 %v7516
        %v8621 = vunpack.c.h.b16 %v7516
        %v8622 = vunpack.c.l.b16 %v7517
        %v8623 = vunpack.c.h.b16 %v7517
        %v8624 = vunpack.c.l.b16 %v7518
        %v8625 = vunpack.c.h.b16 %v7518
        %v8626 = vunpack.c.l.b16 %v7519
        %v8627 = vunpack.c.h.b16 %v7519
        %v8628 = vunpack.c.l.b16 %v7520
        %v8629 = vunpack.c.h.b16 %v7520
        %v8630 = vunpack.c.l.b16 %v7521
        %v8631 = vunpack.c.h.b16 %v7521
        %v8632 = vunpack.c.l.b16 %v7522
        %v8633 = vunpack.c.h.b16 %v7522
        %v8634 = vunpack.c.l.b16 %v7523
        %v8635 = vunpack.c.h.b16 %v7523
        %v8636 = vunpack.c.l.b16 %v7524
        %v8637 = vunpack.c.h.b16 %v7524
        %v8638 = vunpack.c.l.b16 %v7525
        %v8639 = vunpack.c.h.b16 %v7525
        %v8640 = vunpack.c.l.b16 %v7526
        %v8641 = vunpack.c.h.b16 %v7526
        %v8642 = vunpack.c.l.b16 %v7527
        %v8643 = vunpack.c.h.b16 %v7527
        %v8644 = vunpack.c.l.b16 %v7528
        %v8645 = vunpack.c.h.b16 %v7528
        %v8646 = vunpack.c.l.b16 %v7529
        %v8647 = vunpack.c.h.b16 %v7529
        %v8648 = vunpack.c.l.b16 %v7530
        %v8649 = vunpack.c.h.b16 %v7530
        %v8650 = vunpack.c.l.b16 %v7531
        %v8651 = vunpack.c.h.b16 %v7531
        %v8652 = vunpack.c.l.b16 %v7532
        %v8653 = vunpack.c.h.b16 %v7532
        %v8654 = vunpack.c.l.b16 %v7533
        %v8655 = vunpack.c.h.b16 %v7533
        %v8656 = vunpack.c.l.b16 %v7534
        %v8657 = vunpack.c.h.b16 %v7534
        %v8658 = vunpack.c.l.b16 %v7535
        %v8659 = vunpack.c.h.b16 %v7535
        %v8660 = vunpack.c.l.b16 %v7536
        %v8661 = vunpack.c.h.b16 %v7536
        %v8662 = vunpack.c.l.b16 %v7537
        %v8663 = vunpack.c.h.b16 %v7537
        %v8664 = vunpack.c.l.b16 %v7538
        %v8665 = vunpack.c.h.b16 %v7538
        %v8666 = vunpack.c.l.b16 %v7539
        %v8667 = vunpack.c.h.b16 %v7539
        %v8668 = vunpack.c.l.b16 %v7540
        %v8669 = vunpack.c.h.b16 %v7540
        %v8670 = vunpack.c.l.b16 %v7541
        %v8671 = vunpack.c.h.b16 %v7541
        %v8672 = vunpack.c.l.b16 %v7542
        %v8673 = vunpack.c.h.b16 %v7542
        %v8674 = vunpack.c.l.b16 %v7543
        %v8675 = vunpack.c.h.b16 %v7543
        %v8676 = vunpack.c.l.b16 %v7544
        %v8677 = vunpack.c.h.b16 %v7544
        %v8678 = vunpack.c.l.b16 %v7545
        %v8679 = vunpack.c.h.b16 %v7545
        %v8680 = vunpack.c.l.b16 %v7546
        %v8681 = vunpack.c.h.b16 %v7546
        %v8682 = vunpack.c.l.b16 %v7547
        %v8683 = vunpack.c.h.b16 %v7547
        %v8684 = vunpack.c.l.b16 %v7548
        %v8685 = vunpack.c.h.b16 %v7548
        %v8686 = vunpack.c.l.b16 %v7549
        %v8687 = vunpack.c.h.b16 %v7549
        %v8688 = vunpack.c.l.b16 %v7550
        %v8689 = vunpack.c.h.b16 %v7550
        %v8690 = vunpack.c.l.b16 %v7551
        %v8691 = vunpack.c.h.b16 %v7551
        %v8692 = vunpack.c.l.b16 %v7552
        %v8693 = vunpack.c.h.b16 %v7552
        %v8694 = vunpack.c.l.b16 %v7553
        %v8695 = vunpack.c.h.b16 %v7553
        %v8696 = vunpack.c.l.b16 %v7554
        %v8697 = vunpack.c.h.b16 %v7554
        %v8698 = vunpack.c.l.b16 %v7555
        %v8699 = vunpack.c.h.b16 %v7555
        %v8700 = vunpack.c.l.b16 %v7556
        %v8701 = vunpack.c.h.b16 %v7556
        %v8702 = vunpack.c.l.b16 %v7557
        %v8703 = vunpack.c.h.b16 %v7557
        %v8704 = vunpack.c.l.b16 %v7558
        %v8705 = vunpack.c.h.b16 %v7558
        %v8706 = vunpack.c.l.b16 %v7559
        %v8707 = vunpack.c.h.b16 %v7559
        %v8708 = vunpack.c.l.b16 %v7560
        %v8709 = vunpack.c.h.b16 %v7560
        %v8710 = vunpack.c.l.b16 %v7561
        %v8711 = vunpack.c.h.b16 %v7561
        %v8712 = vunpack.c.l.b16 %v7562
        %v8713 = vunpack.c.h.b16 %v7562
        %v8714 = vunpack.c.l.b16 %v7563
        %v8715 = vunpack.c.h.b16 %v7563
        %v8716 = vunpack.c.l.b16 %v7564
        %v8717 = vunpack.c.h.b16 %v7564
        %v8718 = vunpack.c.l.b16 %v7565
        %v8719 = vunpack.c.h.b16 %v7565
        %v8720 = vunpack.c.l.b16 %v7566
        %v8721 = vunpack.c.h.b16 %v7566
        %v8722 = vunpack.c.l.b16 %v7567
        %v8723 = vunpack.c.h.b16 %v7567
        %v8724 = vunpack.c.l.b16 %v7568
        %v8725 = vunpack.c.h.b16 %v7568
        %v8726 = vunpack.c.l.b16 %v7569
        %v8727 = vunpack.c.h.b16 %v7569
        %v8728 = vunpack.c.l.b16 %v7570
        %v8729 = vunpack.c.h.b16 %v7570
        %v8730 = vunpack.c.l.b16 %v7571
        %v8731 = vunpack.c.h.b16 %v7571
        %v8732 = vunpack.c.l.b16 %v7572
        %v8733 = vunpack.c.h.b16 %v7572
        %v8734 = vunpack.c.l.b16 %v7573
        %v8735 = vunpack.c.h.b16 %v7573
        %v8736 = vunpack.c.l.b16 %v7574
        %v8737 = vunpack.c.h.b16 %v7574
        %v8738 = vunpack.c.l.b16 %v7575
        %v8739 = vunpack.c.h.b16 %v7575
        %v8740 = vunpack.c.l.b16 %v7576
        %v8741 = vunpack.c.h.b16 %v7576
        %v8742 = vunpack.c.l.b16 %v7577
        %v8743 = vunpack.c.h.b16 %v7577
        %v8744 = vunpack.c.l.b16 %v7578
        %v8745 = vunpack.c.h.b16 %v7578
        %v8746 = vunpack.c.l.b16 %v7579
        %v8747 = vunpack.c.h.b16 %v7579
        %v8748 = vunpack.c.l.b16 %v7580
        %v8749 = vunpack.c.h.b16 %v7580
        %v8750 = vunpack.c.l.b16 %v7581
        %v8751 = vunpack.c.h.b16 %v7581
        %v8752 = vunpack.c.l.b16 %v7582
        %v8753 = vunpack.c.h.b16 %v7582
        %v8754 = vunpack.c.l.b16 %v7583
        %v8755 = vunpack.c.h.b16 %v7583
        %v8756 = vunpack.c.l.b16 %v7584
        %v8757 = vunpack.c.h.b16 %v7584
        %v8758 = vunpack.c.l.b16 %v7585
        %v8759 = vunpack.c.h.b16 %v7585
        %v8760 = vunpack.c.l.b16 %v7586
        %v8761 = vunpack.c.h.b16 %v7586
        %v8762 = vunpack.c.l.b16 %v7587
        %v8763 = vunpack.c.h.b16 %v7587
        %v8764 = vunpack.c.l.b16 %v7588
        %v8765 = vunpack.c.h.b16 %v7588
        %v8766 = vunpack.c.l.b16 %v7589
        %v8767 = vunpack.c.h.b16 %v7589
        %v8768 = vunpack.c.l.b16 %v7590
        %v8769 = vunpack.c.h.b16 %v7590
        %v8770 = vunpack.c.l.b16 %v7591
        %v8771 = vunpack.c.h.b16 %v7591
        %v8772 = vunpack.c.l.b16 %v7592
        %v8773 = vunpack.c.h.b16 %v7592
        %v8774 = vunpack.c.l.b16 %v7593
        %v8775 = vunpack.c.h.b16 %v7593
        %v8776 = vunpack.c.l.b16 %v7594
        %v8777 = vunpack.c.h.b16 %v7594
        %v8778 = vunpack.c.l.b16 %v7595
        %v8779 = vunpack.c.h.b16 %v7595
        %v8780 = vunpack.c.l.b16 %v7596
        %v8781 = vunpack.c.h.b16 %v7596
        %v8782 = vunpack.c.l.b16 %v7597
        %v8783 = vunpack.c.h.b16 %v7597
        %v8784 = vunpack.c.l.b16 %v7598
        %v8785 = vunpack.c.h.b16 %v7598
        %v8786 = vunpack.c.l.b16 %v7599
        %v8787 = vunpack.c.h.b16 %v7599
        %v8788 = vunpack.c.l.b16 %v7600
        %v8789 = vunpack.c.h.b16 %v7600
        %v8790 = vunpack.c.l.b16 %v7601
        %v8791 = vunpack.c.h.b16 %v7601
        %v8792 = vunpack.c.l.b16 %v7602
        %v8793 = vunpack.c.h.b16 %v7602
        %v8794 = vunpack.c.l.b16 %v7603
        %v8795 = vunpack.c.h.b16 %v7603
        %v8796 = vunpack.c.l.b16 %v7604
        %v8797 = vunpack.c.h.b16 %v7604
        %v8798 = vunpack.c.l.b16 %v7605
        %v8799 = vunpack.c.h.b16 %v7605
        %v8800 = vunpack.c.l.b16 %v7606
        %v8801 = vunpack.c.h.b16 %v7606
        %v8802 = vunpack.c.l.b16 %v7607
        %v8803 = vunpack.c.h.b16 %v7607
        %v8804 = vunpack.c.l.b16 %v7608
        %v8805 = vunpack.c.h.b16 %v7608
        %v8806 = vunpack.c.l.b16 %v7609
        %v8807 = vunpack.c.h.b16 %v7609
        %v8808 = vunpack.c.l.b16 %v7610
        %v8809 = vunpack.c.h.b16 %v7610
        %v8810 = vunpack.c.l.b16 %v7611
        %v8811 = vunpack.c.h.b16 %v7611
        %v8812 = vunpack.c.l.b16 %v7612
        %v8813 = vunpack.c.h.b16 %v7612
        %v8814 = vunpack.c.l.b16 %v7613
        %v8815 = vunpack.c.h.b16 %v7613
        %v8816 = vunpack.c.l.b16 %v7614
        %v8817 = vunpack.c.h.b16 %v7614
        %v8818 = vunpack.c.l.b16 %v7615
        %v8819 = vunpack.c.h.b16 %v7615
        %v8820 = vunpack.c.l.b16 %v7616
        %v8821 = vunpack.c.h.b16 %v7616
        %v8822 = vunpack.c.l.b16 %v7617
        %v8823 = vunpack.c.h.b16 %v7617
        %v8824 = vunpack.c.l.b16 %v7618
        %v8825 = vunpack.c.h.b16 %v7618
        %v8826 = vunpack.c.l.b16 %v7619
        %v8827 = vunpack.c.h.b16 %v7619
        %v8828 = vunpack.c.l.b16 %v7620
        %v8829 = vunpack.c.h.b16 %v7620
        %v8830 = vunpack.c.l.b16 %v7621
        %v8831 = vunpack.c.h.b16 %v7621
        %v8832 = vunpack.c.l.b16 %v7622
        %v8833 = vunpack.c.h.b16 %v7622
        %v8834 = vunpack.c.l.b16 %v7623
        %v8835 = vunpack.c.h.b16 %v7623
        %v8836 = vunpack.c.l.b16 %v7624
        %v8837 = vunpack.c.h.b16 %v7624
        %v8838 = vunpack.c.l.b16 %v7625
        %v8839 = vunpack.c.h.b16 %v7625
        %v8840 = vunpack.c.l.b16 %v7626
        %v8841 = vunpack.c.h.b16 %v7626
        %v8842 = vunpack.c.l.b16 %v7627
        %v8843 = vunpack.c.h.b16 %v7627
        %v8844 = vunpack.c.l.b16 %v7628
        %v8845 = vunpack.c.h.b16 %v7628
        %v8846 = vunpack.c.l.b16 %v7629
        %v8847 = vunpack.c.h.b16 %v7629
        %v8848 = vunpack.c.l.b16 %v7630
        %v8849 = vunpack.c.h.b16 %v7630
        %v8850 = vunpack.c.l.b16 %v7631
        %v8851 = vunpack.c.h.b16 %v7631
        %v8852 = vunpack.c.l.b16 %v7632
        %v8853 = vunpack.c.h.b16 %v7632
        %v8854 = vunpack.c.l.b16 %v7633
        %v8855 = vunpack.c.h.b16 %v7633
        %v8856 = vunpack.c.l.b16 %v7634
        %v8857 = vunpack.c.h.b16 %v7634
        %v8858 = vunpack.c.l.b16 %v7635
        %v8859 = vunpack.c.h.b16 %v7635
        %v8860 = vunpack.c.l.b16 %v7636
        %v8861 = vunpack.c.h.b16 %v7636
        %v8862 = vunpack.c.l.b16 %v7637
        %v8863 = vunpack.c.h.b16 %v7637
        %v8864 = vunpack.c.l.b16 %v7638
        %v8865 = vunpack.c.h.b16 %v7638
        %v8866 = vunpack.c.l.b16 %v7639
        %v8867 = vunpack.c.h.b16 %v7639
        %v8868 = vunpack.c.l.b16 %v7640
        %v8869 = vunpack.c.h.b16 %v7640
        %v8870 = vunpack.c.l.b16 %v7641
        %v8871 = vunpack.c.h.b16 %v7641
        %v8872 = vunpack.c.l.b16 %v7642
        %v8873 = vunpack.c.h.b16 %v7642
        %v8874 = vunpack.c.l.b16 %v7643
        %v8875 = vunpack.c.h.b16 %v7643
        %v8876 = vunpack.c.l.b16 %v7644
        %v8877 = vunpack.c.h.b16 %v7644
        %v8878 = vunpack.c.l.b16 %v7645
        %v8879 = vunpack.c.h.b16 %v7645
        %v8880 = vunpack.c.l.b16 %v7646
        %v8881 = vunpack.c.h.b16 %v7646
        %v8882 = vunpack.c.l.b16 %v7647
        %v8883 = vunpack.c.h.b16 %v7647
        %v8884 = vunpack.c.l.b16 %v7648
        %v8885 = vunpack.c.h.b16 %v7648
        %v8886 = vunpack.c.l.b16 %v7649
        %v8887 = vunpack.c.h.b16 %v7649
        %v8888 = vunpack.c.l.b16 %v7650
        %v8889 = vunpack.c.h.b16 %v7650
        %v8890 = vunpack.c.l.b16 %v7651
        %v8891 = vunpack.c.h.b16 %v7651
        %v8892 = vunpack.c.l.b16 %v7652
        %v8893 = vunpack.c.h.b16 %v7652
        %v8894 = vunpack.c.l.b16 %v7653
        %v8895 = vunpack.c.h.b16 %v7653
        %v8896 = vunpack.c.l.b16 %v7654
        %v8897 = vunpack.c.h.b16 %v7654
        %v8898 = vunpack.c.l.b16 %v7655
        %v8899 = vunpack.c.h.b16 %v7655
        %v8900 = vunpack.c.l.b16 %v7656
        %v8901 = vunpack.c.h.b16 %v7656
        %v8902 = vunpack.c.l.b16 %v7657
        %v8903 = vunpack.c.h.b16 %v7657
        %v8904 = vunpack.c.l.b16 %v7658
        %v8905 = vunpack.c.h.b16 %v7658
        %v8906 = vunpack.c.l.b16 %v7659
        %v8907 = vunpack.c.h.b16 %v7659
        %v8908 = vunpack.c.l.b16 %v7660
        %v8909 = vunpack.c.h.b16 %v7660
        %v8910 = vunpack.c.l.b16 %v7661
        %v8911 = vunpack.c.h.b16 %v7661
        %v8912 = vunpack.c.l.b16 %v7662
        %v8913 = vunpack.c.h.b16 %v7662
        %v8914 = vunpack.c.l.b16 %v7663
        %v8915 = vunpack.c.h.b16 %v7663
        %v8916 = vunpack.c.l.b16 %v7664
        %v8917 = vunpack.c.h.b16 %v7664
        %v8918 = vunpack.c.l.b16 %v7665
        %v8919 = vunpack.c.h.b16 %v7665
        %v8920 = vunpack.c.l.b16 %v7666
        %v8921 = vunpack.c.h.b16 %v7666
        %v8922 = vunpack.c.l.b16 %v7667
        %v8923 = vunpack.c.h.b16 %v7667
        %v8924 = vunpack.c.l.b16 %v7668
        %v8925 = vunpack.c.h.b16 %v7668
        %v8926 = vunpack.c.l.b16 %v7669
        %v8927 = vunpack.c.h.b16 %v7669
        %v8928 = vunpack.c.l.b16 %v7670
        %v8929 = vunpack.c.h.b16 %v7670
        %v8930 = vunpack.c.l.b16 %v7671
        %v8931 = vunpack.c.h.b16 %v7671
        %v8932 = vunpack.c.l.b16 %v7672
        %v8933 = vunpack.c.h.b16 %v7672
        %v8934 = vunpack.c.l.b16 %v7673
        %v8935 = vunpack.c.h.b16 %v7673
        %v8936 = vunpack.c.l.b16 %v7674
        %v8937 = vunpack.c.h.b16 %v7674
        %v8938 = vunpack.c.l.b16 %v7675
        %v8939 = vunpack.c.h.b16 %v7675
        %v8940 = vunpack.c.l.b16 %v7676
        %v8941 = vunpack.c.h.b16 %v7676
        %v8942 = vunpack.c.l.b16 %v7677
        %v8943 = vunpack.c.h.b16 %v7677
        %v8944 = vunpack.c.l.b16 %v7678
        %v8945 = vunpack.c.h.b16 %v7678
        %v8946 = vunpack.c.l.b16 %v7679
        %v8947 = vunpack.c.h.b16 %v7679
        %v8948 = vunpack.c.l.b16 %v7680
        %v8949 = vunpack.c.h.b16 %v7680
        %v8950 = vunpack.c.l.b16 %v7681
        %v8951 = vunpack.c.h.b16 %v7681
        %v8952 = vunpack.c.l.b16 %v7682
        %v8953 = vunpack.c.h.b16 %v7682
        %v8954 = vunpack.c.l.b16 %v7683
        %v8955 = vunpack.c.h.b16 %v7683
        %v8956 = vunpack.c.l.b16 %v7684
        %v8957 = vunpack.c.h.b16 %v7684
        %v8958 = vunpack.c.l.b16 %v7685
        %v8959 = vunpack.c.h.b16 %v7685
        %v8960 = vunpack.c.l.b16 %v7686
        %v8961 = vunpack.c.h.b16 %v7686
        %v8962 = vunpack.c.l.b16 %v7687
        %v8963 = vunpack.c.h.b16 %v7687
        %v8964 = vunpack.c.l.b16 %v7688
        %v8965 = vunpack.c.h.b16 %v7688
        %v8966 = vunpack.c.l.b16 %v7689
        %v8967 = vunpack.c.h.b16 %v7689
        %v8968 = vunpack.c.l.b16 %v7690
        %v8969 = vunpack.c.h.b16 %v7690
        %v8970 = vunpack.c.l.b16 %v7691
        %v8971 = vunpack.c.h.b16 %v7691
        %v8972 = vunpack.c.l.b16 %v7692
        %v8973 = vunpack.c.h.b16 %v7692
        %v8974 = vunpack.c.l.b16 %v7693
        %v8975 = vunpack.c.h.b16 %v7693
        %v8976 = vunpack.c.l.b16 %v7694
        %v8977 = vunpack.c.h.b16 %v7694
        %v8978 = vunpack.c.l.b16 %v7695
        %v8979 = vunpack.c.h.b16 %v7695
        %v8980 = vunpack.c.l.b16 %v7696
        %v8981 = vunpack.c.h.b16 %v7696
        %v8982 = vunpack.c.l.b16 %v7697
        %v8983 = vunpack.c.h.b16 %v7697
        %v8984 = vunpack.c.l.b16 %v7698
        %v8985 = vunpack.c.h.b16 %v7698
        %v8986 = vunpack.c.l.b16 %v7699
        %v8987 = vunpack.c.h.b16 %v7699
        %v8988 = vunpack.c.l.b16 %v7700
        %v8989 = vunpack.c.h.b16 %v7700
        %v8990 = vunpack.c.l.b16 %v7701
        %v8991 = vunpack.c.h.b16 %v7701
        %v8992 = vunpack.c.l.b16 %v7702
        %v8993 = vunpack.c.h.b16 %v7702
        %v8994 = vunpack.c.l.b16 %v7703
        %v8995 = vunpack.c.h.b16 %v7703
        %v8996 = vunpack.c.l.b16 %v7704
        %v8997 = vunpack.c.h.b16 %v7704
        %v8998 = vunpack.c.l.b16 %v7705
        %v8999 = vunpack.c.h.b16 %v7705
        %v9000 = vunpack.c.l.b16 %v7706
        %v9001 = vunpack.c.h.b16 %v7706
        %v9002 = vunpack.c.l.b16 %v7707
        %v9003 = vunpack.c.h.b16 %v7707
        %v9004 = vunpack.c.l.b16 %v7708
        %v9005 = vunpack.c.h.b16 %v7708
        %v9006 = vunpack.c.l.b16 %v7709
        %v9007 = vunpack.c.h.b16 %v7709
        %v9008 = vunpack.c.l.b16 %v7710
        %v9009 = vunpack.c.h.b16 %v7710
        %v9010 = vunpack.c.l.b16 %v7711
        %v9011 = vunpack.c.h.b16 %v7711
        %v9012 = vunpack.c.l.b16 %v7712
        %v9013 = vunpack.c.h.b16 %v7712
        %v9014 = vunpack.c.l.b16 %v7713
        %v9015 = vunpack.c.h.b16 %v7713
        %v9016 = vunpack.c.l.b16 %v7714
        %v9017 = vunpack.c.h.b16 %v7714
        %v9018 = vunpack.c.l.b16 %v7715
        %v9019 = vunpack.c.h.b16 %v7715
        %v9020 = vunpack.c.l.b16 %v7716
        %v9021 = vunpack.c.h.b16 %v7716
        %v9022 = vunpack.c.l.b16 %v7717
        %v9023 = vunpack.c.h.b16 %v7717
        %v9024 = vunpack.c.l.b16 %v7718
        %v9025 = vunpack.c.h.b16 %v7718
        %v9026 = vunpack.c.l.b16 %v7719
        %v9027 = vunpack.c.h.b16 %v7719
        %v9028 = vunpack.c.l.b16 %v7720
        %v9029 = vunpack.c.h.b16 %v7720
        %v9030 = vunpack.c.l.b16 %v7721
        %v9031 = vunpack.c.h.b16 %v7721
        %v9032 = vunpack.c.l.b16 %v7722
        %v9033 = vunpack.c.h.b16 %v7722
        %v9034 = vunpack.c.l.b16 %v7723
        %v9035 = vunpack.c.h.b16 %v7723
        %v9036 = vunpack.c.l.b16 %v7724
        %v9037 = vunpack.c.h.b16 %v7724
        %v9038 = vunpack.c.l.b16 %v7725
        %v9039 = vunpack.c.h.b16 %v7725
        %v9040 = vunpack.c.l.b16 %v7726
        %v9041 = vunpack.c.h.b16 %v7726
        %v9042 = vunpack.c.l.b16 %v7727
        %v9043 = vunpack.c.h.b16 %v7727
        %v9044 = vunpack.c.l.b16 %v7728
        %v9045 = vunpack.c.h.b16 %v7728
        %v9046 = vunpack.c.l.b16 %v7729
        %v9047 = vunpack.c.h.b16 %v7729
        %v9048 = vunpack.c.l.b16 %v7730
        %v9049 = vunpack.c.h.b16 %v7730
        %v9050 = vunpack.c.l.b16 %v7731
        %v9051 = vunpack.c.h.b16 %v7731
        %v9052 = vunpack.c.l.b16 %v7732
        %v9053 = vunpack.c.h.b16 %v7732
        %v9054 = vunpack.c.l.b16 %v7733
        %v9055 = vunpack.c.h.b16 %v7733
        %v9056 = vunpack.c.l.b16 %v7734
        %v9057 = vunpack.c.h.b16 %v7734
        %v9058 = vunpack.c.l.b16 %v7735
        %v9059 = vunpack.c.h.b16 %v7735
        %v9060 = vunpack.c.l.b16 %v7736
        %v9061 = vunpack.c.h.b16 %v7736
        %v9062 = vunpack.c.l.b16 %v7737
        %v9063 = vunpack.c.h.b16 %v7737
        %v9064 = vunpack.c.l.b16 %v7738
        %v9065 = vunpack.c.h.b16 %v7738
        %v9066 = vunpack.c.l.b16 %v7739
        %v9067 = vunpack.c.h.b16 %v7739
        %v9068 = vunpack.c.l.b16 %v7740
        %v9069 = vunpack.c.h.b16 %v7740
        %v9070 = vunpack.c.l.b16 %v7741
        %v9071 = vunpack.c.h.b16 %v7741
        %v9072 = vunpack.c.l.b16 %v7742
        %v9073 = vunpack.c.h.b16 %v7742
        %v9074 = vunpack.c.l.b16 %v7743
        %v9075 = vunpack.c.h.b16 %v7743
        %v9076 = vunpack.c.l.b16 %v7744
        %v9077 = vunpack.c.h.b16 %v7744
        %v9078 = vunpack.c.l.b16 %v7745
        %v9079 = vunpack.c.h.b16 %v7745
        %v9080 = vunpack.c.l.b16 %v7746
        %v9081 = vunpack.c.h.b16 %v7746
        %v9082 = vunpack.c.l.b16 %v7747
        %v9083 = vunpack.c.h.b16 %v7747
        %v9084 = vunpack.c.l.b16 %v7748
        %v9085 = vunpack.c.h.b16 %v7748
        %v9086 = vunpack.c.l.b16 %v7749
        %v9087 = vunpack.c.h.b16 %v7749
        %v9088 = vunpack.c.l.b16 %v7750
        %v9089 = vunpack.c.h.b16 %v7750
        %v9090 = vunpack.c.l.b16 %v7751
        %v9091 = vunpack.c.h.b16 %v7751
        %v9092 = vunpack.c.l.b16 %v7752
        %v9093 = vunpack.c.h.b16 %v7752
        %v9094 = vunpack.c.l.b16 %v7753
        %v9095 = vunpack.c.h.b16 %v7753
        %v9096 = vunpack.c.l.b16 %v7754
        %v9097 = vunpack.c.h.b16 %v7754
        %v9098 = vunpack.c.l.b16 %v7755
        %v9099 = vunpack.c.h.b16 %v7755
        %v9100 = vunpack.c.l.b16 %v7756
        %v9101 = vunpack.c.h.b16 %v7756
        %v9102 = vunpack.c.l.b16 %v7757
        %v9103 = vunpack.c.h.b16 %v7757
        %v9104 = vunpack.c.l.b16 %v7758
        %v9105 = vunpack.c.h.b16 %v7758
        %v9106 = vunpack.c.l.b16 %v7759
        %v9107 = vunpack.c.h.b16 %v7759
        %v9108 = vunpack.c.l.b16 %v7760
        %v9109 = vunpack.c.h.b16 %v7760
        %v9110 = vunpack.c.l.b16 %v7761
        %v9111 = vunpack.c.h.b16 %v7761
        %v9112 = vunpack.c.l.b16 %v7762
        %v9113 = vunpack.c.h.b16 %v7762
        %v9114 = vunpack.c.l.b16 %v7763
        %v9115 = vunpack.c.h.b16 %v7763
        %v9116 = vunpack.c.l.b16 %v7764
        %v9117 = vunpack.c.h.b16 %v7764
        %v9118 = vunpack.c.l.b16 %v7765
        %v9119 = vunpack.c.h.b16 %v7765
        %v9120 = vunpack.c.l.b16 %v7766
        %v9121 = vunpack.c.h.b16 %v7766
        %v9122 = vunpack.c.l.b16 %v7767
        %v9123 = vunpack.c.h.b16 %v7767
        %v9124 = vunpack.c.l.b16 %v7768
        %v9125 = vunpack.c.h.b16 %v7768
        %v9126 = vunpack.c.l.b16 %v7769
        %v9127 = vunpack.c.h.b16 %v7769
        %v9128 = vunpack.c.l.b16 %v7770
        %v9129 = vunpack.c.h.b16 %v7770
        %v9130 = vunpack.c.l.b16 %v7771
        %v9131 = vunpack.c.h.b16 %v7771
        %v9132 = vunpack.c.l.b16 %v7772
        %v9133 = vunpack.c.h.b16 %v7772
        %v9134 = vunpack.c.l.b16 %v7773
        %v9135 = vunpack.c.h.b16 %v7773
        %v9136 = vunpack.c.l.b16 %v7774
        %v9137 = vunpack.c.h.b16 %v7774
        %v9138 = vunpack.c.l.b16 %v7775
        %v9139 = vunpack.c.h.b16 %v7775
        %v9140 = vunpack.c.l.b16 %v7776
        %v9141 = vunpack.c.h.b16 %v7776
        %v9142 = vunpack.c.l.b16 %v7777
        %v9143 = vunpack.c.h.b16 %v7777
        %v9144 = vunpack.c.l.b16 %v7778
        %v9145 = vunpack.c.h.b16 %v7778
        %v9146 = vunpack.c.l.b16 %v7779
        %v9147 = vunpack.c.h.b16 %v7779
        %v9148 = vunpack.c.l.b16 %v7780
        %v9149 = vunpack.c.h.b16 %v7780
        %v9150 = vunpack.c.l.b16 %v7781
        %v9151 = vunpack.c.h.b16 %v7781
        %v9152 = vunpack.c.l.b16 %v7782
        %v9153 = vunpack.c.h.b16 %v7782
        %v9154 = vunpack.c.l.b16 %v7783
        %v9155 = vunpack.c.h.b16 %v7783
        %v9156 = vunpack.c.l.b16 %v7784
        %v9157 = vunpack.c.h.b16 %v7784
        %v9158 = vunpack.c.l.b16 %v7785
        %v9159 = vunpack.c.h.b16 %v7785
        %v9160 = vunpack.c.l.b16 %v7786
        %v9161 = vunpack.c.h.b16 %v7786
        %v9162 = vunpack.c.l.b16 %v7787
        %v9163 = vunpack.c.h.b16 %v7787
        %v9164 = vunpack.c.l.b16 %v7788
        %v9165 = vunpack.c.h.b16 %v7788
        %v9166 = vunpack.c.l.b16 %v7789
        %v9167 = vunpack.c.h.b16 %v7789
        %v9168 = vunpack.c.l.b16 %v7790
        %v9169 = vunpack.c.h.b16 %v7790
        %v9170 = vunpack.c.l.b16 %v7791
        %v9171 = vunpack.c.h.b16 %v7791
        %v9172 = vunpack.c.l.b16 %v7792
        %v9173 = vunpack.c.h.b16 %v7792
        %v9174 = vunpack.c.l.b16 %v7793
        %v9175 = vunpack.c.h.b16 %v7793
        %v9176 = vunpack.c.l.b16 %v7794
        %v9177 = vunpack.c.h.b16 %v7794
        %v9178 = vunpack.c.l.b16 %v7795
        %v9179 = vunpack.c.h.b16 %v7795
        %v9180 = vunpack.c.l.b16 %v7796
        %v9181 = vunpack.c.h.b16 %v7796
        %v9182 = vunpack.c.l.b16 %v7797
        %v9183 = vunpack.c.h.b16 %v7797
        %v9184 = vunpack.c.l.b16 %v7798
        %v9185 = vunpack.c.h.b16 %v7798
        %v9186 = vunpack.c.l.b16 %v7799
        %v9187 = vunpack.c.h.b16 %v7799
        %v9188 = vunpack.c.l.b16 %v7800
        %v9189 = vunpack.c.h.b16 %v7800
        %v9190 = vunpack.c.l.b16 %v7801
        %v9191 = vunpack.c.h.b16 %v7801
        %v9192 = vunpack.c.l.b16 %v7802
        %v9193 = vunpack.c.h.b16 %v7802
        %v9194 = vunpack.c.l.b16 %v7803
        %v9195 = vunpack.c.h.b16 %v7803
        %v9196 = vunpack.c.l.b16 %v7804
        %v9197 = vunpack.c.h.b16 %v7804
        %v9198 = vunpack.c.l.b16 %v7805
        %v9199 = vunpack.c.h.b16 %v7805
        %v9200 = vunpack.c.l.b16 %v7806
        %v9201 = vunpack.c.h.b16 %v7806
        %v9202 = vunpack.c.l.b16 %v7807
        %v9203 = vunpack.c.h.b16 %v7807
        %v9204 = vunpack.c.l.b16 %v7808
        %v9205 = vunpack.c.h.b16 %v7808
        %v9206 = vunpack.c.l.b16 %v7809
        %v9207 = vunpack.c.h.b16 %v7809
        %v9208 = vunpack.c.l.b16 %v7810
        %v9209 = vunpack.c.h.b16 %v7810
        %v9210 = vunpack.c.l.b16 %v7811
        %v9211 = vunpack.c.h.b16 %v7811
        %v9212 = vunpack.c.l.b16 %v7812
        %v9213 = vunpack.c.h.b16 %v7812
        %v9214 = vunpack.c.l.b16 %v7813
        %v9215 = vunpack.c.h.b16 %v7813
        %v9216 = vunpack.c.l.b16 %v7814
        %v9217 = vunpack.c.h.b16 %v7814
        %v9218 = vunpack.c.l.b16 %v7815
        %v9219 = vunpack.c.h.b16 %v7815
        %v9220 = vunpack.c.l.b16 %v7816
        %v9221 = vunpack.c.h.b16 %v7816
        %v9222 = vunpack.c.l.b16 %v7817
        %v9223 = vunpack.c.h.b16 %v7817
        %v9224 = vunpack.c.l.b16 %v7818
        %v9225 = vunpack.c.h.b16 %v7818
        %v9226 = vunpack.c.l.b16 %v7819
        %v9227 = vunpack.c.h.b16 %v7819
        %v9228 = vunpack.c.l.b16 %v7820
        %v9229 = vunpack.c.h.b16 %v7820
        %v9230 = vunpack.c.l.b16 %v7821
        %v9231 = vunpack.c.h.b16 %v7821
        %v9232 = vunpack.c.l.b16 %v7822
        %v9233 = vunpack.c.h.b16 %v7822
        %v9234 = vunpack.c.l.b16 %v7823
        %v9235 = vunpack.c.h.b16 %v7823
        %v9236 = vunpack.c.l.b16 %v7824
        %v9237 = vunpack.c.h.b16 %v7824
        %v9238 = vunpack.c.l.b16 %v7825
        %v9239 = vunpack.c.h.b16 %v7825
        %v9240 = vunpack.c.l.b16 %v7826
        %v9241 = vunpack.c.h.b16 %v7826
        %v9242 = vunpack.c.l.b16 %v7827
        %v9243 = vunpack.c.h.b16 %v7827
        %v9244 = vunpack.c.l.b16 %v7828
        %v9245 = vunpack.c.h.b16 %v7828
        %v9246 = vunpack.c.l.b16 %v7829
        %v9247 = vunpack.c.h.b16 %v7829
        %v9248 = vunpack.c.l.b16 %v7830
        %v9249 = vunpack.c.h.b16 %v7830
        %v9250 = vunpack.c.l.b16 %v7831
        %v9251 = vunpack.c.h.b16 %v7831
        %v9252 = vunpack.c.l.b16 %v7832
        %v9253 = vunpack.c.h.b16 %v7832
        %v9254 = vunpack.c.l.b16 %v7833
        %v9255 = vunpack.c.h.b16 %v7833
        %v9256 = vunpack.c.l.b16 %v7834
        %v9257 = vunpack.c.h.b16 %v7834
        %v9258 = vunpack.c.l.b16 %v7835
        %v9259 = vunpack.c.h.b16 %v7835
        %v9260 = vunpack.c.l.b16 %v7836
        %v9261 = vunpack.c.h.b16 %v7836
        %v9262 = vunpack.c.l.b16 %v7837
        %v9263 = vunpack.c.h.b16 %v7837
        %v9264 = vunpack.c.l.b16 %v7838
        %v9265 = vunpack.c.h.b16 %v7838
        %v9266 = vunpack.c.l.b16 %v7839
        %v9267 = vunpack.c.h.b16 %v7839
        %v9268 = vunpack.c.l.b16 %v7840
        %v9269 = vunpack.c.h.b16 %v7840
        %v9270 = vunpack.c.l.b16 %v7841
        %v9271 = vunpack.c.h.b16 %v7841
        %v9272 = vunpack.c.l.b16 %v7842
        %v9273 = vunpack.c.h.b16 %v7842
        %v9274 = vunpack.c.l.b16 %v7843
        %v9275 = vunpack.c.h.b16 %v7843
        %v9276 = vunpack.c.l.b16 %v7844
        %v9277 = vunpack.c.h.b16 %v7844
        %v9278 = vunpack.c.l.b16 %v7845
        %v9279 = vunpack.c.h.b16 %v7845
        %v9280 = vunpack.c.l.b16 %v7846
        %v9281 = vunpack.c.h.b16 %v7846
        %v9282 = vunpack.c.l.b16 %v7847
        %v9283 = vunpack.c.h.b16 %v7847
        %v9284 = vunpack.c.l.b16 %v7848
        %v9285 = vunpack.c.h.b16 %v7848
        %v9286 = vunpack.c.l.b16 %v7849
        %v9287 = vunpack.c.h.b16 %v7849
        %v9288 = vunpack.c.l.b16 %v7850
        %v9289 = vunpack.c.h.b16 %v7850
        %v9290 = vunpack.c.l.b16 %v7851
        %v9291 = vunpack.c.h.b16 %v7851
        %v9292 = vunpack.c.l.b16 %v7852
        %v9293 = vunpack.c.h.b16 %v7852
        %v9294 = vunpack.c.l.b16 %v7853
        %v9295 = vunpack.c.h.b16 %v7853
        %v9296 = vunpack.c.l.b16 %v7854
        %v9297 = vunpack.c.h.b16 %v7854
        %v9298 = vunpack.c.l.b16 %v7855
        %v9299 = vunpack.c.h.b16 %v7855
        %v9300 = vunpack.c.l.b16 %v7856
        %v9301 = vunpack.c.h.b16 %v7856
        %v9302 = vunpack.c.l.b16 %v7857
        %v9303 = vunpack.c.h.b16 %v7857
        %v9304 = vunpack.c.l.b16 %v7858
        %v9305 = vunpack.c.h.b16 %v7858
        %v9306 = vunpack.c.l.b16 %v7859
        %v9307 = vunpack.c.h.b16 %v7859
        %v9308 = vunpack.c.l.b16 %v7860
        %v9309 = vunpack.c.h.b16 %v7860
        %v9310 = vunpack.c.l.b16 %v7861
        %v9311 = vunpack.c.h.b16 %v7861
        %v9312 = vunpack.c.l.b16 %v7862
        %v9313 = vunpack.c.h.b16 %v7862
        %v9314 = vunpack.c.l.b16 %v7863
        %v9315 = vunpack.c.h.b16 %v7863
        %v9316 = vunpack.c.l.b16 %v7864
        %v9317 = vunpack.c.h.b16 %v7864
        %v9318 = vunpack.c.l.b16 %v7865
        %v9319 = vunpack.c.h.b16 %v7865
        %v9320 = vunpack.c.l.b16 %v7866
        %v9321 = vunpack.c.h.b16 %v7866
        %v9322 = vunpack.c.l.b16 %v7867
        %v9323 = vunpack.c.h.b16 %v7867
        %v9324 = vunpack.c.l.b16 %v7868
        %v9325 = vunpack.c.h.b16 %v7868
        %v9326 = vunpack.c.l.b16 %v7869
        %v9327 = vunpack.c.h.b16 %v7869
        %v9328 = vunpack.c.l.b16 %v7870
        %v9329 = vunpack.c.h.b16 %v7870
        %v9330 = vunpack.c.l.b16 %v7871
        %v9331 = vunpack.c.h.b16 %v7871
        %v9332 = vunpack.c.l.b16 %v7872
        %v9333 = vunpack.c.h.b16 %v7872
        %v9334 = vunpack.c.l.b16 %v7873
        %v9335 = vunpack.c.h.b16 %v7873
        %v9336 = vunpack.c.l.b16 %v7874
        %v9337 = vunpack.c.h.b16 %v7874
        %v9338 = vunpack.c.l.b16 %v7875
        %v9339 = vunpack.c.h.b16 %v7875
        %v9340 = vunpack.c.l.b16 %v7876
        %v9341 = vunpack.c.h.b16 %v7876
        %v9342 = vunpack.c.l.b16 %v7877
        %v9343 = vunpack.c.h.b16 %v7877
        %v9344 = vunpack.c.l.b16 %v7878
        %v9345 = vunpack.c.h.b16 %v7878
        %v9346 = vunpack.c.l.b16 %v7879
        %v9347 = vunpack.c.h.b16 %v7879
        %v9348 = vunpack.c.l.b16 %v7880
        %v9349 = vunpack.c.h.b16 %v7880
        %v9350 = vunpack.c.l.b16 %v7881
        %v9351 = vunpack.c.h.b16 %v7881
        %v9352 = vunpack.c.l.b16 %v7882
        %v9353 = vunpack.c.h.b16 %v7882
        %v9354 = vunpack.c.l.b16 %v7883
        %v9355 = vunpack.c.h.b16 %v7883
        %v9356 = vunpack.c.l.b16 %v7884
        %v9357 = vunpack.c.h.b16 %v7884
        %v9358 = vunpack.c.l.b16 %v7885
        %v9359 = vunpack.c.h.b16 %v7885
        %v9360 = vunpack.c.l.b16 %v7886
        %v9361 = vunpack.c.h.b16 %v7886
        %v9362 = vunpack.c.l.b16 %v7887
        %v9363 = vunpack.c.h.b16 %v7887
        %v9364 = vunpack.c.l.b16 %v7888
        %v9365 = vunpack.c.h.b16 %v7888
        %v9366 = vunpack.c.l.b16 %v7889
        %v9367 = vunpack.c.h.b16 %v7889
        %v9368 = vunpack.c.l.b16 %v7890
        %v9369 = vunpack.c.h.b16 %v7890
        %v9370 = vunpack.c.l.b16 %v7891
        %v9371 = vunpack.c.h.b16 %v7891
        %v9372 = vunpack.c.l.b16 %v7892
        %v9373 = vunpack.c.h.b16 %v7892
        %v9374 = vunpack.c.l.b16 %v7893
        %v9375 = vunpack.c.h.b16 %v7893
        %v9376 = vunpack.c.l.b16 %v7894
        %v9377 = vunpack.c.h.b16 %v7894
        %v9378 = vunpack.c.l.b16 %v7895
        %v9379 = vunpack.c.h.b16 %v7895
        %v9380 = vunpack.c.l.b16 %v7896
        %v9381 = vunpack.c.h.b16 %v7896
        %v9382 = vunpack.c.l.b16 %v7897
        %v9383 = vunpack.c.h.b16 %v7897
        %v9384 = vunpack.c.l.b16 %v7898
        %v9385 = vunpack.c.h.b16 %v7898
        %v9386 = vunpack.c.l.b16 %v7899
        %v9387 = vunpack.c.h.b16 %v7899
        %v9388 = vunpack.c.l.b16 %v7900
        %v9389 = vunpack.c.h.b16 %v7900
        %v9390 = vunpack.c.l.b16 %v7901
        %v9391 = vunpack.c.h.b16 %v7901
        %v9392 = vunpack.c.l.b16 %v7902
        %v9393 = vunpack.c.h.b16 %v7902
        %v9394 = vunpack.c.l.b16 %v7903
        %v9395 = vunpack.c.h.b16 %v7903
        %v9396 = vunpack.c.l.b16 %v7904
        %v9397 = vunpack.c.h.b16 %v7904
        %v9398 = vunpack.c.l.b16 %v7905
        %v9399 = vunpack.c.h.b16 %v7905
        %v9400 = vunpack.c.l.b16 %v7906
        %v9401 = vunpack.c.h.b16 %v7906
        %v9402 = vunpack.c.l.b16 %v7907
        %v9403 = vunpack.c.h.b16 %v7907
        %v9404 = vunpack.c.l.b16 %v7908
        %v9405 = vunpack.c.h.b16 %v7908
        %v9406 = vunpack.c.l.b16 %v7909
        %v9407 = vunpack.c.h.b16 %v7909
        %v9408 = vunpack.c.l.b16 %v7910
        %v9409 = vunpack.c.h.b16 %v7910
        %v9410 = vunpack.c.l.b16 %v7911
        %v9411 = vunpack.c.h.b16 %v7911
        %v9412 = vunpack.c.l.b16 %v7912
        %v9413 = vunpack.c.h.b16 %v7912
        %v9414 = vunpack.c.l.b16 %v7913
        %v9415 = vunpack.c.h.b16 %v7913
        %v9416 = vunpack.c.l.b16 %v7914
        %v9417 = vunpack.c.h.b16 %v7914
        %v9418 = vunpack.c.l.b16 %v7915
        %v9419 = vunpack.c.h.b16 %v7915
        %v9420 = vunpack.c.l.b16 %v7916
        %v9421 = vunpack.c.h.b16 %v7916
        %v9422 = vunpack.c.l.b16 %v7917
        %v9423 = vunpack.c.h.b16 %v7917
        %v9424 = vunpack.c.l.b16 %v7918
        %v9425 = vunpack.c.h.b16 %v7918
        %v9426 = vunpack.c.l.b16 %v7919
        %v9427 = vunpack.c.h.b16 %v7919
        %v9428 = vunpack.c.l.b16 %v7920
        %v9429 = vunpack.c.h.b16 %v7920
        %v9430 = vunpack.c.l.b16 %v7921
        %v9431 = vunpack.c.h.b16 %v7921
        %v9432 = vunpack.c.l.b16 %v7922
        %v9433 = vunpack.c.h.b16 %v7922
        %v9434 = vunpack.c.l.b16 %v7923
        %v9435 = vunpack.c.h.b16 %v7923
        %v9436 = vunpack.c.l.b16 %v7924
        %v9437 = vunpack.c.h.b16 %v7924
        %v9438 = vunpack.c.l.b16 %v7925
        %v9439 = vunpack.c.h.b16 %v7925
        %v9440 = vunpack.c.l.b16 %v7926
        %v9441 = vunpack.c.h.b16 %v7926
        %v9442 = vunpack.c.l.b16 %v7927
        %v9443 = vunpack.c.h.b16 %v7927
        %v9444 = vunpack.c.l.b16 %v7928
        %v9445 = vunpack.c.h.b16 %v7928
        %v9446 = vunpack.c.l.b16 %v7929
        %v9447 = vunpack.c.h.b16 %v7929
        %v9448 = vunpack.c.l.b16 %v7930
        %v9449 = vunpack.c.h.b16 %v7930
        %v9450 = vunpack.c.l.b16 %v7931
        %v9451 = vunpack.c.h.b16 %v7931
        %v9452 = vunpack.c.l.b16 %v7932
        %v9453 = vunpack.c.h.b16 %v7932
        %v9454 = vunpack.c.l.b16 %v7933
        %v9455 = vunpack.c.h.b16 %v7933
        %v9456 = vunpack.c.l.b16 %v7934
        %v9457 = vunpack.c.h.b16 %v7934
        %v9458 = vunpack.c.l.b16 %v7935
        %v9459 = vunpack.c.h.b16 %v7935
        %v9460 = vunpack.c.l.b16 %v7936
        %v9461 = vunpack.c.h.b16 %v7936
        %v9462 = vunpack.c.l.b16 %v7937
        %v9463 = vunpack.c.h.b16 %v7937
        %v9464 = vunpack.c.l.b16 %v7938
        %v9465 = vunpack.c.h.b16 %v7938
        %v9466 = vunpack.c.l.b16 %v7939
        %v9467 = vunpack.c.h.b16 %v7939
        %v9468 = vunpack.c.l.b16 %v7940
        %v9469 = vunpack.c.h.b16 %v7940
        %v9470 = vunpack.c.l.b16 %v7941
        %v9471 = vunpack.c.h.b16 %v7941
        %v9472 = vunpack.c.l.b16 %v7942
        %v9473 = vunpack.c.h.b16 %v7942
        %v9474 = vunpack.c.l.b16 %v7943
        %v9475 = vunpack.c.h.b16 %v7943
        %v9476 = vunpack.c.l.b16 %v7944
        %v9477 = vunpack.c.h.b16 %v7944
        %v9478 = vunpack.c.l.b16 %v7945
        %v9479 = vunpack.c.h.b16 %v7945
        %v9480 = vunpack.c.l.b16 %v7946
        %v9481 = vunpack.c.h.b16 %v7946
        %v9482 = vunpack.c.l.b16 %v7947
        %v9483 = vunpack.c.h.b16 %v7947
        %v9484 = vpack.c.b16 %v8464, %v8460
        %v9485 = vpack.c.b16 %v8465, %v8461
        %v9486 = vpack.c.b16 %v8466, %v8462
        %v9487 = vpack.c.b16 %v8467, %v8463
        %v9488 = vpack.c.b16 %v8472, %v8468
        %v9489 = vpack.c.b16 %v8473, %v8469
        %v9490 = vpack.c.b16 %v8474, %v8470
        %v9491 = vpack.c.b16 %v8475, %v8471
        %v9492 = vpack.c.b16 %v8480, %v8476
        %v9493 = vpack.c.b16 %v8481, %v8477
        %v9494 = vpack.c.b16 %v8482, %v8478
        %v9495 = vpack.c.b16 %v8483, %v8479
        %v9496 = vpack.c.b16 %v8488, %v8484
        %v9497 = vpack.c.b16 %v8489, %v8485
        %v9498 = vpack.c.b16 %v8490, %v8486
        %v9499 = vpack.c.b16 %v8491, %v8487
        %v9500 = vpack.c.b16 %v8496, %v8492
        %v9501 = vpack.c.b16 %v8497, %v8493
        %v9502 = vpack.c.b16 %v8498, %v8494
        %v9503 = vpack.c.b16 %v8499, %v8495
        %v9504 = vpack.c.b16 %v8504, %v8500
        %v9505 = vpack.c.b16 %v8505, %v8501
        %v9506 = vpack.c.b16 %v8506, %v8502
        %v9507 = vpack.c.b16 %v8507, %v8503
        %v9508 = vpack.c.b16 %v8512, %v8508
        %v9509 = vpack.c.b16 %v8513, %v8509
        %v9510 = vpack.c.b16 %v8514, %v8510
        %v9511 = vpack.c.b16 %v8515, %v8511
        %v9512 = vpack.c.b16 %v8520, %v8516
        %v9513 = vpack.c.b16 %v8521, %v8517
        %v9514 = vpack.c.b16 %v8522, %v8518
        %v9515 = vpack.c.b16 %v8523, %v8519
        %v9516 = vpack.c.b16 %v8528, %v8524
        %v9517 = vpack.c.b16 %v8529, %v8525
        %v9518 = vpack.c.b16 %v8530, %v8526
        %v9519 = vpack.c.b16 %v8531, %v8527
        %v9520 = vpack.c.b16 %v8536, %v8532
        %v9521 = vpack.c.b16 %v8537, %v8533
        %v9522 = vpack.c.b16 %v8538, %v8534
        %v9523 = vpack.c.b16 %v8539, %v8535
        %v9524 = vpack.c.b16 %v8544, %v8540
        %v9525 = vpack.c.b16 %v8545, %v8541
        %v9526 = vpack.c.b16 %v8546, %v8542
        %v9527 = vpack.c.b16 %v8547, %v8543
        %v9528 = vpack.c.b16 %v8552, %v8548
        %v9529 = vpack.c.b16 %v8553, %v8549
        %v9530 = vpack.c.b16 %v8554, %v8550
        %v9531 = vpack.c.b16 %v8555, %v8551
        %v9532 = vpack.c.b16 %v8560, %v8556
        %v9533 = vpack.c.b16 %v8561, %v8557
        %v9534 = vpack.c.b16 %v8562, %v8558
        %v9535 = vpack.c.b16 %v8563, %v8559
        %v9536 = vpack.c.b16 %v8568, %v8564
        %v9537 = vpack.c.b16 %v8569, %v8565
        %v9538 = vpack.c.b16 %v8570, %v8566
        %v9539 = vpack.c.b16 %v8571, %v8567
        %v9540 = vpack.c.b16 %v8576, %v8572
        %v9541 = vpack.c.b16 %v8577, %v8573
        %v9542 = vpack.c.b16 %v8578, %v8574
        %v9543 = vpack.c.b16 %v8579, %v8575
        %v9544 = vpack.c.b16 %v8584, %v8580
        %v9545 = vpack.c.b16 %v8585, %v8581
        %v9546 = vpack.c.b16 %v8586, %v8582
        %v9547 = vpack.c.b16 %v8587, %v8583
        %v9548 = vpack.c.b16 %v8592, %v8588
        %v9549 = vpack.c.b16 %v8593, %v8589
        %v9550 = vpack.c.b16 %v8594, %v8590
        %v9551 = vpack.c.b16 %v8595, %v8591
        %v9552 = vpack.c.b16 %v8600, %v8596
        %v9553 = vpack.c.b16 %v8601, %v8597
        %v9554 = vpack.c.b16 %v8602, %v8598
        %v9555 = vpack.c.b16 %v8603, %v8599
        %v9556 = vpack.c.b16 %v8608, %v8604
        %v9557 = vpack.c.b16 %v8609, %v8605
        %v9558 = vpack.c.b16 %v8610, %v8606
        %v9559 = vpack.c.b16 %v8611, %v8607
        %v9560 = vpack.c.b16 %v8616, %v8612
        %v9561 = vpack.c.b16 %v8617, %v8613
        %v9562 = vpack.c.b16 %v8618, %v8614
        %v9563 = vpack.c.b16 %v8619, %v8615
        %v9564 = vpack.c.b16 %v8624, %v8620
        %v9565 = vpack.c.b16 %v8625, %v8621
        %v9566 = vpack.c.b16 %v8626, %v8622
        %v9567 = vpack.c.b16 %v8627, %v8623
        %v9568 = vpack.c.b16 %v8632, %v8628
        %v9569 = vpack.c.b16 %v8633, %v8629
        %v9570 = vpack.c.b16 %v8634, %v8630
        %v9571 = vpack.c.b16 %v8635, %v8631
        %v9572 = vpack.c.b16 %v8640, %v8636
        %v9573 = vpack.c.b16 %v8641, %v8637
        %v9574 = vpack.c.b16 %v8642, %v8638
        %v9575 = vpack.c.b16 %v8643, %v8639
        %v9576 = vpack.c.b16 %v8648, %v8644
        %v9577 = vpack.c.b16 %v8649, %v8645
        %v9578 = vpack.c.b16 %v8650, %v8646
        %v9579 = vpack.c.b16 %v8651, %v8647
        %v9580 = vpack.c.b16 %v8656, %v8652
        %v9581 = vpack.c.b16 %v8657, %v8653
        %v9582 = vpack.c.b16 %v8658, %v8654
        %v9583 = vpack.c.b16 %v8659, %v8655
        %v9584 = vpack.c.b16 %v8664, %v8660
        %v9585 = vpack.c.b16 %v8665, %v8661
        %v9586 = vpack.c.b16 %v8666, %v8662
        %v9587 = vpack.c.b16 %v8667, %v8663
        %v9588 = vpack.c.b16 %v8672, %v8668
        %v9589 = vpack.c.b16 %v8673, %v8669
        %v9590 = vpack.c.b16 %v8674, %v8670
        %v9591 = vpack.c.b16 %v8675, %v8671
        %v9592 = vpack.c.b16 %v8680, %v8676
        %v9593 = vpack.c.b16 %v8681, %v8677
        %v9594 = vpack.c.b16 %v8682, %v8678
        %v9595 = vpack.c.b16 %v8683, %v8679
        %v9596 = vpack.c.b16 %v8688, %v8684
        %v9597 = vpack.c.b16 %v8689, %v8685
        %v9598 = vpack.c.b16 %v8690, %v8686
        %v9599 = vpack.c.b16 %v8691, %v8687
        %v9600 = vpack.c.b16 %v8696, %v8692
        %v9601 = vpack.c.b16 %v8697, %v8693
        %v9602 = vpack.c.b16 %v8698, %v8694
        %v9603 = vpack.c.b16 %v8699, %v8695
        %v9604 = vpack.c.b16 %v8704, %v8700
        %v9605 = vpack.c.b16 %v8705, %v8701
        %v9606 = vpack.c.b16 %v8706, %v8702
        %v9607 = vpack.c.b16 %v8707, %v8703
        %v9608 = vpack.c.b16 %v8712, %v8708
        %v9609 = vpack.c.b16 %v8713, %v8709
        %v9610 = vpack.c.b16 %v8714, %v8710
        %v9611 = vpack.c.b16 %v8715, %v8711
        %v9612 = vpack.c.b16 %v8720, %v8716
        %v9613 = vpack.c.b16 %v8721, %v8717
        %v9614 = vpack.c.b16 %v8722, %v8718
        %v9615 = vpack.c.b16 %v8723, %v8719
        %v9616 = vpack.c.b16 %v8728, %v8724
        %v9617 = vpack.c.b16 %v8729, %v8725
        %v9618 = vpack.c.b16 %v8730, %v8726
        %v9619 = vpack.c.b16 %v8731, %v8727
        %v9620 = vpack.c.b16 %v8736, %v8732
        %v9621 = vpack.c.b16 %v8737, %v8733
        %v9622 = vpack.c.b16 %v8738, %v8734
        %v9623 = vpack.c.b16 %v8739, %v8735
        %v9624 = vpack.c.b16 %v8744, %v8740
        %v9625 = vpack.c.b16 %v8745, %v8741
        %v9626 = vpack.c.b16 %v8746, %v8742
        %v9627 = vpack.c.b16 %v8747, %v8743
        %v9628 = vpack.c.b16 %v8752, %v8748
        %v9629 = vpack.c.b16 %v8753, %v8749
        %v9630 = vpack.c.b16 %v8754, %v8750
        %v9631 = vpack.c.b16 %v8755, %v8751
        %v9632 = vpack.c.b16 %v8760, %v8756
        %v9633 = vpack.c.b16 %v8761, %v8757
        %v9634 = vpack.c.b16 %v8762, %v8758
        %v9635 = vpack.c.b16 %v8763, %v8759
        %v9636 = vpack.c.b16 %v8768, %v8764
        %v9637 = vpack.c.b16 %v8769, %v8765
        %v9638 = vpack.c.b16 %v8770, %v8766
        %v9639 = vpack.c.b16 %v8771, %v8767
        %v9640 = vpack.c.b16 %v8776, %v8772
        %v9641 = vpack.c.b16 %v8777, %v8773
        %v9642 = vpack.c.b16 %v8778, %v8774
        %v9643 = vpack.c.b16 %v8779, %v8775
        %v9644 = vpack.c.b16 %v8784, %v8780
        %v9645 = vpack.c.b16 %v8785, %v8781
        %v9646 = vpack.c.b16 %v8786, %v8782
        %v9647 = vpack.c.b16 %v8787, %v8783
        %v9648 = vpack.c.b16 %v8792, %v8788
        %v9649 = vpack.c.b16 %v8793, %v8789
        %v9650 = vpack.c.b16 %v8794, %v8790
        %v9651 = vpack.c.b16 %v8795, %v8791
        %v9652 = vpack.c.b16 %v8800, %v8796
        %v9653 = vpack.c.b16 %v8801, %v8797
        %v9654 = vpack.c.b16 %v8802, %v8798
        %v9655 = vpack.c.b16 %v8803, %v8799
        %v9656 = vpack.c.b16 %v8808, %v8804
        %v9657 = vpack.c.b16 %v8809, %v8805
        %v9658 = vpack.c.b16 %v8810, %v8806
        %v9659 = vpack.c.b16 %v8811, %v8807
        %v9660 = vpack.c.b16 %v8816, %v8812
        %v9661 = vpack.c.b16 %v8817, %v8813
        %v9662 = vpack.c.b16 %v8818, %v8814
        %v9663 = vpack.c.b16 %v8819, %v8815
        %v9664 = vpack.c.b16 %v8824, %v8820
        %v9665 = vpack.c.b16 %v8825, %v8821
        %v9666 = vpack.c.b16 %v8826, %v8822
        %v9667 = vpack.c.b16 %v8827, %v8823
        %v9668 = vpack.c.b16 %v8832, %v8828
        %v9669 = vpack.c.b16 %v8833, %v8829
        %v9670 = vpack.c.b16 %v8834, %v8830
        %v9671 = vpack.c.b16 %v8835, %v8831
        %v9672 = vpack.c.b16 %v8840, %v8836
        %v9673 = vpack.c.b16 %v8841, %v8837
        %v9674 = vpack.c.b16 %v8842, %v8838
        %v9675 = vpack.c.b16 %v8843, %v8839
        %v9676 = vpack.c.b16 %v8848, %v8844
        %v9677 = vpack.c.b16 %v8849, %v8845
        %v9678 = vpack.c.b16 %v8850, %v8846
        %v9679 = vpack.c.b16 %v8851, %v8847
        %v9680 = vpack.c.b16 %v8856, %v8852
        %v9681 = vpack.c.b16 %v8857, %v8853
        %v9682 = vpack.c.b16 %v8858, %v8854
        %v9683 = vpack.c.b16 %v8859, %v8855
        %v9684 = vpack.c.b16 %v8864, %v8860
        %v9685 = vpack.c.b16 %v8865, %v8861
        %v9686 = vpack.c.b16 %v8866, %v8862
        %v9687 = vpack.c.b16 %v8867, %v8863
        %v9688 = vpack.c.b16 %v8872, %v8868
        %v9689 = vpack.c.b16 %v8873, %v8869
        %v9690 = vpack.c.b16 %v8874, %v8870
        %v9691 = vpack.c.b16 %v8875, %v8871
        %v9692 = vpack.c.b16 %v8880, %v8876
        %v9693 = vpack.c.b16 %v8881, %v8877
        %v9694 = vpack.c.b16 %v8882, %v8878
        %v9695 = vpack.c.b16 %v8883, %v8879
        %v9696 = vpack.c.b16 %v8888, %v8884
        %v9697 = vpack.c.b16 %v8889, %v8885
        %v9698 = vpack.c.b16 %v8890, %v8886
        %v9699 = vpack.c.b16 %v8891, %v8887
        %v9700 = vpack.c.b16 %v8896, %v8892
        %v9701 = vpack.c.b16 %v8897, %v8893
        %v9702 = vpack.c.b16 %v8898, %v8894
        %v9703 = vpack.c.b16 %v8899, %v8895
        %v9704 = vpack.c.b16 %v8904, %v8900
        %v9705 = vpack.c.b16 %v8905, %v8901
        %v9706 = vpack.c.b16 %v8906, %v8902
        %v9707 = vpack.c.b16 %v8907, %v8903
        %v9708 = vpack.c.b16 %v8912, %v8908
        %v9709 = vpack.c.b16 %v8913, %v8909
        %v9710 = vpack.c.b16 %v8914, %v8910
        %v9711 = vpack.c.b16 %v8915, %v8911
        %v9712 = vpack.c.b16 %v8920, %v8916
        %v9713 = vpack.c.b16 %v8921, %v8917
        %v9714 = vpack.c.b16 %v8922, %v8918
        %v9715 = vpack.c.b16 %v8923, %v8919
        %v9716 = vpack.c.b16 %v8928, %v8924
        %v9717 = vpack.c.b16 %v8929, %v8925
        %v9718 = vpack.c.b16 %v8930, %v8926
        %v9719 = vpack.c.b16 %v8931, %v8927
        %v9720 = vpack.c.b16 %v8936, %v8932
        %v9721 = vpack.c.b16 %v8937, %v8933
        %v9722 = vpack.c.b16 %v8938, %v8934
        %v9723 = vpack.c.b16 %v8939, %v8935
        %v9724 = vpack.c.b16 %v8944, %v8940
        %v9725 = vpack.c.b16 %v8945, %v8941
        %v9726 = vpack.c.b16 %v8946, %v8942
        %v9727 = vpack.c.b16 %v8947, %v8943
        %v9728 = vpack.c.b16 %v8952, %v8948
        %v9729 = vpack.c.b16 %v8953, %v8949
        %v9730 = vpack.c.b16 %v8954, %v8950
        %v9731 = vpack.c.b16 %v8955, %v8951
        %v9732 = vpack.c.b16 %v8960, %v8956
        %v9733 = vpack.c.b16 %v8961, %v8957
        %v9734 = vpack.c.b16 %v8962, %v8958
        %v9735 = vpack.c.b16 %v8963, %v8959
        %v9736 = vpack.c.b16 %v8968, %v8964
        %v9737 = vpack.c.b16 %v8969, %v8965
        %v9738 = vpack.c.b16 %v8970, %v8966
        %v9739 = vpack.c.b16 %v8971, %v8967
        %v9740 = vpack.c.b16 %v8976, %v8972
        %v9741 = vpack.c.b16 %v8977, %v8973
        %v9742 = vpack.c.b16 %v8978, %v8974
        %v9743 = vpack.c.b16 %v8979, %v8975
        %v9744 = vpack.c.b16 %v8984, %v8980
        %v9745 = vpack.c.b16 %v8985, %v8981
        %v9746 = vpack.c.b16 %v8986, %v8982
        %v9747 = vpack.c.b16 %v8987, %v8983
        %v9748 = vpack.c.b16 %v8992, %v8988
        %v9749 = vpack.c.b16 %v8993, %v8989
        %v9750 = vpack.c.b16 %v8994, %v8990
        %v9751 = vpack.c.b16 %v8995, %v8991
        %v9752 = vpack.c.b16 %v9000, %v8996
        %v9753 = vpack.c.b16 %v9001, %v8997
        %v9754 = vpack.c.b16 %v9002, %v8998
        %v9755 = vpack.c.b16 %v9003, %v8999
        %v9756 = vpack.c.b16 %v9008, %v9004
        %v9757 = vpack.c.b16 %v9009, %v9005
        %v9758 = vpack.c.b16 %v9010, %v9006
        %v9759 = vpack.c.b16 %v9011, %v9007
        %v9760 = vpack.c.b16 %v9016, %v9012
        %v9761 = vpack.c.b16 %v9017, %v9013
        %v9762 = vpack.c.b16 %v9018, %v9014
        %v9763 = vpack.c.b16 %v9019, %v9015
        %v9764 = vpack.c.b16 %v9024, %v9020
        %v9765 = vpack.c.b16 %v9025, %v9021
        %v9766 = vpack.c.b16 %v9026, %v9022
        %v9767 = vpack.c.b16 %v9027, %v9023
        %v9768 = vpack.c.b16 %v9032, %v9028
        %v9769 = vpack.c.b16 %v9033, %v9029
        %v9770 = vpack.c.b16 %v9034, %v9030
        %v9771 = vpack.c.b16 %v9035, %v9031
        %v9772 = vpack.c.b16 %v9040, %v9036
        %v9773 = vpack.c.b16 %v9041, %v9037
        %v9774 = vpack.c.b16 %v9042, %v9038
        %v9775 = vpack.c.b16 %v9043, %v9039
        %v9776 = vpack.c.b16 %v9048, %v9044
        %v9777 = vpack.c.b16 %v9049, %v9045
        %v9778 = vpack.c.b16 %v9050, %v9046
        %v9779 = vpack.c.b16 %v9051, %v9047
        %v9780 = vpack.c.b16 %v9056, %v9052
        %v9781 = vpack.c.b16 %v9057, %v9053
        %v9782 = vpack.c.b16 %v9058, %v9054
        %v9783 = vpack.c.b16 %v9059, %v9055
        %v9784 = vpack.c.b16 %v9064, %v9060
        %v9785 = vpack.c.b16 %v9065, %v9061
        %v9786 = vpack.c.b16 %v9066, %v9062
        %v9787 = vpack.c.b16 %v9067, %v9063
        %v9788 = vpack.c.b16 %v9072, %v9068
        %v9789 = vpack.c.b16 %v9073, %v9069
        %v9790 = vpack.c.b16 %v9074, %v9070
        %v9791 = vpack.c.b16 %v9075, %v9071
        %v9792 = vpack.c.b16 %v9080, %v9076
        %v9793 = vpack.c.b16 %v9081, %v9077
        %v9794 = vpack.c.b16 %v9082, %v9078
        %v9795 = vpack.c.b16 %v9083, %v9079
        %v9796 = vpack.c.b16 %v9088, %v9084
        %v9797 = vpack.c.b16 %v9089, %v9085
        %v9798 = vpack.c.b16 %v9090, %v9086
        %v9799 = vpack.c.b16 %v9091, %v9087
        %v9800 = vpack.c.b16 %v9096, %v9092
        %v9801 = vpack.c.b16 %v9097, %v9093
        %v9802 = vpack.c.b16 %v9098, %v9094
        %v9803 = vpack.c.b16 %v9099, %v9095
        %v9804 = vpack.c.b16 %v9104, %v9100
        %v9805 = vpack.c.b16 %v9105, %v9101
        %v9806 = vpack.c.b16 %v9106, %v9102
        %v9807 = vpack.c.b16 %v9107, %v9103
        %v9808 = vpack.c.b16 %v9112, %v9108
        %v9809 = vpack.c.b16 %v9113, %v9109
        %v9810 = vpack.c.b16 %v9114, %v9110
        %v9811 = vpack.c.b16 %v9115, %v9111
        %v9812 = vpack.c.b16 %v9120, %v9116
        %v9813 = vpack.c.b16 %v9121, %v9117
        %v9814 = vpack.c.b16 %v9122, %v9118
        %v9815 = vpack.c.b16 %v9123, %v9119
        %v9816 = vpack.c.b16 %v9128, %v9124
        %v9817 = vpack.c.b16 %v9129, %v9125
        %v9818 = vpack.c.b16 %v9130, %v9126
        %v9819 = vpack.c.b16 %v9131, %v9127
        %v9820 = vpack.c.b16 %v9136, %v9132
        %v9821 = vpack.c.b16 %v9137, %v9133
        %v9822 = vpack.c.b16 %v9138, %v9134
        %v9823 = vpack.c.b16 %v9139, %v9135
        %v9824 = vpack.c.b16 %v9144, %v9140
        %v9825 = vpack.c.b16 %v9145, %v9141
        %v9826 = vpack.c.b16 %v9146, %v9142
        %v9827 = vpack.c.b16 %v9147, %v9143
        %v9828 = vpack.c.b16 %v9152, %v9148
        %v9829 = vpack.c.b16 %v9153, %v9149
        %v9830 = vpack.c.b16 %v9154, %v9150
        %v9831 = vpack.c.b16 %v9155, %v9151
        %v9832 = vpack.c.b16 %v9160, %v9156
        %v9833 = vpack.c.b16 %v9161, %v9157
        %v9834 = vpack.c.b16 %v9162, %v9158
        %v9835 = vpack.c.b16 %v9163, %v9159
        %v9836 = vpack.c.b16 %v9168, %v9164
        %v9837 = vpack.c.b16 %v9169, %v9165
        %v9838 = vpack.c.b16 %v9170, %v9166
        %v9839 = vpack.c.b16 %v9171, %v9167
        %v9840 = vpack.c.b16 %v9176, %v9172
        %v9841 = vpack.c.b16 %v9177, %v9173
        %v9842 = vpack.c.b16 %v9178, %v9174
        %v9843 = vpack.c.b16 %v9179, %v9175
        %v9844 = vpack.c.b16 %v9184, %v9180
        %v9845 = vpack.c.b16 %v9185, %v9181
        %v9846 = vpack.c.b16 %v9186, %v9182
        %v9847 = vpack.c.b16 %v9187, %v9183
        %v9848 = vpack.c.b16 %v9192, %v9188
        %v9849 = vpack.c.b16 %v9193, %v9189
        %v9850 = vpack.c.b16 %v9194, %v9190
        %v9851 = vpack.c.b16 %v9195, %v9191
        %v9852 = vpack.c.b16 %v9200, %v9196
        %v9853 = vpack.c.b16 %v9201, %v9197
        %v9854 = vpack.c.b16 %v9202, %v9198
        %v9855 = vpack.c.b16 %v9203, %v9199
        %v9856 = vpack.c.b16 %v9208, %v9204
        %v9857 = vpack.c.b16 %v9209, %v9205
        %v9858 = vpack.c.b16 %v9210, %v9206
        %v9859 = vpack.c.b16 %v9211, %v9207
        %v9860 = vpack.c.b16 %v9216, %v9212
        %v9861 = vpack.c.b16 %v9217, %v9213
        %v9862 = vpack.c.b16 %v9218, %v9214
        %v9863 = vpack.c.b16 %v9219, %v9215
        %v9864 = vpack.c.b16 %v9224, %v9220
        %v9865 = vpack.c.b16 %v9225, %v9221
        %v9866 = vpack.c.b16 %v9226, %v9222
        %v9867 = vpack.c.b16 %v9227, %v9223
        %v9868 = vpack.c.b16 %v9232, %v9228
        %v9869 = vpack.c.b16 %v9233, %v9229
        %v9870 = vpack.c.b16 %v9234, %v9230
        %v9871 = vpack.c.b16 %v9235, %v9231
        %v9872 = vpack.c.b16 %v9240, %v9236
        %v9873 = vpack.c.b16 %v9241, %v9237
        %v9874 = vpack.c.b16 %v9242, %v9238
        %v9875 = vpack.c.b16 %v9243, %v9239
        %v9876 = vpack.c.b16 %v9248, %v9244
        %v9877 = vpack.c.b16 %v9249, %v9245
        %v9878 = vpack.c.b16 %v9250, %v9246
        %v9879 = vpack.c.b16 %v9251, %v9247
        %v9880 = vpack.c.b16 %v9256, %v9252
        %v9881 = vpack.c.b16 %v9257, %v9253
        %v9882 = vpack.c.b16 %v9258, %v9254
        %v9883 = vpack.c.b16 %v9259, %v9255
        %v9884 = vpack.c.b16 %v9264, %v9260
        %v9885 = vpack.c.b16 %v9265, %v9261
        %v9886 = vpack.c.b16 %v9266, %v9262
        %v9887 = vpack.c.b16 %v9267, %v9263
        %v9888 = vpack.c.b16 %v9272, %v9268
        %v9889 = vpack.c.b16 %v9273, %v9269
        %v9890 = vpack.c.b16 %v9274, %v9270
        %v9891 = vpack.c.b16 %v9275, %v9271
        %v9892 = vpack.c.b16 %v9280, %v9276
        %v9893 = vpack.c.b16 %v9281, %v9277
        %v9894 = vpack.c.b16 %v9282, %v9278
        %v9895 = vpack.c.b16 %v9283, %v9279
        %v9896 = vpack.c.b16 %v9288, %v9284
        %v9897 = vpack.c.b16 %v9289, %v9285
        %v9898 = vpack.c.b16 %v9290, %v9286
        %v9899 = vpack.c.b16 %v9291, %v9287
        %v9900 = vpack.c.b16 %v9296, %v9292
        %v9901 = vpack.c.b16 %v9297, %v9293
        %v9902 = vpack.c.b16 %v9298, %v9294
        %v9903 = vpack.c.b16 %v9299, %v9295
        %v9904 = vpack.c.b16 %v9304, %v9300
        %v9905 = vpack.c.b16 %v9305, %v9301
        %v9906 = vpack.c.b16 %v9306, %v9302
        %v9907 = vpack.c.b16 %v9307, %v9303
        %v9908 = vpack.c.b16 %v9312, %v9308
        %v9909 = vpack.c.b16 %v9313, %v9309
        %v9910 = vpack.c.b16 %v9314, %v9310
        %v9911 = vpack.c.b16 %v9315, %v9311
        %v9912 = vpack.c.b16 %v9320, %v9316
        %v9913 = vpack.c.b16 %v9321, %v9317
        %v9914 = vpack.c.b16 %v9322, %v9318
        %v9915 = vpack.c.b16 %v9323, %v9319
        %v9916 = vpack.c.b16 %v9328, %v9324
        %v9917 = vpack.c.b16 %v9329, %v9325
        %v9918 = vpack.c.b16 %v9330, %v9326
        %v9919 = vpack.c.b16 %v9331, %v9327
        %v9920 = vpack.c.b16 %v9336, %v9332
        %v9921 = vpack.c.b16 %v9337, %v9333
        %v9922 = vpack.c.b16 %v9338, %v9334
        %v9923 = vpack.c.b16 %v9339, %v9335
        %v9924 = vpack.c.b16 %v9344, %v9340
        %v9925 = vpack.c.b16 %v9345, %v9341
        %v9926 = vpack.c.b16 %v9346, %v9342
        %v9927 = vpack.c.b16 %v9347, %v9343
        %v9928 = vpack.c.b16 %v9352, %v9348
        %v9929 = vpack.c.b16 %v9353, %v9349
        %v9930 = vpack.c.b16 %v9354, %v9350
        %v9931 = vpack.c.b16 %v9355, %v9351
        %v9932 = vpack.c.b16 %v9360, %v9356
        %v9933 = vpack.c.b16 %v9361, %v9357
        %v9934 = vpack.c.b16 %v9362, %v9358
        %v9935 = vpack.c.b16 %v9363, %v9359
        %v9936 = vpack.c.b16 %v9368, %v9364
        %v9937 = vpack.c.b16 %v9369, %v9365
        %v9938 = vpack.c.b16 %v9370, %v9366
        %v9939 = vpack.c.b16 %v9371, %v9367
        %v9940 = vpack.c.b16 %v9376, %v9372
        %v9941 = vpack.c.b16 %v9377, %v9373
        %v9942 = vpack.c.b16 %v9378, %v9374
        %v9943 = vpack.c.b16 %v9379, %v9375
        %v9944 = vpack.c.b16 %v9384, %v9380
        %v9945 = vpack.c.b16 %v9385, %v9381
        %v9946 = vpack.c.b16 %v9386, %v9382
        %v9947 = vpack.c.b16 %v9387, %v9383
        %v9948 = vpack.c.b16 %v9392, %v9388
        %v9949 = vpack.c.b16 %v9393, %v9389
        %v9950 = vpack.c.b16 %v9394, %v9390
        %v9951 = vpack.c.b16 %v9395, %v9391
        %v9952 = vpack.c.b16 %v9400, %v9396
        %v9953 = vpack.c.b16 %v9401, %v9397
        %v9954 = vpack.c.b16 %v9402, %v9398
        %v9955 = vpack.c.b16 %v9403, %v9399
        %v9956 = vpack.c.b16 %v9408, %v9404
        %v9957 = vpack.c.b16 %v9409, %v9405
        %v9958 = vpack.c.b16 %v9410, %v9406
        %v9959 = vpack.c.b16 %v9411, %v9407
        %v9960 = vpack.c.b16 %v9416, %v9412
        %v9961 = vpack.c.b16 %v9417, %v9413
        %v9962 = vpack.c.b16 %v9418, %v9414
        %v9963 = vpack.c.b16 %v9419, %v9415
        %v9964 = vpack.c.b16 %v9424, %v9420
        %v9965 = vpack.c.b16 %v9425, %v9421
        %v9966 = vpack.c.b16 %v9426, %v9422
        %v9967 = vpack.c.b16 %v9427, %v9423
        %v9968 = vpack.c.b16 %v9432, %v9428
        %v9969 = vpack.c.b16 %v9433, %v9429
        %v9970 = vpack.c.b16 %v9434, %v9430
        %v9971 = vpack.c.b16 %v9435, %v9431
        %v9972 = vpack.c.b16 %v9440, %v9436
        %v9973 = vpack.c.b16 %v9441, %v9437
        %v9974 = vpack.c.b16 %v9442, %v9438
        %v9975 = vpack.c.b16 %v9443, %v9439
        %v9976 = vpack.c.b16 %v9448, %v9444
        %v9977 = vpack.c.b16 %v9449, %v9445
        %v9978 = vpack.c.b16 %v9450, %v9446
        %v9979 = vpack.c.b16 %v9451, %v9447
        %v9980 = vpack.c.b16 %v9456, %v9452
        %v9981 = vpack.c.b16 %v9457, %v9453
        %v9982 = vpack.c.b16 %v9458, %v9454
        %v9983 = vpack.c.b16 %v9459, %v9455
        %v9984 = vpack.c.b16 %v9464, %v9460
        %v9985 = vpack.c.b16 %v9465, %v9461
        %v9986 = vpack.c.b16 %v9466, %v9462
        %v9987 = vpack.c.b16 %v9467, %v9463
        %v9988 = vpack.c.b16 %v9472, %v9468
        %v9989 = vpack.c.b16 %v9473, %v9469
        %v9990 = vpack.c.b16 %v9474, %v9470
        %v9991 = vpack.c.b16 %v9475, %v9471
        %v9992 = vpack.c.b16 %v9480, %v9476
        %v9993 = vpack.c.b16 %v9481, %v9477
        %v9994 = vpack.c.b16 %v9482, %v9478
        %v9995 = vpack.c.b16 %v9483, %v9479
        %10508 = vmatprep.subr.bf16.mxu0 %v9513
        %10509 = vmatpush1.bf16.msra.mxu0 %v9512
        %10510 = vmatprep.subr.bf16.mxu0 %v9509
        %10511 = vmatpush1.bf16.msra.mxu0 %v9508
        %10512 = vmatprep.subr.bf16.mxu0 %v9505
        %10513 = vmatpush1.bf16.msra.mxu0 %v9504
        %10514 = vmatprep.subr.bf16.mxu0 %v9501
        %10515 = vmatpush1.bf16.msra.mxu0 %v9500
        %10516 = vmatprep.subr.bf16.mxu0 %v9497
        %10517 = vmatpush1.bf16.msra.mxu0 %v9496
        %10518 = vmatprep.subr.bf16.mxu0 %v9493
        %10519 = vmatpush1.bf16.msra.mxu0 %v9492
        %10520 = vmatprep.subr.bf16.mxu0 %v9489
        %10521 = vmatpush1.bf16.msra.mxu0 %v9488
        %10522 = vmatprep.subr.bf16.mxu0 %v9485
        %10523 = vmatpush1.bf16.msra.mxu0 %v9484
        %10524 = vmatprep.subr.bf16.mxu0 %v9545
        %10525 = vmatpush2.bf16.msra.mxu0 %v9544
        %10526 = vmatprep.subr.bf16.mxu0 %v9541
        %10527 = vmatpush2.bf16.msra.mxu0 %v9540
        %10528 = vmatprep.subr.bf16.mxu0 %v9537
        %10529 = vmatpush2.bf16.msra.mxu0 %v9536
        %10530 = vmatprep.subr.bf16.mxu0 %v9533
        %10531 = vmatpush2.bf16.msra.mxu0 %v9532
        %10532 = vmatprep.subr.bf16.mxu0 %v9529
        %10533 = vmatpush2.bf16.msra.mxu0 %v9528
        %10534 = vmatprep.subr.bf16.mxu0 %v9525
        %10535 = vmatpush2.bf16.msra.mxu0 %v9524
        %10536 = vmatprep.subr.bf16.mxu0 %v9521
        %10537 = vmatpush2.bf16.msra.mxu0 %v9520
        %10538 = vmatprep.subr.bf16.mxu0 %v9517
        %10539 = vmatpush2.bf16.msra.mxu0 %v9516
        %10540 = vmatprep.mubr.bf16.mxu0 %v7420
        %10541 = vmatmul.mubr.bf16.gmra.mxu0 %v7419
        %v10542 = vpop.f32.mrf.mxu0
        %v10543 = vadd.f32 0.0, %v10542
        %v10544 = vpop.f32.mrf.mxu0
        %v10545 = vadd.f32 0.0, %v10544
        %v10546 = vpop.f32.mrf.mxu0
        %v10547 = vpop.f32.mrf.mxu0
        %10548 = vdwg.mxu0
        %10549 = vmatprep.subr.bf16.mxu0 %v9577
        %10550 = vmatpush1.bf16.msra.mxu0 %v9576
        %10551 = vmatprep.subr.bf16.mxu0 %v9573
        %10552 = vmatpush1.bf16.msra.mxu0 %v9572
        %10553 = vmatprep.subr.bf16.mxu0 %v9569
        %10554 = vmatpush1.bf16.msra.mxu0 %v9568
        %10555 = vmatprep.subr.bf16.mxu0 %v9565
        %10556 = vmatpush1.bf16.msra.mxu0 %v9564
        %10557 = vmatprep.subr.bf16.mxu0 %v9561
        %10558 = vmatpush1.bf16.msra.mxu0 %v9560
        %10559 = vmatprep.subr.bf16.mxu0 %v9557
        %10560 = vmatpush1.bf16.msra.mxu0 %v9556
        %10561 = vmatprep.subr.bf16.mxu0 %v9553
        %10562 = vmatpush1.bf16.msra.mxu0 %v9552
        %10563 = vmatprep.subr.bf16.mxu0 %v9549
        %10564 = vmatpush1.bf16.msra.mxu0 %v9548
        %10565 = vmatprep.subr.bf16.mxu0 %v9609
        %10566 = vmatpush2.bf16.msra.mxu0 %v9608
        %10567 = vmatprep.subr.bf16.mxu0 %v9605
        %10568 = vmatpush2.bf16.msra.mxu0 %v9604
        %10569 = vmatprep.subr.bf16.mxu0 %v9601
        %10570 = vmatpush2.bf16.msra.mxu0 %v9600
        %10571 = vmatprep.subr.bf16.mxu0 %v9597
        %10572 = vmatpush2.bf16.msra.mxu0 %v9596
        %10573 = vmatprep.subr.bf16.mxu0 %v9593
        %10574 = vmatpush2.bf16.msra.mxu0 %v9592
        %10575 = vmatprep.subr.bf16.mxu0 %v9589
        %10576 = vmatpush2.bf16.msra.mxu0 %v9588
        %10577 = vmatprep.subr.bf16.mxu0 %v9585
        %10578 = vmatpush2.bf16.msra.mxu0 %v9584
        %10579 = vmatprep.subr.bf16.mxu0 %v9581
        %10580 = vmatpush2.bf16.msra.mxu0 %v9580
        %10581 = vmatprep.mubr.bf16.mxu0 %v7422
        %10582 = vmatmul.mubr.bf16.gmra.mxu0 %v7421
        %v10583 = vpop.f32.mrf.mxu0
        %v10584 = vadd.f32 %v10543, %v10583
        %v10585 = vpop.f32.mrf.mxu0
        %v10586 = vadd.f32 %v10545, %v10585
        %v10587 = vpop.f32.mrf.mxu0
        %v10588 = vpop.f32.mrf.mxu0
        %10589 = vdwg.mxu0
        %10590 = vmatprep.subr.bf16.mxu0 %v9641
        %10591 = vmatpush1.bf16.msra.mxu0 %v9640
        %10592 = vmatprep.subr.bf16.mxu0 %v9637
        %10593 = vmatpush1.bf16.msra.mxu0 %v9636
        %10594 = vmatprep.subr.bf16.mxu0 %v9633
        %10595 = vmatpush1.bf16.msra.mxu0 %v9632
        %10596 = vmatprep.subr.bf16.mxu0 %v9629
        %10597 = vmatpush1.bf16.msra.mxu0 %v9628
        %10598 = vmatprep.subr.bf16.mxu0 %v9625
        %10599 = vmatpush1.bf16.msra.mxu0 %v9624
        %10600 = vmatprep.subr.bf16.mxu0 %v9621
        %10601 = vmatpush1.bf16.msra.mxu0 %v9620
        %10602 = vmatprep.subr.bf16.mxu0 %v9617
        %10603 = vmatpush1.bf16.msra.mxu0 %v9616
        %10604 = vmatprep.subr.bf16.mxu0 %v9613
        %10605 = vmatpush1.bf16.msra.mxu0 %v9612
        %10606 = vmatprep.subr.bf16.mxu0 %v9673
        %10607 = vmatpush2.bf16.msra.mxu0 %v9672
        %10608 = vmatprep.subr.bf16.mxu0 %v9669
        %10609 = vmatpush2.bf16.msra.mxu0 %v9668
        %10610 = vmatprep.subr.bf16.mxu0 %v9665
        %10611 = vmatpush2.bf16.msra.mxu0 %v9664
        %10612 = vmatprep.subr.bf16.mxu0 %v9661
        %10613 = vmatpush2.bf16.msra.mxu0 %v9660
        %10614 = vmatprep.subr.bf16.mxu0 %v9657
        %10615 = vmatpush2.bf16.msra.mxu0 %v9656
        %10616 = vmatprep.subr.bf16.mxu0 %v9653
        %10617 = vmatpush2.bf16.msra.mxu0 %v9652
        %10618 = vmatprep.subr.bf16.mxu0 %v9649
        %10619 = vmatpush2.bf16.msra.mxu0 %v9648
        %10620 = vmatprep.subr.bf16.mxu0 %v9645
        %10621 = vmatpush2.bf16.msra.mxu0 %v9644
        %10622 = vmatprep.mubr.bf16.mxu0 %v7424
        %10623 = vmatmul.mubr.bf16.gmra.mxu0 %v7423
        %v10624 = vpop.f32.mrf.mxu0
        %v10625 = vadd.f32 %v10584, %v10624
        %v10626 = vpop.f32.mrf.mxu0
        %v10627 = vadd.f32 %v10586, %v10626
        %v10628 = vpop.f32.mrf.mxu0
        %v10629 = vpop.f32.mrf.mxu0
        %10630 = vdwg.mxu0
        %10631 = vmatprep.subr.bf16.mxu0 %v9705
        %10632 = vmatpush1.bf16.msra.mxu0 %v9704
        %10633 = vmatprep.subr.bf16.mxu0 %v9701
        %10634 = vmatpush1.bf16.msra.mxu0 %v9700
        %10635 = vmatprep.subr.bf16.mxu0 %v9697
        %10636 = vmatpush1.bf16.msra.mxu0 %v9696
        %10637 = vmatprep.subr.bf16.mxu0 %v9693
        %10638 = vmatpush1.bf16.msra.mxu0 %v9692
        %10639 = vmatprep.subr.bf16.mxu0 %v9689
        %10640 = vmatpush1.bf16.msra.mxu0 %v9688
        %10641 = vmatprep.subr.bf16.mxu0 %v9685
        %10642 = vmatpush1.bf16.msra.mxu0 %v9684
        %10643 = vmatprep.subr.bf16.mxu0 %v9681
        %10644 = vmatpush1.bf16.msra.mxu0 %v9680
        %10645 = vmatprep.subr.bf16.mxu0 %v9677
        %10646 = vmatpush1.bf16.msra.mxu0 %v9676
        %10647 = vmatprep.subr.bf16.mxu0 %v9737
        %10648 = vmatpush2.bf16.msra.mxu0 %v9736
        %10649 = vmatprep.subr.bf16.mxu0 %v9733
        %10650 = vmatpush2.bf16.msra.mxu0 %v9732
        %10651 = vmatprep.subr.bf16.mxu0 %v9729
        %10652 = vmatpush2.bf16.msra.mxu0 %v9728
        %10653 = vmatprep.subr.bf16.mxu0 %v9725
        %10654 = vmatpush2.bf16.msra.mxu0 %v9724
        %10655 = vmatprep.subr.bf16.mxu0 %v9721
        %10656 = vmatpush2.bf16.msra.mxu0 %v9720
        %10657 = vmatprep.subr.bf16.mxu0 %v9717
        %10658 = vmatpush2.bf16.msra.mxu0 %v9716
        %10659 = vmatprep.subr.bf16.mxu0 %v9713
        %10660 = vmatpush2.bf16.msra.mxu0 %v9712
        %10661 = vmatprep.subr.bf16.mxu0 %v9709
        %10662 = vmatpush2.bf16.msra.mxu0 %v9708
        %10663 = vmatprep.mubr.bf16.mxu0 %v7426
        %10664 = vmatmul.mubr.bf16.gmra.mxu0 %v7425
        %v10665 = vpop.f32.mrf.mxu0
        %v10666 = vadd.f32 %v10625, %v10665
        %v10667 = vpop.f32.mrf.mxu0
        %v10668 = vadd.f32 %v10627, %v10667
        %v10669 = vpop.f32.mrf.mxu0
        %v10670 = vpop.f32.mrf.mxu0
        %10671 = vdwg.mxu0
        %10672 = vmatprep.subr.bf16.mxu0 %v9769
        %10673 = vmatpush1.bf16.msra.mxu0 %v9768
        %10674 = vmatprep.subr.bf16.mxu0 %v9765
        %10675 = vmatpush1.bf16.msra.mxu0 %v9764
        %10676 = vmatprep.subr.bf16.mxu0 %v9761
        %10677 = vmatpush1.bf16.msra.mxu0 %v9760
        %10678 = vmatprep.subr.bf16.mxu0 %v9757
        %10679 = vmatpush1.bf16.msra.mxu0 %v9756
        %10680 = vmatprep.subr.bf16.mxu0 %v9753
        %10681 = vmatpush1.bf16.msra.mxu0 %v9752
        %10682 = vmatprep.subr.bf16.mxu0 %v9749
        %10683 = vmatpush1.bf16.msra.mxu0 %v9748
        %10684 = vmatprep.subr.bf16.mxu0 %v9745
        %10685 = vmatpush1.bf16.msra.mxu0 %v9744
        %10686 = vmatprep.subr.bf16.mxu0 %v9741
        %10687 = vmatpush1.bf16.msra.mxu0 %v9740
        %10688 = vmatprep.subr.bf16.mxu0 %v9801
        %10689 = vmatpush2.bf16.msra.mxu0 %v9800
        %10690 = vmatprep.subr.bf16.mxu0 %v9797
        %10691 = vmatpush2.bf16.msra.mxu0 %v9796
        %10692 = vmatprep.subr.bf16.mxu0 %v9793
        %10693 = vmatpush2.bf16.msra.mxu0 %v9792
        %10694 = vmatprep.subr.bf16.mxu0 %v9789
        %10695 = vmatpush2.bf16.msra.mxu0 %v9788
        %10696 = vmatprep.subr.bf16.mxu0 %v9785
        %10697 = vmatpush2.bf16.msra.mxu0 %v9784
        %10698 = vmatprep.subr.bf16.mxu0 %v9781
        %10699 = vmatpush2.bf16.msra.mxu0 %v9780
        %10700 = vmatprep.subr.bf16.mxu0 %v9777
        %10701 = vmatpush2.bf16.msra.mxu0 %v9776
        %10702 = vmatprep.subr.bf16.mxu0 %v9773
        %10703 = vmatpush2.bf16.msra.mxu0 %v9772
        %10704 = vmatprep.mubr.bf16.mxu0 %v7428
        %10705 = vmatmul.mubr.bf16.gmra.mxu0 %v7427
        %v10706 = vpop.f32.mrf.mxu0
        %v10707 = vadd.f32 %v10666, %v10706
        %v10708 = vpop.f32.mrf.mxu0
        %v10709 = vadd.f32 %v10668, %v10708
        %v10710 = vpop.f32.mrf.mxu0
        %v10711 = vpop.f32.mrf.mxu0
        %10712 = vdwg.mxu0
        %10713 = vmatprep.subr.bf16.mxu0 %v9833
        %10714 = vmatpush1.bf16.msra.mxu0 %v9832
        %10715 = vmatprep.subr.bf16.mxu0 %v9829
        %10716 = vmatpush1.bf16.msra.mxu0 %v9828
        %10717 = vmatprep.subr.bf16.mxu0 %v9825
        %10718 = vmatpush1.bf16.msra.mxu0 %v9824
        %10719 = vmatprep.subr.bf16.mxu0 %v9821
        %10720 = vmatpush1.bf16.msra.mxu0 %v9820
        %10721 = vmatprep.subr.bf16.mxu0 %v9817
        %10722 = vmatpush1.bf16.msra.mxu0 %v9816
        %10723 = vmatprep.subr.bf16.mxu0 %v9813
        %10724 = vmatpush1.bf16.msra.mxu0 %v9812
        %10725 = vmatprep.subr.bf16.mxu0 %v9809
        %10726 = vmatpush1.bf16.msra.mxu0 %v9808
        %10727 = vmatprep.subr.bf16.mxu0 %v9805
        %10728 = vmatpush1.bf16.msra.mxu0 %v9804
        %10729 = vmatprep.subr.bf16.mxu0 %v9865
        %10730 = vmatpush2.bf16.msra.mxu0 %v9864
        %10731 = vmatprep.subr.bf16.mxu0 %v9861
        %10732 = vmatpush2.bf16.msra.mxu0 %v9860
        %10733 = vmatprep.subr.bf16.mxu0 %v9857
        %10734 = vmatpush2.bf16.msra.mxu0 %v9856
        %10735 = vmatprep.subr.bf16.mxu0 %v9853
        %10736 = vmatpush2.bf16.msra.mxu0 %v9852
        %10737 = vmatprep.subr.bf16.mxu0 %v9849
        %10738 = vmatpush2.bf16.msra.mxu0 %v9848
        %10739 = vmatprep.subr.bf16.mxu0 %v9845
        %10740 = vmatpush2.bf16.msra.mxu0 %v9844
        %10741 = vmatprep.subr.bf16.mxu0 %v9841
        %10742 = vmatpush2.bf16.msra.mxu0 %v9840
        %10743 = vmatprep.subr.bf16.mxu0 %v9837
        %10744 = vmatpush2.bf16.msra.mxu0 %v9836
        %10745 = vmatprep.mubr.bf16.mxu0 %v7430
        %10746 = vmatmul.mubr.bf16.gmra.mxu0 %v7429
        %v10747 = vpop.f32.mrf.mxu0
        %v10748 = vadd.f32 %v10707, %v10747
        %v10749 = vpop.f32.mrf.mxu0
        %v10750 = vadd.f32 %v10709, %v10749
        %v10751 = vpop.f32.mrf.mxu0
        %v10752 = vpop.f32.mrf.mxu0
        %10753 = vdwg.mxu0
        %10754 = vmatprep.subr.bf16.mxu0 %v9897
        %10755 = vmatpush1.bf16.msra.mxu0 %v9896
        %10756 = vmatprep.subr.bf16.mxu0 %v9893
        %10757 = vmatpush1.bf16.msra.mxu0 %v9892
        %10758 = vmatprep.subr.bf16.mxu0 %v9889
        %10759 = vmatpush1.bf16.msra.mxu0 %v9888
        %10760 = vmatprep.subr.bf16.mxu0 %v9885
        %10761 = vmatpush1.bf16.msra.mxu0 %v9884
        %10762 = vmatprep.subr.bf16.mxu0 %v9881
        %10763 = vmatpush1.bf16.msra.mxu0 %v9880
        %10764 = vmatprep.subr.bf16.mxu0 %v9877
        %10765 = vmatpush1.bf16.msra.mxu0 %v9876
        %10766 = vmatprep.subr.bf16.mxu0 %v9873
        %10767 = vmatpush1.bf16.msra.mxu0 %v9872
        %10768 = vmatprep.subr.bf16.mxu0 %v9869
        %10769 = vmatpush1.bf16.msra.mxu0 %v9868
        %10770 = vmatprep.subr.bf16.mxu0 %v9929
        %10771 = vmatpush2.bf16.msra.mxu0 %v9928
        %10772 = vmatprep.subr.bf16.mxu0 %v9925
        %10773 = vmatpush2.bf16.msra.mxu0 %v9924
        %10774 = vmatprep.subr.bf16.mxu0 %v9921
        %10775 = vmatpush2.bf16.msra.mxu0 %v9920
        %10776 = vmatprep.subr.bf16.mxu0 %v9917
        %10777 = vmatpush2.bf16.msra.mxu0 %v9916
        %10778 = vmatprep.subr.bf16.mxu0 %v9913
        %10779 = vmatpush2.bf16.msra.mxu0 %v9912
        %10780 = vmatprep.subr.bf16.mxu0 %v9909
        %10781 = vmatpush2.bf16.msra.mxu0 %v9908
        %10782 = vmatprep.subr.bf16.mxu0 %v9905
        %10783 = vmatpush2.bf16.msra.mxu0 %v9904
        %10784 = vmatprep.subr.bf16.mxu0 %v9901
        %10785 = vmatpush2.bf16.msra.mxu0 %v9900
        %10786 = vmatprep.mubr.bf16.mxu0 %v7432
        %10787 = vmatmul.mubr.bf16.gmra.mxu0 %v7431
        %v10788 = vpop.f32.mrf.mxu0
        %v10789 = vadd.f32 %v10748, %v10788
        %v10790 = vpop.f32.mrf.mxu0
        %v10791 = vadd.f32 %v10750, %v10790
        %v10792 = vpop.f32.mrf.mxu0
        %v10793 = vpop.f32.mrf.mxu0
        %10794 = vdwg.mxu0
        %10795 = vmatprep.subr.bf16.mxu0 %v9961
        %10796 = vmatpush1.bf16.msra.mxu0 %v9960
        %10797 = vmatprep.subr.bf16.mxu0 %v9957
        %10798 = vmatpush1.bf16.msra.mxu0 %v9956
        %10799 = vmatprep.subr.bf16.mxu0 %v9953
        %10800 = vmatpush1.bf16.msra.mxu0 %v9952
        %10801 = vmatprep.subr.bf16.mxu0 %v9949
        %10802 = vmatpush1.bf16.msra.mxu0 %v9948
        %10803 = vmatprep.subr.bf16.mxu0 %v9945
        %10804 = vmatpush1.bf16.msra.mxu0 %v9944
        %10805 = vmatprep.subr.bf16.mxu0 %v9941
        %10806 = vmatpush1.bf16.msra.mxu0 %v9940
        %10807 = vmatprep.subr.bf16.mxu0 %v9937
        %10808 = vmatpush1.bf16.msra.mxu0 %v9936
        %10809 = vmatprep.subr.bf16.mxu0 %v9933
        %10810 = vmatpush1.bf16.msra.mxu0 %v9932
        %10811 = vmatprep.subr.bf16.mxu0 %v9993
        %10812 = vmatpush2.bf16.msra.mxu0 %v9992
        %10813 = vmatprep.subr.bf16.mxu0 %v9989
        %10814 = vmatpush2.bf16.msra.mxu0 %v9988
        %10815 = vmatprep.subr.bf16.mxu0 %v9985
        %10816 = vmatpush2.bf16.msra.mxu0 %v9984
        %10817 = vmatprep.subr.bf16.mxu0 %v9981
        %10818 = vmatpush2.bf16.msra.mxu0 %v9980
        %10819 = vmatprep.subr.bf16.mxu0 %v9977
        %10820 = vmatpush2.bf16.msra.mxu0 %v9976
        %10821 = vmatprep.subr.bf16.mxu0 %v9973
        %10822 = vmatpush2.bf16.msra.mxu0 %v9972
        %10823 = vmatprep.subr.bf16.mxu0 %v9969
        %10824 = vmatpush2.bf16.msra.mxu0 %v9968
        %10825 = vmatprep.subr.bf16.mxu0 %v9965
        %10826 = vmatpush2.bf16.msra.mxu0 %v9964
        %10827 = vmatprep.mubr.bf16.mxu0 %v7434
        %10828 = vmatmul.mubr.bf16.gmra.mxu0 %v7433
        %v10829 = vpop.f32.mrf.mxu0
        %v10830 = vadd.f32 %v10789, %v10829
        %v10831 = vpop.f32.mrf.mxu0
        %v10832 = vadd.f32 %v10791, %v10831
        %v10833 = vpop.f32.mrf.mxu0
        %v10834 = vpop.f32.mrf.mxu0
        %10835 = vdwg.mxu0
        %10836 = vmatprep.subr.bf16.mxu0 %v9515
        %10837 = vmatpush1.bf16.msra.mxu0 %v9514
        %10838 = vmatprep.subr.bf16.mxu0 %v9511
        %10839 = vmatpush1.bf16.msra.mxu0 %v9510
        %10840 = vmatprep.subr.bf16.mxu0 %v9507
        %10841 = vmatpush1.bf16.msra.mxu0 %v9506
        %10842 = vmatprep.subr.bf16.mxu0 %v9503
        %10843 = vmatpush1.bf16.msra.mxu0 %v9502
        %10844 = vmatprep.subr.bf16.mxu0 %v9499
        %10845 = vmatpush1.bf16.msra.mxu0 %v9498
        %10846 = vmatprep.subr.bf16.mxu0 %v9495
        %10847 = vmatpush1.bf16.msra.mxu0 %v9494
        %10848 = vmatprep.subr.bf16.mxu0 %v9491
        %10849 = vmatpush1.bf16.msra.mxu0 %v9490
        %10850 = vmatprep.subr.bf16.mxu0 %v9487
        %10851 = vmatpush1.bf16.msra.mxu0 %v9486
        %10852 = vmatprep.subr.bf16.mxu0 %v9547
        %10853 = vmatpush2.bf16.msra.mxu0 %v9546
        %10854 = vmatprep.subr.bf16.mxu0 %v9543
        %10855 = vmatpush2.bf16.msra.mxu0 %v9542
        %10856 = vmatprep.subr.bf16.mxu0 %v9539
        %10857 = vmatpush2.bf16.msra.mxu0 %v9538
        %10858 = vmatprep.subr.bf16.mxu0 %v9535
        %10859 = vmatpush2.bf16.msra.mxu0 %v9534
        %10860 = vmatprep.subr.bf16.mxu0 %v9531
        %10861 = vmatpush2.bf16.msra.mxu0 %v9530
        %10862 = vmatprep.subr.bf16.mxu0 %v9527
        %10863 = vmatpush2.bf16.msra.mxu0 %v9526
        %10864 = vmatprep.subr.bf16.mxu0 %v9523
        %10865 = vmatpush2.bf16.msra.mxu0 %v9522
        %10866 = vmatprep.subr.bf16.mxu0 %v9519
        %10867 = vmatpush2.bf16.msra.mxu0 %v9518
        %10868 = vmatprep.mubr.bf16.mxu0 %v7420
        %10869 = vmatmul.mubr.bf16.gmra.mxu0 %v7419
        %v10870 = vpop.f32.mrf.mxu0
        %v10871 = vadd.f32 0.0, %v10870
        %v10872 = vpop.f32.mrf.mxu0
        %v10873 = vadd.f32 0.0, %v10872
        %v10874 = vpop.f32.mrf.mxu0
        %v10875 = vpop.f32.mrf.mxu0
        %10876 = vdwg.mxu0
        %10877 = vmatprep.subr.bf16.mxu0 %v9579
        %10878 = vmatpush1.bf16.msra.mxu0 %v9578
        %10879 = vmatprep.subr.bf16.mxu0 %v9575
        %10880 = vmatpush1.bf16.msra.mxu0 %v9574
        %10881 = vmatprep.subr.bf16.mxu0 %v9571
        %10882 = vmatpush1.bf16.msra.mxu0 %v9570
        %10883 = vmatprep.subr.bf16.mxu0 %v9567
        %10884 = vmatpush1.bf16.msra.mxu0 %v9566
        %10885 = vmatprep.subr.bf16.mxu0 %v9563
        %10886 = vmatpush1.bf16.msra.mxu0 %v9562
        %10887 = vmatprep.subr.bf16.mxu0 %v9559
        %10888 = vmatpush1.bf16.msra.mxu0 %v9558
        %10889 = vmatprep.subr.bf16.mxu0 %v9555
        %10890 = vmatpush1.bf16.msra.mxu0 %v9554
        %10891 = vmatprep.subr.bf16.mxu0 %v9551
        %10892 = vmatpush1.bf16.msra.mxu0 %v9550
        %10893 = vmatprep.subr.bf16.mxu0 %v9611
        %10894 = vmatpush2.bf16.msra.mxu0 %v9610
        %10895 = vmatprep.subr.bf16.mxu0 %v9607
        %10896 = vmatpush2.bf16.msra.mxu0 %v9606
        %10897 = vmatprep.subr.bf16.mxu0 %v9603
        %10898 = vmatpush2.bf16.msra.mxu0 %v9602
        %10899 = vmatprep.subr.bf16.mxu0 %v9599
        %10900 = vmatpush2.bf16.msra.mxu0 %v9598
        %10901 = vmatprep.subr.bf16.mxu0 %v9595
        %10902 = vmatpush2.bf16.msra.mxu0 %v9594
        %10903 = vmatprep.subr.bf16.mxu0 %v9591
        %10904 = vmatpush2.bf16.msra.mxu0 %v9590
        %10905 = vmatprep.subr.bf16.mxu0 %v9587
        %10906 = vmatpush2.bf16.msra.mxu0 %v9586
        %10907 = vmatprep.subr.bf16.mxu0 %v9583
        %10908 = vmatpush2.bf16.msra.mxu0 %v9582
        %10909 = vmatprep.mubr.bf16.mxu0 %v7422
        %10910 = vmatmul.mubr.bf16.gmra.mxu0 %v7421
        %v10911 = vpop.f32.mrf.mxu0
        %v10912 = vadd.f32 %v10871, %v10911
        %v10913 = vpop.f32.mrf.mxu0
        %v10914 = vadd.f32 %v10873, %v10913
        %v10915 = vpop.f32.mrf.mxu0
        %v10916 = vpop.f32.mrf.mxu0
        %10917 = vdwg.mxu0
        %10918 = vmatprep.subr.bf16.mxu0 %v9643
        %10919 = vmatpush1.bf16.msra.mxu0 %v9642
        %10920 = vmatprep.subr.bf16.mxu0 %v9639
        %10921 = vmatpush1.bf16.msra.mxu0 %v9638
        %10922 = vmatprep.subr.bf16.mxu0 %v9635
        %10923 = vmatpush1.bf16.msra.mxu0 %v9634
        %10924 = vmatprep.subr.bf16.mxu0 %v9631
        %10925 = vmatpush1.bf16.msra.mxu0 %v9630
        %10926 = vmatprep.subr.bf16.mxu0 %v9627
        %10927 = vmatpush1.bf16.msra.mxu0 %v9626
        %10928 = vmatprep.subr.bf16.mxu0 %v9623
        %10929 = vmatpush1.bf16.msra.mxu0 %v9622
        %10930 = vmatprep.subr.bf16.mxu0 %v9619
        %10931 = vmatpush1.bf16.msra.mxu0 %v9618
        %10932 = vmatprep.subr.bf16.mxu0 %v9615
        %10933 = vmatpush1.bf16.msra.mxu0 %v9614
        %10934 = vmatprep.subr.bf16.mxu0 %v9675
        %10935 = vmatpush2.bf16.msra.mxu0 %v9674
        %10936 = vmatprep.subr.bf16.mxu0 %v9671
        %10937 = vmatpush2.bf16.msra.mxu0 %v9670
        %10938 = vmatprep.subr.bf16.mxu0 %v9667
        %10939 = vmatpush2.bf16.msra.mxu0 %v9666
        %10940 = vmatprep.subr.bf16.mxu0 %v9663
        %10941 = vmatpush2.bf16.msra.mxu0 %v9662
        %10942 = vmatprep.subr.bf16.mxu0 %v9659
        %10943 = vmatpush2.bf16.msra.mxu0 %v9658
        %10944 = vmatprep.subr.bf16.mxu0 %v9655
        %10945 = vmatpush2.bf16.msra.mxu0 %v9654
        %10946 = vmatprep.subr.bf16.mxu0 %v9651
        %10947 = vmatpush2.bf16.msra.mxu0 %v9650
        %10948 = vmatprep.subr.bf16.mxu0 %v9647
        %10949 = vmatpush2.bf16.msra.mxu0 %v9646
        %10950 = vmatprep.mubr.bf16.mxu0 %v7424
        %10951 = vmatmul.mubr.bf16.gmra.mxu0 %v7423
        %v10952 = vpop.f32.mrf.mxu0
        %v10953 = vadd.f32 %v10912, %v10952
        %v10954 = vpop.f32.mrf.mxu0
        %v10955 = vadd.f32 %v10914, %v10954
        %v10956 = vpop.f32.mrf.mxu0
        %v10957 = vpop.f32.mrf.mxu0
        %10958 = vdwg.mxu0
        %10959 = vmatprep.subr.bf16.mxu0 %v9707
        %10960 = vmatpush1.bf16.msra.mxu0 %v9706
        %10961 = vmatprep.subr.bf16.mxu0 %v9703
        %10962 = vmatpush1.bf16.msra.mxu0 %v9702
        %10963 = vmatprep.subr.bf16.mxu0 %v9699
        %10964 = vmatpush1.bf16.msra.mxu0 %v9698
        %10965 = vmatprep.subr.bf16.mxu0 %v9695
        %10966 = vmatpush1.bf16.msra.mxu0 %v9694
        %10967 = vmatprep.subr.bf16.mxu0 %v9691
        %10968 = vmatpush1.bf16.msra.mxu0 %v9690
        %10969 = vmatprep.subr.bf16.mxu0 %v9687
        %10970 = vmatpush1.bf16.msra.mxu0 %v9686
        %10971 = vmatprep.subr.bf16.mxu0 %v9683
        %10972 = vmatpush1.bf16.msra.mxu0 %v9682
        %10973 = vmatprep.subr.bf16.mxu0 %v9679
        %10974 = vmatpush1.bf16.msra.mxu0 %v9678
        %10975 = vmatprep.subr.bf16.mxu0 %v9739
        %10976 = vmatpush2.bf16.msra.mxu0 %v9738
        %10977 = vmatprep.subr.bf16.mxu0 %v9735
        %10978 = vmatpush2.bf16.msra.mxu0 %v9734
        %10979 = vmatprep.subr.bf16.mxu0 %v9731
        %10980 = vmatpush2.bf16.msra.mxu0 %v9730
        %10981 = vmatprep.subr.bf16.mxu0 %v9727
        %10982 = vmatpush2.bf16.msra.mxu0 %v9726
        %10983 = vmatprep.subr.bf16.mxu0 %v9723
        %10984 = vmatpush2.bf16.msra.mxu0 %v9722
        %10985 = vmatprep.subr.bf16.mxu0 %v9719
        %10986 = vmatpush2.bf16.msra.mxu0 %v9718
        %10987 = vmatprep.subr.bf16.mxu0 %v9715
        %10988 = vmatpush2.bf16.msra.mxu0 %v9714
        %10989 = vmatprep.subr.bf16.mxu0 %v9711
        %10990 = vmatpush2.bf16.msra.mxu0 %v9710
        %10991 = vmatprep.mubr.bf16.mxu0 %v7426
        %10992 = vmatmul.mubr.bf16.gmra.mxu0 %v7425
        %v10993 = vpop.f32.mrf.mxu0
        %v10994 = vadd.f32 %v10953, %v10993
        %v10995 = vpop.f32.mrf.mxu0
        %v10996 = vadd.f32 %v10955, %v10995
        %v10997 = vpop.f32.mrf.mxu0
        %v10998 = vpop.f32.mrf.mxu0
        %10999 = vdwg.mxu0
        %11000 = vmatprep.subr.bf16.mxu0 %v9771
        %11001 = vmatpush1.bf16.msra.mxu0 %v9770
        %11002 = vmatprep.subr.bf16.mxu0 %v9767
        %11003 = vmatpush1.bf16.msra.mxu0 %v9766
        %11004 = vmatprep.subr.bf16.mxu0 %v9763
        %11005 = vmatpush1.bf16.msra.mxu0 %v9762
        %11006 = vmatprep.subr.bf16.mxu0 %v9759
        %11007 = vmatpush1.bf16.msra.mxu0 %v9758
        %11008 = vmatprep.subr.bf16.mxu0 %v9755
        %11009 = vmatpush1.bf16.msra.mxu0 %v9754
        %11010 = vmatprep.subr.bf16.mxu0 %v9751
        %11011 = vmatpush1.bf16.msra.mxu0 %v9750
        %11012 = vmatprep.subr.bf16.mxu0 %v9747
        %11013 = vmatpush1.bf16.msra.mxu0 %v9746
        %11014 = vmatprep.subr.bf16.mxu0 %v9743
        %11015 = vmatpush1.bf16.msra.mxu0 %v9742
        %11016 = vmatprep.subr.bf16.mxu0 %v9803
        %11017 = vmatpush2.bf16.msra.mxu0 %v9802
        %11018 = vmatprep.subr.bf16.mxu0 %v9799
        %11019 = vmatpush2.bf16.msra.mxu0 %v9798
        %11020 = vmatprep.subr.bf16.mxu0 %v9795
        %11021 = vmatpush2.bf16.msra.mxu0 %v9794
        %11022 = vmatprep.subr.bf16.mxu0 %v9791
        %11023 = vmatpush2.bf16.msra.mxu0 %v9790
        %11024 = vmatprep.subr.bf16.mxu0 %v9787
        %11025 = vmatpush2.bf16.msra.mxu0 %v9786
        %11026 = vmatprep.subr.bf16.mxu0 %v9783
        %11027 = vmatpush2.bf16.msra.mxu0 %v9782
        %11028 = vmatprep.subr.bf16.mxu0 %v9779
        %11029 = vmatpush2.bf16.msra.mxu0 %v9778
        %11030 = vmatprep.subr.bf16.mxu0 %v9775
        %11031 = vmatpush2.bf16.msra.mxu0 %v9774
        %11032 = vmatprep.mubr.bf16.mxu0 %v7428
        %11033 = vmatmul.mubr.bf16.gmra.mxu0 %v7427
        %v11034 = vpop.f32.mrf.mxu0
        %v11035 = vadd.f32 %v10994, %v11034
        %v11036 = vpop.f32.mrf.mxu0
        %v11037 = vadd.f32 %v10996, %v11036
        %v11038 = vpop.f32.mrf.mxu0
        %v11039 = vpop.f32.mrf.mxu0
        %11040 = vdwg.mxu0
        %11041 = vmatprep.subr.bf16.mxu0 %v9835
        %11042 = vmatpush1.bf16.msra.mxu0 %v9834
        %11043 = vmatprep.subr.bf16.mxu0 %v9831
        %11044 = vmatpush1.bf16.msra.mxu0 %v9830
        %11045 = vmatprep.subr.bf16.mxu0 %v9827
        %11046 = vmatpush1.bf16.msra.mxu0 %v9826
        %11047 = vmatprep.subr.bf16.mxu0 %v9823
        %11048 = vmatpush1.bf16.msra.mxu0 %v9822
        %11049 = vmatprep.subr.bf16.mxu0 %v9819
        %11050 = vmatpush1.bf16.msra.mxu0 %v9818
        %11051 = vmatprep.subr.bf16.mxu0 %v9815
        %11052 = vmatpush1.bf16.msra.mxu0 %v9814
        %11053 = vmatprep.subr.bf16.mxu0 %v9811
        %11054 = vmatpush1.bf16.msra.mxu0 %v9810
        %11055 = vmatprep.subr.bf16.mxu0 %v9807
        %11056 = vmatpush1.bf16.msra.mxu0 %v9806
        %11057 = vmatprep.subr.bf16.mxu0 %v9867
        %11058 = vmatpush2.bf16.msra.mxu0 %v9866
        %11059 = vmatprep.subr.bf16.mxu0 %v9863
        %11060 = vmatpush2.bf16.msra.mxu0 %v9862
        %11061 = vmatprep.subr.bf16.mxu0 %v9859
        %11062 = vmatpush2.bf16.msra.mxu0 %v9858
        %11063 = vmatprep.subr.bf16.mxu0 %v9855
        %11064 = vmatpush2.bf16.msra.mxu0 %v9854
        %11065 = vmatprep.subr.bf16.mxu0 %v9851
        %11066 = vmatpush2.bf16.msra.mxu0 %v9850
        %11067 = vmatprep.subr.bf16.mxu0 %v9847
        %11068 = vmatpush2.bf16.msra.mxu0 %v9846
        %11069 = vmatprep.subr.bf16.mxu0 %v9843
        %11070 = vmatpush2.bf16.msra.mxu0 %v9842
        %11071 = vmatprep.subr.bf16.mxu0 %v9839
        %11072 = vmatpush2.bf16.msra.mxu0 %v9838
        %11073 = vmatprep.mubr.bf16.mxu0 %v7430
        %11074 = vmatmul.mubr.bf16.gmra.mxu0 %v7429
        %v11075 = vpop.f32.mrf.mxu0
        %v11076 = vadd.f32 %v11035, %v11075
        %v11077 = vpop.f32.mrf.mxu0
        %v11078 = vadd.f32 %v11037, %v11077
        %v11079 = vpop.f32.mrf.mxu0
        %v11080 = vpop.f32.mrf.mxu0
        %11081 = vdwg.mxu0
        %11082 = vmatprep.subr.bf16.mxu0 %v9899
        %11083 = vmatpush1.bf16.msra.mxu0 %v9898
        %11084 = vmatprep.subr.bf16.mxu0 %v9895
        %11085 = vmatpush1.bf16.msra.mxu0 %v9894
        %11086 = vmatprep.subr.bf16.mxu0 %v9891
        %11087 = vmatpush1.bf16.msra.mxu0 %v9890
        %11088 = vmatprep.subr.bf16.mxu0 %v9887
        %11089 = vmatpush1.bf16.msra.mxu0 %v9886
        %11090 = vmatprep.subr.bf16.mxu0 %v9883
        %11091 = vmatpush1.bf16.msra.mxu0 %v9882
        %11092 = vmatprep.subr.bf16.mxu0 %v9879
        %11093 = vmatpush1.bf16.msra.mxu0 %v9878
        %11094 = vmatprep.subr.bf16.mxu0 %v9875
        %11095 = vmatpush1.bf16.msra.mxu0 %v9874
        %11096 = vmatprep.subr.bf16.mxu0 %v9871
        %11097 = vmatpush1.bf16.msra.mxu0 %v9870
        %11098 = vmatprep.subr.bf16.mxu0 %v9931
        %11099 = vmatpush2.bf16.msra.mxu0 %v9930
        %11100 = vmatprep.subr.bf16.mxu0 %v9927
        %11101 = vmatpush2.bf16.msra.mxu0 %v9926
        %11102 = vmatprep.subr.bf16.mxu0 %v9923
        %11103 = vmatpush2.bf16.msra.mxu0 %v9922
        %11104 = vmatprep.subr.bf16.mxu0 %v9919
        %11105 = vmatpush2.bf16.msra.mxu0 %v9918
        %11106 = vmatprep.subr.bf16.mxu0 %v9915
        %11107 = vmatpush2.bf16.msra.mxu0 %v9914
        %11108 = vmatprep.subr.bf16.mxu0 %v9911
        %11109 = vmatpush2.bf16.msra.mxu0 %v9910
        %11110 = vmatprep.subr.bf16.mxu0 %v9907
        %11111 = vmatpush2.bf16.msra.mxu0 %v9906
        %11112 = vmatprep.subr.bf16.mxu0 %v9903
        %11113 = vmatpush2.bf16.msra.mxu0 %v9902
        %11114 = vmatprep.mubr.bf16.mxu0 %v7432
        %11115 = vmatmul.mubr.bf16.gmra.mxu0 %v7431
        %v11116 = vpop.f32.mrf.mxu0
        %v11117 = vadd.f32 %v11076, %v11116
        %v11118 = vpop.f32.mrf.mxu0
        %v11119 = vadd.f32 %v11078, %v11118
        %v11120 = vpop.f32.mrf.mxu0
        %v11121 = vpop.f32.mrf.mxu0
        %11122 = vdwg.mxu0
        %11123 = vmatprep.subr.bf16.mxu0 %v9963
        %11124 = vmatpush1.bf16.msra.mxu0 %v9962
        %11125 = vmatprep.subr.bf16.mxu0 %v9959
        %11126 = vmatpush1.bf16.msra.mxu0 %v9958
        %11127 = vmatprep.subr.bf16.mxu0 %v9955
        %11128 = vmatpush1.bf16.msra.mxu0 %v9954
        %11129 = vmatprep.subr.bf16.mxu0 %v9951
        %11130 = vmatpush1.bf16.msra.mxu0 %v9950
        %11131 = vmatprep.subr.bf16.mxu0 %v9947
        %11132 = vmatpush1.bf16.msra.mxu0 %v9946
        %11133 = vmatprep.subr.bf16.mxu0 %v9943
        %11134 = vmatpush1.bf16.msra.mxu0 %v9942
        %11135 = vmatprep.subr.bf16.mxu0 %v9939
        %11136 = vmatpush1.bf16.msra.mxu0 %v9938
        %11137 = vmatprep.subr.bf16.mxu0 %v9935
        %11138 = vmatpush1.bf16.msra.mxu0 %v9934
        %11139 = vmatprep.subr.bf16.mxu0 %v9995
        %11140 = vmatpush2.bf16.msra.mxu0 %v9994
        %11141 = vmatprep.subr.bf16.mxu0 %v9991
        %11142 = vmatpush2.bf16.msra.mxu0 %v9990
        %11143 = vmatprep.subr.bf16.mxu0 %v9987
        %11144 = vmatpush2.bf16.msra.mxu0 %v9986
        %11145 = vmatprep.subr.bf16.mxu0 %v9983
        %11146 = vmatpush2.bf16.msra.mxu0 %v9982
        %11147 = vmatprep.subr.bf16.mxu0 %v9979
        %11148 = vmatpush2.bf16.msra.mxu0 %v9978
        %11149 = vmatprep.subr.bf16.mxu0 %v9975
        %11150 = vmatpush2.bf16.msra.mxu0 %v9974
        %11151 = vmatprep.subr.bf16.mxu0 %v9971
        %11152 = vmatpush2.bf16.msra.mxu0 %v9970
        %11153 = vmatprep.subr.bf16.mxu0 %v9967
        %11154 = vmatpush2.bf16.msra.mxu0 %v9966
        %11155 = vmatprep.mubr.bf16.mxu0 %v7434
        %11156 = vmatmul.mubr.bf16.gmra.mxu0 %v7433
        %v11157 = vpop.f32.mrf.mxu0
        %v11158 = vadd.f32 %v11117, %v11157
        %v11159 = vpop.f32.mrf.mxu0
        %v11160 = vadd.f32 %v11119, %v11159
        %v11161 = vpop.f32.mrf.mxu0
        %v11162 = vpop.f32.mrf.mxu0
        %11163 = vdwg.mxu0
        %v11168 = vcombine.low %v10830, %v10832
        %v11169 = vcombine.low %v11158, %v11160
        %v11171 = vunpack.c.l.s4 1983009808
        %v11172 = vunpack.c.0.s8 %v11171
        %v11173 = vlaneseq
        %v11174 = vshrl.u32 %v11173, 7
        %v11175 = vsub.s32 %v11172, %v11174
        %v11176 = vrot.slane %v11168, %v11175
        %v11178 = vunpack.c.l.s4 1983009808
        %v11179 = vunpack.c.0.s8 %v11178
        %v11180 = vlaneseq
        %v11181 = vshrl.u32 %v11180, 7
        %v11182 = vsub.s32 %v11179, %v11181
        %v11183 = vrot.slane %v11169, %v11182
        %v11184 = vcombine.low %v11176, %v11183
        %v11186 = vadd.f32 %v7435, %v11184
        %11187 = vst [vmem:[#allocation4] sm:$0xff] %v11186
        %p11188 = scmp.eq.s32.totalorder %s34, 1
        // Predicated region
        $region149: #{tpu_custom_call.1} parent=83 // pred_check
          %p11189 = pneg %p11188
        $region150: #{tpu_custom_call.1} parent=83 // pred_check_branch
          %11191 = sbr.rel (%p11189) target = $region152
        $region151: #{tpu_custom_call.1} parent=83 // pred_region
          %v11192 = vld [vmem:[#allocation4] sm:$0xff]
          %v11193 = vld [vmem:[#allocation21] sm:$0xf]
          %v11195 = vlaneseq
          %v11196 = vshrl.u32 %v11195, 7
          %v11197 = vsub.s32 0, %v11196
          %v11198 = vrot.slane %v11193, %v11197
          %v11199 = vlaneseq
          %v11200 = vshrl.u32 %v11199, 7
          %v11201 = vsub.s32 1, %v11200
          %v11202 = vrot.slane %v11193, %v11201
          %v11203 = vlaneseq
          %v11204 = vshrl.u32 %v11203, 7
          %v11205 = vsub.s32 2, %v11204
          %v11206 = vrot.slane %v11193, %v11205
          %v11207 = vlaneseq
          %v11208 = vshrl.u32 %v11207, 7
          %v11209 = vsub.s32 3, %v11208
          %v11210 = vrot.slane %v11193, %v11209
          %v11211 = vcombine.low %v11198, %v11202
          %v11212 = vcombine.low %v11206, %v11210
          %v11214 = vunpack.c.l.s4 1983009808
          %v11215 = vunpack.c.0.s8 %v11214
          %v11216 = vlaneseq
          %v11217 = vshrl.u32 %v11216, 7
          %v11218 = vsub.s32 %v11215, %v11217
          %v11219 = vrot.slane %v11211, %v11218
          %v11221 = vunpack.c.l.s4 1983009808
          %v11222 = vunpack.c.0.s8 %v11221
          %v11223 = vlaneseq
          %v11224 = vshrl.u32 %v11223, 7
          %v11225 = vsub.s32 %v11222, %v11224
          %v11226 = vrot.slane %v11212, %v11225
          %v11227 = vcombine.low %v11219, %v11226
          %v11229 = vadd.f32 %v11192, %v11227
          %v11230 = vmax.f32 %v11229, 0.0
          %v11232 = vcombine.high %v11230, %v11230
          %v11234 = vunpack.c.l.s4 1983009808
          %v11235 = vunpack.c.0.s8 %v11234
          %v11236 = vlaneseq
          %v11237 = vshrl.u32 %v11236, 7
          %v11238 = vsub.s32 %v11235, %v11237
          %v11239 = vrot.slane %v11230, %v11238
          %v11241 = vunpack.c.l.s4 1983009808
          %v11242 = vunpack.c.0.s8 %v11241
          %v11243 = vlaneseq
          %v11244 = vshrl.u32 %v11243, 7
          %v11245 = vsub.s32 %v11242, %v11244
          %v11246 = vrot.slane %v11232, %v11245
          %v11247 = vcombine.high %v11239, %v11239
          %v11248 = vcombine.high %v11246, %v11246
          %v11253 = vpack.c.bf16 %v11239, %v11239
          %v11254 = vpack.c.bf16 %v11247, %v11247
          %v11255 = vpack.c.bf16 %v11246, %v11246
          %v11256 = vpack.c.bf16 %v11248, %v11248
          %v11257 = vld [vmem:[#allocation22] sm:$0xff]
          %v11258 = vld [vmem:[#allocation22 + $0x8] sm:$0xff]
          %v11259 = vld [vmem:[#allocation22 + $0x10] sm:$0xff]
          %v11260 = vld [vmem:[#allocation22 + $0x18] sm:$0xff]
          %v11261 = vld [vmem:[#allocation22 + $0x20] sm:$0xff]
          %v11262 = vld [vmem:[#allocation22 + $0x28] sm:$0xff]
          %v11263 = vld [vmem:[#allocation22 + $0x30] sm:$0xff]
          %v11264 = vld [vmem:[#allocation22 + $0x38] sm:$0xff]
          %v11265 = vld [vmem:[#allocation22 + $0x40] sm:$0xff]
          %v11266 = vld [vmem:[#allocation22 + $0x48] sm:$0xff]
          %v11267 = vld [vmem:[#allocation22 + $0x50] sm:$0xff]
          %v11268 = vld [vmem:[#allocation22 + $0x58] sm:$0xff]
          %v11269 = vld [vmem:[#allocation22 + $0x60] sm:$0xff]
          %v11270 = vld [vmem:[#allocation22 + $0x68] sm:$0xff]
          %v11271 = vld [vmem:[#allocation22 + $0x70] sm:$0xff]
          %v11272 = vld [vmem:[#allocation22 + $0x78] sm:$0xff]
          %v11273 = vld [vmem:[#allocation22 + $0x80] sm:$0xff]
          %v11274 = vld [vmem:[#allocation22 + $0x88] sm:$0xff]
          %v11275 = vld [vmem:[#allocation22 + $0x90] sm:$0xff]
          %v11276 = vld [vmem:[#allocation22 + $0x98] sm:$0xff]
          %v11277 = vld [vmem:[#allocation22 + $0xa0] sm:$0xff]
          %v11278 = vld [vmem:[#allocation22 + $0xa8] sm:$0xff]
          %v11279 = vld [vmem:[#allocation22 + $0xb0] sm:$0xff]
          %v11280 = vld [vmem:[#allocation22 + $0xb8] sm:$0xff]
          %v11281 = vld [vmem:[#allocation22 + $0xc0] sm:$0xff]
          %v11282 = vld [vmem:[#allocation22 + $0xc8] sm:$0xff]
          %v11283 = vld [vmem:[#allocation22 + $0xd0] sm:$0xff]
          %v11284 = vld [vmem:[#allocation22 + $0xd8] sm:$0xff]
          %v11285 = vld [vmem:[#allocation22 + $0xe0] sm:$0xff]
          %v11286 = vld [vmem:[#allocation22 + $0xe8] sm:$0xff]
          %v11287 = vld [vmem:[#allocation22 + $0xf0] sm:$0xff]
          %v11288 = vld [vmem:[#allocation22 + $0xf8] sm:$0xff]
          %v11289 = vld [vmem:[#allocation22 + $0x100] sm:$0xff]
          %v11290 = vld [vmem:[#allocation22 + $0x108] sm:$0xff]
          %v11291 = vld [vmem:[#allocation22 + $0x110] sm:$0xff]
          %v11292 = vld [vmem:[#allocation22 + $0x118] sm:$0xff]
          %v11293 = vld [vmem:[#allocation22 + $0x120] sm:$0xff]
          %v11294 = vld [vmem:[#allocation22 + $0x128] sm:$0xff]
          %v11295 = vld [vmem:[#allocation22 + $0x130] sm:$0xff]
          %v11296 = vld [vmem:[#allocation22 + $0x138] sm:$0xff]
          %v11297 = vld [vmem:[#allocation22 + $0x140] sm:$0xff]
          %v11298 = vld [vmem:[#allocation22 + $0x148] sm:$0xff]
          %v11299 = vld [vmem:[#allocation22 + $0x150] sm:$0xff]
          %v11300 = vld [vmem:[#allocation22 + $0x158] sm:$0xff]
          %v11301 = vld [vmem:[#allocation22 + $0x160] sm:$0xff]
          %v11302 = vld [vmem:[#allocation22 + $0x168] sm:$0xff]
          %v11303 = vld [vmem:[#allocation22 + $0x170] sm:$0xff]
          %v11304 = vld [vmem:[#allocation22 + $0x178] sm:$0xff]
          %v11305 = vld [vmem:[#allocation22 + $0x180] sm:$0xff]
          %v11306 = vld [vmem:[#allocation22 + $0x188] sm:$0xff]
          %v11307 = vld [vmem:[#allocation22 + $0x190] sm:$0xff]
          %v11308 = vld [vmem:[#allocation22 + $0x198] sm:$0xff]
          %v11309 = vld [vmem:[#allocation22 + $0x1a0] sm:$0xff]
          %v11310 = vld [vmem:[#allocation22 + $0x1a8] sm:$0xff]
          %v11311 = vld [vmem:[#allocation22 + $0x1b0] sm:$0xff]
          %v11312 = vld [vmem:[#allocation22 + $0x1b8] sm:$0xff]
          %v11313 = vld [vmem:[#allocation22 + $0x1c0] sm:$0xff]
          %v11314 = vld [vmem:[#allocation22 + $0x1c8] sm:$0xff]
          %v11315 = vld [vmem:[#allocation22 + $0x1d0] sm:$0xff]
          %v11316 = vld [vmem:[#allocation22 + $0x1d8] sm:$0xff]
          %v11317 = vld [vmem:[#allocation22 + $0x1e0] sm:$0xff]
          %v11318 = vld [vmem:[#allocation22 + $0x1e8] sm:$0xff]
          %v11319 = vld [vmem:[#allocation22 + $0x1f0] sm:$0xff]
          %v11320 = vld [vmem:[#allocation22 + $0x1f8] sm:$0xff]
          %v11321 = vld [vmem:[#allocation22 + $0x200] sm:$0xff]
          %v11322 = vld [vmem:[#allocation22 + $0x208] sm:$0xff]
          %v11323 = vld [vmem:[#allocation22 + $0x210] sm:$0xff]
          %v11324 = vld [vmem:[#allocation22 + $0x218] sm:$0xff]
          %v11325 = vld [vmem:[#allocation22 + $0x220] sm:$0xff]
          %v11326 = vld [vmem:[#allocation22 + $0x228] sm:$0xff]
          %v11327 = vld [vmem:[#allocation22 + $0x230] sm:$0xff]
          %v11328 = vld [vmem:[#allocation22 + $0x238] sm:$0xff]
          %v11329 = vld [vmem:[#allocation22 + $0x240] sm:$0xff]
          %v11330 = vld [vmem:[#allocation22 + $0x248] sm:$0xff]
          %v11331 = vld [vmem:[#allocation22 + $0x250] sm:$0xff]
          %v11332 = vld [vmem:[#allocation22 + $0x258] sm:$0xff]
          %v11333 = vld [vmem:[#allocation22 + $0x260] sm:$0xff]
          %v11334 = vld [vmem:[#allocation22 + $0x268] sm:$0xff]
          %v11335 = vld [vmem:[#allocation22 + $0x270] sm:$0xff]
          %v11336 = vld [vmem:[#allocation22 + $0x278] sm:$0xff]
          %v11337 = vld [vmem:[#allocation22 + $0x280] sm:$0xff]
          %v11338 = vld [vmem:[#allocation22 + $0x288] sm:$0xff]
          %v11339 = vld [vmem:[#allocation22 + $0x290] sm:$0xff]
          %v11340 = vld [vmem:[#allocation22 + $0x298] sm:$0xff]
          %v11341 = vld [vmem:[#allocation22 + $0x2a0] sm:$0xff]
          %v11342 = vld [vmem:[#allocation22 + $0x2a8] sm:$0xff]
          %v11343 = vld [vmem:[#allocation22 + $0x2b0] sm:$0xff]
          %v11344 = vld [vmem:[#allocation22 + $0x2b8] sm:$0xff]
          %v11345 = vld [vmem:[#allocation22 + $0x2c0] sm:$0xff]
          %v11346 = vld [vmem:[#allocation22 + $0x2c8] sm:$0xff]
          %v11347 = vld [vmem:[#allocation22 + $0x2d0] sm:$0xff]
          %v11348 = vld [vmem:[#allocation22 + $0x2d8] sm:$0xff]
          %v11349 = vld [vmem:[#allocation22 + $0x2e0] sm:$0xff]
          %v11350 = vld [vmem:[#allocation22 + $0x2e8] sm:$0xff]
          %v11351 = vld [vmem:[#allocation22 + $0x2f0] sm:$0xff]
          %v11352 = vld [vmem:[#allocation22 + $0x2f8] sm:$0xff]
          %v11353 = vld [vmem:[#allocation22 + $0x300] sm:$0xff]
          %v11354 = vld [vmem:[#allocation22 + $0x308] sm:$0xff]
          %v11355 = vld [vmem:[#allocation22 + $0x310] sm:$0xff]
          %v11356 = vld [vmem:[#allocation22 + $0x318] sm:$0xff]
          %v11357 = vld [vmem:[#allocation22 + $0x320] sm:$0xff]
          %v11358 = vld [vmem:[#allocation22 + $0x328] sm:$0xff]
          %v11359 = vld [vmem:[#allocation22 + $0x330] sm:$0xff]
          %v11360 = vld [vmem:[#allocation22 + $0x338] sm:$0xff]
          %v11361 = vld [vmem:[#allocation22 + $0x340] sm:$0xff]
          %v11362 = vld [vmem:[#allocation22 + $0x348] sm:$0xff]
          %v11363 = vld [vmem:[#allocation22 + $0x350] sm:$0xff]
          %v11364 = vld [vmem:[#allocation22 + $0x358] sm:$0xff]
          %v11365 = vld [vmem:[#allocation22 + $0x360] sm:$0xff]
          %v11366 = vld [vmem:[#allocation22 + $0x368] sm:$0xff]
          %v11367 = vld [vmem:[#allocation22 + $0x370] sm:$0xff]
          %v11368 = vld [vmem:[#allocation22 + $0x378] sm:$0xff]
          %v11369 = vld [vmem:[#allocation22 + $0x380] sm:$0xff]
          %v11370 = vld [vmem:[#allocation22 + $0x388] sm:$0xff]
          %v11371 = vld [vmem:[#allocation22 + $0x390] sm:$0xff]
          %v11372 = vld [vmem:[#allocation22 + $0x398] sm:$0xff]
          %v11373 = vld [vmem:[#allocation22 + $0x3a0] sm:$0xff]
          %v11374 = vld [vmem:[#allocation22 + $0x3a8] sm:$0xff]
          %v11375 = vld [vmem:[#allocation22 + $0x3b0] sm:$0xff]
          %v11376 = vld [vmem:[#allocation22 + $0x3b8] sm:$0xff]
          %v11377 = vld [vmem:[#allocation22 + $0x3c0] sm:$0xff]
          %v11378 = vld [vmem:[#allocation22 + $0x3c8] sm:$0xff]
          %v11379 = vld [vmem:[#allocation22 + $0x3d0] sm:$0xff]
          %v11380 = vld [vmem:[#allocation22 + $0x3d8] sm:$0xff]
          %v11381 = vld [vmem:[#allocation22 + $0x3e0] sm:$0xff]
          %v11382 = vld [vmem:[#allocation22 + $0x3e8] sm:$0xff]
          %v11383 = vld [vmem:[#allocation22 + $0x3f0] sm:$0xff]
          %v11384 = vld [vmem:[#allocation22 + $0x3f8] sm:$0xff]
          %v11385 = vld [vmem:[#allocation23] sm:$0xf]
          %v11387 = vlaneseq
          %v11388 = vshrl.u32 %v11387, 7
          %v11389 = vsub.s32 0, %v11388
          %v11390 = vrot.slane %v11385, %v11389
          %v11391 = vlaneseq
          %v11392 = vshrl.u32 %v11391, 7
          %v11393 = vsub.s32 1, %v11392
          %v11394 = vrot.slane %v11385, %v11393
          %v11395 = vlaneseq
          %v11396 = vshrl.u32 %v11395, 7
          %v11397 = vsub.s32 2, %v11396
          %v11398 = vrot.slane %v11385, %v11397
          %v11399 = vlaneseq
          %v11400 = vshrl.u32 %v11399, 7
          %v11401 = vsub.s32 3, %v11400
          %v11402 = vrot.slane %v11385, %v11401
          %v11535 = vunpack.c.l.b16 %v11257
          %v11536 = vunpack.c.h.b16 %v11257
          %v11537 = vunpack.c.l.b16 %v11258
          %v11538 = vunpack.c.h.b16 %v11258
          %v11539 = vunpack.c.l.b16 %v11259
          %v11540 = vunpack.c.h.b16 %v11259
          %v11541 = vunpack.c.l.b16 %v11260
          %v11542 = vunpack.c.h.b16 %v11260
          %v11543 = vunpack.c.l.b16 %v11261
          %v11544 = vunpack.c.h.b16 %v11261
          %v11545 = vunpack.c.l.b16 %v11262
          %v11546 = vunpack.c.h.b16 %v11262
          %v11547 = vunpack.c.l.b16 %v11263
          %v11548 = vunpack.c.h.b16 %v11263
          %v11549 = vunpack.c.l.b16 %v11264
          %v11550 = vunpack.c.h.b16 %v11264
          %v11551 = vunpack.c.l.b16 %v11265
          %v11552 = vunpack.c.h.b16 %v11265
          %v11553 = vunpack.c.l.b16 %v11266
          %v11554 = vunpack.c.h.b16 %v11266
          %v11555 = vunpack.c.l.b16 %v11267
          %v11556 = vunpack.c.h.b16 %v11267
          %v11557 = vunpack.c.l.b16 %v11268
          %v11558 = vunpack.c.h.b16 %v11268
          %v11559 = vunpack.c.l.b16 %v11269
          %v11560 = vunpack.c.h.b16 %v11269
          %v11561 = vunpack.c.l.b16 %v11270
          %v11562 = vunpack.c.h.b16 %v11270
          %v11563 = vunpack.c.l.b16 %v11271
          %v11564 = vunpack.c.h.b16 %v11271
          %v11565 = vunpack.c.l.b16 %v11272
          %v11566 = vunpack.c.h.b16 %v11272
          %v11567 = vunpack.c.l.b16 %v11273
          %v11568 = vunpack.c.h.b16 %v11273
          %v11569 = vunpack.c.l.b16 %v11274
          %v11570 = vunpack.c.h.b16 %v11274
          %v11571 = vunpack.c.l.b16 %v11275
          %v11572 = vunpack.c.h.b16 %v11275
          %v11573 = vunpack.c.l.b16 %v11276
          %v11574 = vunpack.c.h.b16 %v11276
          %v11575 = vunpack.c.l.b16 %v11277
          %v11576 = vunpack.c.h.b16 %v11277
          %v11577 = vunpack.c.l.b16 %v11278
          %v11578 = vunpack.c.h.b16 %v11278
          %v11579 = vunpack.c.l.b16 %v11279
          %v11580 = vunpack.c.h.b16 %v11279
          %v11581 = vunpack.c.l.b16 %v11280
          %v11582 = vunpack.c.h.b16 %v11280
          %v11583 = vunpack.c.l.b16 %v11281
          %v11584 = vunpack.c.h.b16 %v11281
          %v11585 = vunpack.c.l.b16 %v11282
          %v11586 = vunpack.c.h.b16 %v11282
          %v11587 = vunpack.c.l.b16 %v11283
          %v11588 = vunpack.c.h.b16 %v11283
          %v11589 = vunpack.c.l.b16 %v11284
          %v11590 = vunpack.c.h.b16 %v11284
          %v11591 = vunpack.c.l.b16 %v11285
          %v11592 = vunpack.c.h.b16 %v11285
          %v11593 = vunpack.c.l.b16 %v11286
          %v11594 = vunpack.c.h.b16 %v11286
          %v11595 = vunpack.c.l.b16 %v11287
          %v11596 = vunpack.c.h.b16 %v11287
          %v11597 = vunpack.c.l.b16 %v11288
          %v11598 = vunpack.c.h.b16 %v11288
          %v11599 = vunpack.c.l.b16 %v11289
          %v11600 = vunpack.c.h.b16 %v11289
          %v11601 = vunpack.c.l.b16 %v11290
          %v11602 = vunpack.c.h.b16 %v11290
          %v11603 = vunpack.c.l.b16 %v11291
          %v11604 = vunpack.c.h.b16 %v11291
          %v11605 = vunpack.c.l.b16 %v11292
          %v11606 = vunpack.c.h.b16 %v11292
          %v11607 = vunpack.c.l.b16 %v11293
          %v11608 = vunpack.c.h.b16 %v11293
          %v11609 = vunpack.c.l.b16 %v11294
          %v11610 = vunpack.c.h.b16 %v11294
          %v11611 = vunpack.c.l.b16 %v11295
          %v11612 = vunpack.c.h.b16 %v11295
          %v11613 = vunpack.c.l.b16 %v11296
          %v11614 = vunpack.c.h.b16 %v11296
          %v11615 = vunpack.c.l.b16 %v11297
          %v11616 = vunpack.c.h.b16 %v11297
          %v11617 = vunpack.c.l.b16 %v11298
          %v11618 = vunpack.c.h.b16 %v11298
          %v11619 = vunpack.c.l.b16 %v11299
          %v11620 = vunpack.c.h.b16 %v11299
          %v11621 = vunpack.c.l.b16 %v11300
          %v11622 = vunpack.c.h.b16 %v11300
          %v11623 = vunpack.c.l.b16 %v11301
          %v11624 = vunpack.c.h.b16 %v11301
          %v11625 = vunpack.c.l.b16 %v11302
          %v11626 = vunpack.c.h.b16 %v11302
          %v11627 = vunpack.c.l.b16 %v11303
          %v11628 = vunpack.c.h.b16 %v11303
          %v11629 = vunpack.c.l.b16 %v11304
          %v11630 = vunpack.c.h.b16 %v11304
          %v11631 = vunpack.c.l.b16 %v11305
          %v11632 = vunpack.c.h.b16 %v11305
          %v11633 = vunpack.c.l.b16 %v11306
          %v11634 = vunpack.c.h.b16 %v11306
          %v11635 = vunpack.c.l.b16 %v11307
          %v11636 = vunpack.c.h.b16 %v11307
          %v11637 = vunpack.c.l.b16 %v11308
          %v11638 = vunpack.c.h.b16 %v11308
          %v11639 = vunpack.c.l.b16 %v11309
          %v11640 = vunpack.c.h.b16 %v11309
          %v11641 = vunpack.c.l.b16 %v11310
          %v11642 = vunpack.c.h.b16 %v11310
          %v11643 = vunpack.c.l.b16 %v11311
          %v11644 = vunpack.c.h.b16 %v11311
          %v11645 = vunpack.c.l.b16 %v11312
          %v11646 = vunpack.c.h.b16 %v11312
          %v11647 = vunpack.c.l.b16 %v11313
          %v11648 = vunpack.c.h.b16 %v11313
          %v11649 = vunpack.c.l.b16 %v11314
          %v11650 = vunpack.c.h.b16 %v11314
          %v11651 = vunpack.c.l.b16 %v11315
          %v11652 = vunpack.c.h.b16 %v11315
          %v11653 = vunpack.c.l.b16 %v11316
          %v11654 = vunpack.c.h.b16 %v11316
          %v11655 = vunpack.c.l.b16 %v11317
          %v11656 = vunpack.c.h.b16 %v11317
          %v11657 = vunpack.c.l.b16 %v11318
          %v11658 = vunpack.c.h.b16 %v11318
          %v11659 = vunpack.c.l.b16 %v11319
          %v11660 = vunpack.c.h.b16 %v11319
          %v11661 = vunpack.c.l.b16 %v11320
          %v11662 = vunpack.c.h.b16 %v11320
          %v11663 = vunpack.c.l.b16 %v11321
          %v11664 = vunpack.c.h.b16 %v11321
          %v11665 = vunpack.c.l.b16 %v11322
          %v11666 = vunpack.c.h.b16 %v11322
          %v11667 = vunpack.c.l.b16 %v11323
          %v11668 = vunpack.c.h.b16 %v11323
          %v11669 = vunpack.c.l.b16 %v11324
          %v11670 = vunpack.c.h.b16 %v11324
          %v11671 = vunpack.c.l.b16 %v11325
          %v11672 = vunpack.c.h.b16 %v11325
          %v11673 = vunpack.c.l.b16 %v11326
          %v11674 = vunpack.c.h.b16 %v11326
          %v11675 = vunpack.c.l.b16 %v11327
          %v11676 = vunpack.c.h.b16 %v11327
          %v11677 = vunpack.c.l.b16 %v11328
          %v11678 = vunpack.c.h.b16 %v11328
          %v11679 = vunpack.c.l.b16 %v11329
          %v11680 = vunpack.c.h.b16 %v11329
          %v11681 = vunpack.c.l.b16 %v11330
          %v11682 = vunpack.c.h.b16 %v11330
          %v11683 = vunpack.c.l.b16 %v11331
          %v11684 = vunpack.c.h.b16 %v11331
          %v11685 = vunpack.c.l.b16 %v11332
          %v11686 = vunpack.c.h.b16 %v11332
          %v11687 = vunpack.c.l.b16 %v11333
          %v11688 = vunpack.c.h.b16 %v11333
          %v11689 = vunpack.c.l.b16 %v11334
          %v11690 = vunpack.c.h.b16 %v11334
          %v11691 = vunpack.c.l.b16 %v11335
          %v11692 = vunpack.c.h.b16 %v11335
          %v11693 = vunpack.c.l.b16 %v11336
          %v11694 = vunpack.c.h.b16 %v11336
          %v11695 = vunpack.c.l.b16 %v11337
          %v11696 = vunpack.c.h.b16 %v11337
          %v11697 = vunpack.c.l.b16 %v11338
          %v11698 = vunpack.c.h.b16 %v11338
          %v11699 = vunpack.c.l.b16 %v11339
          %v11700 = vunpack.c.h.b16 %v11339
          %v11701 = vunpack.c.l.b16 %v11340
          %v11702 = vunpack.c.h.b16 %v11340
          %v11703 = vunpack.c.l.b16 %v11341
          %v11704 = vunpack.c.h.b16 %v11341
          %v11705 = vunpack.c.l.b16 %v11342
          %v11706 = vunpack.c.h.b16 %v11342
          %v11707 = vunpack.c.l.b16 %v11343
          %v11708 = vunpack.c.h.b16 %v11343
          %v11709 = vunpack.c.l.b16 %v11344
          %v11710 = vunpack.c.h.b16 %v11344
          %v11711 = vunpack.c.l.b16 %v11345
          %v11712 = vunpack.c.h.b16 %v11345
          %v11713 = vunpack.c.l.b16 %v11346
          %v11714 = vunpack.c.h.b16 %v11346
          %v11715 = vunpack.c.l.b16 %v11347
          %v11716 = vunpack.c.h.b16 %v11347
          %v11717 = vunpack.c.l.b16 %v11348
          %v11718 = vunpack.c.h.b16 %v11348
          %v11719 = vunpack.c.l.b16 %v11349
          %v11720 = vunpack.c.h.b16 %v11349
          %v11721 = vunpack.c.l.b16 %v11350
          %v11722 = vunpack.c.h.b16 %v11350
          %v11723 = vunpack.c.l.b16 %v11351
          %v11724 = vunpack.c.h.b16 %v11351
          %v11725 = vunpack.c.l.b16 %v11352
          %v11726 = vunpack.c.h.b16 %v11352
          %v11727 = vunpack.c.l.b16 %v11353
          %v11728 = vunpack.c.h.b16 %v11353
          %v11729 = vunpack.c.l.b16 %v11354
          %v11730 = vunpack.c.h.b16 %v11354
          %v11731 = vunpack.c.l.b16 %v11355
          %v11732 = vunpack.c.h.b16 %v11355
          %v11733 = vunpack.c.l.b16 %v11356
          %v11734 = vunpack.c.h.b16 %v11356
          %v11735 = vunpack.c.l.b16 %v11357
          %v11736 = vunpack.c.h.b16 %v11357
          %v11737 = vunpack.c.l.b16 %v11358
          %v11738 = vunpack.c.h.b16 %v11358
          %v11739 = vunpack.c.l.b16 %v11359
          %v11740 = vunpack.c.h.b16 %v11359
          %v11741 = vunpack.c.l.b16 %v11360
          %v11742 = vunpack.c.h.b16 %v11360
          %v11743 = vunpack.c.l.b16 %v11361
          %v11744 = vunpack.c.h.b16 %v11361
          %v11745 = vunpack.c.l.b16 %v11362
          %v11746 = vunpack.c.h.b16 %v11362
          %v11747 = vunpack.c.l.b16 %v11363
          %v11748 = vunpack.c.h.b16 %v11363
          %v11749 = vunpack.c.l.b16 %v11364
          %v11750 = vunpack.c.h.b16 %v11364
          %v11751 = vunpack.c.l.b16 %v11365
          %v11752 = vunpack.c.h.b16 %v11365
          %v11753 = vunpack.c.l.b16 %v11366
          %v11754 = vunpack.c.h.b16 %v11366
          %v11755 = vunpack.c.l.b16 %v11367
          %v11756 = vunpack.c.h.b16 %v11367
          %v11757 = vunpack.c.l.b16 %v11368
          %v11758 = vunpack.c.h.b16 %v11368
          %v11759 = vunpack.c.l.b16 %v11369
          %v11760 = vunpack.c.h.b16 %v11369
          %v11761 = vunpack.c.l.b16 %v11370
          %v11762 = vunpack.c.h.b16 %v11370
          %v11763 = vunpack.c.l.b16 %v11371
          %v11764 = vunpack.c.h.b16 %v11371
          %v11765 = vunpack.c.l.b16 %v11372
          %v11766 = vunpack.c.h.b16 %v11372
          %v11767 = vunpack.c.l.b16 %v11373
          %v11768 = vunpack.c.h.b16 %v11373
          %v11769 = vunpack.c.l.b16 %v11374
          %v11770 = vunpack.c.h.b16 %v11374
          %v11771 = vunpack.c.l.b16 %v11375
          %v11772 = vunpack.c.h.b16 %v11375
          %v11773 = vunpack.c.l.b16 %v11376
          %v11774 = vunpack.c.h.b16 %v11376
          %v11775 = vunpack.c.l.b16 %v11377
          %v11776 = vunpack.c.h.b16 %v11377
          %v11777 = vunpack.c.l.b16 %v11378
          %v11778 = vunpack.c.h.b16 %v11378
          %v11779 = vunpack.c.l.b16 %v11379
          %v11780 = vunpack.c.h.b16 %v11379
          %v11781 = vunpack.c.l.b16 %v11380
          %v11782 = vunpack.c.h.b16 %v11380
          %v11783 = vunpack.c.l.b16 %v11381
          %v11784 = vunpack.c.h.b16 %v11381
          %v11785 = vunpack.c.l.b16 %v11382
          %v11786 = vunpack.c.h.b16 %v11382
          %v11787 = vunpack.c.l.b16 %v11383
          %v11788 = vunpack.c.h.b16 %v11383
          %v11789 = vunpack.c.l.b16 %v11384
          %v11790 = vunpack.c.h.b16 %v11384
          %v11791 = vpack.c.b16 %v11539, %v11535
          %v11792 = vpack.c.b16 %v11540, %v11536
          %v11793 = vpack.c.b16 %v11541, %v11537
          %v11794 = vpack.c.b16 %v11542, %v11538
          %v11795 = vpack.c.b16 %v11547, %v11543
          %v11796 = vpack.c.b16 %v11548, %v11544
          %v11797 = vpack.c.b16 %v11549, %v11545
          %v11798 = vpack.c.b16 %v11550, %v11546
          %v11799 = vpack.c.b16 %v11555, %v11551
          %v11800 = vpack.c.b16 %v11556, %v11552
          %v11801 = vpack.c.b16 %v11557, %v11553
          %v11802 = vpack.c.b16 %v11558, %v11554
          %v11803 = vpack.c.b16 %v11563, %v11559
          %v11804 = vpack.c.b16 %v11564, %v11560
          %v11805 = vpack.c.b16 %v11565, %v11561
          %v11806 = vpack.c.b16 %v11566, %v11562
          %v11807 = vpack.c.b16 %v11571, %v11567
          %v11808 = vpack.c.b16 %v11572, %v11568
          %v11809 = vpack.c.b16 %v11573, %v11569
          %v11810 = vpack.c.b16 %v11574, %v11570
          %v11811 = vpack.c.b16 %v11579, %v11575
          %v11812 = vpack.c.b16 %v11580, %v11576
          %v11813 = vpack.c.b16 %v11581, %v11577
          %v11814 = vpack.c.b16 %v11582, %v11578
          %v11815 = vpack.c.b16 %v11587, %v11583
          %v11816 = vpack.c.b16 %v11588, %v11584
          %v11817 = vpack.c.b16 %v11589, %v11585
          %v11818 = vpack.c.b16 %v11590, %v11586
          %v11819 = vpack.c.b16 %v11595, %v11591
          %v11820 = vpack.c.b16 %v11596, %v11592
          %v11821 = vpack.c.b16 %v11597, %v11593
          %v11822 = vpack.c.b16 %v11598, %v11594
          %v11823 = vpack.c.b16 %v11603, %v11599
          %v11824 = vpack.c.b16 %v11604, %v11600
          %v11825 = vpack.c.b16 %v11605, %v11601
          %v11826 = vpack.c.b16 %v11606, %v11602
          %v11827 = vpack.c.b16 %v11611, %v11607
          %v11828 = vpack.c.b16 %v11612, %v11608
          %v11829 = vpack.c.b16 %v11613, %v11609
          %v11830 = vpack.c.b16 %v11614, %v11610
          %v11831 = vpack.c.b16 %v11619, %v11615
          %v11832 = vpack.c.b16 %v11620, %v11616
          %v11833 = vpack.c.b16 %v11621, %v11617
          %v11834 = vpack.c.b16 %v11622, %v11618
          %v11835 = vpack.c.b16 %v11627, %v11623
          %v11836 = vpack.c.b16 %v11628, %v11624
          %v11837 = vpack.c.b16 %v11629, %v11625
          %v11838 = vpack.c.b16 %v11630, %v11626
          %v11839 = vpack.c.b16 %v11635, %v11631
          %v11840 = vpack.c.b16 %v11636, %v11632
          %v11841 = vpack.c.b16 %v11637, %v11633
          %v11842 = vpack.c.b16 %v11638, %v11634
          %v11843 = vpack.c.b16 %v11643, %v11639
          %v11844 = vpack.c.b16 %v11644, %v11640
          %v11845 = vpack.c.b16 %v11645, %v11641
          %v11846 = vpack.c.b16 %v11646, %v11642
          %v11847 = vpack.c.b16 %v11651, %v11647
          %v11848 = vpack.c.b16 %v11652, %v11648
          %v11849 = vpack.c.b16 %v11653, %v11649
          %v11850 = vpack.c.b16 %v11654, %v11650
          %v11851 = vpack.c.b16 %v11659, %v11655
          %v11852 = vpack.c.b16 %v11660, %v11656
          %v11853 = vpack.c.b16 %v11661, %v11657
          %v11854 = vpack.c.b16 %v11662, %v11658
          %v11855 = vpack.c.b16 %v11667, %v11663
          %v11856 = vpack.c.b16 %v11668, %v11664
          %v11857 = vpack.c.b16 %v11669, %v11665
          %v11858 = vpack.c.b16 %v11670, %v11666
          %v11859 = vpack.c.b16 %v11675, %v11671
          %v11860 = vpack.c.b16 %v11676, %v11672
          %v11861 = vpack.c.b16 %v11677, %v11673
          %v11862 = vpack.c.b16 %v11678, %v11674
          %v11863 = vpack.c.b16 %v11683, %v11679
          %v11864 = vpack.c.b16 %v11684, %v11680
          %v11865 = vpack.c.b16 %v11685, %v11681
          %v11866 = vpack.c.b16 %v11686, %v11682
          %v11867 = vpack.c.b16 %v11691, %v11687
          %v11868 = vpack.c.b16 %v11692, %v11688
          %v11869 = vpack.c.b16 %v11693, %v11689
          %v11870 = vpack.c.b16 %v11694, %v11690
          %v11871 = vpack.c.b16 %v11699, %v11695
          %v11872 = vpack.c.b16 %v11700, %v11696
          %v11873 = vpack.c.b16 %v11701, %v11697
          %v11874 = vpack.c.b16 %v11702, %v11698
          %v11875 = vpack.c.b16 %v11707, %v11703
          %v11876 = vpack.c.b16 %v11708, %v11704
          %v11877 = vpack.c.b16 %v11709, %v11705
          %v11878 = vpack.c.b16 %v11710, %v11706
          %v11879 = vpack.c.b16 %v11715, %v11711
          %v11880 = vpack.c.b16 %v11716, %v11712
          %v11881 = vpack.c.b16 %v11717, %v11713
          %v11882 = vpack.c.b16 %v11718, %v11714
          %v11883 = vpack.c.b16 %v11723, %v11719
          %v11884 = vpack.c.b16 %v11724, %v11720
          %v11885 = vpack.c.b16 %v11725, %v11721
          %v11886 = vpack.c.b16 %v11726, %v11722
          %v11887 = vpack.c.b16 %v11731, %v11727
          %v11888 = vpack.c.b16 %v11732, %v11728
          %v11889 = vpack.c.b16 %v11733, %v11729
          %v11890 = vpack.c.b16 %v11734, %v11730
          %v11891 = vpack.c.b16 %v11739, %v11735
          %v11892 = vpack.c.b16 %v11740, %v11736
          %v11893 = vpack.c.b16 %v11741, %v11737
          %v11894 = vpack.c.b16 %v11742, %v11738
          %v11895 = vpack.c.b16 %v11747, %v11743
          %v11896 = vpack.c.b16 %v11748, %v11744
          %v11897 = vpack.c.b16 %v11749, %v11745
          %v11898 = vpack.c.b16 %v11750, %v11746
          %v11899 = vpack.c.b16 %v11755, %v11751
          %v11900 = vpack.c.b16 %v11756, %v11752
          %v11901 = vpack.c.b16 %v11757, %v11753
          %v11902 = vpack.c.b16 %v11758, %v11754
          %v11903 = vpack.c.b16 %v11763, %v11759
          %v11904 = vpack.c.b16 %v11764, %v11760
          %v11905 = vpack.c.b16 %v11765, %v11761
          %v11906 = vpack.c.b16 %v11766, %v11762
          %v11907 = vpack.c.b16 %v11771, %v11767
          %v11908 = vpack.c.b16 %v11772, %v11768
          %v11909 = vpack.c.b16 %v11773, %v11769
          %v11910 = vpack.c.b16 %v11774, %v11770
          %v11911 = vpack.c.b16 %v11779, %v11775
          %v11912 = vpack.c.b16 %v11780, %v11776
          %v11913 = vpack.c.b16 %v11781, %v11777
          %v11914 = vpack.c.b16 %v11782, %v11778
          %v11915 = vpack.c.b16 %v11787, %v11783
          %v11916 = vpack.c.b16 %v11788, %v11784
          %v11917 = vpack.c.b16 %v11789, %v11785
          %v11918 = vpack.c.b16 %v11790, %v11786
          %12047 = vmatprep.subr.bf16.mxu0 %v11820
          %12048 = vmatpush1.bf16.msra.mxu0 %v11819
          %12049 = vmatprep.subr.bf16.mxu0 %v11816
          %12050 = vmatpush1.bf16.msra.mxu0 %v11815
          %12051 = vmatprep.subr.bf16.mxu0 %v11812
          %12052 = vmatpush1.bf16.msra.mxu0 %v11811
          %12053 = vmatprep.subr.bf16.mxu0 %v11808
          %12054 = vmatpush1.bf16.msra.mxu0 %v11807
          %12055 = vmatprep.subr.bf16.mxu0 %v11804
          %12056 = vmatpush1.bf16.msra.mxu0 %v11803
          %12057 = vmatprep.subr.bf16.mxu0 %v11800
          %12058 = vmatpush1.bf16.msra.mxu0 %v11799
          %12059 = vmatprep.subr.bf16.mxu0 %v11796
          %12060 = vmatpush1.bf16.msra.mxu0 %v11795
          %12061 = vmatprep.subr.bf16.mxu0 %v11792
          %12062 = vmatpush1.bf16.msra.mxu0 %v11791
          %12063 = vmatprep.subr.bf16.mxu0 %v11852
          %12064 = vmatpush2.bf16.msra.mxu0 %v11851
          %12065 = vmatprep.subr.bf16.mxu0 %v11848
          %12066 = vmatpush2.bf16.msra.mxu0 %v11847
          %12067 = vmatprep.subr.bf16.mxu0 %v11844
          %12068 = vmatpush2.bf16.msra.mxu0 %v11843
          %12069 = vmatprep.subr.bf16.mxu0 %v11840
          %12070 = vmatpush2.bf16.msra.mxu0 %v11839
          %12071 = vmatprep.subr.bf16.mxu0 %v11836
          %12072 = vmatpush2.bf16.msra.mxu0 %v11835
          %12073 = vmatprep.subr.bf16.mxu0 %v11832
          %12074 = vmatpush2.bf16.msra.mxu0 %v11831
          %12075 = vmatprep.subr.bf16.mxu0 %v11828
          %12076 = vmatpush2.bf16.msra.mxu0 %v11827
          %12077 = vmatprep.subr.bf16.mxu0 %v11824
          %12078 = vmatpush2.bf16.msra.mxu0 %v11823
          %12079 = vmatprep.mubr.bf16.mxu0 %v11254
          %12080 = vmatmul.mubr.bf16.gmra.mxu0 %v11253
          %v12081 = vpop.f32.mrf.mxu0
          %v12082 = vadd.f32 %v11390, %v12081
          %v12083 = vpop.f32.mrf.mxu0
          %v12084 = vadd.f32 %v11394, %v12083
          %v12085 = vpop.f32.mrf.mxu0
          %v12086 = vpop.f32.mrf.mxu0
          %12087 = vdwg.mxu0
          %12088 = vmatprep.subr.bf16.mxu0 %v11884
          %12089 = vmatpush1.bf16.msra.mxu0 %v11883
          %12090 = vmatprep.subr.bf16.mxu0 %v11880
          %12091 = vmatpush1.bf16.msra.mxu0 %v11879
          %12092 = vmatprep.subr.bf16.mxu0 %v11876
          %12093 = vmatpush1.bf16.msra.mxu0 %v11875
          %12094 = vmatprep.subr.bf16.mxu0 %v11872
          %12095 = vmatpush1.bf16.msra.mxu0 %v11871
          %12096 = vmatprep.subr.bf16.mxu0 %v11868
          %12097 = vmatpush1.bf16.msra.mxu0 %v11867
          %12098 = vmatprep.subr.bf16.mxu0 %v11864
          %12099 = vmatpush1.bf16.msra.mxu0 %v11863
          %12100 = vmatprep.subr.bf16.mxu0 %v11860
          %12101 = vmatpush1.bf16.msra.mxu0 %v11859
          %12102 = vmatprep.subr.bf16.mxu0 %v11856
          %12103 = vmatpush1.bf16.msra.mxu0 %v11855
          %12104 = vmatprep.subr.bf16.mxu0 %v11916
          %12105 = vmatpush2.bf16.msra.mxu0 %v11915
          %12106 = vmatprep.subr.bf16.mxu0 %v11912
          %12107 = vmatpush2.bf16.msra.mxu0 %v11911
          %12108 = vmatprep.subr.bf16.mxu0 %v11908
          %12109 = vmatpush2.bf16.msra.mxu0 %v11907
          %12110 = vmatprep.subr.bf16.mxu0 %v11904
          %12111 = vmatpush2.bf16.msra.mxu0 %v11903
          %12112 = vmatprep.subr.bf16.mxu0 %v11900
          %12113 = vmatpush2.bf16.msra.mxu0 %v11899
          %12114 = vmatprep.subr.bf16.mxu0 %v11896
          %12115 = vmatpush2.bf16.msra.mxu0 %v11895
          %12116 = vmatprep.subr.bf16.mxu0 %v11892
          %12117 = vmatpush2.bf16.msra.mxu0 %v11891
          %12118 = vmatprep.subr.bf16.mxu0 %v11888
          %12119 = vmatpush2.bf16.msra.mxu0 %v11887
          %12120 = vmatprep.mubr.bf16.mxu0 %v11256
          %12121 = vmatmul.mubr.bf16.gmra.mxu0 %v11255
          %v12122 = vpop.f32.mrf.mxu0
          %v12123 = vadd.f32 %v12082, %v12122
          %v12124 = vpop.f32.mrf.mxu0
          %v12125 = vadd.f32 %v12084, %v12124
          %v12126 = vpop.f32.mrf.mxu0
          %v12127 = vpop.f32.mrf.mxu0
          %12128 = vdwg.mxu0
          %12129 = vmatprep.subr.bf16.mxu0 %v11822
          %12130 = vmatpush1.bf16.msra.mxu0 %v11821
          %12131 = vmatprep.subr.bf16.mxu0 %v11818
          %12132 = vmatpush1.bf16.msra.mxu0 %v11817
          %12133 = vmatprep.subr.bf16.mxu0 %v11814
          %12134 = vmatpush1.bf16.msra.mxu0 %v11813
          %12135 = vmatprep.subr.bf16.mxu0 %v11810
          %12136 = vmatpush1.bf16.msra.mxu0 %v11809
          %12137 = vmatprep.subr.bf16.mxu0 %v11806
          %12138 = vmatpush1.bf16.msra.mxu0 %v11805
          %12139 = vmatprep.subr.bf16.mxu0 %v11802
          %12140 = vmatpush1.bf16.msra.mxu0 %v11801
          %12141 = vmatprep.subr.bf16.mxu0 %v11798
          %12142 = vmatpush1.bf16.msra.mxu0 %v11797
          %12143 = vmatprep.subr.bf16.mxu0 %v11794
          %12144 = vmatpush1.bf16.msra.mxu0 %v11793
          %12145 = vmatprep.subr.bf16.mxu0 %v11854
          %12146 = vmatpush2.bf16.msra.mxu0 %v11853
          %12147 = vmatprep.subr.bf16.mxu0 %v11850
          %12148 = vmatpush2.bf16.msra.mxu0 %v11849
          %12149 = vmatprep.subr.bf16.mxu0 %v11846
          %12150 = vmatpush2.bf16.msra.mxu0 %v11845
          %12151 = vmatprep.subr.bf16.mxu0 %v11842
          %12152 = vmatpush2.bf16.msra.mxu0 %v11841
          %12153 = vmatprep.subr.bf16.mxu0 %v11838
          %12154 = vmatpush2.bf16.msra.mxu0 %v11837
          %12155 = vmatprep.subr.bf16.mxu0 %v11834
          %12156 = vmatpush2.bf16.msra.mxu0 %v11833
          %12157 = vmatprep.subr.bf16.mxu0 %v11830
          %12158 = vmatpush2.bf16.msra.mxu0 %v11829
          %12159 = vmatprep.subr.bf16.mxu0 %v11826
          %12160 = vmatpush2.bf16.msra.mxu0 %v11825
          %12161 = vmatprep.mubr.bf16.mxu0 %v11254
          %12162 = vmatmul.mubr.bf16.gmra.mxu0 %v11253
          %v12163 = vpop.f32.mrf.mxu0
          %v12164 = vadd.f32 %v11398, %v12163
          %v12165 = vpop.f32.mrf.mxu0
          %v12166 = vadd.f32 %v11402, %v12165
          %v12167 = vpop.f32.mrf.mxu0
          %v12168 = vpop.f32.mrf.mxu0
          %12169 = vdwg.mxu0
          %12170 = vmatprep.subr.bf16.mxu0 %v11886
          %12171 = vmatpush1.bf16.msra.mxu0 %v11885
          %12172 = vmatprep.subr.bf16.mxu0 %v11882
          %12173 = vmatpush1.bf16.msra.mxu0 %v11881
          %12174 = vmatprep.subr.bf16.mxu0 %v11878
          %12175 = vmatpush1.bf16.msra.mxu0 %v11877
          %12176 = vmatprep.subr.bf16.mxu0 %v11874
          %12177 = vmatpush1.bf16.msra.mxu0 %v11873
          %12178 = vmatprep.subr.bf16.mxu0 %v11870
          %12179 = vmatpush1.bf16.msra.mxu0 %v11869
          %12180 = vmatprep.subr.bf16.mxu0 %v11866
          %12181 = vmatpush1.bf16.msra.mxu0 %v11865
          %12182 = vmatprep.subr.bf16.mxu0 %v11862
          %12183 = vmatpush1.bf16.msra.mxu0 %v11861
          %12184 = vmatprep.subr.bf16.mxu0 %v11858
          %12185 = vmatpush1.bf16.msra.mxu0 %v11857
          %12186 = vmatprep.subr.bf16.mxu0 %v11918
          %12187 = vmatpush2.bf16.msra.mxu0 %v11917
          %12188 = vmatprep.subr.bf16.mxu0 %v11914
          %12189 = vmatpush2.bf16.msra.mxu0 %v11913
          %12190 = vmatprep.subr.bf16.mxu0 %v11910
          %12191 = vmatpush2.bf16.msra.mxu0 %v11909
          %12192 = vmatprep.subr.bf16.mxu0 %v11906
          %12193 = vmatpush2.bf16.msra.mxu0 %v11905
          %12194 = vmatprep.subr.bf16.mxu0 %v11902
          %12195 = vmatpush2.bf16.msra.mxu0 %v11901
          %12196 = vmatprep.subr.bf16.mxu0 %v11898
          %12197 = vmatpush2.bf16.msra.mxu0 %v11897
          %12198 = vmatprep.subr.bf16.mxu0 %v11894
          %12199 = vmatpush2.bf16.msra.mxu0 %v11893
          %12200 = vmatprep.subr.bf16.mxu0 %v11890
          %12201 = vmatpush2.bf16.msra.mxu0 %v11889
          %12202 = vmatprep.mubr.bf16.mxu0 %v11256
          %12203 = vmatmul.mubr.bf16.gmra.mxu0 %v11255
          %v12204 = vpop.f32.mrf.mxu0
          %v12205 = vadd.f32 %v12164, %v12204
          %v12206 = vpop.f32.mrf.mxu0
          %v12207 = vadd.f32 %v12166, %v12206
          %v12208 = vpop.f32.mrf.mxu0
          %v12209 = vpop.f32.mrf.mxu0
          %12210 = vdwg.mxu0
          %v12211 = vmax.f32 %v12123, 0.0
          %v12212 = vmax.f32 %v12125, 0.0
          %v12213 = vmax.f32 %v12205, 0.0
          %v12214 = vmax.f32 %v12207, 0.0
          %v12215 = vld [vmem:[#allocation24] sm:$0xf]
          %v12217 = vlaneseq
          %v12218 = vshrl.u32 %v12217, 7
          %v12219 = vsub.s32 0, %v12218
          %v12220 = vrot.slane %v12215, %v12219
          %v12221 = vlaneseq
          %v12222 = vshrl.u32 %v12221, 7
          %v12223 = vsub.s32 1, %v12222
          %v12224 = vrot.slane %v12215, %v12223
          %v12225 = vlaneseq
          %v12226 = vshrl.u32 %v12225, 7
          %v12227 = vsub.s32 2, %v12226
          %v12228 = vrot.slane %v12215, %v12227
          %v12229 = vlaneseq
          %v12230 = vshrl.u32 %v12229, 7
          %v12231 = vsub.s32 3, %v12230
          %v12232 = vrot.slane %v12215, %v12231
          %v12237 = vmul.f32 %v12211, %v12220
          %v12238 = vmul.f32 %v12212, %v12224
          %v12239 = vmul.f32 %v12213, %v12228
          %v12240 = vmul.f32 %v12214, %v12232
          %vm12241 = vcmask 1041408
          %v12242 = vsel %vm12241, %v12237, 0.0
          %v12243 = vsel %vm12241, %v12238, 0.0
          %v12244 = vadd.f32 %v12242, %v12243
          %v12245 = vsel %vm12241, %v12239, 0.0
          %v12246 = vadd.f32 %v12244, %v12245
          %v12247 = vsel %vm12241, %v12240, 0.0
          %v12248 = vadd.f32 %v12246, %v12247
          %12249 = vadd.xlane.f32.xlu0 %v12248
          %v12250 = vpop.xlane.xlu0 %12249
          %v12251 = vld [vmem:[#allocation5] sm:$0x1]
          %v12253 = vlaneseq
          %v12254 = vshrl.u32 %v12253, 7
          %v12255 = vsub.s32 0, %v12254
          %v12256 = vrot.slane %v12251, %v12255
          %v12258 = vadd.f32 %v12250, %v12256
          %v12259 = vsub.f32 0.0, %v12258
          %v12260 = vmul.f32 %v12259, 1.442695
          %v12261 = vpow.pop %v12260
          %v12262 = vadd.f32 %v12261, 1.0
          %v12263 = vrcp.pop %v12262
          %v12264 = vmul.f32 1.0, %v12263
          %vm12265 = vcmask 1024
          %12266 = vst.msk [vmem:[%s16] sm:$0x3] %vm12265, %v12264
        $region152: #{tpu_custom_call.1} parent=83 // pred_fallthru
          _
        // Predicated region
        $region153: #{tpu_custom_call.1} parent=83 // pred_check
          %p12267 = pneg %p408
        $region154: #{tpu_custom_call.1} parent=83 // pred_check_branch
          %12269 = sbr.rel (%p12267) target = $region156
        $region155: #{tpu_custom_call.1} parent=83 // pred_region
          _
        $region156: #{tpu_custom_call.1} parent=83 // pred_fallthru
          _
        // Predicated region
        $region157: #{tpu_custom_call.1} parent=83 // pred_check
          %p12270 = pneg %p408
        $region158: #{tpu_custom_call.1} parent=83 // pred_check_branch
          %12272 = sbr.rel (%p12270) target = $region160
        $region159: #{tpu_custom_call.1} parent=83 // pred_region
          _
        $region160: #{tpu_custom_call.1} parent=83 // pred_fallthru
          _
      $region84: #{tpu_custom_call.1} parent=5 // pred_fallthru
        _
      %p12273 = scmp.le.s32.totalorder 2, %s29
      // Predicated region
      $region161: #{tpu_custom_call.1} parent=5 // pred_check
        %p12274 = pneg %p12273
      $region162: #{tpu_custom_call.1} parent=5 // pred_check_branch
        %12276 = sbr.rel (%p12274) target = $region164
      $region163: #{tpu_custom_call.1} parent=5 // pred_region
        %s12277 = ssub.s32 %s29, 2
      $region164: #{tpu_custom_call.1} parent=5 // pred_fallthru
        _
    $region6: #{tpu_custom_call.1} parent=1 // loop_footer
      %s33 = sadd.s32 1, %s29
    $region7: #{tpu_custom_call.1} parent=1 // loop_footer_branch
      %28 = sbr.rel target = $region3
    $region8: #{tpu_custom_call.1} parent=1 // loop_exit
      _
    %12278 = vsyncpa [#allocation7], 1
    %s12279 = scalar_lea.sflag [#allocation7], 1
    %12280 = vsyncpa %s12279, 1
    %12281 = vsyncpa [#allocation9], 1
    %12282 = vsyncpa [#allocation12], 1
    %12283 = vsyncpa [#allocation15], 1
    %12284 = vsyncpa [#allocation25], 1

</llo_original>
